<compile_context>
chip_gen: v7x
topology: tpu7x:2x2x1
jax: 0.10.0
libtpu: 0.0.40
codegen_flags: <defaults>
</compile_context>

<pallas_src>
import functools
import math

import jax
import jax.numpy as jnp
import numpy as np
from jax.experimental import pallas as pl
from jax.experimental.pallas import tpu as pltpu


_SLAB_W = 256          # lane width of both parameter slabs
_PN_HID = 128          # PointNet shared-MLP hidden width
_PN_OUT = 1024         # PointNet global-feature width
_PN_CHUNK = 256        # output chunk for the 128->1024 layer (fused max-pool)
_CLS_HID = 256         # classifier hidden width


# ----------------------------------------------------------------------------
# helpers
# ----------------------------------------------------------------------------

def _round_up(x, m):
    return ((x + m - 1) // m) * m


def _full_spec(shape):
    # Whole-array block resident in VMEM (everything here is tiny).
    return pl.BlockSpec(shape, lambda i: (0,) * len(shape))


def _apply_act(h, name):
    if name in (None, "none", "linear", "identity"):
        return h
    if name == "relu":
        return jnp.maximum(h, 0.0)
    if name == "tanh":
        return jnp.tanh(h)
    if name == "sigmoid":
        return jax.nn.sigmoid(h)
    raise ValueError(f"unsupported activation: {name!r}")


class _SlabBuilder:
    """Packs many small 2-D parameter arrays into one lane-dense slab."""

    def __init__(self, dtype, width=_SLAB_W, row_align=8):
        self.dtype = dtype
        self.width = width
        self.row_align = row_align
        self.pieces = []
        self.layout = {}      # name -> (row_offset, rows, cols)
        self.off = 0

    def add(self, name, arr):
        arr = jnp.asarray(arr, self.dtype)
        if arr.ndim == 1:
            arr = arr.reshape(1, -1)
        r, c = arr.shape
        assert c <= self.width, (name, arr.shape)
        rp = _round_up(r, self.row_align)
        buf = jnp.zeros((rp, self.width), self.dtype)
        buf = buf.at[:r, :c].set(arr)
        self.pieces.append(buf)
        self.layout[name] = (self.off, r, c)
        self.off += rp

    def finish(self):
        return jnp.concatenate(self.pieces, axis=0), self.layout


# ----------------------------------------------------------------------------
# fused whole-model kernel
# ----------------------------------------------------------------------------

def _fused_forward_kernel(x_ref, p32_ref, p16_ref, out_ref, *,
                          cfg, layout32, layout16, layer_four_idx, B, N, eps):
    def ld32(name):
        off, r, c = layout32[name]
        v = p32_ref[pl.ds(off, r), :]
        return v[:, :c] if c < _SLAB_W else v

    def ld16(name):
        off, r, c = layout16[name]
        v = p16_ref[pl.ds(off, r), :]
        return v[:, :c] if c < _SLAB_W else v

    def mm(a, b):   # bf16 operands, f32 MXU accumulation
        return jnp.dot(a.astype(jnp.bfloat16), b,
                       preferred_element_type=jnp.float32)

    X = x_ref[...]                                              # (B*N, 3) stacked
    r_all = jnp.sqrt(jnp.sum(X * X, axis=-1, keepdims=True))    # (B*N, 1) radius

    # Fourier features computed ONCE per unique (freq, fourier_dim):
    # phi = sin(r * mult + offset), cos folded into sin via a +pi/2 phase.
    n_four = max(layer_four_idx) + 1
    phi_all = [jnp.sin(r_all * ld32(f"four_mult_{k}") + ld32(f"four_off_{k}"))
               for k in range(n_four)]

    # Active row segments in ORIGINAL row-index space: (start, length) per batch elem.
    full_segs = [(b * N, N) for b in range(B)]
    segs = list(full_segs)

    def gather(arr, segments):
        if segments == full_segs:
            return arr
        parts = [arr[s:s + l] for (s, l) in segments]
        return parts[0] if len(parts) == 1 else jnp.concatenate(parts, axis=0)

    # sphere_coord_and_feature -> per-point radius feature (SO(3) invariant).
    F = gather(r_all, segs)

    # ---- SO3 conv blocks (approx) with fused BatchNorm ----------------------
    # TODO(synk): SO3EquivConv's exact definition (kNN grouping, Monte-Carlo
    # rotation sampling, do_norm) was not provided; approximated by an
    # SO(3)-invariant radius-Fourier-feature MLP.
    for li, lcfg in enumerate(cfg["conv"]):
        din = lcfg["input_dim"]
        phi = gather(phi_all[layer_four_idx[li]], segs)          # (rows, fdim)

        if din == 1:
            h = F * ld32(f"c{li}_w_in_F")        # (rows,1)*(1,H): VPU broadcast
        else:
            h = mm(F, ld16(f"c{li}_w_in_F"))
        h = h + mm(phi, ld16(f"c{li}_w_in_phi"))                 # no concat: split w_in
        h = jnp.maximum(h + ld32(f"c{li}_b_in"), 0.0)
        for j in range(lcfg["hidden_num"]):
            h = mm(h, ld16(f"c{li}_w_hid_{j}"))
            h = jnp.maximum(h + ld32(f"c{li}_b_hid_{j}"), 0.0)
        h = mm(h, ld16(f"c{li}_w_out")) + ld32(f"c{li}_b_out")
        h = _apply_act(h, lcfg["activation"])                    # (rows, out_dim)

        if lcfg["do_sample"]:
            # TODO(synk): deterministic "first mc_num points" stands in for the
            # reference's Monte-Carlo / random sampling.
            mc = lcfg["mc_num"]
            offs = np.cumsum([0] + [l for _, l in segs])
            h = jnp.concatenate(
                [h[int(offs[b]):int(offs[b]) + mc] for b in range(B)], axis=0)
            segs = [(s, mc) for (s, _) in segs]

        # Fused BatchNorm1d (training-mode batch statistics), single pass.
        rows = sum(l for _, l in segs)
        mean = jnp.sum(h, axis=0, keepdims=True) * (1.0 / rows)
        ex2 = jnp.sum(h * h, axis=0, keepdims=True) * (1.0 / rows)
        var = jnp.maximum(ex2 - mean * mean, 0.0)
        inv = jax.lax.rsqrt(var + eps)
        F = (h - mean) * inv * ld32(f"c{li}_gamma") + ld32(f"c{li}_beta")

    # ---- PointNet shared MLP, chunked 128->1024 layer with fused max-pool,
    # ---- and the classifier Linear(1024,256) folded in as K-chunk accumulation.
    # TODO(synk): PointNet internals were not provided; implemented as a shared
    # MLP (C -> 128 -> 1024, ReLU) followed by a global max over points.
    h1 = jnp.maximum(mm(F, ld16("pn_w1")) + ld32("pn_b1"), 0.0)  # (rows, 128)
    h1b = h1.astype(jnp.bfloat16)
    pn_b2 = ld32("pn_b2")                                        # (n_chunks, 256)
    seg_len = segs[0][1]
    n_chunks = _PN_OUT // _PN_CHUNK
    w2_off = layout16["pn_w2"][0]
    w1c_off = layout16["cls_w1"][0]
    c_acc = jnp.zeros((B, _CLS_HID), jnp.float32)
    for j in range(n_chunks):
        w2j = p16_ref[pl.ds(w2_off + j * _PN_HID, _PN_HID), :]   # (128, 256) bf16
        hj = jnp.maximum(
            jnp.dot(h1b, w2j, preferred_element_type=jnp.float32)
            + pn_b2[j:j + 1, :], 0.0)                            # (rows, 256)
        gj = jnp.concatenate(
            [jnp.max(hj[b * seg_len:(b + 1) * seg_len], axis=0, keepdims=True)
             for b in range(B)], axis=0)                         # (B, 256)
        w1j = p16_ref[pl.ds(w1c_off + j * _PN_CHUNK, _PN_CHUNK), :]  # (256, 256)
        c_acc = c_acc + jnp.dot(gj.astype(jnp.bfloat16), w1j,
                                preferred_element_type=jnp.float32)
    c = jnp.maximum(c_acc + ld32("cls_b1"), 0.0)                 # (B, 256)
    logits = mm(c, ld16("cls_w2")) + ld32("cls_b2")              # (B, 128 padded)
    out_ref[...] = logits.astype(out_ref.dtype)


# ----------------------------------------------------------------------------
# wrapper: pack params into 2 slabs + single pallas_call
# ----------------------------------------------------------------------------

def _prepare_kernel_params(params, cfg, class_dim):
    f32 = _SlabBuilder(jnp.float32, row_align=8)
    b16 = _SlabBuilder(jnp.bfloat16, row_align=16)

    # Fourier phase constants, one pair per unique (freq, fourier_dim):
    #   mult = (floor(k/2)+1)*freq ; offset = (k mod 2)*pi/2
    four_keys, layer_four_idx = [], []
    for lcfg in cfg["conv"]:
        key = (float(lcfg["freq"]), int(lcfg["fourier_dim"]))
        if key not in four_keys:
            four_keys.append(key)
            freq, fdim = key
            k = np.arange(fdim, dtype=np.float32)
            half = np.floor(k * 0.5)
            idx = len(four_keys) - 1
            f32.add(f"four_mult_{idx}", (half + 1.0) * freq)
            f32.add(f"four_off_{idx}", (k - 2.0 * half) * (0.5 * math.pi))
        layer_four_idx.append(four_keys.index(key))

    for li, (lcfg, lp, bnp) in enumerate(zip(cfg["conv"], params["conv"],
                                             params["bn"])):
        din = lcfg["input_dim"]
        w_in_F, w_in_phi = lp["w_in"][:din], lp["w_in"][din:]
        if din == 1:
            f32.add(f"c{li}_w_in_F", w_in_F)     # consumed by a VPU broadcast mul
        else:
            b16.add(f"c{li}_w_in_F", w_in_F)
        b16.add(f"c{li}_w_in_phi", w_in_phi)
        f32.add(f"c{li}_b_in", lp["b_in"])
        for j, (wh, bh) in enumerate(zip(lp["w_hid"], lp["b_hid"])):
            b16.add(f"c{li}_w_hid_{j}", wh)
            f32.add(f"c{li}_b_hid_{j}", bh)
        b16.add(f"c{li}_w_out", lp["w_out"])
        f32.add(f"c{li}_b_out", lp["b_out"])
        f32.add(f"c{li}_gamma", bnp["gamma"])
        f32.add(f"c{li}_beta", bnp["beta"])

    pn = params["pointnet"]
    b16.add("pn_w1", pn["w1"])
    f32.add("pn_b1", pn["b1"])
    n_chunks = _PN_OUT // _PN_CHUNK
    b16.add("pn_w2", jnp.concatenate(
        [pn["w2"][:, j * _PN_CHUNK:(j + 1) * _PN_CHUNK] for j in range(n_chunks)],
        axis=0))                                                  # (512, 256)
    f32.add("pn_b2", pn["b2"].reshape(n_chunks, _PN_CHUNK))       # (4, 256)

    cl = params["classifier"]
    b16.add("cls_w1", cl["w1"])                                   # (1024, 256)
    f32.add("cls_b1", cl["b1"])
    padded = _round_up(class_dim, 128)
    w2c = jnp.zeros((_CLS_HID, padded), jnp.float32).at[:, :class_dim].set(cl["w2"])
    b2c = jnp.zeros((padded,), jnp.float32).at[:class_dim].set(cl["b2"])
    b16.add("cls_w2", w2c)
    f32.add("cls_b2", b2c)

    f32_slab, layout32 = f32.finish()
    b16_slab, layout16 = b16.finish()
    return f32_slab, b16_slab, layout32, layout16, tuple(layer_four_idx)


def so3_modelnet_forward(X, params, cfg, class_dim=40):
    B, N, C = X.shape
    f32_slab, b16_slab, layout32, layout16, layer_four_idx = \
        _prepare_kernel_params(params, cfg, class_dim)
    padded = _round_up(class_dim, 128)
    x2 = X.reshape(B * N, C).astype(jnp.float32)                  # row-stacked batch

    kernel = functools.partial(
        _fused_forward_kernel, cfg=cfg, layout32=layout32, layout16=layout16,
        layer_four_idx=layer_four_idx, B=B, N=N, eps=1e-5)

    out = pl.pallas_call(
        kernel,
        grid=(1,),
        in_specs=[_full_spec(tuple(x2.shape)),
                  _full_spec(tuple(f32_slab.shape)),
                  _full_spec(tuple(b16_slab.shape))],
        out_specs=_full_spec((B, padded)),
        out_shape=jax.ShapeDtypeStruct((B, padded), jnp.float32),
        compiler_params=pltpu.CompilerParams(dimension_semantics=("arbitrary",)),
    )(x2, f32_slab, b16_slab)
    return out[:, :class_dim]


# ----------------------------------------------------------------------------
# Deterministic parameter initialization (nn.Linear-style uniform)
# ----------------------------------------------------------------------------

def _dense_init(key, k_in, k_out):
    kw, kb = jax.random.split(key)
    s = 1.0 / jnp.sqrt(jnp.float32(k_in))
    w = jax.random.uniform(kw, (k_in, k_out), jnp.float32, -s, s)
    b = jax.random.uniform(kb, (k_out,), jnp.float32, -s, s)
    return w, b


def init_params(key, cfg, class_dim=40):
    params = {"conv": [], "bn": []}
    for lcfg in cfg["conv"]:
        key, k_in, k_out = jax.random.split(key, 3)
        w_in, b_in = _dense_init(k_in, lcfg["input_dim"] + lcfg["fourier_dim"],
                                 lcfg["hidden_dim"])
        w_hid, b_hid = [], []
        for _ in range(lcfg["hidden_num"]):
            key, kh = jax.random.split(key)
            wh, bh = _dense_init(kh, lcfg["hidden_dim"], lcfg["hidden_dim"])
            w_hid.append(wh), b_hid.append(bh)
        w_out, b_out = _dense_init(k_out, lcfg["hidden_dim"], lcfg["output_dim"])
        params["conv"].append({"w_in": w_in, "b_in": b_in,
                               "w_hid": w_hid, "b_hid": b_hid,
                               "w_out": w_out, "b_out": b_out})
        params["bn"].append({"gamma": jnp.ones((lcfg["output_dim"],), jnp.float32),
                             "beta": jnp.zeros((lcfg["output_dim"],), jnp.float32)})
    last = cfg["conv"][-1]
    key, k1, k2, k3, k4 = jax.random.split(key, 5)
    w1, b1 = _dense_init(k1, last["output_dim"], _PN_HID)
    w2, b2 = _dense_init(k2, _PN_HID, _PN_OUT)
    params["pointnet"] = {"w1": w1, "b1": b1, "w2": w2, "b2": b2}
    cw1, cb1 = _dense_init(k3, _PN_OUT, _CLS_HID)
    cw2, cb2 = _dense_init(k4, _CLS_HID, class_dim)
    params["classifier"] = {"w1": cw1, "b1": cb1, "w2": cw2, "b2": cb2}
    return params


# ----------------------------------------------------------------------------
if __name__ == "__main__":
    cfg = {
        "conv": [
            {"input_dim": 1, "output_dim": 16, "fourier_dim": 8,
             "hidden_dim": 32, "hidden_num": 1, "freq": 1.0, "do_norm": False,
             "do_sample": True, "k": 8, "mc_num": 64, "activation": "relu"},
            {"input_dim": 16, "output_dim": 32, "fourier_dim": 8,
             "hidden_dim": 32, "hidden_num": 1, "freq": 1.0, "do_norm": False,
             "do_sample": True, "k": 8, "mc_num": 32, "activation": "relu"},
        ]
    }
    class_dim = 40

    key = jax.random.PRNGKey(0)
    kx, kp = jax.random.split(key)
    X = jax.random.normal(kx, (2, 128, 3), jnp.float32)   # (B, N, 3) point cloud
    params = init_params(kp, cfg, class_dim=class_dim)

    fwd = jax.jit(lambda x, prm: so3_modelnet_forward(x, prm, cfg, class_dim))
    out = jax.block_until_ready(fwd(X, params))
    assert out.shape == (2, class_dim), out.shape
    assert bool(jnp.all(jnp.isfinite(out)))
    print("KERNEL_OK")
</pallas_src>

<mosaic_0001>
module attributes {stable_mosaic.version = 11 : i64} {
  func.func @_fused_forward_kernel(%arg0: i32, %arg1: memref<256x3xf32, #tpu.memory_space<vmem>>, %arg2: memref<136x256xf32, #tpu.memory_space<vmem>>, %arg3: memref<2000x256xbf16, #tpu.memory_space<vmem>>, %arg4: memref<2x128xf32, #tpu.memory_space<vmem>>) attributes {dimension_semantics = [#tpu.dimension_semantics<arbitrary>], iteration_bounds = array<i64: 1>, scalar_prefetch = 0 : i64, scratch_operands = 0 : i64, tpu.core_type = #tpu.core_type<tc>, window_params = [{pipeline_mode = #tpu.pipeline_mode<synchronous>, transform_indices = @transform_0, window_bounds = array<i64: 256, 3>}, {pipeline_mode = #tpu.pipeline_mode<synchronous>, transform_indices = @transform_1, window_bounds = array<i64: 136, 256>}, {pipeline_mode = #tpu.pipeline_mode<synchronous>, transform_indices = @transform_2, window_bounds = array<i64: 2000, 256>}, {pipeline_mode = #tpu.pipeline_mode<synchronous>, transform_indices = @transform_3, window_bounds = array<i64: 2, 128>}]} {
    %c0 = arith.constant 0 : index
    %c0_0 = arith.constant 0 : index
    %0 = vector.load %arg1[%c0, %c0_0] : memref<256x3xf32, #tpu.memory_space<vmem>>, vector<256x3xf32>
    %1 = arith.mulf %0, %0 : vector<256x3xf32>
    %cst = arith.constant dense<0.000000e+00> : vector<256xf32>
    %2 = vector.multi_reduction <add>, %1, %cst [1] : vector<256x3xf32> to vector<256xf32>
    %3 = vector.shape_cast %2 : vector<256xf32> to vector<256x1xf32>
    %4 = math.sqrt %3 : vector<256x1xf32>
    %c0_1 = arith.constant 0 : index
    %c0_2 = arith.constant 0 : index
    %5 = vector.load %arg2[%c0_1, %c0_2] : memref<136x256xf32, #tpu.memory_space<vmem>>, vector<1x256xf32>
    %6 = vector.extract_strided_slice %5 {offsets = [0, 0], sizes = [1, 8], strides = [1, 1]} : vector<1x256xf32> to vector<1x8xf32>
    %7 = vector.broadcast %4 : vector<256x1xf32> to vector<256x8xf32>
    %8 = vector.broadcast %6 : vector<1x8xf32> to vector<256x8xf32>
    %9 = arith.mulf %7, %8 : vector<256x8xf32>
    %c8 = arith.constant 8 : index
    %c0_3 = arith.constant 0 : index
    %10 = vector.load %arg2[%c8, %c0_3] : memref<136x256xf32, #tpu.memory_space<vmem>>, vector<1x256xf32>
    %11 = vector.extract_strided_slice %10 {offsets = [0, 0], sizes = [1, 8], strides = [1, 1]} : vector<1x256xf32> to vector<1x8xf32>
    %12 = vector.broadcast %11 : vector<1x8xf32> to vector<256x8xf32>
    %13 = arith.addf %9, %12 : vector<256x8xf32>
    %14 = math.sin %13 : vector<256x8xf32>
    %c16 = arith.constant 16 : index
    %c0_4 = arith.constant 0 : index
    %15 = vector.load %arg2[%c16, %c0_4] : memref<136x256xf32, #tpu.memory_space<vmem>>, vector<1x256xf32>
    %16 = vector.extract_strided_slice %15 {offsets = [0, 0], sizes = [1, 32], strides = [1, 1]} : vector<1x256xf32> to vector<1x32xf32>
    %17 = vector.broadcast %4 : vector<256x1xf32> to vector<256x32xf32>
    %18 = vector.broadcast %16 : vector<1x32xf32> to vector<256x32xf32>
    %19 = arith.mulf %17, %18 : vector<256x32xf32>
    %c0_5 = arith.constant 0 : index
    %c0_6 = arith.constant 0 : index
    %20 = vector.load %arg3[%c0_5, %c0_6] : memref<2000x256xbf16, #tpu.memory_space<vmem>>, vector<8x256xbf16>
    %21 = vector.extract_strided_slice %20 {offsets = [0, 0], sizes = [8, 32], strides = [1, 1]} : vector<8x256xbf16> to vector<8x32xbf16>
    %22 = arith.truncf %14 : vector<256x8xf32> to vector<256x8xbf16>
    %cst_7 = arith.constant dense<0.000000e+00> : vector<256x32xf32>
    %23 = tpu.matmul %22, %21, %cst_7 {dimension_numbers = #tpu.dot_dimension_numbers<[1], [0], [0], [1], [0, 0, 1, 1], [], []>} : vector<256x8xbf16>, vector<8x32xbf16>, vector<256x32xf32> -> vector<256x32xf32>
    %24 = arith.addf %19, %23 : vector<256x32xf32>
    %c24 = arith.constant 24 : index
    %c0_8 = arith.constant 0 : index
    %25 = vector.load %arg2[%c24, %c0_8] : memref<136x256xf32, #tpu.memory_space<vmem>>, vector<1x256xf32>
    %26 = vector.extract_strided_slice %25 {offsets = [0, 0], sizes = [1, 32], strides = [1, 1]} : vector<1x256xf32> to vector<1x32xf32>
    %27 = vector.broadcast %26 : vector<1x32xf32> to vector<256x32xf32>
    %28 = arith.addf %24, %27 : vector<256x32xf32>
    %cst_9 = arith.constant 0.000000e+00 : f32
    %29 = vector.broadcast %cst_9 : f32 to vector<256x32xf32>
    %30 = arith.maximumf %28, %29 : vector<256x32xf32>
    %c16_10 = arith.constant 16 : index
    %c0_11 = arith.constant 0 : index
    %31 = vector.load %arg3[%c16_10, %c0_11] : memref<2000x256xbf16, #tpu.memory_space<vmem>>, vector<32x256xbf16>
    %32 = vector.extract_strided_slice %31 {offsets = [0, 0], sizes = [32, 32], strides = [1, 1]} : vector<32x256xbf16> to vector<32x32xbf16>
    %33 = arith.truncf %30 : vector<256x32xf32> to vector<256x32xbf16>
    %cst_12 = arith.constant dense<0.000000e+00> : vector<256x32xf32>
    %34 = tpu.matmul %33, %32, %cst_12 {dimension_numbers = #tpu.dot_dimension_numbers<[1], [0], [0], [1], [0, 0, 1, 1], [], []>} : vector<256x32xbf16>, vector<32x32xbf16>, vector<256x32xf32> -> vector<256x32xf32>
    %c32 = arith.constant 32 : index
    %c0_13 = arith.constant 0 : index
    %35 = vector.load %arg2[%c32, %c0_13] : memref<136x256xf32, #tpu.memory_space<vmem>>, vector<1x256xf32>
    %36 = vector.extract_strided_slice %35 {offsets = [0, 0], sizes = [1, 32], strides = [1, 1]} : vector<1x256xf32> to vector<1x32xf32>
    %37 = vector.broadcast %36 : vector<1x32xf32> to vector<256x32xf32>
    %38 = arith.addf %34, %37 : vector<256x32xf32>
    %cst_14 = arith.constant 0.000000e+00 : f32
    %39 = vector.broadcast %cst_14 : f32 to vector<256x32xf32>
    %40 = arith.maximumf %38, %39 : vector<256x32xf32>
    %c48 = arith.constant 48 : index
    %c0_15 = arith.constant 0 : index
    %41 = vector.load %arg3[%c48, %c0_15] : memref<2000x256xbf16, #tpu.memory_space<vmem>>, vector<32x256xbf16>
    %42 = vector.extract_strided_slice %41 {offsets = [0, 0], sizes = [32, 16], strides = [1, 1]} : vector<32x256xbf16> to vector<32x16xbf16>
    %43 = arith.truncf %40 : vector<256x32xf32> to vector<256x32xbf16>
    %cst_16 = arith.constant dense<0.000000e+00> : vector<256x16xf32>
    %44 = tpu.matmul %43, %42, %cst_16 {dimension_numbers = #tpu.dot_dimension_numbers<[1], [0], [0], [1], [0, 0, 1, 1], [], []>} : vector<256x32xbf16>, vector<32x16xbf16>, vector<256x16xf32> -> vector<256x16xf32>
    %c40 = arith.constant 40 : index
    %c0_17 = arith.constant 0 : index
    %45 = vector.load %arg2[%c40, %c0_17] : memref<136x256xf32, #tpu.memory_space<vmem>>, vector<1x256xf32>
    %46 = vector.extract_strided_slice %45 {offsets = [0, 0], sizes = [1, 16], strides = [1, 1]} : vector<1x256xf32> to vector<1x16xf32>
    %47 = vector.broadcast %46 : vector<1x16xf32> to vector<256x16xf32>
    %48 = arith.addf %44, %47 : vector<256x16xf32>
    %cst_18 = arith.constant 0.000000e+00 : f32
    %49 = vector.broadcast %cst_18 : f32 to vector<256x16xf32>
    %50 = arith.maximumf %48, %49 : vector<256x16xf32>
    %51 = vector.extract_strided_slice %50 {offsets = [0, 0], sizes = [64, 16], strides = [1, 1]} : vector<256x16xf32> to vector<64x16xf32>
    %52 = vector.extract_strided_slice %50 {offsets = [128, 0], sizes = [64, 16], strides = [1, 1]} : vector<256x16xf32> to vector<64x16xf32>
    %53 = tpu.concatenate %51, %52 in 0 : vector<64x16xf32>, vector<64x16xf32> -> vector<128x16xf32>
    %cst_19 = arith.constant dense<0.000000e+00> : vector<16xf32>
    %54 = vector.multi_reduction <add>, %53, %cst_19 [0] : vector<128x16xf32> to vector<16xf32>
    %55 = vector.shape_cast %54 : vector<16xf32> to vector<1x16xf32>
    %cst_20 = arith.constant 7.812500e-03 : f32
    %56 = vector.broadcast %cst_20 : f32 to vector<1x16xf32>
    %57 = arith.mulf %55, %56 : vector<1x16xf32>
    %58 = arith.mulf %53, %53 : vector<128x16xf32>
    %cst_21 = arith.constant dense<0.000000e+00> : vector<16xf32>
    %59 = vector.multi_reduction <add>, %58, %cst_21 [0] : vector<128x16xf32> to vector<16xf32>
    %60 = vector.shape_cast %59 : vector<16xf32> to vector<1x16xf32>
    %cst_22 = arith.constant 7.812500e-03 : f32
    %61 = vector.broadcast %cst_22 : f32 to vector<1x16xf32>
    %62 = arith.mulf %60, %61 : vector<1x16xf32>
    %63 = arith.mulf %57, %57 : vector<1x16xf32>
    %64 = arith.subf %62, %63 : vector<1x16xf32>
    %cst_23 = arith.constant 0.000000e+00 : f32
    %65 = vector.broadcast %cst_23 : f32 to vector<1x16xf32>
    %66 = arith.maximumf %64, %65 : vector<1x16xf32>
    %cst_24 = arith.constant 9.99999974E-6 : f32
    %67 = vector.broadcast %cst_24 : f32 to vector<1x16xf32>
    %68 = arith.addf %66, %67 : vector<1x16xf32>
    %69 = math.rsqrt %68 : vector<1x16xf32>
    %70 = vector.broadcast %57 : vector<1x16xf32> to vector<128x16xf32>
    %71 = arith.subf %53, %70 : vector<128x16xf32>
    %72 = vector.broadcast %69 : vector<1x16xf32> to vector<128x16xf32>
    %73 = arith.mulf %71, %72 : vector<128x16xf32>
    %c48_25 = arith.constant 48 : index
    %c0_26 = arith.constant 0 : index
    %74 = vector.load %arg2[%c48_25, %c0_26] : memref<136x256xf32, #tpu.memory_space<vmem>>, vector<1x256xf32>
    %75 = vector.extract_strided_slice %74 {offsets = [0, 0], sizes = [1, 16], strides = [1, 1]} : vector<1x256xf32> to vector<1x16xf32>
    %76 = vector.broadcast %75 : vector<1x16xf32> to vector<128x16xf32>
    %77 = arith.mulf %73, %76 : vector<128x16xf32>
    %c56 = arith.constant 56 : index
    %c0_27 = arith.constant 0 : index
    %78 = vector.load %arg2[%c56, %c0_27] : memref<136x256xf32, #tpu.memory_space<vmem>>, vector<1x256xf32>
    %79 = vector.extract_strided_slice %78 {offsets = [0, 0], sizes = [1, 16], strides = [1, 1]} : vector<1x256xf32> to vector<1x16xf32>
    %80 = vector.broadcast %79 : vector<1x16xf32> to vector<128x16xf32>
    %81 = arith.addf %77, %80 : vector<128x16xf32>
    %82 = vector.extract_strided_slice %14 {offsets = [0, 0], sizes = [64, 8], strides = [1, 1]} : vector<256x8xf32> to vector<64x8xf32>
    %83 = vector.extract_strided_slice %14 {offsets = [128, 0], sizes = [64, 8], strides = [1, 1]} : vector<256x8xf32> to vector<64x8xf32>
    %84 = tpu.concatenate %82, %83 in 0 : vector<64x8xf32>, vector<64x8xf32> -> vector<128x8xf32>
    %c80 = arith.constant 80 : index
    %c0_28 = arith.constant 0 : index
    %85 = vector.load %arg3[%c80, %c0_28] : memref<2000x256xbf16, #tpu.memory_space<vmem>>, vector<16x256xbf16>
    %86 = vector.extract_strided_slice %85 {offsets = [0, 0], sizes = [16, 32], strides = [1, 1]} : vector<16x256xbf16> to vector<16x32xbf16>
    %87 = arith.truncf %81 : vector<128x16xf32> to vector<128x16xbf16>
    %cst_29 = arith.constant dense<0.000000e+00> : vector<128x32xf32>
    %88 = tpu.matmul %87, %86, %cst_29 {dimension_numbers = #tpu.dot_dimension_numbers<[1], [0], [0], [1], [0, 0, 1, 1], [], []>} : vector<128x16xbf16>, vector<16x32xbf16>, vector<128x32xf32> -> vector<128x32xf32>
    %c96 = arith.constant 96 : index
    %c0_30 = arith.constant 0 : index
    %89 = vector.load %arg3[%c96, %c0_30] : memref<2000x256xbf16, #tpu.memory_space<vmem>>, vector<8x256xbf16>
    %90 = vector.extract_strided_slice %89 {offsets = [0, 0], sizes = [8, 32], strides = [1, 1]} : vector<8x256xbf16> to vector<8x32xbf16>
    %91 = arith.truncf %84 : vector<128x8xf32> to vector<128x8xbf16>
    %cst_31 = arith.constant dense<0.000000e+00> : vector<128x32xf32>
    %92 = tpu.matmul %91, %90, %cst_31 {dimension_numbers = #tpu.dot_dimension_numbers<[1], [0], [0], [1], [0, 0, 1, 1], [], []>} : vector<128x8xbf16>, vector<8x32xbf16>, vector<128x32xf32> -> vector<128x32xf32>
    %93 = arith.addf %88, %92 : vector<128x32xf32>
    %c64 = arith.constant 64 : index
    %c0_32 = arith.constant 0 : index
    %94 = vector.load %arg2[%c64, %c0_32] : memref<136x256xf32, #tpu.memory_space<vmem>>, vector<1x256xf32>
    %95 = vector.extract_strided_slice %94 {offsets = [0, 0], sizes = [1, 32], strides = [1, 1]} : vector<1x256xf32> to vector<1x32xf32>
    %96 = vector.broadcast %95 : vector<1x32xf32> to vector<128x32xf32>
    %97 = arith.addf %93, %96 : vector<128x32xf32>
    %cst_33 = arith.constant 0.000000e+00 : f32
    %98 = vector.broadcast %cst_33 : f32 to vector<128x32xf32>
    %99 = arith.maximumf %97, %98 : vector<128x32xf32>
    %c112 = arith.constant 112 : index
    %c0_34 = arith.constant 0 : index
    %100 = vector.load %arg3[%c112, %c0_34] : memref<2000x256xbf16, #tpu.memory_space<vmem>>, vector<32x256xbf16>
    %101 = vector.extract_strided_slice %100 {offsets = [0, 0], sizes = [32, 32], strides = [1, 1]} : vector<32x256xbf16> to vector<32x32xbf16>
    %102 = arith.truncf %99 : vector<128x32xf32> to vector<128x32xbf16>
    %cst_35 = arith.constant dense<0.000000e+00> : vector<128x32xf32>
    %103 = tpu.matmul %102, %101, %cst_35 {dimension_numbers = #tpu.dot_dimension_numbers<[1], [0], [0], [1], [0, 0, 1, 1], [], []>} : vector<128x32xbf16>, vector<32x32xbf16>, vector<128x32xf32> -> vector<128x32xf32>
    %c72 = arith.constant 72 : index
    %c0_36 = arith.constant 0 : index
    %104 = vector.load %arg2[%c72, %c0_36] : memref<136x256xf32, #tpu.memory_space<vmem>>, vector<1x256xf32>
    %105 = vector.extract_strided_slice %104 {offsets = [0, 0], sizes = [1, 32], strides = [1, 1]} : vector<1x256xf32> to vector<1x32xf32>
    %106 = vector.broadcast %105 : vector<1x32xf32> to vector<128x32xf32>
    %107 = arith.addf %103, %106 : vector<128x32xf32>
    %cst_37 = arith.constant 0.000000e+00 : f32
    %108 = vector.broadcast %cst_37 : f32 to vector<128x32xf32>
    %109 = arith.maximumf %107, %108 : vector<128x32xf32>
    %c144 = arith.constant 144 : index
    %c0_38 = arith.constant 0 : index
    %110 = vector.load %arg3[%c144, %c0_38] : memref<2000x256xbf16, #tpu.memory_space<vmem>>, vector<32x256xbf16>
    %111 = vector.extract_strided_slice %110 {offsets = [0, 0], sizes = [32, 32], strides = [1, 1]} : vector<32x256xbf16> to vector<32x32xbf16>
    %112 = arith.truncf %109 : vector<128x32xf32> to vector<128x32xbf16>
    %cst_39 = arith.constant dense<0.000000e+00> : vector<128x32xf32>
    %113 = tpu.matmul %112, %111, %cst_39 {dimension_numbers = #tpu.dot_dimension_numbers<[1], [0], [0], [1], [0, 0, 1, 1], [], []>} : vector<128x32xbf16>, vector<32x32xbf16>, vector<128x32xf32> -> vector<128x32xf32>
    %c80_40 = arith.constant 80 : index
    %c0_41 = arith.constant 0 : index
    %114 = vector.load %arg2[%c80_40, %c0_41] : memref<136x256xf32, #tpu.memory_space<vmem>>, vector<1x256xf32>
    %115 = vector.extract_strided_slice %114 {offsets = [0, 0], sizes = [1, 32], strides = [1, 1]} : vector<1x256xf32> to vector<1x32xf32>
    %116 = vector.broadcast %115 : vector<1x32xf32> to vector<128x32xf32>
    %117 = arith.addf %113, %116 : vector<128x32xf32>
    %cst_42 = arith.constant 0.000000e+00 : f32
    %118 = vector.broadcast %cst_42 : f32 to vector<128x32xf32>
    %119 = arith.maximumf %117, %118 : vector<128x32xf32>
    %120 = vector.extract_strided_slice %119 {offsets = [0, 0], sizes = [32, 32], strides = [1, 1]} : vector<128x32xf32> to vector<32x32xf32>
    %121 = vector.extract_strided_slice %119 {offsets = [64, 0], sizes = [32, 32], strides = [1, 1]} : vector<128x32xf32> to vector<32x32xf32>
    %122 = tpu.concatenate %120, %121 in 0 : vector<32x32xf32>, vector<32x32xf32> -> vector<64x32xf32>
    %cst_43 = arith.constant dense<0.000000e+00> : vector<32xf32>
    %123 = vector.multi_reduction <add>, %122, %cst_43 [0] : vector<64x32xf32> to vector<32xf32>
    %124 = vector.shape_cast %123 : vector<32xf32> to vector<1x32xf32>
    %cst_44 = arith.constant 1.562500e-02 : f32
    %125 = vector.broadcast %cst_44 : f32 to vector<1x32xf32>
    %126 = arith.mulf %124, %125 : vector<1x32xf32>
    %127 = arith.mulf %122, %122 : vector<64x32xf32>
    %cst_45 = arith.constant dense<0.000000e+00> : vector<32xf32>
    %128 = vector.multi_reduction <add>, %127, %cst_45 [0] : vector<64x32xf32> to vector<32xf32>
    %129 = vector.shape_cast %128 : vector<32xf32> to vector<1x32xf32>
    %cst_46 = arith.constant 1.562500e-02 : f32
    %130 = vector.broadcast %cst_46 : f32 to vector<1x32xf32>
    %131 = arith.mulf %129, %130 : vector<1x32xf32>
    %132 = arith.mulf %126, %126 : vector<1x32xf32>
    %133 = arith.subf %131, %132 : vector<1x32xf32>
    %cst_47 = arith.constant 0.000000e+00 : f32
    %134 = vector.broadcast %cst_47 : f32 to vector<1x32xf32>
    %135 = arith.maximumf %133, %134 : vector<1x32xf32>
    %cst_48 = arith.constant 9.99999974E-6 : f32
    %136 = vector.broadcast %cst_48 : f32 to vector<1x32xf32>
    %137 = arith.addf %135, %136 : vector<1x32xf32>
    %138 = math.rsqrt %137 : vector<1x32xf32>
    %139 = vector.broadcast %126 : vector<1x32xf32> to vector<64x32xf32>
    %140 = arith.subf %122, %139 : vector<64x32xf32>
    %141 = vector.broadcast %138 : vector<1x32xf32> to vector<64x32xf32>
    %142 = arith.mulf %140, %141 : vector<64x32xf32>
    %c88 = arith.constant 88 : index
    %c0_49 = arith.constant 0 : index
    %143 = vector.load %arg2[%c88, %c0_49] : memref<136x256xf32, #tpu.memory_space<vmem>>, vector<1x256xf32>
    %144 = vector.extract_strided_slice %143 {offsets = [0, 0], sizes = [1, 32], strides = [1, 1]} : vector<1x256xf32> to vector<1x32xf32>
    %145 = vector.broadcast %144 : vector<1x32xf32> to vector<64x32xf32>
    %146 = arith.mulf %142, %145 : vector<64x32xf32>
    %c96_50 = arith.constant 96 : index
    %c0_51 = arith.constant 0 : index
    %147 = vector.load %arg2[%c96_50, %c0_51] : memref<136x256xf32, #tpu.memory_space<vmem>>, vector<1x256xf32>
    %148 = vector.extract_strided_slice %147 {offsets = [0, 0], sizes = [1, 32], strides = [1, 1]} : vector<1x256xf32> to vector<1x32xf32>
    %149 = vector.broadcast %148 : vector<1x32xf32> to vector<64x32xf32>
    %150 = arith.addf %146, %149 : vector<64x32xf32>
    %c176 = arith.constant 176 : index
    %c0_52 = arith.constant 0 : index
    %151 = vector.load %arg3[%c176, %c0_52] : memref<2000x256xbf16, #tpu.memory_space<vmem>>, vector<32x256xbf16>
    %152 = vector.extract_strided_slice %151 {offsets = [0, 0], sizes = [32, 128], strides = [1, 1]} : vector<32x256xbf16> to vector<32x128xbf16>
    %153 = arith.truncf %150 : vector<64x32xf32> to vector<64x32xbf16>
    %cst_53 = arith.constant dense<0.000000e+00> : vector<64x128xf32>
    %154 = tpu.matmul %153, %152, %cst_53 {dimension_numbers = #tpu.dot_dimension_numbers<[1], [0], [0], [1], [0, 0, 1, 1], [], []>} : vector<64x32xbf16>, vector<32x128xbf16>, vector<64x128xf32> -> vector<64x128xf32>
    %c104 = arith.constant 104 : index
    %c0_54 = arith.constant 0 : index
    %155 = vector.load %arg2[%c104, %c0_54] : memref<136x256xf32, #tpu.memory_space<vmem>>, vector<1x256xf32>
    %156 = vector.extract_strided_slice %155 {offsets = [0, 0], sizes = [1, 128], strides = [1, 1]} : vector<1x256xf32> to vector<1x128xf32>
    %157 = vector.broadcast %156 : vector<1x128xf32> to vector<64x128xf32>
    %158 = arith.addf %154, %157 : vector<64x128xf32>
    %cst_55 = arith.constant 0.000000e+00 : f32
    %159 = vector.broadcast %cst_55 : f32 to vector<64x128xf32>
    %160 = arith.maximumf %158, %159 : vector<64x128xf32>
    %161 = arith.truncf %160 : vector<64x128xf32> to vector<64x128xbf16>
    %c112_56 = arith.constant 112 : index
    %c0_57 = arith.constant 0 : index
    %162 = vector.load %arg2[%c112_56, %c0_57] : memref<136x256xf32, #tpu.memory_space<vmem>>, vector<4x256xf32>
    %cst_58 = arith.constant 0.000000e+00 : f32
    %163 = vector.broadcast %cst_58 : f32 to vector<2x256xf32>
    %c208 = arith.constant 208 : index
    %c0_59 = arith.constant 0 : index
    %164 = vector.load %arg3[%c208, %c0_59] : memref<2000x256xbf16, #tpu.memory_space<vmem>>, vector<128x256xbf16>
    %cst_60 = arith.constant dense<0.000000e+00> : vector<64x256xf32>
    %165 = tpu.matmul %161, %164, %cst_60 {dimension_numbers = #tpu.dot_dimension_numbers<[1], [0], [0], [1], [0, 0, 1, 1], [], []>} : vector<64x128xbf16>, vector<128x256xbf16>, vector<64x256xf32> -> vector<64x256xf32>
    %166 = vector.extract_strided_slice %162 {offsets = [0, 0], sizes = [1, 256], strides = [1, 1]} : vector<4x256xf32> to vector<1x256xf32>
    %167 = vector.broadcast %166 : vector<1x256xf32> to vector<64x256xf32>
    %168 = arith.addf %165, %167 : vector<64x256xf32>
    %cst_61 = arith.constant 0.000000e+00 : f32
    %169 = vector.broadcast %cst_61 : f32 to vector<64x256xf32>
    %170 = arith.maximumf %168, %169 : vector<64x256xf32>
    %171 = vector.extract_strided_slice %170 {offsets = [0, 0], sizes = [32, 256], strides = [1, 1]} : vector<64x256xf32> to vector<32x256xf32>
    %cst_62 = arith.constant dense<0xFF800000> : vector<256xf32>
    %172 = vector.multi_reduction <maximumf>, %171, %cst_62 [0] : vector<32x256xf32> to vector<256xf32>
    %173 = vector.shape_cast %172 : vector<256xf32> to vector<1x256xf32>
    %174 = vector.extract_strided_slice %170 {offsets = [32, 0], sizes = [32, 256], strides = [1, 1]} : vector<64x256xf32> to vector<32x256xf32>
    %cst_63 = arith.constant dense<0xFF800000> : vector<256xf32>
    %175 = vector.multi_reduction <maximumf>, %174, %cst_63 [0] : vector<32x256xf32> to vector<256xf32>
    %176 = vector.shape_cast %175 : vector<256xf32> to vector<1x256xf32>
    %177 = tpu.concatenate %173, %176 in 0 : vector<1x256xf32>, vector<1x256xf32> -> vector<2x256xf32>
    %c720 = arith.constant 720 : index
    %c0_64 = arith.constant 0 : index
    %178 = vector.load %arg3[%c720, %c0_64] : memref<2000x256xbf16, #tpu.memory_space<vmem>>, vector<256x256xbf16>
    %179 = arith.truncf %177 : vector<2x256xf32> to vector<2x256xbf16>
    %cst_65 = arith.constant dense<0.000000e+00> : vector<2x256xf32>
    %180 = tpu.matmul %179, %178, %cst_65 {dimension_numbers = #tpu.dot_dimension_numbers<[1], [0], [0], [1], [0, 0, 1, 1], [], []>} : vector<2x256xbf16>, vector<256x256xbf16>, vector<2x256xf32> -> vector<2x256xf32>
    %181 = arith.addf %163, %180 : vector<2x256xf32>
    %c336 = arith.constant 336 : index
    %c0_66 = arith.constant 0 : index
    %182 = vector.load %arg3[%c336, %c0_66] : memref<2000x256xbf16, #tpu.memory_space<vmem>>, vector<128x256xbf16>
    %cst_67 = arith.constant dense<0.000000e+00> : vector<64x256xf32>
    %183 = tpu.matmul %161, %182, %cst_67 {dimension_numbers = #tpu.dot_dimension_numbers<[1], [0], [0], [1], [0, 0, 1, 1], [], []>} : vector<64x128xbf16>, vector<128x256xbf16>, vector<64x256xf32> -> vector<64x256xf32>
    %184 = vector.extract_strided_slice %162 {offsets = [1, 0], sizes = [1, 256], strides = [1, 1]} : vector<4x256xf32> to vector<1x256xf32>
    %185 = vector.broadcast %184 : vector<1x256xf32> to vector<64x256xf32>
    %186 = arith.addf %183, %185 : vector<64x256xf32>
    %cst_68 = arith.constant 0.000000e+00 : f32
    %187 = vector.broadcast %cst_68 : f32 to vector<64x256xf32>
    %188 = arith.maximumf %186, %187 : vector<64x256xf32>
    %189 = vector.extract_strided_slice %188 {offsets = [0, 0], sizes = [32, 256], strides = [1, 1]} : vector<64x256xf32> to vector<32x256xf32>
    %cst_69 = arith.constant dense<0xFF800000> : vector<256xf32>
    %190 = vector.multi_reduction <maximumf>, %189, %cst_69 [0] : vector<32x256xf32> to vector<256xf32>
    %191 = vector.shape_cast %190 : vector<256xf32> to vector<1x256xf32>
    %192 = vector.extract_strided_slice %188 {offsets = [32, 0], sizes = [32, 256], strides = [1, 1]} : vector<64x256xf32> to vector<32x256xf32>
    %cst_70 = arith.constant dense<0xFF800000> : vector<256xf32>
    %193 = vector.multi_reduction <maximumf>, %192, %cst_70 [0] : vector<32x256xf32> to vector<256xf32>
    %194 = vector.shape_cast %193 : vector<256xf32> to vector<1x256xf32>
    %195 = tpu.concatenate %191, %194 in 0 : vector<1x256xf32>, vector<1x256xf32> -> vector<2x256xf32>
    %c976 = arith.constant 976 : index
    %c0_71 = arith.constant 0 : index
    %196 = vector.load %arg3[%c976, %c0_71] : memref<2000x256xbf16, #tpu.memory_space<vmem>>, vector<256x256xbf16>
    %197 = arith.truncf %195 : vector<2x256xf32> to vector<2x256xbf16>
    %cst_72 = arith.constant dense<0.000000e+00> : vector<2x256xf32>
    %198 = tpu.matmul %197, %196, %cst_72 {dimension_numbers = #tpu.dot_dimension_numbers<[1], [0], [0], [1], [0, 0, 1, 1], [], []>} : vector<2x256xbf16>, vector<256x256xbf16>, vector<2x256xf32> -> vector<2x256xf32>
    %199 = arith.addf %181, %198 : vector<2x256xf32>
    %c464 = arith.constant 464 : index
    %c0_73 = arith.constant 0 : index
    %200 = vector.load %arg3[%c464, %c0_73] : memref<2000x256xbf16, #tpu.memory_space<vmem>>, vector<128x256xbf16>
    %cst_74 = arith.constant dense<0.000000e+00> : vector<64x256xf32>
    %201 = tpu.matmul %161, %200, %cst_74 {dimension_numbers = #tpu.dot_dimension_numbers<[1], [0], [0], [1], [0, 0, 1, 1], [], []>} : vector<64x128xbf16>, vector<128x256xbf16>, vector<64x256xf32> -> vector<64x256xf32>
    %202 = vector.extract_strided_slice %162 {offsets = [2, 0], sizes = [1, 256], strides = [1, 1]} : vector<4x256xf32> to vector<1x256xf32>
    %203 = vector.broadcast %202 : vector<1x256xf32> to vector<64x256xf32>
    %204 = arith.addf %201, %203 : vector<64x256xf32>
    %cst_75 = arith.constant 0.000000e+00 : f32
    %205 = vector.broadcast %cst_75 : f32 to vector<64x256xf32>
    %206 = arith.maximumf %204, %205 : vector<64x256xf32>
    %207 = vector.extract_strided_slice %206 {offsets = [0, 0], sizes = [32, 256], strides = [1, 1]} : vector<64x256xf32> to vector<32x256xf32>
    %cst_76 = arith.constant dense<0xFF800000> : vector<256xf32>
    %208 = vector.multi_reduction <maximumf>, %207, %cst_76 [0] : vector<32x256xf32> to vector<256xf32>
    %209 = vector.shape_cast %208 : vector<256xf32> to vector<1x256xf32>
    %210 = vector.extract_strided_slice %206 {offsets = [32, 0], sizes = [32, 256], strides = [1, 1]} : vector<64x256xf32> to vector<32x256xf32>
    %cst_77 = arith.constant dense<0xFF800000> : vector<256xf32>
    %211 = vector.multi_reduction <maximumf>, %210, %cst_77 [0] : vector<32x256xf32> to vector<256xf32>
    %212 = vector.shape_cast %211 : vector<256xf32> to vector<1x256xf32>
    %213 = tpu.concatenate %209, %212 in 0 : vector<1x256xf32>, vector<1x256xf32> -> vector<2x256xf32>
    %c1232 = arith.constant 1232 : index
    %c0_78 = arith.constant 0 : index
    %214 = vector.load %arg3[%c1232, %c0_78] : memref<2000x256xbf16, #tpu.memory_space<vmem>>, vector<256x256xbf16>
    %215 = arith.truncf %213 : vector<2x256xf32> to vector<2x256xbf16>
    %cst_79 = arith.constant dense<0.000000e+00> : vector<2x256xf32>
    %216 = tpu.matmul %215, %214, %cst_79 {dimension_numbers = #tpu.dot_dimension_numbers<[1], [0], [0], [1], [0, 0, 1, 1], [], []>} : vector<2x256xbf16>, vector<256x256xbf16>, vector<2x256xf32> -> vector<2x256xf32>
    %217 = arith.addf %199, %216 : vector<2x256xf32>
    %c592 = arith.constant 592 : index
    %c0_80 = arith.constant 0 : index
    %218 = vector.load %arg3[%c592, %c0_80] : memref<2000x256xbf16, #tpu.memory_space<vmem>>, vector<128x256xbf16>
    %cst_81 = arith.constant dense<0.000000e+00> : vector<64x256xf32>
    %219 = tpu.matmul %161, %218, %cst_81 {dimension_numbers = #tpu.dot_dimension_numbers<[1], [0], [0], [1], [0, 0, 1, 1], [], []>} : vector<64x128xbf16>, vector<128x256xbf16>, vector<64x256xf32> -> vector<64x256xf32>
    %220 = vector.extract_strided_slice %162 {offsets = [3, 0], sizes = [1, 256], strides = [1, 1]} : vector<4x256xf32> to vector<1x256xf32>
    %221 = vector.broadcast %220 : vector<1x256xf32> to vector<64x256xf32>
    %222 = arith.addf %219, %221 : vector<64x256xf32>
    %cst_82 = arith.constant 0.000000e+00 : f32
    %223 = vector.broadcast %cst_82 : f32 to vector<64x256xf32>
    %224 = arith.maximumf %222, %223 : vector<64x256xf32>
    %225 = vector.extract_strided_slice %224 {offsets = [0, 0], sizes = [32, 256], strides = [1, 1]} : vector<64x256xf32> to vector<32x256xf32>
    %cst_83 = arith.constant dense<0xFF800000> : vector<256xf32>
    %226 = vector.multi_reduction <maximumf>, %225, %cst_83 [0] : vector<32x256xf32> to vector<256xf32>
    %227 = vector.shape_cast %226 : vector<256xf32> to vector<1x256xf32>
    %228 = vector.extract_strided_slice %224 {offsets = [32, 0], sizes = [32, 256], strides = [1, 1]} : vector<64x256xf32> to vector<32x256xf32>
    %cst_84 = arith.constant dense<0xFF800000> : vector<256xf32>
    %229 = vector.multi_reduction <maximumf>, %228, %cst_84 [0] : vector<32x256xf32> to vector<256xf32>
    %230 = vector.shape_cast %229 : vector<256xf32> to vector<1x256xf32>
    %231 = tpu.concatenate %227, %230 in 0 : vector<1x256xf32>, vector<1x256xf32> -> vector<2x256xf32>
    %c1488 = arith.constant 1488 : index
    %c0_85 = arith.constant 0 : index
    %232 = vector.load %arg3[%c1488, %c0_85] : memref<2000x256xbf16, #tpu.memory_space<vmem>>, vector<256x256xbf16>
    %233 = arith.truncf %231 : vector<2x256xf32> to vector<2x256xbf16>
    %cst_86 = arith.constant dense<0.000000e+00> : vector<2x256xf32>
    %234 = tpu.matmul %233, %232, %cst_86 {dimension_numbers = #tpu.dot_dimension_numbers<[1], [0], [0], [1], [0, 0, 1, 1], [], []>} : vector<2x256xbf16>, vector<256x256xbf16>, vector<2x256xf32> -> vector<2x256xf32>
    %235 = arith.addf %217, %234 : vector<2x256xf32>
    %c120 = arith.constant 120 : index
    %c0_87 = arith.constant 0 : index
    %236 = vector.load %arg2[%c120, %c0_87] : memref<136x256xf32, #tpu.memory_space<vmem>>, vector<1x256xf32>
    %237 = vector.broadcast %236 : vector<1x256xf32> to vector<2x256xf32>
    %238 = arith.addf %235, %237 : vector<2x256xf32>
    %cst_88 = arith.constant 0.000000e+00 : f32
    %239 = vector.broadcast %cst_88 : f32 to vector<2x256xf32>
    %240 = arith.maximumf %238, %239 : vector<2x256xf32>
    %c1744 = arith.constant 1744 : index
    %c0_89 = arith.constant 0 : index
    %241 = vector.load %arg3[%c1744, %c0_89] : memref<2000x256xbf16, #tpu.memory_space<vmem>>, vector<256x256xbf16>
    %242 = vector.extract_strided_slice %241 {offsets = [0, 0], sizes = [256, 128], strides = [1, 1]} : vector<256x256xbf16> to vector<256x128xbf16>
    %243 = arith.truncf %240 : vector<2x256xf32> to vector<2x256xbf16>
    %cst_90 = arith.constant dense<0.000000e+00> : vector<2x128xf32>
    %244 = tpu.matmul %243, %242, %cst_90 {dimension_numbers = #tpu.dot_dimension_numbers<[1], [0], [0], [1], [0, 0, 1, 1], [], []>} : vector<2x256xbf16>, vector<256x128xbf16>, vector<2x128xf32> -> vector<2x128xf32>
    %c128 = arith.constant 128 : index
    %c0_91 = arith.constant 0 : index
    %245 = vector.load %arg2[%c128, %c0_91] : memref<136x256xf32, #tpu.memory_space<vmem>>, vector<1x256xf32>
    %246 = vector.extract_strided_slice %245 {offsets = [0, 0], sizes = [1, 128], strides = [1, 1]} : vector<1x256xf32> to vector<1x128xf32>
    %247 = vector.broadcast %246 : vector<1x128xf32> to vector<2x128xf32>
    %248 = arith.addf %244, %247 : vector<2x128xf32>
    %c0_92 = arith.constant 0 : index
    %c0_93 = arith.constant 0 : index
    %249 = vector.load %arg4[%c0_92, %c0_93] : memref<2x128xf32, #tpu.memory_space<vmem>>, vector<2x128xf32>
    tpu.vector_store %arg4[%c0_92, %c0_93], %248 {strides = array<i32>} : memref<2x128xf32, #tpu.memory_space<vmem>>, vector<2x128xf32>,
    return
  }
  func.func @transform_0(%arg0: i32) -> (i32, i32) {
    %c0_i32 = arith.constant 0 : i32
    %c0_i32_0 = arith.constant 0 : i32
    %c0_i32_1 = arith.constant 0 : i32
    return %c0_i32, %c0_i32_0 : i32, i32
  }
  func.func @transform_1(%arg0: i32) -> (i32, i32) {
    %c0_i32 = arith.constant 0 : i32
    %c0_i32_0 = arith.constant 0 : i32
    %c0_i32_1 = arith.constant 0 : i32
    return %c0_i32, %c0_i32_0 : i32, i32
  }
  func.func @transform_2(%arg0: i32) -> (i32, i32) {
    %c0_i32 = arith.constant 0 : i32
    %c0_i32_0 = arith.constant 0 : i32
    %c0_i32_1 = arith.constant 0 : i32
    return %c0_i32, %c0_i32_0 : i32, i32
  }
  func.func @transform_3(%arg0: i32) -> (i32, i32) {
    %c0_i32 = arith.constant 0 : i32
    %c0_i32_0 = arith.constant 0 : i32
    %c0_i32_1 = arith.constant 0 : i32
    return %c0_i32, %c0_i32_0 : i32, i32
  }
}

</mosaic_0001>

<llo_original>
// kernel: _lambda_.1
$region0: #{_lambda_.1}
  #allocation0 [shape = 'u32[]', space=smem, size = 0x4, offset = 0x4, fixed_abs, tag = 'smem constant byte address 0x4 - core index']
  #allocation1 [shape = 'u32[144,128]{1,0:T(1,128)}', space=vmem, size = 0x12000, scoped, tag = 'internal scratch']
  %s0 = inlined_call_operand.vmem [shape: f32[256,3], index: 0, kind: input, shape index: {}]
  %s1 = inlined_call_operand.vmem [shape: f32[136,256], index: 1, kind: input, shape index: {}]
  %s2 = inlined_call_operand.vmem [shape: bf16[2000,256], index: 2, kind: input, shape index: {}]
  %s3 = inlined_call_operand.hbm [shape: f32[2,128], index: 3, kind: output, shape index: {}]
  %s4 = sld [smem:[#allocation0]]
  $region22: #{_lambda_.1} parent=0
    _
  %s6 = ssub.s32 1, %s4
  %s7 = scalar_select 0, %s6, %s4
  $region1: #{_lambda_.1} parent=0
    #allocation2 [shape = 'u8[1024]{0}', space=vmem, size = 0x400, scoped, tag = 'output window, operand 0, single buffered']
    #allocation3 [shape = 's32[1]{0}', space=sflag, size = 0x4, scoped, tag = 'scoped memory for _lambda_.1']
    %8 = vsyncpa [#allocation3], 0
    // Predicated region
    $region2: #{_lambda_.1} parent=1 // pred_check
      _
    $region3: #{_lambda_.1} parent=1 // pred_check_branch
      %10 = sbr.rel (0) target = $region5
    $region4: #{_lambda_.1} parent=1 // pred_region
      _
    $region5: #{_lambda_.1} parent=1 // pred_fallthru
      _
    // Predicated region
    $region6: #{_lambda_.1} parent=1 // pred_check
      _
    $region7: #{_lambda_.1} parent=1 // pred_check_branch
      %12 = sbr.rel (0) target = $region9
    $region8: #{_lambda_.1} parent=1 // pred_region
      _
    $region9: #{_lambda_.1} parent=1 // pred_fallthru
      _
    // Predicated region
    $region10: #{_lambda_.1} parent=1 // pred_check
      _
    $region11: #{_lambda_.1} parent=1 // pred_check_branch
      %14 = sbr.rel (0) target = $region13
    $region12: #{_lambda_.1} parent=1 // pred_region
      _
    $region13: #{_lambda_.1} parent=1 // pred_fallthru
      _
    %v16 = vld [vmem:[%s0] sm:$0xff]
    %v17 = vld [vmem:[%s0 + $0x8] sm:$0xff]
    %v18 = vld [vmem:[%s0 + $0x10] sm:$0xff]
    %v19 = vld [vmem:[%s0 + $0x18] sm:$0xff]
    %v20 = vld [vmem:[%s0 + $0x20] sm:$0xff]
    %v21 = vld [vmem:[%s0 + $0x28] sm:$0xff]
    %v22 = vld [vmem:[%s0 + $0x30] sm:$0xff]
    %v23 = vld [vmem:[%s0 + $0x38] sm:$0xff]
    %v24 = vld [vmem:[%s0 + $0x40] sm:$0xff]
    %v25 = vld [vmem:[%s0 + $0x48] sm:$0xff]
    %v26 = vld [vmem:[%s0 + $0x50] sm:$0xff]
    %v27 = vld [vmem:[%s0 + $0x58] sm:$0xff]
    %v28 = vld [vmem:[%s0 + $0x60] sm:$0xff]
    %v29 = vld [vmem:[%s0 + $0x68] sm:$0xff]
    %v30 = vld [vmem:[%s0 + $0x70] sm:$0xff]
    %v31 = vld [vmem:[%s0 + $0x78] sm:$0xff]
    %v32 = vld [vmem:[%s0 + $0x80] sm:$0xff]
    %v33 = vld [vmem:[%s0 + $0x88] sm:$0xff]
    %v34 = vld [vmem:[%s0 + $0x90] sm:$0xff]
    %v35 = vld [vmem:[%s0 + $0x98] sm:$0xff]
    %v36 = vld [vmem:[%s0 + $0xa0] sm:$0xff]
    %v37 = vld [vmem:[%s0 + $0xa8] sm:$0xff]
    %v38 = vld [vmem:[%s0 + $0xb0] sm:$0xff]
    %v39 = vld [vmem:[%s0 + $0xb8] sm:$0xff]
    %v40 = vld [vmem:[%s0 + $0xc0] sm:$0xff]
    %v41 = vld [vmem:[%s0 + $0xc8] sm:$0xff]
    %v42 = vld [vmem:[%s0 + $0xd0] sm:$0xff]
    %v43 = vld [vmem:[%s0 + $0xd8] sm:$0xff]
    %v44 = vld [vmem:[%s0 + $0xe0] sm:$0xff]
    %v45 = vld [vmem:[%s0 + $0xe8] sm:$0xff]
    %v46 = vld [vmem:[%s0 + $0xf0] sm:$0xff]
    %v47 = vld [vmem:[%s0 + $0xf8] sm:$0xff]
    %v48 = vmul.f32 %v16, %v16
    %v49 = vmul.f32 %v17, %v17
    %v50 = vmul.f32 %v18, %v18
    %v51 = vmul.f32 %v19, %v19
    %v52 = vmul.f32 %v20, %v20
    %v53 = vmul.f32 %v21, %v21
    %v54 = vmul.f32 %v22, %v22
    %v55 = vmul.f32 %v23, %v23
    %v56 = vmul.f32 %v24, %v24
    %v57 = vmul.f32 %v25, %v25
    %v58 = vmul.f32 %v26, %v26
    %v59 = vmul.f32 %v27, %v27
    %v60 = vmul.f32 %v28, %v28
    %v61 = vmul.f32 %v29, %v29
    %v62 = vmul.f32 %v30, %v30
    %v63 = vmul.f32 %v31, %v31
    %v64 = vmul.f32 %v32, %v32
    %v65 = vmul.f32 %v33, %v33
    %v66 = vmul.f32 %v34, %v34
    %v67 = vmul.f32 %v35, %v35
    %v68 = vmul.f32 %v36, %v36
    %v69 = vmul.f32 %v37, %v37
    %v70 = vmul.f32 %v38, %v38
    %v71 = vmul.f32 %v39, %v39
    %v72 = vmul.f32 %v40, %v40
    %v73 = vmul.f32 %v41, %v41
    %v74 = vmul.f32 %v42, %v42
    %v75 = vmul.f32 %v43, %v43
    %v76 = vmul.f32 %v44, %v44
    %v77 = vmul.f32 %v45, %v45
    %v78 = vmul.f32 %v46, %v46
    %v79 = vmul.f32 %v47, %v47
    %vm80 = vcmask 23552
    %v81 = vsel %vm80, %v48, 0.0
    %82 = vadd.xlane.f32.xlu0 %v81
    %v83 = vpop.xlane.xlu0 %82
    %v84 = vsel %vm80, %v49, 0.0
    %85 = vadd.xlane.f32.xlu0 %v84
    %v86 = vpop.xlane.xlu0 %85
    %v87 = vsel %vm80, %v50, 0.0
    %88 = vadd.xlane.f32.xlu0 %v87
    %v89 = vpop.xlane.xlu0 %88
    %v90 = vsel %vm80, %v51, 0.0
    %91 = vadd.xlane.f32.xlu0 %v90
    %v92 = vpop.xlane.xlu0 %91
    %v93 = vsel %vm80, %v52, 0.0
    %94 = vadd.xlane.f32.xlu0 %v93
    %v95 = vpop.xlane.xlu0 %94
    %v96 = vsel %vm80, %v53, 0.0
    %97 = vadd.xlane.f32.xlu0 %v96
    %v98 = vpop.xlane.xlu0 %97
    %v99 = vsel %vm80, %v54, 0.0
    %100 = vadd.xlane.f32.xlu0 %v99
    %v101 = vpop.xlane.xlu0 %100
    %v102 = vsel %vm80, %v55, 0.0
    %103 = vadd.xlane.f32.xlu0 %v102
    %v104 = vpop.xlane.xlu0 %103
    %v105 = vsel %vm80, %v56, 0.0
    %106 = vadd.xlane.f32.xlu0 %v105
    %v107 = vpop.xlane.xlu0 %106
    %v108 = vsel %vm80, %v57, 0.0
    %109 = vadd.xlane.f32.xlu0 %v108
    %v110 = vpop.xlane.xlu0 %109
    %v111 = vsel %vm80, %v58, 0.0
    %112 = vadd.xlane.f32.xlu0 %v111
    %v113 = vpop.xlane.xlu0 %112
    %v114 = vsel %vm80, %v59, 0.0
    %115 = vadd.xlane.f32.xlu0 %v114
    %v116 = vpop.xlane.xlu0 %115
    %v117 = vsel %vm80, %v60, 0.0
    %118 = vadd.xlane.f32.xlu0 %v117
    %v119 = vpop.xlane.xlu0 %118
    %v120 = vsel %vm80, %v61, 0.0
    %121 = vadd.xlane.f32.xlu0 %v120
    %v122 = vpop.xlane.xlu0 %121
    %v123 = vsel %vm80, %v62, 0.0
    %124 = vadd.xlane.f32.xlu0 %v123
    %v125 = vpop.xlane.xlu0 %124
    %v126 = vsel %vm80, %v63, 0.0
    %127 = vadd.xlane.f32.xlu0 %v126
    %v128 = vpop.xlane.xlu0 %127
    %v129 = vsel %vm80, %v64, 0.0
    %130 = vadd.xlane.f32.xlu0 %v129
    %v131 = vpop.xlane.xlu0 %130
    %v132 = vsel %vm80, %v65, 0.0
    %133 = vadd.xlane.f32.xlu0 %v132
    %v134 = vpop.xlane.xlu0 %133
    %v135 = vsel %vm80, %v66, 0.0
    %136 = vadd.xlane.f32.xlu0 %v135
    %v137 = vpop.xlane.xlu0 %136
    %v138 = vsel %vm80, %v67, 0.0
    %139 = vadd.xlane.f32.xlu0 %v138
    %v140 = vpop.xlane.xlu0 %139
    %v141 = vsel %vm80, %v68, 0.0
    %142 = vadd.xlane.f32.xlu0 %v141
    %v143 = vpop.xlane.xlu0 %142
    %v144 = vsel %vm80, %v69, 0.0
    %145 = vadd.xlane.f32.xlu0 %v144
    %v146 = vpop.xlane.xlu0 %145
    %v147 = vsel %vm80, %v70, 0.0
    %148 = vadd.xlane.f32.xlu0 %v147
    %v149 = vpop.xlane.xlu0 %148
    %v150 = vsel %vm80, %v71, 0.0
    %151 = vadd.xlane.f32.xlu0 %v150
    %v152 = vpop.xlane.xlu0 %151
    %v153 = vsel %vm80, %v72, 0.0
    %154 = vadd.xlane.f32.xlu0 %v153
    %v155 = vpop.xlane.xlu0 %154
    %v156 = vsel %vm80, %v73, 0.0
    %157 = vadd.xlane.f32.xlu0 %v156
    %v158 = vpop.xlane.xlu0 %157
    %v159 = vsel %vm80, %v74, 0.0
    %160 = vadd.xlane.f32.xlu0 %v159
    %v161 = vpop.xlane.xlu0 %160
    %v162 = vsel %vm80, %v75, 0.0
    %163 = vadd.xlane.f32.xlu0 %v162
    %v164 = vpop.xlane.xlu0 %163
    %v165 = vsel %vm80, %v76, 0.0
    %166 = vadd.xlane.f32.xlu0 %v165
    %v167 = vpop.xlane.xlu0 %166
    %v168 = vsel %vm80, %v77, 0.0
    %169 = vadd.xlane.f32.xlu0 %v168
    %v170 = vpop.xlane.xlu0 %169
    %v171 = vsel %vm80, %v78, 0.0
    %172 = vadd.xlane.f32.xlu0 %v171
    %v173 = vpop.xlane.xlu0 %172
    %v174 = vsel %vm80, %v79, 0.0
    %175 = vadd.xlane.f32.xlu0 %v174
    %v176 = vpop.xlane.xlu0 %175
    %v177 = vrsqrt.pop %v83
    %v178 = vmul.f32 %v83, %v177
    %vm179 = vcmp.eq.f32.partialorder %v83, inf
    %v180 = vsel %vm179, %v83, %v178
    %vm181 = vcmp.eq.f32.partialorder %v83, 0.0
    %v182 = vand.u32 %v83, 2147483648
    %v183 = vsel %vm181, %v182, %v180
    %v184 = vrsqrt.pop %v86
    %v185 = vmul.f32 %v86, %v184
    %vm186 = vcmp.eq.f32.partialorder %v86, inf
    %v187 = vsel %vm186, %v86, %v185
    %vm188 = vcmp.eq.f32.partialorder %v86, 0.0
    %v189 = vand.u32 %v86, 2147483648
    %v190 = vsel %vm188, %v189, %v187
    %v191 = vrsqrt.pop %v89
    %v192 = vmul.f32 %v89, %v191
    %vm193 = vcmp.eq.f32.partialorder %v89, inf
    %v194 = vsel %vm193, %v89, %v192
    %vm195 = vcmp.eq.f32.partialorder %v89, 0.0
    %v196 = vand.u32 %v89, 2147483648
    %v197 = vsel %vm195, %v196, %v194
    %v198 = vrsqrt.pop %v92
    %v199 = vmul.f32 %v92, %v198
    %vm200 = vcmp.eq.f32.partialorder %v92, inf
    %v201 = vsel %vm200, %v92, %v199
    %vm202 = vcmp.eq.f32.partialorder %v92, 0.0
    %v203 = vand.u32 %v92, 2147483648
    %v204 = vsel %vm202, %v203, %v201
    %v205 = vrsqrt.pop %v95
    %v206 = vmul.f32 %v95, %v205
    %vm207 = vcmp.eq.f32.partialorder %v95, inf
    %v208 = vsel %vm207, %v95, %v206
    %vm209 = vcmp.eq.f32.partialorder %v95, 0.0
    %v210 = vand.u32 %v95, 2147483648
    %v211 = vsel %vm209, %v210, %v208
    %v212 = vrsqrt.pop %v98
    %v213 = vmul.f32 %v98, %v212
    %vm214 = vcmp.eq.f32.partialorder %v98, inf
    %v215 = vsel %vm214, %v98, %v213
    %vm216 = vcmp.eq.f32.partialorder %v98, 0.0
    %v217 = vand.u32 %v98, 2147483648
    %v218 = vsel %vm216, %v217, %v215
    %v219 = vrsqrt.pop %v101
    %v220 = vmul.f32 %v101, %v219
    %vm221 = vcmp.eq.f32.partialorder %v101, inf
    %v222 = vsel %vm221, %v101, %v220
    %vm223 = vcmp.eq.f32.partialorder %v101, 0.0
    %v224 = vand.u32 %v101, 2147483648
    %v225 = vsel %vm223, %v224, %v222
    %v226 = vrsqrt.pop %v104
    %v227 = vmul.f32 %v104, %v226
    %vm228 = vcmp.eq.f32.partialorder %v104, inf
    %v229 = vsel %vm228, %v104, %v227
    %vm230 = vcmp.eq.f32.partialorder %v104, 0.0
    %v231 = vand.u32 %v104, 2147483648
    %v232 = vsel %vm230, %v231, %v229
    %v233 = vrsqrt.pop %v107
    %v234 = vmul.f32 %v107, %v233
    %vm235 = vcmp.eq.f32.partialorder %v107, inf
    %v236 = vsel %vm235, %v107, %v234
    %vm237 = vcmp.eq.f32.partialorder %v107, 0.0
    %v238 = vand.u32 %v107, 2147483648
    %v239 = vsel %vm237, %v238, %v236
    %v240 = vrsqrt.pop %v110
    %v241 = vmul.f32 %v110, %v240
    %vm242 = vcmp.eq.f32.partialorder %v110, inf
    %v243 = vsel %vm242, %v110, %v241
    %vm244 = vcmp.eq.f32.partialorder %v110, 0.0
    %v245 = vand.u32 %v110, 2147483648
    %v246 = vsel %vm244, %v245, %v243
    %v247 = vrsqrt.pop %v113
    %v248 = vmul.f32 %v113, %v247
    %vm249 = vcmp.eq.f32.partialorder %v113, inf
    %v250 = vsel %vm249, %v113, %v248
    %vm251 = vcmp.eq.f32.partialorder %v113, 0.0
    %v252 = vand.u32 %v113, 2147483648
    %v253 = vsel %vm251, %v252, %v250
    %v254 = vrsqrt.pop %v116
    %v255 = vmul.f32 %v116, %v254
    %vm256 = vcmp.eq.f32.partialorder %v116, inf
    %v257 = vsel %vm256, %v116, %v255
    %vm258 = vcmp.eq.f32.partialorder %v116, 0.0
    %v259 = vand.u32 %v116, 2147483648
    %v260 = vsel %vm258, %v259, %v257
    %v261 = vrsqrt.pop %v119
    %v262 = vmul.f32 %v119, %v261
    %vm263 = vcmp.eq.f32.partialorder %v119, inf
    %v264 = vsel %vm263, %v119, %v262
    %vm265 = vcmp.eq.f32.partialorder %v119, 0.0
    %v266 = vand.u32 %v119, 2147483648
    %v267 = vsel %vm265, %v266, %v264
    %v268 = vrsqrt.pop %v122
    %v269 = vmul.f32 %v122, %v268
    %vm270 = vcmp.eq.f32.partialorder %v122, inf
    %v271 = vsel %vm270, %v122, %v269
    %vm272 = vcmp.eq.f32.partialorder %v122, 0.0
    %v273 = vand.u32 %v122, 2147483648
    %v274 = vsel %vm272, %v273, %v271
    %v275 = vrsqrt.pop %v125
    %v276 = vmul.f32 %v125, %v275
    %vm277 = vcmp.eq.f32.partialorder %v125, inf
    %v278 = vsel %vm277, %v125, %v276
    %vm279 = vcmp.eq.f32.partialorder %v125, 0.0
    %v280 = vand.u32 %v125, 2147483648
    %v281 = vsel %vm279, %v280, %v278
    %v282 = vrsqrt.pop %v128
    %v283 = vmul.f32 %v128, %v282
    %vm284 = vcmp.eq.f32.partialorder %v128, inf
    %v285 = vsel %vm284, %v128, %v283
    %vm286 = vcmp.eq.f32.partialorder %v128, 0.0
    %v287 = vand.u32 %v128, 2147483648
    %v288 = vsel %vm286, %v287, %v285
    %v289 = vrsqrt.pop %v131
    %v290 = vmul.f32 %v131, %v289
    %vm291 = vcmp.eq.f32.partialorder %v131, inf
    %v292 = vsel %vm291, %v131, %v290
    %vm293 = vcmp.eq.f32.partialorder %v131, 0.0
    %v294 = vand.u32 %v131, 2147483648
    %v295 = vsel %vm293, %v294, %v292
    %v296 = vrsqrt.pop %v134
    %v297 = vmul.f32 %v134, %v296
    %vm298 = vcmp.eq.f32.partialorder %v134, inf
    %v299 = vsel %vm298, %v134, %v297
    %vm300 = vcmp.eq.f32.partialorder %v134, 0.0
    %v301 = vand.u32 %v134, 2147483648
    %v302 = vsel %vm300, %v301, %v299
    %v303 = vrsqrt.pop %v137
    %v304 = vmul.f32 %v137, %v303
    %vm305 = vcmp.eq.f32.partialorder %v137, inf
    %v306 = vsel %vm305, %v137, %v304
    %vm307 = vcmp.eq.f32.partialorder %v137, 0.0
    %v308 = vand.u32 %v137, 2147483648
    %v309 = vsel %vm307, %v308, %v306
    %v310 = vrsqrt.pop %v140
    %v311 = vmul.f32 %v140, %v310
    %vm312 = vcmp.eq.f32.partialorder %v140, inf
    %v313 = vsel %vm312, %v140, %v311
    %vm314 = vcmp.eq.f32.partialorder %v140, 0.0
    %v315 = vand.u32 %v140, 2147483648
    %v316 = vsel %vm314, %v315, %v313
    %v317 = vrsqrt.pop %v143
    %v318 = vmul.f32 %v143, %v317
    %vm319 = vcmp.eq.f32.partialorder %v143, inf
    %v320 = vsel %vm319, %v143, %v318
    %vm321 = vcmp.eq.f32.partialorder %v143, 0.0
    %v322 = vand.u32 %v143, 2147483648
    %v323 = vsel %vm321, %v322, %v320
    %v324 = vrsqrt.pop %v146
    %v325 = vmul.f32 %v146, %v324
    %vm326 = vcmp.eq.f32.partialorder %v146, inf
    %v327 = vsel %vm326, %v146, %v325
    %vm328 = vcmp.eq.f32.partialorder %v146, 0.0
    %v329 = vand.u32 %v146, 2147483648
    %v330 = vsel %vm328, %v329, %v327
    %v331 = vrsqrt.pop %v149
    %v332 = vmul.f32 %v149, %v331
    %vm333 = vcmp.eq.f32.partialorder %v149, inf
    %v334 = vsel %vm333, %v149, %v332
    %vm335 = vcmp.eq.f32.partialorder %v149, 0.0
    %v336 = vand.u32 %v149, 2147483648
    %v337 = vsel %vm335, %v336, %v334
    %v338 = vrsqrt.pop %v152
    %v339 = vmul.f32 %v152, %v338
    %vm340 = vcmp.eq.f32.partialorder %v152, inf
    %v341 = vsel %vm340, %v152, %v339
    %vm342 = vcmp.eq.f32.partialorder %v152, 0.0
    %v343 = vand.u32 %v152, 2147483648
    %v344 = vsel %vm342, %v343, %v341
    %v345 = vrsqrt.pop %v155
    %v346 = vmul.f32 %v155, %v345
    %vm347 = vcmp.eq.f32.partialorder %v155, inf
    %v348 = vsel %vm347, %v155, %v346
    %vm349 = vcmp.eq.f32.partialorder %v155, 0.0
    %v350 = vand.u32 %v155, 2147483648
    %v351 = vsel %vm349, %v350, %v348
    %v352 = vrsqrt.pop %v158
    %v353 = vmul.f32 %v158, %v352
    %vm354 = vcmp.eq.f32.partialorder %v158, inf
    %v355 = vsel %vm354, %v158, %v353
    %vm356 = vcmp.eq.f32.partialorder %v158, 0.0
    %v357 = vand.u32 %v158, 2147483648
    %v358 = vsel %vm356, %v357, %v355
    %v359 = vrsqrt.pop %v161
    %v360 = vmul.f32 %v161, %v359
    %vm361 = vcmp.eq.f32.partialorder %v161, inf
    %v362 = vsel %vm361, %v161, %v360
    %vm363 = vcmp.eq.f32.partialorder %v161, 0.0
    %v364 = vand.u32 %v161, 2147483648
    %v365 = vsel %vm363, %v364, %v362
    %v366 = vrsqrt.pop %v164
    %v367 = vmul.f32 %v164, %v366
    %vm368 = vcmp.eq.f32.partialorder %v164, inf
    %v369 = vsel %vm368, %v164, %v367
    %vm370 = vcmp.eq.f32.partialorder %v164, 0.0
    %v371 = vand.u32 %v164, 2147483648
    %v372 = vsel %vm370, %v371, %v369
    %v373 = vrsqrt.pop %v167
    %v374 = vmul.f32 %v167, %v373
    %vm375 = vcmp.eq.f32.partialorder %v167, inf
    %v376 = vsel %vm375, %v167, %v374
    %vm377 = vcmp.eq.f32.partialorder %v167, 0.0
    %v378 = vand.u32 %v167, 2147483648
    %v379 = vsel %vm377, %v378, %v376
    %v380 = vrsqrt.pop %v170
    %v381 = vmul.f32 %v170, %v380
    %vm382 = vcmp.eq.f32.partialorder %v170, inf
    %v383 = vsel %vm382, %v170, %v381
    %vm384 = vcmp.eq.f32.partialorder %v170, 0.0
    %v385 = vand.u32 %v170, 2147483648
    %v386 = vsel %vm384, %v385, %v383
    %v387 = vrsqrt.pop %v173
    %v388 = vmul.f32 %v173, %v387
    %vm389 = vcmp.eq.f32.partialorder %v173, inf
    %v390 = vsel %vm389, %v173, %v388
    %vm391 = vcmp.eq.f32.partialorder %v173, 0.0
    %v392 = vand.u32 %v173, 2147483648
    %v393 = vsel %vm391, %v392, %v390
    %v394 = vrsqrt.pop %v176
    %v395 = vmul.f32 %v176, %v394
    %vm396 = vcmp.eq.f32.partialorder %v176, inf
    %v397 = vsel %vm396, %v176, %v395
    %vm398 = vcmp.eq.f32.partialorder %v176, 0.0
    %v399 = vand.u32 %v176, 2147483648
    %v400 = vsel %vm398, %v399, %v397
    %v401 = vld [vmem:[%s1] ss:$8 sm:$0x3]
    %v403 = vlaneseq
    %v404 = vshrl.u32 %v403, 7
    %v405 = vsub.s32 0, %v404
    %v406 = vrot.slane %v401, %v405
    %v408 = vmul.f32 %v183, %v406
    %v409 = vmul.f32 %v190, %v406
    %v410 = vmul.f32 %v197, %v406
    %v411 = vmul.f32 %v204, %v406
    %v412 = vmul.f32 %v211, %v406
    %v413 = vmul.f32 %v218, %v406
    %v414 = vmul.f32 %v225, %v406
    %v415 = vmul.f32 %v232, %v406
    %v416 = vmul.f32 %v239, %v406
    %v417 = vmul.f32 %v246, %v406
    %v418 = vmul.f32 %v253, %v406
    %v419 = vmul.f32 %v260, %v406
    %v420 = vmul.f32 %v267, %v406
    %v421 = vmul.f32 %v274, %v406
    %v422 = vmul.f32 %v281, %v406
    %v423 = vmul.f32 %v288, %v406
    %v424 = vmul.f32 %v295, %v406
    %v425 = vmul.f32 %v302, %v406
    %v426 = vmul.f32 %v309, %v406
    %v427 = vmul.f32 %v316, %v406
    %v428 = vmul.f32 %v323, %v406
    %v429 = vmul.f32 %v330, %v406
    %v430 = vmul.f32 %v337, %v406
    %v431 = vmul.f32 %v344, %v406
    %v432 = vmul.f32 %v351, %v406
    %v433 = vmul.f32 %v358, %v406
    %v434 = vmul.f32 %v365, %v406
    %v435 = vmul.f32 %v372, %v406
    %v436 = vmul.f32 %v379, %v406
    %v437 = vmul.f32 %v386, %v406
    %v438 = vmul.f32 %v393, %v406
    %v439 = vmul.f32 %v400, %v406
    %s440 = scalar_lea.vmem %s1, 16
    %v441 = vld [vmem:[%s440] ss:$8 sm:$0x3]
    %v443 = vlaneseq
    %v444 = vshrl.u32 %v443, 7
    %v445 = vsub.s32 0, %v444
    %v446 = vrot.slane %v441, %v445
    %v448 = vadd.f32 %v408, %v446
    %v449 = vadd.f32 %v409, %v446
    %v450 = vadd.f32 %v410, %v446
    %v451 = vadd.f32 %v411, %v446
    %v452 = vadd.f32 %v412, %v446
    %v453 = vadd.f32 %v413, %v446
    %v454 = vadd.f32 %v414, %v446
    %v455 = vadd.f32 %v415, %v446
    %v456 = vadd.f32 %v416, %v446
    %v457 = vadd.f32 %v417, %v446
    %v458 = vadd.f32 %v418, %v446
    %v459 = vadd.f32 %v419, %v446
    %v460 = vadd.f32 %v420, %v446
    %v461 = vadd.f32 %v421, %v446
    %v462 = vadd.f32 %v422, %v446
    %v463 = vadd.f32 %v423, %v446
    %v464 = vadd.f32 %v424, %v446
    %v465 = vadd.f32 %v425, %v446
    %v466 = vadd.f32 %v426, %v446
    %v467 = vadd.f32 %v427, %v446
    %v468 = vadd.f32 %v428, %v446
    %v469 = vadd.f32 %v429, %v446
    %v470 = vadd.f32 %v430, %v446
    %v471 = vadd.f32 %v431, %v446
    %v472 = vadd.f32 %v432, %v446
    %v473 = vadd.f32 %v433, %v446
    %v474 = vadd.f32 %v434, %v446
    %v475 = vadd.f32 %v435, %v446
    %v476 = vadd.f32 %v436, %v446
    %v477 = vadd.f32 %v437, %v446
    %v478 = vadd.f32 %v438, %v446
    %v479 = vadd.f32 %v439, %v446
    %v480 = vand.u32 2147483647, %v448
    %vm481 = vcmp.le.f32.partialorder %v480, 0.7853982
    %vm482 = vcmp.lt.s32.totalorder %v448, 0
    %v483 = vand.u32 %v448, 2139095040
    %v484 = vshrl.u32 %v483, 23
    %v485 = vsub.s32 %v484, 127
    %v486 = vand.u32 2147483647, %v448
    %v487 = vand.u32 %v486, 8388607
    %v488 = vor.u32 %v487, 8388608
    %v489 = vsub.s32 0, %v488
    %v490 = vadd.s32 %v485, 1
    %vm491 = vcmp.gt.s32.totalorder %v490, 0
    %v492 = vsel %vm491, %v490, 0
    %v493 = vshrl.u32 %v492, 5
    %v494 = vand.u32 %v492, 31
    %v495 = vsub.s32 32, %v494
    %v496 = vshrl.u32 683565275, %v495
    %v497 = vshll.u32 683565275, %v494
    %v498 = vshrl.u32 2475754826, %v495
    %v499 = vor.u32 %v497, %v498
    %v500 = vshll.u32 2475754826, %v494
    %v501 = vshrl.u32 2131351028, %v495
    %v502 = vor.u32 %v500, %v501
    %v503 = vshll.u32 2131351028, %v494
    %v504 = vshrl.u32 2102212464, %v495
    %v505 = vor.u32 %v503, %v504
    %v506 = vshll.u32 2102212464, %v494
    %v507 = vshrl.u32 920167782, %v495
    %v508 = vor.u32 %v506, %v507
    %v509 = vshll.u32 920167782, %v494
    %v510 = vshrl.u32 1326507024, %v495
    %v511 = vor.u32 %v509, %v510
    %vm512 = vcmp.lt.s32.totalorder %v493, 1
    %vm513 = vcmp.lt.s32.totalorder %v493, 2
    %vm514 = vcmp.lt.s32.totalorder %v493, 3
    %vm515 = vcmp.lt.s32.totalorder %v493, 4
    %v516 = vsel %vm512, %v496, %v499
    %v517 = vsel %vm515, %v505, 2102212464
    %v518 = vsel %vm514, %v502, %v517
    %v519 = vsel %vm513, %v516, %v518
    %v520 = vsel %vm512, %v499, %v502
    %v521 = vsel %vm515, %v508, 920167782
    %v522 = vsel %vm514, %v505, %v521
    %v523 = vsel %vm513, %v520, %v522
    %v524 = vsel %vm512, %v502, %v505
    %v525 = vsel %vm515, %v511, 1326507024
    %v526 = vsel %vm514, %v508, %v525
    %v527 = vsel %vm513, %v524, %v526
    %v528 = vshll.u32 %v488, 8
    %v529 = vmul.u32.u64.compose %v528, %v527
    %v530 = vextract.low.u32 %v529
    %v531 = vextract.high.u32 %v529
    %v532 = vmul.u32.u64.compose %v528, %v523
    %v533 = vextract.low.u32 %v532
    %v534 = vextract.high.u32 %v532
    %v535 = vmul.u32 %v528, %v519
    %v536 = vadd.s32 %v531, %v533
    %vm537 = vc.u32 %v531, %v533
    %v538 = vadd.s32 %v534, 1
    %v539 = vsel %vm537, %v538, %v534
    %v540 = vadd.s32 %v535, %v539
    %v541 = vadd.s32 %v540, 536870912
    %v542 = vshrl.u32 %v541, 30
    %v543 = vshll.u32 %v542, 30
    %v544 = vsub.s32 %v540, %v543
    %vm545 = vcmp.lt.s32.totalorder %v544, 0
    %v546 = vsub.s32 0, %v544
    %v547 = vsel %vm545, %v546, %v544
    %v548 = vclz %v547
    %v549 = vsub.s32 %v548, 2
    %vm550 = vcmp.gt.s32.totalorder 0, %v549
    %v551 = vsel %vm550, 0, %v549
    %v552 = vsub.s32 32, %v551
    %v553 = vshll.u32 %v544, %v551
    %v554 = vshrl.u32 %v536, %v552
    %v555 = vor.u32 %v553, %v554
    %v556 = vsub.s32 4294967266, %v551
    %v557 = vadd.s32 %v556, 127
    %v558 = vshll.u32 %v557, 23
    %v559 = vor.u32 4788187, %v558
    %v560 = vand.u32 2147483647, %v559
    %v562 = vcvt.s32.f32 %v555
    %v563 = vmul.f32 %v562, %v560
    %v564 = vxor.u32 %v563, 2147483648
    %v565 = vsel %vm482, %v564, %v563
    %v566 = vsub.s32 4, %v542
    %v567 = vsel %vm482, %v566, %v542
    %v568 = vsel %vm481, %v448, %v565
    %v569 = vsel %vm481, 0, %v567
    %v570 = vcosq.f32.pop %v568
    %v571 = vsinq.f32.pop %v568
    %vm572 = vweird.f32 %v448
    %v573 = vadd.s32 %v569, 3
    %v574 = vand.u32 %v573, 3
    %vm575 = vcmp.lt.s32.totalorder %v574, 2
    %vm576 = vcmp.eq.s32.totalorder %v574, 0
    %v577 = vxor.u32 %v571, 2147483648
    %v578 = vsel %vm576, %v570, %v577
    %vm579 = vcmp.eq.s32.totalorder %v574, 2
    %v580 = vxor.u32 %v570, 2147483648
    %v581 = vsel %vm579, %v580, %v571
    %v582 = vsel %vm575, %v578, %v581
    %v583 = vsel %vm572, nan, %v582
    %v584 = vand.u32 2147483647, %v449
    %vm585 = vcmp.le.f32.partialorder %v584, 0.7853982
    %vm586 = vcmp.lt.s32.totalorder %v449, 0
    %v587 = vand.u32 %v449, 2139095040
    %v588 = vshrl.u32 %v587, 23
    %v589 = vsub.s32 %v588, 127
    %v590 = vand.u32 2147483647, %v449
    %v591 = vand.u32 %v590, 8388607
    %v592 = vor.u32 %v591, 8388608
    %v593 = vsub.s32 0, %v592
    %v594 = vadd.s32 %v589, 1
    %vm595 = vcmp.gt.s32.totalorder %v594, 0
    %v596 = vsel %vm595, %v594, 0
    %v597 = vshrl.u32 %v596, 5
    %v598 = vand.u32 %v596, 31
    %v599 = vsub.s32 32, %v598
    %v600 = vshrl.u32 683565275, %v599
    %v601 = vshll.u32 683565275, %v598
    %v602 = vshrl.u32 2475754826, %v599
    %v603 = vor.u32 %v601, %v602
    %v604 = vshll.u32 2475754826, %v598
    %v605 = vshrl.u32 2131351028, %v599
    %v606 = vor.u32 %v604, %v605
    %v607 = vshll.u32 2131351028, %v598
    %v608 = vshrl.u32 2102212464, %v599
    %v609 = vor.u32 %v607, %v608
    %v610 = vshll.u32 2102212464, %v598
    %v611 = vshrl.u32 920167782, %v599
    %v612 = vor.u32 %v610, %v611
    %v613 = vshll.u32 920167782, %v598
    %v614 = vshrl.u32 1326507024, %v599
    %v615 = vor.u32 %v613, %v614
    %vm616 = vcmp.lt.s32.totalorder %v597, 1
    %vm617 = vcmp.lt.s32.totalorder %v597, 2
    %vm618 = vcmp.lt.s32.totalorder %v597, 3
    %vm619 = vcmp.lt.s32.totalorder %v597, 4
    %v620 = vsel %vm616, %v600, %v603
    %v621 = vsel %vm619, %v609, 2102212464
    %v622 = vsel %vm618, %v606, %v621
    %v623 = vsel %vm617, %v620, %v622
    %v624 = vsel %vm616, %v603, %v606
    %v625 = vsel %vm619, %v612, 920167782
    %v626 = vsel %vm618, %v609, %v625
    %v627 = vsel %vm617, %v624, %v626
    %v628 = vsel %vm616, %v606, %v609
    %v629 = vsel %vm619, %v615, 1326507024
    %v630 = vsel %vm618, %v612, %v629
    %v631 = vsel %vm617, %v628, %v630
    %v632 = vshll.u32 %v592, 8
    %v633 = vmul.u32.u64.compose %v632, %v631
    %v634 = vextract.low.u32 %v633
    %v635 = vextract.high.u32 %v633
    %v636 = vmul.u32.u64.compose %v632, %v627
    %v637 = vextract.low.u32 %v636
    %v638 = vextract.high.u32 %v636
    %v639 = vmul.u32 %v632, %v623
    %v640 = vadd.s32 %v635, %v637
    %vm641 = vc.u32 %v635, %v637
    %v642 = vadd.s32 %v638, 1
    %v643 = vsel %vm641, %v642, %v638
    %v644 = vadd.s32 %v639, %v643
    %v645 = vadd.s32 %v644, 536870912
    %v646 = vshrl.u32 %v645, 30
    %v647 = vshll.u32 %v646, 30
    %v648 = vsub.s32 %v644, %v647
    %vm649 = vcmp.lt.s32.totalorder %v648, 0
    %v650 = vsub.s32 0, %v648
    %v651 = vsel %vm649, %v650, %v648
    %v652 = vclz %v651
    %v653 = vsub.s32 %v652, 2
    %vm654 = vcmp.gt.s32.totalorder 0, %v653
    %v655 = vsel %vm654, 0, %v653
    %v656 = vsub.s32 32, %v655
    %v657 = vshll.u32 %v648, %v655
    %v658 = vshrl.u32 %v640, %v656
    %v659 = vor.u32 %v657, %v658
    %v660 = vsub.s32 4294967266, %v655
    %v661 = vadd.s32 %v660, 127
    %v662 = vshll.u32 %v661, 23
    %v663 = vor.u32 4788187, %v662
    %v664 = vand.u32 2147483647, %v663
    %v666 = vcvt.s32.f32 %v659
    %v667 = vmul.f32 %v666, %v664
    %v668 = vxor.u32 %v667, 2147483648
    %v669 = vsel %vm586, %v668, %v667
    %v670 = vsub.s32 4, %v646
    %v671 = vsel %vm586, %v670, %v646
    %v672 = vsel %vm585, %v449, %v669
    %v673 = vsel %vm585, 0, %v671
    %v674 = vcosq.f32.pop %v672
    %v675 = vsinq.f32.pop %v672
    %vm676 = vweird.f32 %v449
    %v677 = vadd.s32 %v673, 3
    %v678 = vand.u32 %v677, 3
    %vm679 = vcmp.lt.s32.totalorder %v678, 2
    %vm680 = vcmp.eq.s32.totalorder %v678, 0
    %v681 = vxor.u32 %v675, 2147483648
    %v682 = vsel %vm680, %v674, %v681
    %vm683 = vcmp.eq.s32.totalorder %v678, 2
    %v684 = vxor.u32 %v674, 2147483648
    %v685 = vsel %vm683, %v684, %v675
    %v686 = vsel %vm679, %v682, %v685
    %v687 = vsel %vm676, nan, %v686
    %v688 = vand.u32 2147483647, %v450
    %vm689 = vcmp.le.f32.partialorder %v688, 0.7853982
    %vm690 = vcmp.lt.s32.totalorder %v450, 0
    %v691 = vand.u32 %v450, 2139095040
    %v692 = vshrl.u32 %v691, 23
    %v693 = vsub.s32 %v692, 127
    %v694 = vand.u32 2147483647, %v450
    %v695 = vand.u32 %v694, 8388607
    %v696 = vor.u32 %v695, 8388608
    %v697 = vsub.s32 0, %v696
    %v698 = vadd.s32 %v693, 1
    %vm699 = vcmp.gt.s32.totalorder %v698, 0
    %v700 = vsel %vm699, %v698, 0
    %v701 = vshrl.u32 %v700, 5
    %v702 = vand.u32 %v700, 31
    %v703 = vsub.s32 32, %v702
    %v704 = vshrl.u32 683565275, %v703
    %v705 = vshll.u32 683565275, %v702
    %v706 = vshrl.u32 2475754826, %v703
    %v707 = vor.u32 %v705, %v706
    %v708 = vshll.u32 2475754826, %v702
    %v709 = vshrl.u32 2131351028, %v703
    %v710 = vor.u32 %v708, %v709
    %v711 = vshll.u32 2131351028, %v702
    %v712 = vshrl.u32 2102212464, %v703
    %v713 = vor.u32 %v711, %v712
    %v714 = vshll.u32 2102212464, %v702
    %v715 = vshrl.u32 920167782, %v703
    %v716 = vor.u32 %v714, %v715
    %v717 = vshll.u32 920167782, %v702
    %v718 = vshrl.u32 1326507024, %v703
    %v719 = vor.u32 %v717, %v718
    %vm720 = vcmp.lt.s32.totalorder %v701, 1
    %vm721 = vcmp.lt.s32.totalorder %v701, 2
    %vm722 = vcmp.lt.s32.totalorder %v701, 3
    %vm723 = vcmp.lt.s32.totalorder %v701, 4
    %v724 = vsel %vm720, %v704, %v707
    %v725 = vsel %vm723, %v713, 2102212464
    %v726 = vsel %vm722, %v710, %v725
    %v727 = vsel %vm721, %v724, %v726
    %v728 = vsel %vm720, %v707, %v710
    %v729 = vsel %vm723, %v716, 920167782
    %v730 = vsel %vm722, %v713, %v729
    %v731 = vsel %vm721, %v728, %v730
    %v732 = vsel %vm720, %v710, %v713
    %v733 = vsel %vm723, %v719, 1326507024
    %v734 = vsel %vm722, %v716, %v733
    %v735 = vsel %vm721, %v732, %v734
    %v736 = vshll.u32 %v696, 8
    %v737 = vmul.u32.u64.compose %v736, %v735
    %v738 = vextract.low.u32 %v737
    %v739 = vextract.high.u32 %v737
    %v740 = vmul.u32.u64.compose %v736, %v731
    %v741 = vextract.low.u32 %v740
    %v742 = vextract.high.u32 %v740
    %v743 = vmul.u32 %v736, %v727
    %v744 = vadd.s32 %v739, %v741
    %vm745 = vc.u32 %v739, %v741
    %v746 = vadd.s32 %v742, 1
    %v747 = vsel %vm745, %v746, %v742
    %v748 = vadd.s32 %v743, %v747
    %v749 = vadd.s32 %v748, 536870912
    %v750 = vshrl.u32 %v749, 30
    %v751 = vshll.u32 %v750, 30
    %v752 = vsub.s32 %v748, %v751
    %vm753 = vcmp.lt.s32.totalorder %v752, 0
    %v754 = vsub.s32 0, %v752
    %v755 = vsel %vm753, %v754, %v752
    %v756 = vclz %v755
    %v757 = vsub.s32 %v756, 2
    %vm758 = vcmp.gt.s32.totalorder 0, %v757
    %v759 = vsel %vm758, 0, %v757
    %v760 = vsub.s32 32, %v759
    %v761 = vshll.u32 %v752, %v759
    %v762 = vshrl.u32 %v744, %v760
    %v763 = vor.u32 %v761, %v762
    %v764 = vsub.s32 4294967266, %v759
    %v765 = vadd.s32 %v764, 127
    %v766 = vshll.u32 %v765, 23
    %v767 = vor.u32 4788187, %v766
    %v768 = vand.u32 2147483647, %v767
    %v770 = vcvt.s32.f32 %v763
    %v771 = vmul.f32 %v770, %v768
    %v772 = vxor.u32 %v771, 2147483648
    %v773 = vsel %vm690, %v772, %v771
    %v774 = vsub.s32 4, %v750
    %v775 = vsel %vm690, %v774, %v750
    %v776 = vsel %vm689, %v450, %v773
    %v777 = vsel %vm689, 0, %v775
    %v778 = vcosq.f32.pop %v776
    %v779 = vsinq.f32.pop %v776
    %vm780 = vweird.f32 %v450
    %v781 = vadd.s32 %v777, 3
    %v782 = vand.u32 %v781, 3
    %vm783 = vcmp.lt.s32.totalorder %v782, 2
    %vm784 = vcmp.eq.s32.totalorder %v782, 0
    %v785 = vxor.u32 %v779, 2147483648
    %v786 = vsel %vm784, %v778, %v785
    %vm787 = vcmp.eq.s32.totalorder %v782, 2
    %v788 = vxor.u32 %v778, 2147483648
    %v789 = vsel %vm787, %v788, %v779
    %v790 = vsel %vm783, %v786, %v789
    %v791 = vsel %vm780, nan, %v790
    %v792 = vand.u32 2147483647, %v451
    %vm793 = vcmp.le.f32.partialorder %v792, 0.7853982
    %vm794 = vcmp.lt.s32.totalorder %v451, 0
    %v795 = vand.u32 %v451, 2139095040
    %v796 = vshrl.u32 %v795, 23
    %v797 = vsub.s32 %v796, 127
    %v798 = vand.u32 2147483647, %v451
    %v799 = vand.u32 %v798, 8388607
    %v800 = vor.u32 %v799, 8388608
    %v801 = vsub.s32 0, %v800
    %v802 = vadd.s32 %v797, 1
    %vm803 = vcmp.gt.s32.totalorder %v802, 0
    %v804 = vsel %vm803, %v802, 0
    %v805 = vshrl.u32 %v804, 5
    %v806 = vand.u32 %v804, 31
    %v807 = vsub.s32 32, %v806
    %v808 = vshrl.u32 683565275, %v807
    %v809 = vshll.u32 683565275, %v806
    %v810 = vshrl.u32 2475754826, %v807
    %v811 = vor.u32 %v809, %v810
    %v812 = vshll.u32 2475754826, %v806
    %v813 = vshrl.u32 2131351028, %v807
    %v814 = vor.u32 %v812, %v813
    %v815 = vshll.u32 2131351028, %v806
    %v816 = vshrl.u32 2102212464, %v807
    %v817 = vor.u32 %v815, %v816
    %v818 = vshll.u32 2102212464, %v806
    %v819 = vshrl.u32 920167782, %v807
    %v820 = vor.u32 %v818, %v819
    %v821 = vshll.u32 920167782, %v806
    %v822 = vshrl.u32 1326507024, %v807
    %v823 = vor.u32 %v821, %v822
    %vm824 = vcmp.lt.s32.totalorder %v805, 1
    %vm825 = vcmp.lt.s32.totalorder %v805, 2
    %vm826 = vcmp.lt.s32.totalorder %v805, 3
    %vm827 = vcmp.lt.s32.totalorder %v805, 4
    %v828 = vsel %vm824, %v808, %v811
    %v829 = vsel %vm827, %v817, 2102212464
    %v830 = vsel %vm826, %v814, %v829
    %v831 = vsel %vm825, %v828, %v830
    %v832 = vsel %vm824, %v811, %v814
    %v833 = vsel %vm827, %v820, 920167782
    %v834 = vsel %vm826, %v817, %v833
    %v835 = vsel %vm825, %v832, %v834
    %v836 = vsel %vm824, %v814, %v817
    %v837 = vsel %vm827, %v823, 1326507024
    %v838 = vsel %vm826, %v820, %v837
    %v839 = vsel %vm825, %v836, %v838
    %v840 = vshll.u32 %v800, 8
    %v841 = vmul.u32.u64.compose %v840, %v839
    %v842 = vextract.low.u32 %v841
    %v843 = vextract.high.u32 %v841
    %v844 = vmul.u32.u64.compose %v840, %v835
    %v845 = vextract.low.u32 %v844
    %v846 = vextract.high.u32 %v844
    %v847 = vmul.u32 %v840, %v831
    %v848 = vadd.s32 %v843, %v845
    %vm849 = vc.u32 %v843, %v845
    %v850 = vadd.s32 %v846, 1
    %v851 = vsel %vm849, %v850, %v846
    %v852 = vadd.s32 %v847, %v851
    %v853 = vadd.s32 %v852, 536870912
    %v854 = vshrl.u32 %v853, 30
    %v855 = vshll.u32 %v854, 30
    %v856 = vsub.s32 %v852, %v855
    %vm857 = vcmp.lt.s32.totalorder %v856, 0
    %v858 = vsub.s32 0, %v856
    %v859 = vsel %vm857, %v858, %v856
    %v860 = vclz %v859
    %v861 = vsub.s32 %v860, 2
    %vm862 = vcmp.gt.s32.totalorder 0, %v861
    %v863 = vsel %vm862, 0, %v861
    %v864 = vsub.s32 32, %v863
    %v865 = vshll.u32 %v856, %v863
    %v866 = vshrl.u32 %v848, %v864
    %v867 = vor.u32 %v865, %v866
    %v868 = vsub.s32 4294967266, %v863
    %v869 = vadd.s32 %v868, 127
    %v870 = vshll.u32 %v869, 23
    %v871 = vor.u32 4788187, %v870
    %v872 = vand.u32 2147483647, %v871
    %v874 = vcvt.s32.f32 %v867
    %v875 = vmul.f32 %v874, %v872
    %v876 = vxor.u32 %v875, 2147483648
    %v877 = vsel %vm794, %v876, %v875
    %v878 = vsub.s32 4, %v854
    %v879 = vsel %vm794, %v878, %v854
    %v880 = vsel %vm793, %v451, %v877
    %v881 = vsel %vm793, 0, %v879
    %v882 = vcosq.f32.pop %v880
    %v883 = vsinq.f32.pop %v880
    %vm884 = vweird.f32 %v451
    %v885 = vadd.s32 %v881, 3
    %v886 = vand.u32 %v885, 3
    %vm887 = vcmp.lt.s32.totalorder %v886, 2
    %vm888 = vcmp.eq.s32.totalorder %v886, 0
    %v889 = vxor.u32 %v883, 2147483648
    %v890 = vsel %vm888, %v882, %v889
    %vm891 = vcmp.eq.s32.totalorder %v886, 2
    %v892 = vxor.u32 %v882, 2147483648
    %v893 = vsel %vm891, %v892, %v883
    %v894 = vsel %vm887, %v890, %v893
    %v895 = vsel %vm884, nan, %v894
    %v896 = vand.u32 2147483647, %v452
    %vm897 = vcmp.le.f32.partialorder %v896, 0.7853982
    %vm898 = vcmp.lt.s32.totalorder %v452, 0
    %v899 = vand.u32 %v452, 2139095040
    %v900 = vshrl.u32 %v899, 23
    %v901 = vsub.s32 %v900, 127
    %v902 = vand.u32 2147483647, %v452
    %v903 = vand.u32 %v902, 8388607
    %v904 = vor.u32 %v903, 8388608
    %v905 = vsub.s32 0, %v904
    %v906 = vadd.s32 %v901, 1
    %vm907 = vcmp.gt.s32.totalorder %v906, 0
    %v908 = vsel %vm907, %v906, 0
    %v909 = vshrl.u32 %v908, 5
    %v910 = vand.u32 %v908, 31
    %v911 = vsub.s32 32, %v910
    %v912 = vshrl.u32 683565275, %v911
    %v913 = vshll.u32 683565275, %v910
    %v914 = vshrl.u32 2475754826, %v911
    %v915 = vor.u32 %v913, %v914
    %v916 = vshll.u32 2475754826, %v910
    %v917 = vshrl.u32 2131351028, %v911
    %v918 = vor.u32 %v916, %v917
    %v919 = vshll.u32 2131351028, %v910
    %v920 = vshrl.u32 2102212464, %v911
    %v921 = vor.u32 %v919, %v920
    %v922 = vshll.u32 2102212464, %v910
    %v923 = vshrl.u32 920167782, %v911
    %v924 = vor.u32 %v922, %v923
    %v925 = vshll.u32 920167782, %v910
    %v926 = vshrl.u32 1326507024, %v911
    %v927 = vor.u32 %v925, %v926
    %vm928 = vcmp.lt.s32.totalorder %v909, 1
    %vm929 = vcmp.lt.s32.totalorder %v909, 2
    %vm930 = vcmp.lt.s32.totalorder %v909, 3
    %vm931 = vcmp.lt.s32.totalorder %v909, 4
    %v932 = vsel %vm928, %v912, %v915
    %v933 = vsel %vm931, %v921, 2102212464
    %v934 = vsel %vm930, %v918, %v933
    %v935 = vsel %vm929, %v932, %v934
    %v936 = vsel %vm928, %v915, %v918
    %v937 = vsel %vm931, %v924, 920167782
    %v938 = vsel %vm930, %v921, %v937
    %v939 = vsel %vm929, %v936, %v938
    %v940 = vsel %vm928, %v918, %v921
    %v941 = vsel %vm931, %v927, 1326507024
    %v942 = vsel %vm930, %v924, %v941
    %v943 = vsel %vm929, %v940, %v942
    %v944 = vshll.u32 %v904, 8
    %v945 = vmul.u32.u64.compose %v944, %v943
    %v946 = vextract.low.u32 %v945
    %v947 = vextract.high.u32 %v945
    %v948 = vmul.u32.u64.compose %v944, %v939
    %v949 = vextract.low.u32 %v948
    %v950 = vextract.high.u32 %v948
    %v951 = vmul.u32 %v944, %v935
    %v952 = vadd.s32 %v947, %v949
    %vm953 = vc.u32 %v947, %v949
    %v954 = vadd.s32 %v950, 1
    %v955 = vsel %vm953, %v954, %v950
    %v956 = vadd.s32 %v951, %v955
    %v957 = vadd.s32 %v956, 536870912
    %v958 = vshrl.u32 %v957, 30
    %v959 = vshll.u32 %v958, 30
    %v960 = vsub.s32 %v956, %v959
    %vm961 = vcmp.lt.s32.totalorder %v960, 0
    %v962 = vsub.s32 0, %v960
    %v963 = vsel %vm961, %v962, %v960
    %v964 = vclz %v963
    %v965 = vsub.s32 %v964, 2
    %vm966 = vcmp.gt.s32.totalorder 0, %v965
    %v967 = vsel %vm966, 0, %v965
    %v968 = vsub.s32 32, %v967
    %v969 = vshll.u32 %v960, %v967
    %v970 = vshrl.u32 %v952, %v968
    %v971 = vor.u32 %v969, %v970
    %v972 = vsub.s32 4294967266, %v967
    %v973 = vadd.s32 %v972, 127
    %v974 = vshll.u32 %v973, 23
    %v975 = vor.u32 4788187, %v974
    %v976 = vand.u32 2147483647, %v975
    %v978 = vcvt.s32.f32 %v971
    %v979 = vmul.f32 %v978, %v976
    %v980 = vxor.u32 %v979, 2147483648
    %v981 = vsel %vm898, %v980, %v979
    %v982 = vsub.s32 4, %v958
    %v983 = vsel %vm898, %v982, %v958
    %v984 = vsel %vm897, %v452, %v981
    %v985 = vsel %vm897, 0, %v983
    %v986 = vcosq.f32.pop %v984
    %v987 = vsinq.f32.pop %v984
    %vm988 = vweird.f32 %v452
    %v989 = vadd.s32 %v985, 3
    %v990 = vand.u32 %v989, 3
    %vm991 = vcmp.lt.s32.totalorder %v990, 2
    %vm992 = vcmp.eq.s32.totalorder %v990, 0
    %v993 = vxor.u32 %v987, 2147483648
    %v994 = vsel %vm992, %v986, %v993
    %vm995 = vcmp.eq.s32.totalorder %v990, 2
    %v996 = vxor.u32 %v986, 2147483648
    %v997 = vsel %vm995, %v996, %v987
    %v998 = vsel %vm991, %v994, %v997
    %v999 = vsel %vm988, nan, %v998
    %v1000 = vand.u32 2147483647, %v453
    %vm1001 = vcmp.le.f32.partialorder %v1000, 0.7853982
    %vm1002 = vcmp.lt.s32.totalorder %v453, 0
    %v1003 = vand.u32 %v453, 2139095040
    %v1004 = vshrl.u32 %v1003, 23
    %v1005 = vsub.s32 %v1004, 127
    %v1006 = vand.u32 2147483647, %v453
    %v1007 = vand.u32 %v1006, 8388607
    %v1008 = vor.u32 %v1007, 8388608
    %v1009 = vsub.s32 0, %v1008
    %v1010 = vadd.s32 %v1005, 1
    %vm1011 = vcmp.gt.s32.totalorder %v1010, 0
    %v1012 = vsel %vm1011, %v1010, 0
    %v1013 = vshrl.u32 %v1012, 5
    %v1014 = vand.u32 %v1012, 31
    %v1015 = vsub.s32 32, %v1014
    %v1016 = vshrl.u32 683565275, %v1015
    %v1017 = vshll.u32 683565275, %v1014
    %v1018 = vshrl.u32 2475754826, %v1015
    %v1019 = vor.u32 %v1017, %v1018
    %v1020 = vshll.u32 2475754826, %v1014
    %v1021 = vshrl.u32 2131351028, %v1015
    %v1022 = vor.u32 %v1020, %v1021
    %v1023 = vshll.u32 2131351028, %v1014
    %v1024 = vshrl.u32 2102212464, %v1015
    %v1025 = vor.u32 %v1023, %v1024
    %v1026 = vshll.u32 2102212464, %v1014
    %v1027 = vshrl.u32 920167782, %v1015
    %v1028 = vor.u32 %v1026, %v1027
    %v1029 = vshll.u32 920167782, %v1014
    %v1030 = vshrl.u32 1326507024, %v1015
    %v1031 = vor.u32 %v1029, %v1030
    %vm1032 = vcmp.lt.s32.totalorder %v1013, 1
    %vm1033 = vcmp.lt.s32.totalorder %v1013, 2
    %vm1034 = vcmp.lt.s32.totalorder %v1013, 3
    %vm1035 = vcmp.lt.s32.totalorder %v1013, 4
    %v1036 = vsel %vm1032, %v1016, %v1019
    %v1037 = vsel %vm1035, %v1025, 2102212464
    %v1038 = vsel %vm1034, %v1022, %v1037
    %v1039 = vsel %vm1033, %v1036, %v1038
    %v1040 = vsel %vm1032, %v1019, %v1022
    %v1041 = vsel %vm1035, %v1028, 920167782
    %v1042 = vsel %vm1034, %v1025, %v1041
    %v1043 = vsel %vm1033, %v1040, %v1042
    %v1044 = vsel %vm1032, %v1022, %v1025
    %v1045 = vsel %vm1035, %v1031, 1326507024
    %v1046 = vsel %vm1034, %v1028, %v1045
    %v1047 = vsel %vm1033, %v1044, %v1046
    %v1048 = vshll.u32 %v1008, 8
    %v1049 = vmul.u32.u64.compose %v1048, %v1047
    %v1050 = vextract.low.u32 %v1049
    %v1051 = vextract.high.u32 %v1049
    %v1052 = vmul.u32.u64.compose %v1048, %v1043
    %v1053 = vextract.low.u32 %v1052
    %v1054 = vextract.high.u32 %v1052
    %v1055 = vmul.u32 %v1048, %v1039
    %v1056 = vadd.s32 %v1051, %v1053
    %vm1057 = vc.u32 %v1051, %v1053
    %v1058 = vadd.s32 %v1054, 1
    %v1059 = vsel %vm1057, %v1058, %v1054
    %v1060 = vadd.s32 %v1055, %v1059
    %v1061 = vadd.s32 %v1060, 536870912
    %v1062 = vshrl.u32 %v1061, 30
    %v1063 = vshll.u32 %v1062, 30
    %v1064 = vsub.s32 %v1060, %v1063
    %vm1065 = vcmp.lt.s32.totalorder %v1064, 0
    %v1066 = vsub.s32 0, %v1064
    %v1067 = vsel %vm1065, %v1066, %v1064
    %v1068 = vclz %v1067
    %v1069 = vsub.s32 %v1068, 2
    %vm1070 = vcmp.gt.s32.totalorder 0, %v1069
    %v1071 = vsel %vm1070, 0, %v1069
    %v1072 = vsub.s32 32, %v1071
    %v1073 = vshll.u32 %v1064, %v1071
    %v1074 = vshrl.u32 %v1056, %v1072
    %v1075 = vor.u32 %v1073, %v1074
    %v1076 = vsub.s32 4294967266, %v1071
    %v1077 = vadd.s32 %v1076, 127
    %v1078 = vshll.u32 %v1077, 23
    %v1079 = vor.u32 4788187, %v1078
    %v1080 = vand.u32 2147483647, %v1079
    %v1082 = vcvt.s32.f32 %v1075
    %v1083 = vmul.f32 %v1082, %v1080
    %v1084 = vxor.u32 %v1083, 2147483648
    %v1085 = vsel %vm1002, %v1084, %v1083
    %v1086 = vsub.s32 4, %v1062
    %v1087 = vsel %vm1002, %v1086, %v1062
    %v1088 = vsel %vm1001, %v453, %v1085
    %v1089 = vsel %vm1001, 0, %v1087
    %v1090 = vcosq.f32.pop %v1088
    %v1091 = vsinq.f32.pop %v1088
    %vm1092 = vweird.f32 %v453
    %v1093 = vadd.s32 %v1089, 3
    %v1094 = vand.u32 %v1093, 3
    %vm1095 = vcmp.lt.s32.totalorder %v1094, 2
    %vm1096 = vcmp.eq.s32.totalorder %v1094, 0
    %v1097 = vxor.u32 %v1091, 2147483648
    %v1098 = vsel %vm1096, %v1090, %v1097
    %vm1099 = vcmp.eq.s32.totalorder %v1094, 2
    %v1100 = vxor.u32 %v1090, 2147483648
    %v1101 = vsel %vm1099, %v1100, %v1091
    %v1102 = vsel %vm1095, %v1098, %v1101
    %v1103 = vsel %vm1092, nan, %v1102
    %v1104 = vand.u32 2147483647, %v454
    %vm1105 = vcmp.le.f32.partialorder %v1104, 0.7853982
    %vm1106 = vcmp.lt.s32.totalorder %v454, 0
    %v1107 = vand.u32 %v454, 2139095040
    %v1108 = vshrl.u32 %v1107, 23
    %v1109 = vsub.s32 %v1108, 127
    %v1110 = vand.u32 2147483647, %v454
    %v1111 = vand.u32 %v1110, 8388607
    %v1112 = vor.u32 %v1111, 8388608
    %v1113 = vsub.s32 0, %v1112
    %v1114 = vadd.s32 %v1109, 1
    %vm1115 = vcmp.gt.s32.totalorder %v1114, 0
    %v1116 = vsel %vm1115, %v1114, 0
    %v1117 = vshrl.u32 %v1116, 5
    %v1118 = vand.u32 %v1116, 31
    %v1119 = vsub.s32 32, %v1118
    %v1120 = vshrl.u32 683565275, %v1119
    %v1121 = vshll.u32 683565275, %v1118
    %v1122 = vshrl.u32 2475754826, %v1119
    %v1123 = vor.u32 %v1121, %v1122
    %v1124 = vshll.u32 2475754826, %v1118
    %v1125 = vshrl.u32 2131351028, %v1119
    %v1126 = vor.u32 %v1124, %v1125
    %v1127 = vshll.u32 2131351028, %v1118
    %v1128 = vshrl.u32 2102212464, %v1119
    %v1129 = vor.u32 %v1127, %v1128
    %v1130 = vshll.u32 2102212464, %v1118
    %v1131 = vshrl.u32 920167782, %v1119
    %v1132 = vor.u32 %v1130, %v1131
    %v1133 = vshll.u32 920167782, %v1118
    %v1134 = vshrl.u32 1326507024, %v1119
    %v1135 = vor.u32 %v1133, %v1134
    %vm1136 = vcmp.lt.s32.totalorder %v1117, 1
    %vm1137 = vcmp.lt.s32.totalorder %v1117, 2
    %vm1138 = vcmp.lt.s32.totalorder %v1117, 3
    %vm1139 = vcmp.lt.s32.totalorder %v1117, 4
    %v1140 = vsel %vm1136, %v1120, %v1123
    %v1141 = vsel %vm1139, %v1129, 2102212464
    %v1142 = vsel %vm1138, %v1126, %v1141
    %v1143 = vsel %vm1137, %v1140, %v1142
    %v1144 = vsel %vm1136, %v1123, %v1126
    %v1145 = vsel %vm1139, %v1132, 920167782
    %v1146 = vsel %vm1138, %v1129, %v1145
    %v1147 = vsel %vm1137, %v1144, %v1146
    %v1148 = vsel %vm1136, %v1126, %v1129
    %v1149 = vsel %vm1139, %v1135, 1326507024
    %v1150 = vsel %vm1138, %v1132, %v1149
    %v1151 = vsel %vm1137, %v1148, %v1150
    %v1152 = vshll.u32 %v1112, 8
    %v1153 = vmul.u32.u64.compose %v1152, %v1151
    %v1154 = vextract.low.u32 %v1153
    %v1155 = vextract.high.u32 %v1153
    %v1156 = vmul.u32.u64.compose %v1152, %v1147
    %v1157 = vextract.low.u32 %v1156
    %v1158 = vextract.high.u32 %v1156
    %v1159 = vmul.u32 %v1152, %v1143
    %v1160 = vadd.s32 %v1155, %v1157
    %vm1161 = vc.u32 %v1155, %v1157
    %v1162 = vadd.s32 %v1158, 1
    %v1163 = vsel %vm1161, %v1162, %v1158
    %v1164 = vadd.s32 %v1159, %v1163
    %v1165 = vadd.s32 %v1164, 536870912
    %v1166 = vshrl.u32 %v1165, 30
    %v1167 = vshll.u32 %v1166, 30
    %v1168 = vsub.s32 %v1164, %v1167
    %vm1169 = vcmp.lt.s32.totalorder %v1168, 0
    %v1170 = vsub.s32 0, %v1168
    %v1171 = vsel %vm1169, %v1170, %v1168
    %v1172 = vclz %v1171
    %v1173 = vsub.s32 %v1172, 2
    %vm1174 = vcmp.gt.s32.totalorder 0, %v1173
    %v1175 = vsel %vm1174, 0, %v1173
    %v1176 = vsub.s32 32, %v1175
    %v1177 = vshll.u32 %v1168, %v1175
    %v1178 = vshrl.u32 %v1160, %v1176
    %v1179 = vor.u32 %v1177, %v1178
    %v1180 = vsub.s32 4294967266, %v1175
    %v1181 = vadd.s32 %v1180, 127
    %v1182 = vshll.u32 %v1181, 23
    %v1183 = vor.u32 4788187, %v1182
    %v1184 = vand.u32 2147483647, %v1183
    %v1186 = vcvt.s32.f32 %v1179
    %v1187 = vmul.f32 %v1186, %v1184
    %v1188 = vxor.u32 %v1187, 2147483648
    %v1189 = vsel %vm1106, %v1188, %v1187
    %v1190 = vsub.s32 4, %v1166
    %v1191 = vsel %vm1106, %v1190, %v1166
    %v1192 = vsel %vm1105, %v454, %v1189
    %v1193 = vsel %vm1105, 0, %v1191
    %v1194 = vcosq.f32.pop %v1192
    %v1195 = vsinq.f32.pop %v1192
    %vm1196 = vweird.f32 %v454
    %v1197 = vadd.s32 %v1193, 3
    %v1198 = vand.u32 %v1197, 3
    %vm1199 = vcmp.lt.s32.totalorder %v1198, 2
    %vm1200 = vcmp.eq.s32.totalorder %v1198, 0
    %v1201 = vxor.u32 %v1195, 2147483648
    %v1202 = vsel %vm1200, %v1194, %v1201
    %vm1203 = vcmp.eq.s32.totalorder %v1198, 2
    %v1204 = vxor.u32 %v1194, 2147483648
    %v1205 = vsel %vm1203, %v1204, %v1195
    %v1206 = vsel %vm1199, %v1202, %v1205
    %v1207 = vsel %vm1196, nan, %v1206
    %v1208 = vand.u32 2147483647, %v455
    %vm1209 = vcmp.le.f32.partialorder %v1208, 0.7853982
    %vm1210 = vcmp.lt.s32.totalorder %v455, 0
    %v1211 = vand.u32 %v455, 2139095040
    %v1212 = vshrl.u32 %v1211, 23
    %v1213 = vsub.s32 %v1212, 127
    %v1214 = vand.u32 2147483647, %v455
    %v1215 = vand.u32 %v1214, 8388607
    %v1216 = vor.u32 %v1215, 8388608
    %v1217 = vsub.s32 0, %v1216
    %v1218 = vadd.s32 %v1213, 1
    %vm1219 = vcmp.gt.s32.totalorder %v1218, 0
    %v1220 = vsel %vm1219, %v1218, 0
    %v1221 = vshrl.u32 %v1220, 5
    %v1222 = vand.u32 %v1220, 31
    %v1223 = vsub.s32 32, %v1222
    %v1224 = vshrl.u32 683565275, %v1223
    %v1225 = vshll.u32 683565275, %v1222
    %v1226 = vshrl.u32 2475754826, %v1223
    %v1227 = vor.u32 %v1225, %v1226
    %v1228 = vshll.u32 2475754826, %v1222
    %v1229 = vshrl.u32 2131351028, %v1223
    %v1230 = vor.u32 %v1228, %v1229
    %v1231 = vshll.u32 2131351028, %v1222
    %v1232 = vshrl.u32 2102212464, %v1223
    %v1233 = vor.u32 %v1231, %v1232
    %v1234 = vshll.u32 2102212464, %v1222
    %v1235 = vshrl.u32 920167782, %v1223
    %v1236 = vor.u32 %v1234, %v1235
    %v1237 = vshll.u32 920167782, %v1222
    %v1238 = vshrl.u32 1326507024, %v1223
    %v1239 = vor.u32 %v1237, %v1238
    %vm1240 = vcmp.lt.s32.totalorder %v1221, 1
    %vm1241 = vcmp.lt.s32.totalorder %v1221, 2
    %vm1242 = vcmp.lt.s32.totalorder %v1221, 3
    %vm1243 = vcmp.lt.s32.totalorder %v1221, 4
    %v1244 = vsel %vm1240, %v1224, %v1227
    %v1245 = vsel %vm1243, %v1233, 2102212464
    %v1246 = vsel %vm1242, %v1230, %v1245
    %v1247 = vsel %vm1241, %v1244, %v1246
    %v1248 = vsel %vm1240, %v1227, %v1230
    %v1249 = vsel %vm1243, %v1236, 920167782
    %v1250 = vsel %vm1242, %v1233, %v1249
    %v1251 = vsel %vm1241, %v1248, %v1250
    %v1252 = vsel %vm1240, %v1230, %v1233
    %v1253 = vsel %vm1243, %v1239, 1326507024
    %v1254 = vsel %vm1242, %v1236, %v1253
    %v1255 = vsel %vm1241, %v1252, %v1254
    %v1256 = vshll.u32 %v1216, 8
    %v1257 = vmul.u32.u64.compose %v1256, %v1255
    %v1258 = vextract.low.u32 %v1257
    %v1259 = vextract.high.u32 %v1257
    %v1260 = vmul.u32.u64.compose %v1256, %v1251
    %v1261 = vextract.low.u32 %v1260
    %v1262 = vextract.high.u32 %v1260
    %v1263 = vmul.u32 %v1256, %v1247
    %v1264 = vadd.s32 %v1259, %v1261
    %vm1265 = vc.u32 %v1259, %v1261
    %v1266 = vadd.s32 %v1262, 1
    %v1267 = vsel %vm1265, %v1266, %v1262
    %v1268 = vadd.s32 %v1263, %v1267
    %v1269 = vadd.s32 %v1268, 536870912
    %v1270 = vshrl.u32 %v1269, 30
    %v1271 = vshll.u32 %v1270, 30
    %v1272 = vsub.s32 %v1268, %v1271
    %vm1273 = vcmp.lt.s32.totalorder %v1272, 0
    %v1274 = vsub.s32 0, %v1272
    %v1275 = vsel %vm1273, %v1274, %v1272
    %v1276 = vclz %v1275
    %v1277 = vsub.s32 %v1276, 2
    %vm1278 = vcmp.gt.s32.totalorder 0, %v1277
    %v1279 = vsel %vm1278, 0, %v1277
    %v1280 = vsub.s32 32, %v1279
    %v1281 = vshll.u32 %v1272, %v1279
    %v1282 = vshrl.u32 %v1264, %v1280
    %v1283 = vor.u32 %v1281, %v1282
    %v1284 = vsub.s32 4294967266, %v1279
    %v1285 = vadd.s32 %v1284, 127
    %v1286 = vshll.u32 %v1285, 23
    %v1287 = vor.u32 4788187, %v1286
    %v1288 = vand.u32 2147483647, %v1287
    %v1290 = vcvt.s32.f32 %v1283
    %v1291 = vmul.f32 %v1290, %v1288
    %v1292 = vxor.u32 %v1291, 2147483648
    %v1293 = vsel %vm1210, %v1292, %v1291
    %v1294 = vsub.s32 4, %v1270
    %v1295 = vsel %vm1210, %v1294, %v1270
    %v1296 = vsel %vm1209, %v455, %v1293
    %v1297 = vsel %vm1209, 0, %v1295
    %v1298 = vcosq.f32.pop %v1296
    %v1299 = vsinq.f32.pop %v1296
    %vm1300 = vweird.f32 %v455
    %v1301 = vadd.s32 %v1297, 3
    %v1302 = vand.u32 %v1301, 3
    %vm1303 = vcmp.lt.s32.totalorder %v1302, 2
    %vm1304 = vcmp.eq.s32.totalorder %v1302, 0
    %v1305 = vxor.u32 %v1299, 2147483648
    %v1306 = vsel %vm1304, %v1298, %v1305
    %vm1307 = vcmp.eq.s32.totalorder %v1302, 2
    %v1308 = vxor.u32 %v1298, 2147483648
    %v1309 = vsel %vm1307, %v1308, %v1299
    %v1310 = vsel %vm1303, %v1306, %v1309
    %v1311 = vsel %vm1300, nan, %v1310
    %v1312 = vand.u32 2147483647, %v456
    %vm1313 = vcmp.le.f32.partialorder %v1312, 0.7853982
    %vm1314 = vcmp.lt.s32.totalorder %v456, 0
    %v1315 = vand.u32 %v456, 2139095040
    %v1316 = vshrl.u32 %v1315, 23
    %v1317 = vsub.s32 %v1316, 127
    %v1318 = vand.u32 2147483647, %v456
    %v1319 = vand.u32 %v1318, 8388607
    %v1320 = vor.u32 %v1319, 8388608
    %v1321 = vsub.s32 0, %v1320
    %v1322 = vadd.s32 %v1317, 1
    %vm1323 = vcmp.gt.s32.totalorder %v1322, 0
    %v1324 = vsel %vm1323, %v1322, 0
    %v1325 = vshrl.u32 %v1324, 5
    %v1326 = vand.u32 %v1324, 31
    %v1327 = vsub.s32 32, %v1326
    %v1328 = vshrl.u32 683565275, %v1327
    %v1329 = vshll.u32 683565275, %v1326
    %v1330 = vshrl.u32 2475754826, %v1327
    %v1331 = vor.u32 %v1329, %v1330
    %v1332 = vshll.u32 2475754826, %v1326
    %v1333 = vshrl.u32 2131351028, %v1327
    %v1334 = vor.u32 %v1332, %v1333
    %v1335 = vshll.u32 2131351028, %v1326
    %v1336 = vshrl.u32 2102212464, %v1327
    %v1337 = vor.u32 %v1335, %v1336
    %v1338 = vshll.u32 2102212464, %v1326
    %v1339 = vshrl.u32 920167782, %v1327
    %v1340 = vor.u32 %v1338, %v1339
    %v1341 = vshll.u32 920167782, %v1326
    %v1342 = vshrl.u32 1326507024, %v1327
    %v1343 = vor.u32 %v1341, %v1342
    %vm1344 = vcmp.lt.s32.totalorder %v1325, 1
    %vm1345 = vcmp.lt.s32.totalorder %v1325, 2
    %vm1346 = vcmp.lt.s32.totalorder %v1325, 3
    %vm1347 = vcmp.lt.s32.totalorder %v1325, 4
    %v1348 = vsel %vm1344, %v1328, %v1331
    %v1349 = vsel %vm1347, %v1337, 2102212464
    %v1350 = vsel %vm1346, %v1334, %v1349
    %v1351 = vsel %vm1345, %v1348, %v1350
    %v1352 = vsel %vm1344, %v1331, %v1334
    %v1353 = vsel %vm1347, %v1340, 920167782
    %v1354 = vsel %vm1346, %v1337, %v1353
    %v1355 = vsel %vm1345, %v1352, %v1354
    %v1356 = vsel %vm1344, %v1334, %v1337
    %v1357 = vsel %vm1347, %v1343, 1326507024
    %v1358 = vsel %vm1346, %v1340, %v1357
    %v1359 = vsel %vm1345, %v1356, %v1358
    %v1360 = vshll.u32 %v1320, 8
    %v1361 = vmul.u32.u64.compose %v1360, %v1359
    %v1362 = vextract.low.u32 %v1361
    %v1363 = vextract.high.u32 %v1361
    %v1364 = vmul.u32.u64.compose %v1360, %v1355
    %v1365 = vextract.low.u32 %v1364
    %v1366 = vextract.high.u32 %v1364
    %v1367 = vmul.u32 %v1360, %v1351
    %v1368 = vadd.s32 %v1363, %v1365
    %vm1369 = vc.u32 %v1363, %v1365
    %v1370 = vadd.s32 %v1366, 1
    %v1371 = vsel %vm1369, %v1370, %v1366
    %v1372 = vadd.s32 %v1367, %v1371
    %v1373 = vadd.s32 %v1372, 536870912
    %v1374 = vshrl.u32 %v1373, 30
    %v1375 = vshll.u32 %v1374, 30
    %v1376 = vsub.s32 %v1372, %v1375
    %vm1377 = vcmp.lt.s32.totalorder %v1376, 0
    %v1378 = vsub.s32 0, %v1376
    %v1379 = vsel %vm1377, %v1378, %v1376
    %v1380 = vclz %v1379
    %v1381 = vsub.s32 %v1380, 2
    %vm1382 = vcmp.gt.s32.totalorder 0, %v1381
    %v1383 = vsel %vm1382, 0, %v1381
    %v1384 = vsub.s32 32, %v1383
    %v1385 = vshll.u32 %v1376, %v1383
    %v1386 = vshrl.u32 %v1368, %v1384
    %v1387 = vor.u32 %v1385, %v1386
    %v1388 = vsub.s32 4294967266, %v1383
    %v1389 = vadd.s32 %v1388, 127
    %v1390 = vshll.u32 %v1389, 23
    %v1391 = vor.u32 4788187, %v1390
    %v1392 = vand.u32 2147483647, %v1391
    %v1394 = vcvt.s32.f32 %v1387
    %v1395 = vmul.f32 %v1394, %v1392
    %v1396 = vxor.u32 %v1395, 2147483648
    %v1397 = vsel %vm1314, %v1396, %v1395
    %v1398 = vsub.s32 4, %v1374
    %v1399 = vsel %vm1314, %v1398, %v1374
    %v1400 = vsel %vm1313, %v456, %v1397
    %v1401 = vsel %vm1313, 0, %v1399
    %v1402 = vcosq.f32.pop %v1400
    %v1403 = vsinq.f32.pop %v1400
    %vm1404 = vweird.f32 %v456
    %v1405 = vadd.s32 %v1401, 3
    %v1406 = vand.u32 %v1405, 3
    %vm1407 = vcmp.lt.s32.totalorder %v1406, 2
    %vm1408 = vcmp.eq.s32.totalorder %v1406, 0
    %v1409 = vxor.u32 %v1403, 2147483648
    %v1410 = vsel %vm1408, %v1402, %v1409
    %vm1411 = vcmp.eq.s32.totalorder %v1406, 2
    %v1412 = vxor.u32 %v1402, 2147483648
    %v1413 = vsel %vm1411, %v1412, %v1403
    %v1414 = vsel %vm1407, %v1410, %v1413
    %v1415 = vsel %vm1404, nan, %v1414
    %v1416 = vand.u32 2147483647, %v457
    %vm1417 = vcmp.le.f32.partialorder %v1416, 0.7853982
    %vm1418 = vcmp.lt.s32.totalorder %v457, 0
    %v1419 = vand.u32 %v457, 2139095040
    %v1420 = vshrl.u32 %v1419, 23
    %v1421 = vsub.s32 %v1420, 127
    %v1422 = vand.u32 2147483647, %v457
    %v1423 = vand.u32 %v1422, 8388607
    %v1424 = vor.u32 %v1423, 8388608
    %v1425 = vsub.s32 0, %v1424
    %v1426 = vadd.s32 %v1421, 1
    %vm1427 = vcmp.gt.s32.totalorder %v1426, 0
    %v1428 = vsel %vm1427, %v1426, 0
    %v1429 = vshrl.u32 %v1428, 5
    %v1430 = vand.u32 %v1428, 31
    %v1431 = vsub.s32 32, %v1430
    %v1432 = vshrl.u32 683565275, %v1431
    %v1433 = vshll.u32 683565275, %v1430
    %v1434 = vshrl.u32 2475754826, %v1431
    %v1435 = vor.u32 %v1433, %v1434
    %v1436 = vshll.u32 2475754826, %v1430
    %v1437 = vshrl.u32 2131351028, %v1431
    %v1438 = vor.u32 %v1436, %v1437
    %v1439 = vshll.u32 2131351028, %v1430
    %v1440 = vshrl.u32 2102212464, %v1431
    %v1441 = vor.u32 %v1439, %v1440
    %v1442 = vshll.u32 2102212464, %v1430
    %v1443 = vshrl.u32 920167782, %v1431
    %v1444 = vor.u32 %v1442, %v1443
    %v1445 = vshll.u32 920167782, %v1430
    %v1446 = vshrl.u32 1326507024, %v1431
    %v1447 = vor.u32 %v1445, %v1446
    %vm1448 = vcmp.lt.s32.totalorder %v1429, 1
    %vm1449 = vcmp.lt.s32.totalorder %v1429, 2
    %vm1450 = vcmp.lt.s32.totalorder %v1429, 3
    %vm1451 = vcmp.lt.s32.totalorder %v1429, 4
    %v1452 = vsel %vm1448, %v1432, %v1435
    %v1453 = vsel %vm1451, %v1441, 2102212464
    %v1454 = vsel %vm1450, %v1438, %v1453
    %v1455 = vsel %vm1449, %v1452, %v1454
    %v1456 = vsel %vm1448, %v1435, %v1438
    %v1457 = vsel %vm1451, %v1444, 920167782
    %v1458 = vsel %vm1450, %v1441, %v1457
    %v1459 = vsel %vm1449, %v1456, %v1458
    %v1460 = vsel %vm1448, %v1438, %v1441
    %v1461 = vsel %vm1451, %v1447, 1326507024
    %v1462 = vsel %vm1450, %v1444, %v1461
    %v1463 = vsel %vm1449, %v1460, %v1462
    %v1464 = vshll.u32 %v1424, 8
    %v1465 = vmul.u32.u64.compose %v1464, %v1463
    %v1466 = vextract.low.u32 %v1465
    %v1467 = vextract.high.u32 %v1465
    %v1468 = vmul.u32.u64.compose %v1464, %v1459
    %v1469 = vextract.low.u32 %v1468
    %v1470 = vextract.high.u32 %v1468
    %v1471 = vmul.u32 %v1464, %v1455
    %v1472 = vadd.s32 %v1467, %v1469
    %vm1473 = vc.u32 %v1467, %v1469
    %v1474 = vadd.s32 %v1470, 1
    %v1475 = vsel %vm1473, %v1474, %v1470
    %v1476 = vadd.s32 %v1471, %v1475
    %v1477 = vadd.s32 %v1476, 536870912
    %v1478 = vshrl.u32 %v1477, 30
    %v1479 = vshll.u32 %v1478, 30
    %v1480 = vsub.s32 %v1476, %v1479
    %vm1481 = vcmp.lt.s32.totalorder %v1480, 0
    %v1482 = vsub.s32 0, %v1480
    %v1483 = vsel %vm1481, %v1482, %v1480
    %v1484 = vclz %v1483
    %v1485 = vsub.s32 %v1484, 2
    %vm1486 = vcmp.gt.s32.totalorder 0, %v1485
    %v1487 = vsel %vm1486, 0, %v1485
    %v1488 = vsub.s32 32, %v1487
    %v1489 = vshll.u32 %v1480, %v1487
    %v1490 = vshrl.u32 %v1472, %v1488
    %v1491 = vor.u32 %v1489, %v1490
    %v1492 = vsub.s32 4294967266, %v1487
    %v1493 = vadd.s32 %v1492, 127
    %v1494 = vshll.u32 %v1493, 23
    %v1495 = vor.u32 4788187, %v1494
    %v1496 = vand.u32 2147483647, %v1495
    %v1498 = vcvt.s32.f32 %v1491
    %v1499 = vmul.f32 %v1498, %v1496
    %v1500 = vxor.u32 %v1499, 2147483648
    %v1501 = vsel %vm1418, %v1500, %v1499
    %v1502 = vsub.s32 4, %v1478
    %v1503 = vsel %vm1418, %v1502, %v1478
    %v1504 = vsel %vm1417, %v457, %v1501
    %v1505 = vsel %vm1417, 0, %v1503
    %v1506 = vcosq.f32.pop %v1504
    %v1507 = vsinq.f32.pop %v1504
    %vm1508 = vweird.f32 %v457
    %v1509 = vadd.s32 %v1505, 3
    %v1510 = vand.u32 %v1509, 3
    %vm1511 = vcmp.lt.s32.totalorder %v1510, 2
    %vm1512 = vcmp.eq.s32.totalorder %v1510, 0
    %v1513 = vxor.u32 %v1507, 2147483648
    %v1514 = vsel %vm1512, %v1506, %v1513
    %vm1515 = vcmp.eq.s32.totalorder %v1510, 2
    %v1516 = vxor.u32 %v1506, 2147483648
    %v1517 = vsel %vm1515, %v1516, %v1507
    %v1518 = vsel %vm1511, %v1514, %v1517
    %v1519 = vsel %vm1508, nan, %v1518
    %v1520 = vand.u32 2147483647, %v458
    %vm1521 = vcmp.le.f32.partialorder %v1520, 0.7853982
    %vm1522 = vcmp.lt.s32.totalorder %v458, 0
    %v1523 = vand.u32 %v458, 2139095040
    %v1524 = vshrl.u32 %v1523, 23
    %v1525 = vsub.s32 %v1524, 127
    %v1526 = vand.u32 2147483647, %v458
    %v1527 = vand.u32 %v1526, 8388607
    %v1528 = vor.u32 %v1527, 8388608
    %v1529 = vsub.s32 0, %v1528
    %v1530 = vadd.s32 %v1525, 1
    %vm1531 = vcmp.gt.s32.totalorder %v1530, 0
    %v1532 = vsel %vm1531, %v1530, 0
    %v1533 = vshrl.u32 %v1532, 5
    %v1534 = vand.u32 %v1532, 31
    %v1535 = vsub.s32 32, %v1534
    %v1536 = vshrl.u32 683565275, %v1535
    %v1537 = vshll.u32 683565275, %v1534
    %v1538 = vshrl.u32 2475754826, %v1535
    %v1539 = vor.u32 %v1537, %v1538
    %v1540 = vshll.u32 2475754826, %v1534
    %v1541 = vshrl.u32 2131351028, %v1535
    %v1542 = vor.u32 %v1540, %v1541
    %v1543 = vshll.u32 2131351028, %v1534
    %v1544 = vshrl.u32 2102212464, %v1535
    %v1545 = vor.u32 %v1543, %v1544
    %v1546 = vshll.u32 2102212464, %v1534
    %v1547 = vshrl.u32 920167782, %v1535
    %v1548 = vor.u32 %v1546, %v1547
    %v1549 = vshll.u32 920167782, %v1534
    %v1550 = vshrl.u32 1326507024, %v1535
    %v1551 = vor.u32 %v1549, %v1550
    %vm1552 = vcmp.lt.s32.totalorder %v1533, 1
    %vm1553 = vcmp.lt.s32.totalorder %v1533, 2
    %vm1554 = vcmp.lt.s32.totalorder %v1533, 3
    %vm1555 = vcmp.lt.s32.totalorder %v1533, 4
    %v1556 = vsel %vm1552, %v1536, %v1539
    %v1557 = vsel %vm1555, %v1545, 2102212464
    %v1558 = vsel %vm1554, %v1542, %v1557
    %v1559 = vsel %vm1553, %v1556, %v1558
    %v1560 = vsel %vm1552, %v1539, %v1542
    %v1561 = vsel %vm1555, %v1548, 920167782
    %v1562 = vsel %vm1554, %v1545, %v1561
    %v1563 = vsel %vm1553, %v1560, %v1562
    %v1564 = vsel %vm1552, %v1542, %v1545
    %v1565 = vsel %vm1555, %v1551, 1326507024
    %v1566 = vsel %vm1554, %v1548, %v1565
    %v1567 = vsel %vm1553, %v1564, %v1566
    %v1568 = vshll.u32 %v1528, 8
    %v1569 = vmul.u32.u64.compose %v1568, %v1567
    %v1570 = vextract.low.u32 %v1569
    %v1571 = vextract.high.u32 %v1569
    %v1572 = vmul.u32.u64.compose %v1568, %v1563
    %v1573 = vextract.low.u32 %v1572
    %v1574 = vextract.high.u32 %v1572
    %v1575 = vmul.u32 %v1568, %v1559
    %v1576 = vadd.s32 %v1571, %v1573
    %vm1577 = vc.u32 %v1571, %v1573
    %v1578 = vadd.s32 %v1574, 1
    %v1579 = vsel %vm1577, %v1578, %v1574
    %v1580 = vadd.s32 %v1575, %v1579
    %v1581 = vadd.s32 %v1580, 536870912
    %v1582 = vshrl.u32 %v1581, 30
    %v1583 = vshll.u32 %v1582, 30
    %v1584 = vsub.s32 %v1580, %v1583
    %vm1585 = vcmp.lt.s32.totalorder %v1584, 0
    %v1586 = vsub.s32 0, %v1584
    %v1587 = vsel %vm1585, %v1586, %v1584
    %v1588 = vclz %v1587
    %v1589 = vsub.s32 %v1588, 2
    %vm1590 = vcmp.gt.s32.totalorder 0, %v1589
    %v1591 = vsel %vm1590, 0, %v1589
    %v1592 = vsub.s32 32, %v1591
    %v1593 = vshll.u32 %v1584, %v1591
    %v1594 = vshrl.u32 %v1576, %v1592
    %v1595 = vor.u32 %v1593, %v1594
    %v1596 = vsub.s32 4294967266, %v1591
    %v1597 = vadd.s32 %v1596, 127
    %v1598 = vshll.u32 %v1597, 23
    %v1599 = vor.u32 4788187, %v1598
    %v1600 = vand.u32 2147483647, %v1599
    %v1602 = vcvt.s32.f32 %v1595
    %v1603 = vmul.f32 %v1602, %v1600
    %v1604 = vxor.u32 %v1603, 2147483648
    %v1605 = vsel %vm1522, %v1604, %v1603
    %v1606 = vsub.s32 4, %v1582
    %v1607 = vsel %vm1522, %v1606, %v1582
    %v1608 = vsel %vm1521, %v458, %v1605
    %v1609 = vsel %vm1521, 0, %v1607
    %v1610 = vcosq.f32.pop %v1608
    %v1611 = vsinq.f32.pop %v1608
    %vm1612 = vweird.f32 %v458
    %v1613 = vadd.s32 %v1609, 3
    %v1614 = vand.u32 %v1613, 3
    %vm1615 = vcmp.lt.s32.totalorder %v1614, 2
    %vm1616 = vcmp.eq.s32.totalorder %v1614, 0
    %v1617 = vxor.u32 %v1611, 2147483648
    %v1618 = vsel %vm1616, %v1610, %v1617
    %vm1619 = vcmp.eq.s32.totalorder %v1614, 2
    %v1620 = vxor.u32 %v1610, 2147483648
    %v1621 = vsel %vm1619, %v1620, %v1611
    %v1622 = vsel %vm1615, %v1618, %v1621
    %v1623 = vsel %vm1612, nan, %v1622
    %v1624 = vand.u32 2147483647, %v459
    %vm1625 = vcmp.le.f32.partialorder %v1624, 0.7853982
    %vm1626 = vcmp.lt.s32.totalorder %v459, 0
    %v1627 = vand.u32 %v459, 2139095040
    %v1628 = vshrl.u32 %v1627, 23
    %v1629 = vsub.s32 %v1628, 127
    %v1630 = vand.u32 2147483647, %v459
    %v1631 = vand.u32 %v1630, 8388607
    %v1632 = vor.u32 %v1631, 8388608
    %v1633 = vsub.s32 0, %v1632
    %v1634 = vadd.s32 %v1629, 1
    %vm1635 = vcmp.gt.s32.totalorder %v1634, 0
    %v1636 = vsel %vm1635, %v1634, 0
    %v1637 = vshrl.u32 %v1636, 5
    %v1638 = vand.u32 %v1636, 31
    %v1639 = vsub.s32 32, %v1638
    %v1640 = vshrl.u32 683565275, %v1639
    %v1641 = vshll.u32 683565275, %v1638
    %v1642 = vshrl.u32 2475754826, %v1639
    %v1643 = vor.u32 %v1641, %v1642
    %v1644 = vshll.u32 2475754826, %v1638
    %v1645 = vshrl.u32 2131351028, %v1639
    %v1646 = vor.u32 %v1644, %v1645
    %v1647 = vshll.u32 2131351028, %v1638
    %v1648 = vshrl.u32 2102212464, %v1639
    %v1649 = vor.u32 %v1647, %v1648
    %v1650 = vshll.u32 2102212464, %v1638
    %v1651 = vshrl.u32 920167782, %v1639
    %v1652 = vor.u32 %v1650, %v1651
    %v1653 = vshll.u32 920167782, %v1638
    %v1654 = vshrl.u32 1326507024, %v1639
    %v1655 = vor.u32 %v1653, %v1654
    %vm1656 = vcmp.lt.s32.totalorder %v1637, 1
    %vm1657 = vcmp.lt.s32.totalorder %v1637, 2
    %vm1658 = vcmp.lt.s32.totalorder %v1637, 3
    %vm1659 = vcmp.lt.s32.totalorder %v1637, 4
    %v1660 = vsel %vm1656, %v1640, %v1643
    %v1661 = vsel %vm1659, %v1649, 2102212464
    %v1662 = vsel %vm1658, %v1646, %v1661
    %v1663 = vsel %vm1657, %v1660, %v1662
    %v1664 = vsel %vm1656, %v1643, %v1646
    %v1665 = vsel %vm1659, %v1652, 920167782
    %v1666 = vsel %vm1658, %v1649, %v1665
    %v1667 = vsel %vm1657, %v1664, %v1666
    %v1668 = vsel %vm1656, %v1646, %v1649
    %v1669 = vsel %vm1659, %v1655, 1326507024
    %v1670 = vsel %vm1658, %v1652, %v1669
    %v1671 = vsel %vm1657, %v1668, %v1670
    %v1672 = vshll.u32 %v1632, 8
    %v1673 = vmul.u32.u64.compose %v1672, %v1671
    %v1674 = vextract.low.u32 %v1673
    %v1675 = vextract.high.u32 %v1673
    %v1676 = vmul.u32.u64.compose %v1672, %v1667
    %v1677 = vextract.low.u32 %v1676
    %v1678 = vextract.high.u32 %v1676
    %v1679 = vmul.u32 %v1672, %v1663
    %v1680 = vadd.s32 %v1675, %v1677
    %vm1681 = vc.u32 %v1675, %v1677
    %v1682 = vadd.s32 %v1678, 1
    %v1683 = vsel %vm1681, %v1682, %v1678
    %v1684 = vadd.s32 %v1679, %v1683
    %v1685 = vadd.s32 %v1684, 536870912
    %v1686 = vshrl.u32 %v1685, 30
    %v1687 = vshll.u32 %v1686, 30
    %v1688 = vsub.s32 %v1684, %v1687
    %vm1689 = vcmp.lt.s32.totalorder %v1688, 0
    %v1690 = vsub.s32 0, %v1688
    %v1691 = vsel %vm1689, %v1690, %v1688
    %v1692 = vclz %v1691
    %v1693 = vsub.s32 %v1692, 2
    %vm1694 = vcmp.gt.s32.totalorder 0, %v1693
    %v1695 = vsel %vm1694, 0, %v1693
    %v1696 = vsub.s32 32, %v1695
    %v1697 = vshll.u32 %v1688, %v1695
    %v1698 = vshrl.u32 %v1680, %v1696
    %v1699 = vor.u32 %v1697, %v1698
    %v1700 = vsub.s32 4294967266, %v1695
    %v1701 = vadd.s32 %v1700, 127
    %v1702 = vshll.u32 %v1701, 23
    %v1703 = vor.u32 4788187, %v1702
    %v1704 = vand.u32 2147483647, %v1703
    %v1706 = vcvt.s32.f32 %v1699
    %v1707 = vmul.f32 %v1706, %v1704
    %v1708 = vxor.u32 %v1707, 2147483648
    %v1709 = vsel %vm1626, %v1708, %v1707
    %v1710 = vsub.s32 4, %v1686
    %v1711 = vsel %vm1626, %v1710, %v1686
    %v1712 = vsel %vm1625, %v459, %v1709
    %v1713 = vsel %vm1625, 0, %v1711
    %v1714 = vcosq.f32.pop %v1712
    %v1715 = vsinq.f32.pop %v1712
    %vm1716 = vweird.f32 %v459
    %v1717 = vadd.s32 %v1713, 3
    %v1718 = vand.u32 %v1717, 3
    %vm1719 = vcmp.lt.s32.totalorder %v1718, 2
    %vm1720 = vcmp.eq.s32.totalorder %v1718, 0
    %v1721 = vxor.u32 %v1715, 2147483648
    %v1722 = vsel %vm1720, %v1714, %v1721
    %vm1723 = vcmp.eq.s32.totalorder %v1718, 2
    %v1724 = vxor.u32 %v1714, 2147483648
    %v1725 = vsel %vm1723, %v1724, %v1715
    %v1726 = vsel %vm1719, %v1722, %v1725
    %v1727 = vsel %vm1716, nan, %v1726
    %v1728 = vand.u32 2147483647, %v460
    %vm1729 = vcmp.le.f32.partialorder %v1728, 0.7853982
    %vm1730 = vcmp.lt.s32.totalorder %v460, 0
    %v1731 = vand.u32 %v460, 2139095040
    %v1732 = vshrl.u32 %v1731, 23
    %v1733 = vsub.s32 %v1732, 127
    %v1734 = vand.u32 2147483647, %v460
    %v1735 = vand.u32 %v1734, 8388607
    %v1736 = vor.u32 %v1735, 8388608
    %v1737 = vsub.s32 0, %v1736
    %v1738 = vadd.s32 %v1733, 1
    %vm1739 = vcmp.gt.s32.totalorder %v1738, 0
    %v1740 = vsel %vm1739, %v1738, 0
    %v1741 = vshrl.u32 %v1740, 5
    %v1742 = vand.u32 %v1740, 31
    %v1743 = vsub.s32 32, %v1742
    %v1744 = vshrl.u32 683565275, %v1743
    %v1745 = vshll.u32 683565275, %v1742
    %v1746 = vshrl.u32 2475754826, %v1743
    %v1747 = vor.u32 %v1745, %v1746
    %v1748 = vshll.u32 2475754826, %v1742
    %v1749 = vshrl.u32 2131351028, %v1743
    %v1750 = vor.u32 %v1748, %v1749
    %v1751 = vshll.u32 2131351028, %v1742
    %v1752 = vshrl.u32 2102212464, %v1743
    %v1753 = vor.u32 %v1751, %v1752
    %v1754 = vshll.u32 2102212464, %v1742
    %v1755 = vshrl.u32 920167782, %v1743
    %v1756 = vor.u32 %v1754, %v1755
    %v1757 = vshll.u32 920167782, %v1742
    %v1758 = vshrl.u32 1326507024, %v1743
    %v1759 = vor.u32 %v1757, %v1758
    %vm1760 = vcmp.lt.s32.totalorder %v1741, 1
    %vm1761 = vcmp.lt.s32.totalorder %v1741, 2
    %vm1762 = vcmp.lt.s32.totalorder %v1741, 3
    %vm1763 = vcmp.lt.s32.totalorder %v1741, 4
    %v1764 = vsel %vm1760, %v1744, %v1747
    %v1765 = vsel %vm1763, %v1753, 2102212464
    %v1766 = vsel %vm1762, %v1750, %v1765
    %v1767 = vsel %vm1761, %v1764, %v1766
    %v1768 = vsel %vm1760, %v1747, %v1750
    %v1769 = vsel %vm1763, %v1756, 920167782
    %v1770 = vsel %vm1762, %v1753, %v1769
    %v1771 = vsel %vm1761, %v1768, %v1770
    %v1772 = vsel %vm1760, %v1750, %v1753
    %v1773 = vsel %vm1763, %v1759, 1326507024
    %v1774 = vsel %vm1762, %v1756, %v1773
    %v1775 = vsel %vm1761, %v1772, %v1774
    %v1776 = vshll.u32 %v1736, 8
    %v1777 = vmul.u32.u64.compose %v1776, %v1775
    %v1778 = vextract.low.u32 %v1777
    %v1779 = vextract.high.u32 %v1777
    %v1780 = vmul.u32.u64.compose %v1776, %v1771
    %v1781 = vextract.low.u32 %v1780
    %v1782 = vextract.high.u32 %v1780
    %v1783 = vmul.u32 %v1776, %v1767
    %v1784 = vadd.s32 %v1779, %v1781
    %vm1785 = vc.u32 %v1779, %v1781
    %v1786 = vadd.s32 %v1782, 1
    %v1787 = vsel %vm1785, %v1786, %v1782
    %v1788 = vadd.s32 %v1783, %v1787
    %v1789 = vadd.s32 %v1788, 536870912
    %v1790 = vshrl.u32 %v1789, 30
    %v1791 = vshll.u32 %v1790, 30
    %v1792 = vsub.s32 %v1788, %v1791
    %vm1793 = vcmp.lt.s32.totalorder %v1792, 0
    %v1794 = vsub.s32 0, %v1792
    %v1795 = vsel %vm1793, %v1794, %v1792
    %v1796 = vclz %v1795
    %v1797 = vsub.s32 %v1796, 2
    %vm1798 = vcmp.gt.s32.totalorder 0, %v1797
    %v1799 = vsel %vm1798, 0, %v1797
    %v1800 = vsub.s32 32, %v1799
    %v1801 = vshll.u32 %v1792, %v1799
    %v1802 = vshrl.u32 %v1784, %v1800
    %v1803 = vor.u32 %v1801, %v1802
    %v1804 = vsub.s32 4294967266, %v1799
    %v1805 = vadd.s32 %v1804, 127
    %v1806 = vshll.u32 %v1805, 23
    %v1807 = vor.u32 4788187, %v1806
    %v1808 = vand.u32 2147483647, %v1807
    %v1810 = vcvt.s32.f32 %v1803
    %v1811 = vmul.f32 %v1810, %v1808
    %v1812 = vxor.u32 %v1811, 2147483648
    %v1813 = vsel %vm1730, %v1812, %v1811
    %v1814 = vsub.s32 4, %v1790
    %v1815 = vsel %vm1730, %v1814, %v1790
    %v1816 = vsel %vm1729, %v460, %v1813
    %v1817 = vsel %vm1729, 0, %v1815
    %v1818 = vcosq.f32.pop %v1816
    %v1819 = vsinq.f32.pop %v1816
    %vm1820 = vweird.f32 %v460
    %v1821 = vadd.s32 %v1817, 3
    %v1822 = vand.u32 %v1821, 3
    %vm1823 = vcmp.lt.s32.totalorder %v1822, 2
    %vm1824 = vcmp.eq.s32.totalorder %v1822, 0
    %v1825 = vxor.u32 %v1819, 2147483648
    %v1826 = vsel %vm1824, %v1818, %v1825
    %vm1827 = vcmp.eq.s32.totalorder %v1822, 2
    %v1828 = vxor.u32 %v1818, 2147483648
    %v1829 = vsel %vm1827, %v1828, %v1819
    %v1830 = vsel %vm1823, %v1826, %v1829
    %v1831 = vsel %vm1820, nan, %v1830
    %v1832 = vand.u32 2147483647, %v461
    %vm1833 = vcmp.le.f32.partialorder %v1832, 0.7853982
    %vm1834 = vcmp.lt.s32.totalorder %v461, 0
    %v1835 = vand.u32 %v461, 2139095040
    %v1836 = vshrl.u32 %v1835, 23
    %v1837 = vsub.s32 %v1836, 127
    %v1838 = vand.u32 2147483647, %v461
    %v1839 = vand.u32 %v1838, 8388607
    %v1840 = vor.u32 %v1839, 8388608
    %v1841 = vsub.s32 0, %v1840
    %v1842 = vadd.s32 %v1837, 1
    %vm1843 = vcmp.gt.s32.totalorder %v1842, 0
    %v1844 = vsel %vm1843, %v1842, 0
    %v1845 = vshrl.u32 %v1844, 5
    %v1846 = vand.u32 %v1844, 31
    %v1847 = vsub.s32 32, %v1846
    %v1848 = vshrl.u32 683565275, %v1847
    %v1849 = vshll.u32 683565275, %v1846
    %v1850 = vshrl.u32 2475754826, %v1847
    %v1851 = vor.u32 %v1849, %v1850
    %v1852 = vshll.u32 2475754826, %v1846
    %v1853 = vshrl.u32 2131351028, %v1847
    %v1854 = vor.u32 %v1852, %v1853
    %v1855 = vshll.u32 2131351028, %v1846
    %v1856 = vshrl.u32 2102212464, %v1847
    %v1857 = vor.u32 %v1855, %v1856
    %v1858 = vshll.u32 2102212464, %v1846
    %v1859 = vshrl.u32 920167782, %v1847
    %v1860 = vor.u32 %v1858, %v1859
    %v1861 = vshll.u32 920167782, %v1846
    %v1862 = vshrl.u32 1326507024, %v1847
    %v1863 = vor.u32 %v1861, %v1862
    %vm1864 = vcmp.lt.s32.totalorder %v1845, 1
    %vm1865 = vcmp.lt.s32.totalorder %v1845, 2
    %vm1866 = vcmp.lt.s32.totalorder %v1845, 3
    %vm1867 = vcmp.lt.s32.totalorder %v1845, 4
    %v1868 = vsel %vm1864, %v1848, %v1851
    %v1869 = vsel %vm1867, %v1857, 2102212464
    %v1870 = vsel %vm1866, %v1854, %v1869
    %v1871 = vsel %vm1865, %v1868, %v1870
    %v1872 = vsel %vm1864, %v1851, %v1854
    %v1873 = vsel %vm1867, %v1860, 920167782
    %v1874 = vsel %vm1866, %v1857, %v1873
    %v1875 = vsel %vm1865, %v1872, %v1874
    %v1876 = vsel %vm1864, %v1854, %v1857
    %v1877 = vsel %vm1867, %v1863, 1326507024
    %v1878 = vsel %vm1866, %v1860, %v1877
    %v1879 = vsel %vm1865, %v1876, %v1878
    %v1880 = vshll.u32 %v1840, 8
    %v1881 = vmul.u32.u64.compose %v1880, %v1879
    %v1882 = vextract.low.u32 %v1881
    %v1883 = vextract.high.u32 %v1881
    %v1884 = vmul.u32.u64.compose %v1880, %v1875
    %v1885 = vextract.low.u32 %v1884
    %v1886 = vextract.high.u32 %v1884
    %v1887 = vmul.u32 %v1880, %v1871
    %v1888 = vadd.s32 %v1883, %v1885
    %vm1889 = vc.u32 %v1883, %v1885
    %v1890 = vadd.s32 %v1886, 1
    %v1891 = vsel %vm1889, %v1890, %v1886
    %v1892 = vadd.s32 %v1887, %v1891
    %v1893 = vadd.s32 %v1892, 536870912
    %v1894 = vshrl.u32 %v1893, 30
    %v1895 = vshll.u32 %v1894, 30
    %v1896 = vsub.s32 %v1892, %v1895
    %vm1897 = vcmp.lt.s32.totalorder %v1896, 0
    %v1898 = vsub.s32 0, %v1896
    %v1899 = vsel %vm1897, %v1898, %v1896
    %v1900 = vclz %v1899
    %v1901 = vsub.s32 %v1900, 2
    %vm1902 = vcmp.gt.s32.totalorder 0, %v1901
    %v1903 = vsel %vm1902, 0, %v1901
    %v1904 = vsub.s32 32, %v1903
    %v1905 = vshll.u32 %v1896, %v1903
    %v1906 = vshrl.u32 %v1888, %v1904
    %v1907 = vor.u32 %v1905, %v1906
    %v1908 = vsub.s32 4294967266, %v1903
    %v1909 = vadd.s32 %v1908, 127
    %v1910 = vshll.u32 %v1909, 23
    %v1911 = vor.u32 4788187, %v1910
    %v1912 = vand.u32 2147483647, %v1911
    %v1914 = vcvt.s32.f32 %v1907
    %v1915 = vmul.f32 %v1914, %v1912
    %v1916 = vxor.u32 %v1915, 2147483648
    %v1917 = vsel %vm1834, %v1916, %v1915
    %v1918 = vsub.s32 4, %v1894
    %v1919 = vsel %vm1834, %v1918, %v1894
    %v1920 = vsel %vm1833, %v461, %v1917
    %v1921 = vsel %vm1833, 0, %v1919
    %v1922 = vcosq.f32.pop %v1920
    %v1923 = vsinq.f32.pop %v1920
    %vm1924 = vweird.f32 %v461
    %v1925 = vadd.s32 %v1921, 3
    %v1926 = vand.u32 %v1925, 3
    %vm1927 = vcmp.lt.s32.totalorder %v1926, 2
    %vm1928 = vcmp.eq.s32.totalorder %v1926, 0
    %v1929 = vxor.u32 %v1923, 2147483648
    %v1930 = vsel %vm1928, %v1922, %v1929
    %vm1931 = vcmp.eq.s32.totalorder %v1926, 2
    %v1932 = vxor.u32 %v1922, 2147483648
    %v1933 = vsel %vm1931, %v1932, %v1923
    %v1934 = vsel %vm1927, %v1930, %v1933
    %v1935 = vsel %vm1924, nan, %v1934
    %v1936 = vand.u32 2147483647, %v462
    %vm1937 = vcmp.le.f32.partialorder %v1936, 0.7853982
    %vm1938 = vcmp.lt.s32.totalorder %v462, 0
    %v1939 = vand.u32 %v462, 2139095040
    %v1940 = vshrl.u32 %v1939, 23
    %v1941 = vsub.s32 %v1940, 127
    %v1942 = vand.u32 2147483647, %v462
    %v1943 = vand.u32 %v1942, 8388607
    %v1944 = vor.u32 %v1943, 8388608
    %v1945 = vsub.s32 0, %v1944
    %v1946 = vadd.s32 %v1941, 1
    %vm1947 = vcmp.gt.s32.totalorder %v1946, 0
    %v1948 = vsel %vm1947, %v1946, 0
    %v1949 = vshrl.u32 %v1948, 5
    %v1950 = vand.u32 %v1948, 31
    %v1951 = vsub.s32 32, %v1950
    %v1952 = vshrl.u32 683565275, %v1951
    %v1953 = vshll.u32 683565275, %v1950
    %v1954 = vshrl.u32 2475754826, %v1951
    %v1955 = vor.u32 %v1953, %v1954
    %v1956 = vshll.u32 2475754826, %v1950
    %v1957 = vshrl.u32 2131351028, %v1951
    %v1958 = vor.u32 %v1956, %v1957
    %v1959 = vshll.u32 2131351028, %v1950
    %v1960 = vshrl.u32 2102212464, %v1951
    %v1961 = vor.u32 %v1959, %v1960
    %v1962 = vshll.u32 2102212464, %v1950
    %v1963 = vshrl.u32 920167782, %v1951
    %v1964 = vor.u32 %v1962, %v1963
    %v1965 = vshll.u32 920167782, %v1950
    %v1966 = vshrl.u32 1326507024, %v1951
    %v1967 = vor.u32 %v1965, %v1966
    %vm1968 = vcmp.lt.s32.totalorder %v1949, 1
    %vm1969 = vcmp.lt.s32.totalorder %v1949, 2
    %vm1970 = vcmp.lt.s32.totalorder %v1949, 3
    %vm1971 = vcmp.lt.s32.totalorder %v1949, 4
    %v1972 = vsel %vm1968, %v1952, %v1955
    %v1973 = vsel %vm1971, %v1961, 2102212464
    %v1974 = vsel %vm1970, %v1958, %v1973
    %v1975 = vsel %vm1969, %v1972, %v1974
    %v1976 = vsel %vm1968, %v1955, %v1958
    %v1977 = vsel %vm1971, %v1964, 920167782
    %v1978 = vsel %vm1970, %v1961, %v1977
    %v1979 = vsel %vm1969, %v1976, %v1978
    %v1980 = vsel %vm1968, %v1958, %v1961
    %v1981 = vsel %vm1971, %v1967, 1326507024
    %v1982 = vsel %vm1970, %v1964, %v1981
    %v1983 = vsel %vm1969, %v1980, %v1982
    %v1984 = vshll.u32 %v1944, 8
    %v1985 = vmul.u32.u64.compose %v1984, %v1983
    %v1986 = vextract.low.u32 %v1985
    %v1987 = vextract.high.u32 %v1985
    %v1988 = vmul.u32.u64.compose %v1984, %v1979
    %v1989 = vextract.low.u32 %v1988
    %v1990 = vextract.high.u32 %v1988
    %v1991 = vmul.u32 %v1984, %v1975
    %v1992 = vadd.s32 %v1987, %v1989
    %vm1993 = vc.u32 %v1987, %v1989
    %v1994 = vadd.s32 %v1990, 1
    %v1995 = vsel %vm1993, %v1994, %v1990
    %v1996 = vadd.s32 %v1991, %v1995
    %v1997 = vadd.s32 %v1996, 536870912
    %v1998 = vshrl.u32 %v1997, 30
    %v1999 = vshll.u32 %v1998, 30
    %v2000 = vsub.s32 %v1996, %v1999
    %vm2001 = vcmp.lt.s32.totalorder %v2000, 0
    %v2002 = vsub.s32 0, %v2000
    %v2003 = vsel %vm2001, %v2002, %v2000
    %v2004 = vclz %v2003
    %v2005 = vsub.s32 %v2004, 2
    %vm2006 = vcmp.gt.s32.totalorder 0, %v2005
    %v2007 = vsel %vm2006, 0, %v2005
    %v2008 = vsub.s32 32, %v2007
    %v2009 = vshll.u32 %v2000, %v2007
    %v2010 = vshrl.u32 %v1992, %v2008
    %v2011 = vor.u32 %v2009, %v2010
    %v2012 = vsub.s32 4294967266, %v2007
    %v2013 = vadd.s32 %v2012, 127
    %v2014 = vshll.u32 %v2013, 23
    %v2015 = vor.u32 4788187, %v2014
    %v2016 = vand.u32 2147483647, %v2015
    %v2018 = vcvt.s32.f32 %v2011
    %v2019 = vmul.f32 %v2018, %v2016
    %v2020 = vxor.u32 %v2019, 2147483648
    %v2021 = vsel %vm1938, %v2020, %v2019
    %v2022 = vsub.s32 4, %v1998
    %v2023 = vsel %vm1938, %v2022, %v1998
    %v2024 = vsel %vm1937, %v462, %v2021
    %v2025 = vsel %vm1937, 0, %v2023
    %v2026 = vcosq.f32.pop %v2024
    %v2027 = vsinq.f32.pop %v2024
    %vm2028 = vweird.f32 %v462
    %v2029 = vadd.s32 %v2025, 3
    %v2030 = vand.u32 %v2029, 3
    %vm2031 = vcmp.lt.s32.totalorder %v2030, 2
    %vm2032 = vcmp.eq.s32.totalorder %v2030, 0
    %v2033 = vxor.u32 %v2027, 2147483648
    %v2034 = vsel %vm2032, %v2026, %v2033
    %vm2035 = vcmp.eq.s32.totalorder %v2030, 2
    %v2036 = vxor.u32 %v2026, 2147483648
    %v2037 = vsel %vm2035, %v2036, %v2027
    %v2038 = vsel %vm2031, %v2034, %v2037
    %v2039 = vsel %vm2028, nan, %v2038
    %v2040 = vand.u32 2147483647, %v463
    %vm2041 = vcmp.le.f32.partialorder %v2040, 0.7853982
    %vm2042 = vcmp.lt.s32.totalorder %v463, 0
    %v2043 = vand.u32 %v463, 2139095040
    %v2044 = vshrl.u32 %v2043, 23
    %v2045 = vsub.s32 %v2044, 127
    %v2046 = vand.u32 2147483647, %v463
    %v2047 = vand.u32 %v2046, 8388607
    %v2048 = vor.u32 %v2047, 8388608
    %v2049 = vsub.s32 0, %v2048
    %v2050 = vadd.s32 %v2045, 1
    %vm2051 = vcmp.gt.s32.totalorder %v2050, 0
    %v2052 = vsel %vm2051, %v2050, 0
    %v2053 = vshrl.u32 %v2052, 5
    %v2054 = vand.u32 %v2052, 31
    %v2055 = vsub.s32 32, %v2054
    %v2056 = vshrl.u32 683565275, %v2055
    %v2057 = vshll.u32 683565275, %v2054
    %v2058 = vshrl.u32 2475754826, %v2055
    %v2059 = vor.u32 %v2057, %v2058
    %v2060 = vshll.u32 2475754826, %v2054
    %v2061 = vshrl.u32 2131351028, %v2055
    %v2062 = vor.u32 %v2060, %v2061
    %v2063 = vshll.u32 2131351028, %v2054
    %v2064 = vshrl.u32 2102212464, %v2055
    %v2065 = vor.u32 %v2063, %v2064
    %v2066 = vshll.u32 2102212464, %v2054
    %v2067 = vshrl.u32 920167782, %v2055
    %v2068 = vor.u32 %v2066, %v2067
    %v2069 = vshll.u32 920167782, %v2054
    %v2070 = vshrl.u32 1326507024, %v2055
    %v2071 = vor.u32 %v2069, %v2070
    %vm2072 = vcmp.lt.s32.totalorder %v2053, 1
    %vm2073 = vcmp.lt.s32.totalorder %v2053, 2
    %vm2074 = vcmp.lt.s32.totalorder %v2053, 3
    %vm2075 = vcmp.lt.s32.totalorder %v2053, 4
    %v2076 = vsel %vm2072, %v2056, %v2059
    %v2077 = vsel %vm2075, %v2065, 2102212464
    %v2078 = vsel %vm2074, %v2062, %v2077
    %v2079 = vsel %vm2073, %v2076, %v2078
    %v2080 = vsel %vm2072, %v2059, %v2062
    %v2081 = vsel %vm2075, %v2068, 920167782
    %v2082 = vsel %vm2074, %v2065, %v2081
    %v2083 = vsel %vm2073, %v2080, %v2082
    %v2084 = vsel %vm2072, %v2062, %v2065
    %v2085 = vsel %vm2075, %v2071, 1326507024
    %v2086 = vsel %vm2074, %v2068, %v2085
    %v2087 = vsel %vm2073, %v2084, %v2086
    %v2088 = vshll.u32 %v2048, 8
    %v2089 = vmul.u32.u64.compose %v2088, %v2087
    %v2090 = vextract.low.u32 %v2089
    %v2091 = vextract.high.u32 %v2089
    %v2092 = vmul.u32.u64.compose %v2088, %v2083
    %v2093 = vextract.low.u32 %v2092
    %v2094 = vextract.high.u32 %v2092
    %v2095 = vmul.u32 %v2088, %v2079
    %v2096 = vadd.s32 %v2091, %v2093
    %vm2097 = vc.u32 %v2091, %v2093
    %v2098 = vadd.s32 %v2094, 1
    %v2099 = vsel %vm2097, %v2098, %v2094
    %v2100 = vadd.s32 %v2095, %v2099
    %v2101 = vadd.s32 %v2100, 536870912
    %v2102 = vshrl.u32 %v2101, 30
    %v2103 = vshll.u32 %v2102, 30
    %v2104 = vsub.s32 %v2100, %v2103
    %vm2105 = vcmp.lt.s32.totalorder %v2104, 0
    %v2106 = vsub.s32 0, %v2104
    %v2107 = vsel %vm2105, %v2106, %v2104
    %v2108 = vclz %v2107
    %v2109 = vsub.s32 %v2108, 2
    %vm2110 = vcmp.gt.s32.totalorder 0, %v2109
    %v2111 = vsel %vm2110, 0, %v2109
    %v2112 = vsub.s32 32, %v2111
    %v2113 = vshll.u32 %v2104, %v2111
    %v2114 = vshrl.u32 %v2096, %v2112
    %v2115 = vor.u32 %v2113, %v2114
    %v2116 = vsub.s32 4294967266, %v2111
    %v2117 = vadd.s32 %v2116, 127
    %v2118 = vshll.u32 %v2117, 23
    %v2119 = vor.u32 4788187, %v2118
    %v2120 = vand.u32 2147483647, %v2119
    %v2122 = vcvt.s32.f32 %v2115
    %v2123 = vmul.f32 %v2122, %v2120
    %v2124 = vxor.u32 %v2123, 2147483648
    %v2125 = vsel %vm2042, %v2124, %v2123
    %v2126 = vsub.s32 4, %v2102
    %v2127 = vsel %vm2042, %v2126, %v2102
    %v2128 = vsel %vm2041, %v463, %v2125
    %v2129 = vsel %vm2041, 0, %v2127
    %v2130 = vcosq.f32.pop %v2128
    %v2131 = vsinq.f32.pop %v2128
    %vm2132 = vweird.f32 %v463
    %v2133 = vadd.s32 %v2129, 3
    %v2134 = vand.u32 %v2133, 3
    %vm2135 = vcmp.lt.s32.totalorder %v2134, 2
    %vm2136 = vcmp.eq.s32.totalorder %v2134, 0
    %v2137 = vxor.u32 %v2131, 2147483648
    %v2138 = vsel %vm2136, %v2130, %v2137
    %vm2139 = vcmp.eq.s32.totalorder %v2134, 2
    %v2140 = vxor.u32 %v2130, 2147483648
    %v2141 = vsel %vm2139, %v2140, %v2131
    %v2142 = vsel %vm2135, %v2138, %v2141
    %v2143 = vsel %vm2132, nan, %v2142
    %v2144 = vand.u32 2147483647, %v464
    %vm2145 = vcmp.le.f32.partialorder %v2144, 0.7853982
    %vm2146 = vcmp.lt.s32.totalorder %v464, 0
    %v2147 = vand.u32 %v464, 2139095040
    %v2148 = vshrl.u32 %v2147, 23
    %v2149 = vsub.s32 %v2148, 127
    %v2150 = vand.u32 2147483647, %v464
    %v2151 = vand.u32 %v2150, 8388607
    %v2152 = vor.u32 %v2151, 8388608
    %v2153 = vsub.s32 0, %v2152
    %v2154 = vadd.s32 %v2149, 1
    %vm2155 = vcmp.gt.s32.totalorder %v2154, 0
    %v2156 = vsel %vm2155, %v2154, 0
    %v2157 = vshrl.u32 %v2156, 5
    %v2158 = vand.u32 %v2156, 31
    %v2159 = vsub.s32 32, %v2158
    %v2160 = vshrl.u32 683565275, %v2159
    %v2161 = vshll.u32 683565275, %v2158
    %v2162 = vshrl.u32 2475754826, %v2159
    %v2163 = vor.u32 %v2161, %v2162
    %v2164 = vshll.u32 2475754826, %v2158
    %v2165 = vshrl.u32 2131351028, %v2159
    %v2166 = vor.u32 %v2164, %v2165
    %v2167 = vshll.u32 2131351028, %v2158
    %v2168 = vshrl.u32 2102212464, %v2159
    %v2169 = vor.u32 %v2167, %v2168
    %v2170 = vshll.u32 2102212464, %v2158
    %v2171 = vshrl.u32 920167782, %v2159
    %v2172 = vor.u32 %v2170, %v2171
    %v2173 = vshll.u32 920167782, %v2158
    %v2174 = vshrl.u32 1326507024, %v2159
    %v2175 = vor.u32 %v2173, %v2174
    %vm2176 = vcmp.lt.s32.totalorder %v2157, 1
    %vm2177 = vcmp.lt.s32.totalorder %v2157, 2
    %vm2178 = vcmp.lt.s32.totalorder %v2157, 3
    %vm2179 = vcmp.lt.s32.totalorder %v2157, 4
    %v2180 = vsel %vm2176, %v2160, %v2163
    %v2181 = vsel %vm2179, %v2169, 2102212464
    %v2182 = vsel %vm2178, %v2166, %v2181
    %v2183 = vsel %vm2177, %v2180, %v2182
    %v2184 = vsel %vm2176, %v2163, %v2166
    %v2185 = vsel %vm2179, %v2172, 920167782
    %v2186 = vsel %vm2178, %v2169, %v2185
    %v2187 = vsel %vm2177, %v2184, %v2186
    %v2188 = vsel %vm2176, %v2166, %v2169
    %v2189 = vsel %vm2179, %v2175, 1326507024
    %v2190 = vsel %vm2178, %v2172, %v2189
    %v2191 = vsel %vm2177, %v2188, %v2190
    %v2192 = vshll.u32 %v2152, 8
    %v2193 = vmul.u32.u64.compose %v2192, %v2191
    %v2194 = vextract.low.u32 %v2193
    %v2195 = vextract.high.u32 %v2193
    %v2196 = vmul.u32.u64.compose %v2192, %v2187
    %v2197 = vextract.low.u32 %v2196
    %v2198 = vextract.high.u32 %v2196
    %v2199 = vmul.u32 %v2192, %v2183
    %v2200 = vadd.s32 %v2195, %v2197
    %vm2201 = vc.u32 %v2195, %v2197
    %v2202 = vadd.s32 %v2198, 1
    %v2203 = vsel %vm2201, %v2202, %v2198
    %v2204 = vadd.s32 %v2199, %v2203
    %v2205 = vadd.s32 %v2204, 536870912
    %v2206 = vshrl.u32 %v2205, 30
    %v2207 = vshll.u32 %v2206, 30
    %v2208 = vsub.s32 %v2204, %v2207
    %vm2209 = vcmp.lt.s32.totalorder %v2208, 0
    %v2210 = vsub.s32 0, %v2208
    %v2211 = vsel %vm2209, %v2210, %v2208
    %v2212 = vclz %v2211
    %v2213 = vsub.s32 %v2212, 2
    %vm2214 = vcmp.gt.s32.totalorder 0, %v2213
    %v2215 = vsel %vm2214, 0, %v2213
    %v2216 = vsub.s32 32, %v2215
    %v2217 = vshll.u32 %v2208, %v2215
    %v2218 = vshrl.u32 %v2200, %v2216
    %v2219 = vor.u32 %v2217, %v2218
    %v2220 = vsub.s32 4294967266, %v2215
    %v2221 = vadd.s32 %v2220, 127
    %v2222 = vshll.u32 %v2221, 23
    %v2223 = vor.u32 4788187, %v2222
    %v2224 = vand.u32 2147483647, %v2223
    %v2226 = vcvt.s32.f32 %v2219
    %v2227 = vmul.f32 %v2226, %v2224
    %v2228 = vxor.u32 %v2227, 2147483648
    %v2229 = vsel %vm2146, %v2228, %v2227
    %v2230 = vsub.s32 4, %v2206
    %v2231 = vsel %vm2146, %v2230, %v2206
    %v2232 = vsel %vm2145, %v464, %v2229
    %v2233 = vsel %vm2145, 0, %v2231
    %v2234 = vcosq.f32.pop %v2232
    %v2235 = vsinq.f32.pop %v2232
    %vm2236 = vweird.f32 %v464
    %v2237 = vadd.s32 %v2233, 3
    %v2238 = vand.u32 %v2237, 3
    %vm2239 = vcmp.lt.s32.totalorder %v2238, 2
    %vm2240 = vcmp.eq.s32.totalorder %v2238, 0
    %v2241 = vxor.u32 %v2235, 2147483648
    %v2242 = vsel %vm2240, %v2234, %v2241
    %vm2243 = vcmp.eq.s32.totalorder %v2238, 2
    %v2244 = vxor.u32 %v2234, 2147483648
    %v2245 = vsel %vm2243, %v2244, %v2235
    %v2246 = vsel %vm2239, %v2242, %v2245
    %v2247 = vsel %vm2236, nan, %v2246
    %v2248 = vand.u32 2147483647, %v465
    %vm2249 = vcmp.le.f32.partialorder %v2248, 0.7853982
    %vm2250 = vcmp.lt.s32.totalorder %v465, 0
    %v2251 = vand.u32 %v465, 2139095040
    %v2252 = vshrl.u32 %v2251, 23
    %v2253 = vsub.s32 %v2252, 127
    %v2254 = vand.u32 2147483647, %v465
    %v2255 = vand.u32 %v2254, 8388607
    %v2256 = vor.u32 %v2255, 8388608
    %v2257 = vsub.s32 0, %v2256
    %v2258 = vadd.s32 %v2253, 1
    %vm2259 = vcmp.gt.s32.totalorder %v2258, 0
    %v2260 = vsel %vm2259, %v2258, 0
    %v2261 = vshrl.u32 %v2260, 5
    %v2262 = vand.u32 %v2260, 31
    %v2263 = vsub.s32 32, %v2262
    %v2264 = vshrl.u32 683565275, %v2263
    %v2265 = vshll.u32 683565275, %v2262
    %v2266 = vshrl.u32 2475754826, %v2263
    %v2267 = vor.u32 %v2265, %v2266
    %v2268 = vshll.u32 2475754826, %v2262
    %v2269 = vshrl.u32 2131351028, %v2263
    %v2270 = vor.u32 %v2268, %v2269
    %v2271 = vshll.u32 2131351028, %v2262
    %v2272 = vshrl.u32 2102212464, %v2263
    %v2273 = vor.u32 %v2271, %v2272
    %v2274 = vshll.u32 2102212464, %v2262
    %v2275 = vshrl.u32 920167782, %v2263
    %v2276 = vor.u32 %v2274, %v2275
    %v2277 = vshll.u32 920167782, %v2262
    %v2278 = vshrl.u32 1326507024, %v2263
    %v2279 = vor.u32 %v2277, %v2278
    %vm2280 = vcmp.lt.s32.totalorder %v2261, 1
    %vm2281 = vcmp.lt.s32.totalorder %v2261, 2
    %vm2282 = vcmp.lt.s32.totalorder %v2261, 3
    %vm2283 = vcmp.lt.s32.totalorder %v2261, 4
    %v2284 = vsel %vm2280, %v2264, %v2267
    %v2285 = vsel %vm2283, %v2273, 2102212464
    %v2286 = vsel %vm2282, %v2270, %v2285
    %v2287 = vsel %vm2281, %v2284, %v2286
    %v2288 = vsel %vm2280, %v2267, %v2270
    %v2289 = vsel %vm2283, %v2276, 920167782
    %v2290 = vsel %vm2282, %v2273, %v2289
    %v2291 = vsel %vm2281, %v2288, %v2290
    %v2292 = vsel %vm2280, %v2270, %v2273
    %v2293 = vsel %vm2283, %v2279, 1326507024
    %v2294 = vsel %vm2282, %v2276, %v2293
    %v2295 = vsel %vm2281, %v2292, %v2294
    %v2296 = vshll.u32 %v2256, 8
    %v2297 = vmul.u32.u64.compose %v2296, %v2295
    %v2298 = vextract.low.u32 %v2297
    %v2299 = vextract.high.u32 %v2297
    %v2300 = vmul.u32.u64.compose %v2296, %v2291
    %v2301 = vextract.low.u32 %v2300
    %v2302 = vextract.high.u32 %v2300
    %v2303 = vmul.u32 %v2296, %v2287
    %v2304 = vadd.s32 %v2299, %v2301
    %vm2305 = vc.u32 %v2299, %v2301
    %v2306 = vadd.s32 %v2302, 1
    %v2307 = vsel %vm2305, %v2306, %v2302
    %v2308 = vadd.s32 %v2303, %v2307
    %v2309 = vadd.s32 %v2308, 536870912
    %v2310 = vshrl.u32 %v2309, 30
    %v2311 = vshll.u32 %v2310, 30
    %v2312 = vsub.s32 %v2308, %v2311
    %vm2313 = vcmp.lt.s32.totalorder %v2312, 0
    %v2314 = vsub.s32 0, %v2312
    %v2315 = vsel %vm2313, %v2314, %v2312
    %v2316 = vclz %v2315
    %v2317 = vsub.s32 %v2316, 2
    %vm2318 = vcmp.gt.s32.totalorder 0, %v2317
    %v2319 = vsel %vm2318, 0, %v2317
    %v2320 = vsub.s32 32, %v2319
    %v2321 = vshll.u32 %v2312, %v2319
    %v2322 = vshrl.u32 %v2304, %v2320
    %v2323 = vor.u32 %v2321, %v2322
    %v2324 = vsub.s32 4294967266, %v2319
    %v2325 = vadd.s32 %v2324, 127
    %v2326 = vshll.u32 %v2325, 23
    %v2327 = vor.u32 4788187, %v2326
    %v2328 = vand.u32 2147483647, %v2327
    %v2330 = vcvt.s32.f32 %v2323
    %v2331 = vmul.f32 %v2330, %v2328
    %v2332 = vxor.u32 %v2331, 2147483648
    %v2333 = vsel %vm2250, %v2332, %v2331
    %v2334 = vsub.s32 4, %v2310
    %v2335 = vsel %vm2250, %v2334, %v2310
    %v2336 = vsel %vm2249, %v465, %v2333
    %v2337 = vsel %vm2249, 0, %v2335
    %v2338 = vcosq.f32.pop %v2336
    %v2339 = vsinq.f32.pop %v2336
    %vm2340 = vweird.f32 %v465
    %v2341 = vadd.s32 %v2337, 3
    %v2342 = vand.u32 %v2341, 3
    %vm2343 = vcmp.lt.s32.totalorder %v2342, 2
    %vm2344 = vcmp.eq.s32.totalorder %v2342, 0
    %v2345 = vxor.u32 %v2339, 2147483648
    %v2346 = vsel %vm2344, %v2338, %v2345
    %vm2347 = vcmp.eq.s32.totalorder %v2342, 2
    %v2348 = vxor.u32 %v2338, 2147483648
    %v2349 = vsel %vm2347, %v2348, %v2339
    %v2350 = vsel %vm2343, %v2346, %v2349
    %v2351 = vsel %vm2340, nan, %v2350
    %v2352 = vand.u32 2147483647, %v466
    %vm2353 = vcmp.le.f32.partialorder %v2352, 0.7853982
    %vm2354 = vcmp.lt.s32.totalorder %v466, 0
    %v2355 = vand.u32 %v466, 2139095040
    %v2356 = vshrl.u32 %v2355, 23
    %v2357 = vsub.s32 %v2356, 127
    %v2358 = vand.u32 2147483647, %v466
    %v2359 = vand.u32 %v2358, 8388607
    %v2360 = vor.u32 %v2359, 8388608
    %v2361 = vsub.s32 0, %v2360
    %v2362 = vadd.s32 %v2357, 1
    %vm2363 = vcmp.gt.s32.totalorder %v2362, 0
    %v2364 = vsel %vm2363, %v2362, 0
    %v2365 = vshrl.u32 %v2364, 5
    %v2366 = vand.u32 %v2364, 31
    %v2367 = vsub.s32 32, %v2366
    %v2368 = vshrl.u32 683565275, %v2367
    %v2369 = vshll.u32 683565275, %v2366
    %v2370 = vshrl.u32 2475754826, %v2367
    %v2371 = vor.u32 %v2369, %v2370
    %v2372 = vshll.u32 2475754826, %v2366
    %v2373 = vshrl.u32 2131351028, %v2367
    %v2374 = vor.u32 %v2372, %v2373
    %v2375 = vshll.u32 2131351028, %v2366
    %v2376 = vshrl.u32 2102212464, %v2367
    %v2377 = vor.u32 %v2375, %v2376
    %v2378 = vshll.u32 2102212464, %v2366
    %v2379 = vshrl.u32 920167782, %v2367
    %v2380 = vor.u32 %v2378, %v2379
    %v2381 = vshll.u32 920167782, %v2366
    %v2382 = vshrl.u32 1326507024, %v2367
    %v2383 = vor.u32 %v2381, %v2382
    %vm2384 = vcmp.lt.s32.totalorder %v2365, 1
    %vm2385 = vcmp.lt.s32.totalorder %v2365, 2
    %vm2386 = vcmp.lt.s32.totalorder %v2365, 3
    %vm2387 = vcmp.lt.s32.totalorder %v2365, 4
    %v2388 = vsel %vm2384, %v2368, %v2371
    %v2389 = vsel %vm2387, %v2377, 2102212464
    %v2390 = vsel %vm2386, %v2374, %v2389
    %v2391 = vsel %vm2385, %v2388, %v2390
    %v2392 = vsel %vm2384, %v2371, %v2374
    %v2393 = vsel %vm2387, %v2380, 920167782
    %v2394 = vsel %vm2386, %v2377, %v2393
    %v2395 = vsel %vm2385, %v2392, %v2394
    %v2396 = vsel %vm2384, %v2374, %v2377
    %v2397 = vsel %vm2387, %v2383, 1326507024
    %v2398 = vsel %vm2386, %v2380, %v2397
    %v2399 = vsel %vm2385, %v2396, %v2398
    %v2400 = vshll.u32 %v2360, 8
    %v2401 = vmul.u32.u64.compose %v2400, %v2399
    %v2402 = vextract.low.u32 %v2401
    %v2403 = vextract.high.u32 %v2401
    %v2404 = vmul.u32.u64.compose %v2400, %v2395
    %v2405 = vextract.low.u32 %v2404
    %v2406 = vextract.high.u32 %v2404
    %v2407 = vmul.u32 %v2400, %v2391
    %v2408 = vadd.s32 %v2403, %v2405
    %vm2409 = vc.u32 %v2403, %v2405
    %v2410 = vadd.s32 %v2406, 1
    %v2411 = vsel %vm2409, %v2410, %v2406
    %v2412 = vadd.s32 %v2407, %v2411
    %v2413 = vadd.s32 %v2412, 536870912
    %v2414 = vshrl.u32 %v2413, 30
    %v2415 = vshll.u32 %v2414, 30
    %v2416 = vsub.s32 %v2412, %v2415
    %vm2417 = vcmp.lt.s32.totalorder %v2416, 0
    %v2418 = vsub.s32 0, %v2416
    %v2419 = vsel %vm2417, %v2418, %v2416
    %v2420 = vclz %v2419
    %v2421 = vsub.s32 %v2420, 2
    %vm2422 = vcmp.gt.s32.totalorder 0, %v2421
    %v2423 = vsel %vm2422, 0, %v2421
    %v2424 = vsub.s32 32, %v2423
    %v2425 = vshll.u32 %v2416, %v2423
    %v2426 = vshrl.u32 %v2408, %v2424
    %v2427 = vor.u32 %v2425, %v2426
    %v2428 = vsub.s32 4294967266, %v2423
    %v2429 = vadd.s32 %v2428, 127
    %v2430 = vshll.u32 %v2429, 23
    %v2431 = vor.u32 4788187, %v2430
    %v2432 = vand.u32 2147483647, %v2431
    %v2434 = vcvt.s32.f32 %v2427
    %v2435 = vmul.f32 %v2434, %v2432
    %v2436 = vxor.u32 %v2435, 2147483648
    %v2437 = vsel %vm2354, %v2436, %v2435
    %v2438 = vsub.s32 4, %v2414
    %v2439 = vsel %vm2354, %v2438, %v2414
    %v2440 = vsel %vm2353, %v466, %v2437
    %v2441 = vsel %vm2353, 0, %v2439
    %v2442 = vcosq.f32.pop %v2440
    %v2443 = vsinq.f32.pop %v2440
    %vm2444 = vweird.f32 %v466
    %v2445 = vadd.s32 %v2441, 3
    %v2446 = vand.u32 %v2445, 3
    %vm2447 = vcmp.lt.s32.totalorder %v2446, 2
    %vm2448 = vcmp.eq.s32.totalorder %v2446, 0
    %v2449 = vxor.u32 %v2443, 2147483648
    %v2450 = vsel %vm2448, %v2442, %v2449
    %vm2451 = vcmp.eq.s32.totalorder %v2446, 2
    %v2452 = vxor.u32 %v2442, 2147483648
    %v2453 = vsel %vm2451, %v2452, %v2443
    %v2454 = vsel %vm2447, %v2450, %v2453
    %v2455 = vsel %vm2444, nan, %v2454
    %v2456 = vand.u32 2147483647, %v467
    %vm2457 = vcmp.le.f32.partialorder %v2456, 0.7853982
    %vm2458 = vcmp.lt.s32.totalorder %v467, 0
    %v2459 = vand.u32 %v467, 2139095040
    %v2460 = vshrl.u32 %v2459, 23
    %v2461 = vsub.s32 %v2460, 127
    %v2462 = vand.u32 2147483647, %v467
    %v2463 = vand.u32 %v2462, 8388607
    %v2464 = vor.u32 %v2463, 8388608
    %v2465 = vsub.s32 0, %v2464
    %v2466 = vadd.s32 %v2461, 1
    %vm2467 = vcmp.gt.s32.totalorder %v2466, 0
    %v2468 = vsel %vm2467, %v2466, 0
    %v2469 = vshrl.u32 %v2468, 5
    %v2470 = vand.u32 %v2468, 31
    %v2471 = vsub.s32 32, %v2470
    %v2472 = vshrl.u32 683565275, %v2471
    %v2473 = vshll.u32 683565275, %v2470
    %v2474 = vshrl.u32 2475754826, %v2471
    %v2475 = vor.u32 %v2473, %v2474
    %v2476 = vshll.u32 2475754826, %v2470
    %v2477 = vshrl.u32 2131351028, %v2471
    %v2478 = vor.u32 %v2476, %v2477
    %v2479 = vshll.u32 2131351028, %v2470
    %v2480 = vshrl.u32 2102212464, %v2471
    %v2481 = vor.u32 %v2479, %v2480
    %v2482 = vshll.u32 2102212464, %v2470
    %v2483 = vshrl.u32 920167782, %v2471
    %v2484 = vor.u32 %v2482, %v2483
    %v2485 = vshll.u32 920167782, %v2470
    %v2486 = vshrl.u32 1326507024, %v2471
    %v2487 = vor.u32 %v2485, %v2486
    %vm2488 = vcmp.lt.s32.totalorder %v2469, 1
    %vm2489 = vcmp.lt.s32.totalorder %v2469, 2
    %vm2490 = vcmp.lt.s32.totalorder %v2469, 3
    %vm2491 = vcmp.lt.s32.totalorder %v2469, 4
    %v2492 = vsel %vm2488, %v2472, %v2475
    %v2493 = vsel %vm2491, %v2481, 2102212464
    %v2494 = vsel %vm2490, %v2478, %v2493
    %v2495 = vsel %vm2489, %v2492, %v2494
    %v2496 = vsel %vm2488, %v2475, %v2478
    %v2497 = vsel %vm2491, %v2484, 920167782
    %v2498 = vsel %vm2490, %v2481, %v2497
    %v2499 = vsel %vm2489, %v2496, %v2498
    %v2500 = vsel %vm2488, %v2478, %v2481
    %v2501 = vsel %vm2491, %v2487, 1326507024
    %v2502 = vsel %vm2490, %v2484, %v2501
    %v2503 = vsel %vm2489, %v2500, %v2502
    %v2504 = vshll.u32 %v2464, 8
    %v2505 = vmul.u32.u64.compose %v2504, %v2503
    %v2506 = vextract.low.u32 %v2505
    %v2507 = vextract.high.u32 %v2505
    %v2508 = vmul.u32.u64.compose %v2504, %v2499
    %v2509 = vextract.low.u32 %v2508
    %v2510 = vextract.high.u32 %v2508
    %v2511 = vmul.u32 %v2504, %v2495
    %v2512 = vadd.s32 %v2507, %v2509
    %vm2513 = vc.u32 %v2507, %v2509
    %v2514 = vadd.s32 %v2510, 1
    %v2515 = vsel %vm2513, %v2514, %v2510
    %v2516 = vadd.s32 %v2511, %v2515
    %v2517 = vadd.s32 %v2516, 536870912
    %v2518 = vshrl.u32 %v2517, 30
    %v2519 = vshll.u32 %v2518, 30
    %v2520 = vsub.s32 %v2516, %v2519
    %vm2521 = vcmp.lt.s32.totalorder %v2520, 0
    %v2522 = vsub.s32 0, %v2520
    %v2523 = vsel %vm2521, %v2522, %v2520
    %v2524 = vclz %v2523
    %v2525 = vsub.s32 %v2524, 2
    %vm2526 = vcmp.gt.s32.totalorder 0, %v2525
    %v2527 = vsel %vm2526, 0, %v2525
    %v2528 = vsub.s32 32, %v2527
    %v2529 = vshll.u32 %v2520, %v2527
    %v2530 = vshrl.u32 %v2512, %v2528
    %v2531 = vor.u32 %v2529, %v2530
    %v2532 = vsub.s32 4294967266, %v2527
    %v2533 = vadd.s32 %v2532, 127
    %v2534 = vshll.u32 %v2533, 23
    %v2535 = vor.u32 4788187, %v2534
    %v2536 = vand.u32 2147483647, %v2535
    %v2538 = vcvt.s32.f32 %v2531
    %v2539 = vmul.f32 %v2538, %v2536
    %v2540 = vxor.u32 %v2539, 2147483648
    %v2541 = vsel %vm2458, %v2540, %v2539
    %v2542 = vsub.s32 4, %v2518
    %v2543 = vsel %vm2458, %v2542, %v2518
    %v2544 = vsel %vm2457, %v467, %v2541
    %v2545 = vsel %vm2457, 0, %v2543
    %v2546 = vcosq.f32.pop %v2544
    %v2547 = vsinq.f32.pop %v2544
    %vm2548 = vweird.f32 %v467
    %v2549 = vadd.s32 %v2545, 3
    %v2550 = vand.u32 %v2549, 3
    %vm2551 = vcmp.lt.s32.totalorder %v2550, 2
    %vm2552 = vcmp.eq.s32.totalorder %v2550, 0
    %v2553 = vxor.u32 %v2547, 2147483648
    %v2554 = vsel %vm2552, %v2546, %v2553
    %vm2555 = vcmp.eq.s32.totalorder %v2550, 2
    %v2556 = vxor.u32 %v2546, 2147483648
    %v2557 = vsel %vm2555, %v2556, %v2547
    %v2558 = vsel %vm2551, %v2554, %v2557
    %v2559 = vsel %vm2548, nan, %v2558
    %v2560 = vand.u32 2147483647, %v468
    %vm2561 = vcmp.le.f32.partialorder %v2560, 0.7853982
    %vm2562 = vcmp.lt.s32.totalorder %v468, 0
    %v2563 = vand.u32 %v468, 2139095040
    %v2564 = vshrl.u32 %v2563, 23
    %v2565 = vsub.s32 %v2564, 127
    %v2566 = vand.u32 2147483647, %v468
    %v2567 = vand.u32 %v2566, 8388607
    %v2568 = vor.u32 %v2567, 8388608
    %v2569 = vsub.s32 0, %v2568
    %v2570 = vadd.s32 %v2565, 1
    %vm2571 = vcmp.gt.s32.totalorder %v2570, 0
    %v2572 = vsel %vm2571, %v2570, 0
    %v2573 = vshrl.u32 %v2572, 5
    %v2574 = vand.u32 %v2572, 31
    %v2575 = vsub.s32 32, %v2574
    %v2576 = vshrl.u32 683565275, %v2575
    %v2577 = vshll.u32 683565275, %v2574
    %v2578 = vshrl.u32 2475754826, %v2575
    %v2579 = vor.u32 %v2577, %v2578
    %v2580 = vshll.u32 2475754826, %v2574
    %v2581 = vshrl.u32 2131351028, %v2575
    %v2582 = vor.u32 %v2580, %v2581
    %v2583 = vshll.u32 2131351028, %v2574
    %v2584 = vshrl.u32 2102212464, %v2575
    %v2585 = vor.u32 %v2583, %v2584
    %v2586 = vshll.u32 2102212464, %v2574
    %v2587 = vshrl.u32 920167782, %v2575
    %v2588 = vor.u32 %v2586, %v2587
    %v2589 = vshll.u32 920167782, %v2574
    %v2590 = vshrl.u32 1326507024, %v2575
    %v2591 = vor.u32 %v2589, %v2590
    %vm2592 = vcmp.lt.s32.totalorder %v2573, 1
    %vm2593 = vcmp.lt.s32.totalorder %v2573, 2
    %vm2594 = vcmp.lt.s32.totalorder %v2573, 3
    %vm2595 = vcmp.lt.s32.totalorder %v2573, 4
    %v2596 = vsel %vm2592, %v2576, %v2579
    %v2597 = vsel %vm2595, %v2585, 2102212464
    %v2598 = vsel %vm2594, %v2582, %v2597
    %v2599 = vsel %vm2593, %v2596, %v2598
    %v2600 = vsel %vm2592, %v2579, %v2582
    %v2601 = vsel %vm2595, %v2588, 920167782
    %v2602 = vsel %vm2594, %v2585, %v2601
    %v2603 = vsel %vm2593, %v2600, %v2602
    %v2604 = vsel %vm2592, %v2582, %v2585
    %v2605 = vsel %vm2595, %v2591, 1326507024
    %v2606 = vsel %vm2594, %v2588, %v2605
    %v2607 = vsel %vm2593, %v2604, %v2606
    %v2608 = vshll.u32 %v2568, 8
    %v2609 = vmul.u32.u64.compose %v2608, %v2607
    %v2610 = vextract.low.u32 %v2609
    %v2611 = vextract.high.u32 %v2609
    %v2612 = vmul.u32.u64.compose %v2608, %v2603
    %v2613 = vextract.low.u32 %v2612
    %v2614 = vextract.high.u32 %v2612
    %v2615 = vmul.u32 %v2608, %v2599
    %v2616 = vadd.s32 %v2611, %v2613
    %vm2617 = vc.u32 %v2611, %v2613
    %v2618 = vadd.s32 %v2614, 1
    %v2619 = vsel %vm2617, %v2618, %v2614
    %v2620 = vadd.s32 %v2615, %v2619
    %v2621 = vadd.s32 %v2620, 536870912
    %v2622 = vshrl.u32 %v2621, 30
    %v2623 = vshll.u32 %v2622, 30
    %v2624 = vsub.s32 %v2620, %v2623
    %vm2625 = vcmp.lt.s32.totalorder %v2624, 0
    %v2626 = vsub.s32 0, %v2624
    %v2627 = vsel %vm2625, %v2626, %v2624
    %v2628 = vclz %v2627
    %v2629 = vsub.s32 %v2628, 2
    %vm2630 = vcmp.gt.s32.totalorder 0, %v2629
    %v2631 = vsel %vm2630, 0, %v2629
    %v2632 = vsub.s32 32, %v2631
    %v2633 = vshll.u32 %v2624, %v2631
    %v2634 = vshrl.u32 %v2616, %v2632
    %v2635 = vor.u32 %v2633, %v2634
    %v2636 = vsub.s32 4294967266, %v2631
    %v2637 = vadd.s32 %v2636, 127
    %v2638 = vshll.u32 %v2637, 23
    %v2639 = vor.u32 4788187, %v2638
    %v2640 = vand.u32 2147483647, %v2639
    %v2642 = vcvt.s32.f32 %v2635
    %v2643 = vmul.f32 %v2642, %v2640
    %v2644 = vxor.u32 %v2643, 2147483648
    %v2645 = vsel %vm2562, %v2644, %v2643
    %v2646 = vsub.s32 4, %v2622
    %v2647 = vsel %vm2562, %v2646, %v2622
    %v2648 = vsel %vm2561, %v468, %v2645
    %v2649 = vsel %vm2561, 0, %v2647
    %v2650 = vcosq.f32.pop %v2648
    %v2651 = vsinq.f32.pop %v2648
    %vm2652 = vweird.f32 %v468
    %v2653 = vadd.s32 %v2649, 3
    %v2654 = vand.u32 %v2653, 3
    %vm2655 = vcmp.lt.s32.totalorder %v2654, 2
    %vm2656 = vcmp.eq.s32.totalorder %v2654, 0
    %v2657 = vxor.u32 %v2651, 2147483648
    %v2658 = vsel %vm2656, %v2650, %v2657
    %vm2659 = vcmp.eq.s32.totalorder %v2654, 2
    %v2660 = vxor.u32 %v2650, 2147483648
    %v2661 = vsel %vm2659, %v2660, %v2651
    %v2662 = vsel %vm2655, %v2658, %v2661
    %v2663 = vsel %vm2652, nan, %v2662
    %v2664 = vand.u32 2147483647, %v469
    %vm2665 = vcmp.le.f32.partialorder %v2664, 0.7853982
    %vm2666 = vcmp.lt.s32.totalorder %v469, 0
    %v2667 = vand.u32 %v469, 2139095040
    %v2668 = vshrl.u32 %v2667, 23
    %v2669 = vsub.s32 %v2668, 127
    %v2670 = vand.u32 2147483647, %v469
    %v2671 = vand.u32 %v2670, 8388607
    %v2672 = vor.u32 %v2671, 8388608
    %v2673 = vsub.s32 0, %v2672
    %v2674 = vadd.s32 %v2669, 1
    %vm2675 = vcmp.gt.s32.totalorder %v2674, 0
    %v2676 = vsel %vm2675, %v2674, 0
    %v2677 = vshrl.u32 %v2676, 5
    %v2678 = vand.u32 %v2676, 31
    %v2679 = vsub.s32 32, %v2678
    %v2680 = vshrl.u32 683565275, %v2679
    %v2681 = vshll.u32 683565275, %v2678
    %v2682 = vshrl.u32 2475754826, %v2679
    %v2683 = vor.u32 %v2681, %v2682
    %v2684 = vshll.u32 2475754826, %v2678
    %v2685 = vshrl.u32 2131351028, %v2679
    %v2686 = vor.u32 %v2684, %v2685
    %v2687 = vshll.u32 2131351028, %v2678
    %v2688 = vshrl.u32 2102212464, %v2679
    %v2689 = vor.u32 %v2687, %v2688
    %v2690 = vshll.u32 2102212464, %v2678
    %v2691 = vshrl.u32 920167782, %v2679
    %v2692 = vor.u32 %v2690, %v2691
    %v2693 = vshll.u32 920167782, %v2678
    %v2694 = vshrl.u32 1326507024, %v2679
    %v2695 = vor.u32 %v2693, %v2694
    %vm2696 = vcmp.lt.s32.totalorder %v2677, 1
    %vm2697 = vcmp.lt.s32.totalorder %v2677, 2
    %vm2698 = vcmp.lt.s32.totalorder %v2677, 3
    %vm2699 = vcmp.lt.s32.totalorder %v2677, 4
    %v2700 = vsel %vm2696, %v2680, %v2683
    %v2701 = vsel %vm2699, %v2689, 2102212464
    %v2702 = vsel %vm2698, %v2686, %v2701
    %v2703 = vsel %vm2697, %v2700, %v2702
    %v2704 = vsel %vm2696, %v2683, %v2686
    %v2705 = vsel %vm2699, %v2692, 920167782
    %v2706 = vsel %vm2698, %v2689, %v2705
    %v2707 = vsel %vm2697, %v2704, %v2706
    %v2708 = vsel %vm2696, %v2686, %v2689
    %v2709 = vsel %vm2699, %v2695, 1326507024
    %v2710 = vsel %vm2698, %v2692, %v2709
    %v2711 = vsel %vm2697, %v2708, %v2710
    %v2712 = vshll.u32 %v2672, 8
    %v2713 = vmul.u32.u64.compose %v2712, %v2711
    %v2714 = vextract.low.u32 %v2713
    %v2715 = vextract.high.u32 %v2713
    %v2716 = vmul.u32.u64.compose %v2712, %v2707
    %v2717 = vextract.low.u32 %v2716
    %v2718 = vextract.high.u32 %v2716
    %v2719 = vmul.u32 %v2712, %v2703
    %v2720 = vadd.s32 %v2715, %v2717
    %vm2721 = vc.u32 %v2715, %v2717
    %v2722 = vadd.s32 %v2718, 1
    %v2723 = vsel %vm2721, %v2722, %v2718
    %v2724 = vadd.s32 %v2719, %v2723
    %v2725 = vadd.s32 %v2724, 536870912
    %v2726 = vshrl.u32 %v2725, 30
    %v2727 = vshll.u32 %v2726, 30
    %v2728 = vsub.s32 %v2724, %v2727
    %vm2729 = vcmp.lt.s32.totalorder %v2728, 0
    %v2730 = vsub.s32 0, %v2728
    %v2731 = vsel %vm2729, %v2730, %v2728
    %v2732 = vclz %v2731
    %v2733 = vsub.s32 %v2732, 2
    %vm2734 = vcmp.gt.s32.totalorder 0, %v2733
    %v2735 = vsel %vm2734, 0, %v2733
    %v2736 = vsub.s32 32, %v2735
    %v2737 = vshll.u32 %v2728, %v2735
    %v2738 = vshrl.u32 %v2720, %v2736
    %v2739 = vor.u32 %v2737, %v2738
    %v2740 = vsub.s32 4294967266, %v2735
    %v2741 = vadd.s32 %v2740, 127
    %v2742 = vshll.u32 %v2741, 23
    %v2743 = vor.u32 4788187, %v2742
    %v2744 = vand.u32 2147483647, %v2743
    %v2746 = vcvt.s32.f32 %v2739
    %v2747 = vmul.f32 %v2746, %v2744
    %v2748 = vxor.u32 %v2747, 2147483648
    %v2749 = vsel %vm2666, %v2748, %v2747
    %v2750 = vsub.s32 4, %v2726
    %v2751 = vsel %vm2666, %v2750, %v2726
    %v2752 = vsel %vm2665, %v469, %v2749
    %v2753 = vsel %vm2665, 0, %v2751
    %v2754 = vcosq.f32.pop %v2752
    %v2755 = vsinq.f32.pop %v2752
    %vm2756 = vweird.f32 %v469
    %v2757 = vadd.s32 %v2753, 3
    %v2758 = vand.u32 %v2757, 3
    %vm2759 = vcmp.lt.s32.totalorder %v2758, 2
    %vm2760 = vcmp.eq.s32.totalorder %v2758, 0
    %v2761 = vxor.u32 %v2755, 2147483648
    %v2762 = vsel %vm2760, %v2754, %v2761
    %vm2763 = vcmp.eq.s32.totalorder %v2758, 2
    %v2764 = vxor.u32 %v2754, 2147483648
    %v2765 = vsel %vm2763, %v2764, %v2755
    %v2766 = vsel %vm2759, %v2762, %v2765
    %v2767 = vsel %vm2756, nan, %v2766
    %v2768 = vand.u32 2147483647, %v470
    %vm2769 = vcmp.le.f32.partialorder %v2768, 0.7853982
    %vm2770 = vcmp.lt.s32.totalorder %v470, 0
    %v2771 = vand.u32 %v470, 2139095040
    %v2772 = vshrl.u32 %v2771, 23
    %v2773 = vsub.s32 %v2772, 127
    %v2774 = vand.u32 2147483647, %v470
    %v2775 = vand.u32 %v2774, 8388607
    %v2776 = vor.u32 %v2775, 8388608
    %v2777 = vsub.s32 0, %v2776
    %v2778 = vadd.s32 %v2773, 1
    %vm2779 = vcmp.gt.s32.totalorder %v2778, 0
    %v2780 = vsel %vm2779, %v2778, 0
    %v2781 = vshrl.u32 %v2780, 5
    %v2782 = vand.u32 %v2780, 31
    %v2783 = vsub.s32 32, %v2782
    %v2784 = vshrl.u32 683565275, %v2783
    %v2785 = vshll.u32 683565275, %v2782
    %v2786 = vshrl.u32 2475754826, %v2783
    %v2787 = vor.u32 %v2785, %v2786
    %v2788 = vshll.u32 2475754826, %v2782
    %v2789 = vshrl.u32 2131351028, %v2783
    %v2790 = vor.u32 %v2788, %v2789
    %v2791 = vshll.u32 2131351028, %v2782
    %v2792 = vshrl.u32 2102212464, %v2783
    %v2793 = vor.u32 %v2791, %v2792
    %v2794 = vshll.u32 2102212464, %v2782
    %v2795 = vshrl.u32 920167782, %v2783
    %v2796 = vor.u32 %v2794, %v2795
    %v2797 = vshll.u32 920167782, %v2782
    %v2798 = vshrl.u32 1326507024, %v2783
    %v2799 = vor.u32 %v2797, %v2798
    %vm2800 = vcmp.lt.s32.totalorder %v2781, 1
    %vm2801 = vcmp.lt.s32.totalorder %v2781, 2
    %vm2802 = vcmp.lt.s32.totalorder %v2781, 3
    %vm2803 = vcmp.lt.s32.totalorder %v2781, 4
    %v2804 = vsel %vm2800, %v2784, %v2787
    %v2805 = vsel %vm2803, %v2793, 2102212464
    %v2806 = vsel %vm2802, %v2790, %v2805
    %v2807 = vsel %vm2801, %v2804, %v2806
    %v2808 = vsel %vm2800, %v2787, %v2790
    %v2809 = vsel %vm2803, %v2796, 920167782
    %v2810 = vsel %vm2802, %v2793, %v2809
    %v2811 = vsel %vm2801, %v2808, %v2810
    %v2812 = vsel %vm2800, %v2790, %v2793
    %v2813 = vsel %vm2803, %v2799, 1326507024
    %v2814 = vsel %vm2802, %v2796, %v2813
    %v2815 = vsel %vm2801, %v2812, %v2814
    %v2816 = vshll.u32 %v2776, 8
    %v2817 = vmul.u32.u64.compose %v2816, %v2815
    %v2818 = vextract.low.u32 %v2817
    %v2819 = vextract.high.u32 %v2817
    %v2820 = vmul.u32.u64.compose %v2816, %v2811
    %v2821 = vextract.low.u32 %v2820
    %v2822 = vextract.high.u32 %v2820
    %v2823 = vmul.u32 %v2816, %v2807
    %v2824 = vadd.s32 %v2819, %v2821
    %vm2825 = vc.u32 %v2819, %v2821
    %v2826 = vadd.s32 %v2822, 1
    %v2827 = vsel %vm2825, %v2826, %v2822
    %v2828 = vadd.s32 %v2823, %v2827
    %v2829 = vadd.s32 %v2828, 536870912
    %v2830 = vshrl.u32 %v2829, 30
    %v2831 = vshll.u32 %v2830, 30
    %v2832 = vsub.s32 %v2828, %v2831
    %vm2833 = vcmp.lt.s32.totalorder %v2832, 0
    %v2834 = vsub.s32 0, %v2832
    %v2835 = vsel %vm2833, %v2834, %v2832
    %v2836 = vclz %v2835
    %v2837 = vsub.s32 %v2836, 2
    %vm2838 = vcmp.gt.s32.totalorder 0, %v2837
    %v2839 = vsel %vm2838, 0, %v2837
    %v2840 = vsub.s32 32, %v2839
    %v2841 = vshll.u32 %v2832, %v2839
    %v2842 = vshrl.u32 %v2824, %v2840
    %v2843 = vor.u32 %v2841, %v2842
    %v2844 = vsub.s32 4294967266, %v2839
    %v2845 = vadd.s32 %v2844, 127
    %v2846 = vshll.u32 %v2845, 23
    %v2847 = vor.u32 4788187, %v2846
    %v2848 = vand.u32 2147483647, %v2847
    %v2850 = vcvt.s32.f32 %v2843
    %v2851 = vmul.f32 %v2850, %v2848
    %v2852 = vxor.u32 %v2851, 2147483648
    %v2853 = vsel %vm2770, %v2852, %v2851
    %v2854 = vsub.s32 4, %v2830
    %v2855 = vsel %vm2770, %v2854, %v2830
    %v2856 = vsel %vm2769, %v470, %v2853
    %v2857 = vsel %vm2769, 0, %v2855
    %v2858 = vcosq.f32.pop %v2856
    %v2859 = vsinq.f32.pop %v2856
    %vm2860 = vweird.f32 %v470
    %v2861 = vadd.s32 %v2857, 3
    %v2862 = vand.u32 %v2861, 3
    %vm2863 = vcmp.lt.s32.totalorder %v2862, 2
    %vm2864 = vcmp.eq.s32.totalorder %v2862, 0
    %v2865 = vxor.u32 %v2859, 2147483648
    %v2866 = vsel %vm2864, %v2858, %v2865
    %vm2867 = vcmp.eq.s32.totalorder %v2862, 2
    %v2868 = vxor.u32 %v2858, 2147483648
    %v2869 = vsel %vm2867, %v2868, %v2859
    %v2870 = vsel %vm2863, %v2866, %v2869
    %v2871 = vsel %vm2860, nan, %v2870
    %v2872 = vand.u32 2147483647, %v471
    %vm2873 = vcmp.le.f32.partialorder %v2872, 0.7853982
    %vm2874 = vcmp.lt.s32.totalorder %v471, 0
    %v2875 = vand.u32 %v471, 2139095040
    %v2876 = vshrl.u32 %v2875, 23
    %v2877 = vsub.s32 %v2876, 127
    %v2878 = vand.u32 2147483647, %v471
    %v2879 = vand.u32 %v2878, 8388607
    %v2880 = vor.u32 %v2879, 8388608
    %v2881 = vsub.s32 0, %v2880
    %v2882 = vadd.s32 %v2877, 1
    %vm2883 = vcmp.gt.s32.totalorder %v2882, 0
    %v2884 = vsel %vm2883, %v2882, 0
    %v2885 = vshrl.u32 %v2884, 5
    %v2886 = vand.u32 %v2884, 31
    %v2887 = vsub.s32 32, %v2886
    %v2888 = vshrl.u32 683565275, %v2887
    %v2889 = vshll.u32 683565275, %v2886
    %v2890 = vshrl.u32 2475754826, %v2887
    %v2891 = vor.u32 %v2889, %v2890
    %v2892 = vshll.u32 2475754826, %v2886
    %v2893 = vshrl.u32 2131351028, %v2887
    %v2894 = vor.u32 %v2892, %v2893
    %v2895 = vshll.u32 2131351028, %v2886
    %v2896 = vshrl.u32 2102212464, %v2887
    %v2897 = vor.u32 %v2895, %v2896
    %v2898 = vshll.u32 2102212464, %v2886
    %v2899 = vshrl.u32 920167782, %v2887
    %v2900 = vor.u32 %v2898, %v2899
    %v2901 = vshll.u32 920167782, %v2886
    %v2902 = vshrl.u32 1326507024, %v2887
    %v2903 = vor.u32 %v2901, %v2902
    %vm2904 = vcmp.lt.s32.totalorder %v2885, 1
    %vm2905 = vcmp.lt.s32.totalorder %v2885, 2
    %vm2906 = vcmp.lt.s32.totalorder %v2885, 3
    %vm2907 = vcmp.lt.s32.totalorder %v2885, 4
    %v2908 = vsel %vm2904, %v2888, %v2891
    %v2909 = vsel %vm2907, %v2897, 2102212464
    %v2910 = vsel %vm2906, %v2894, %v2909
    %v2911 = vsel %vm2905, %v2908, %v2910
    %v2912 = vsel %vm2904, %v2891, %v2894
    %v2913 = vsel %vm2907, %v2900, 920167782
    %v2914 = vsel %vm2906, %v2897, %v2913
    %v2915 = vsel %vm2905, %v2912, %v2914
    %v2916 = vsel %vm2904, %v2894, %v2897
    %v2917 = vsel %vm2907, %v2903, 1326507024
    %v2918 = vsel %vm2906, %v2900, %v2917
    %v2919 = vsel %vm2905, %v2916, %v2918
    %v2920 = vshll.u32 %v2880, 8
    %v2921 = vmul.u32.u64.compose %v2920, %v2919
    %v2922 = vextract.low.u32 %v2921
    %v2923 = vextract.high.u32 %v2921
    %v2924 = vmul.u32.u64.compose %v2920, %v2915
    %v2925 = vextract.low.u32 %v2924
    %v2926 = vextract.high.u32 %v2924
    %v2927 = vmul.u32 %v2920, %v2911
    %v2928 = vadd.s32 %v2923, %v2925
    %vm2929 = vc.u32 %v2923, %v2925
    %v2930 = vadd.s32 %v2926, 1
    %v2931 = vsel %vm2929, %v2930, %v2926
    %v2932 = vadd.s32 %v2927, %v2931
    %v2933 = vadd.s32 %v2932, 536870912
    %v2934 = vshrl.u32 %v2933, 30
    %v2935 = vshll.u32 %v2934, 30
    %v2936 = vsub.s32 %v2932, %v2935
    %vm2937 = vcmp.lt.s32.totalorder %v2936, 0
    %v2938 = vsub.s32 0, %v2936
    %v2939 = vsel %vm2937, %v2938, %v2936
    %v2940 = vclz %v2939
    %v2941 = vsub.s32 %v2940, 2
    %vm2942 = vcmp.gt.s32.totalorder 0, %v2941
    %v2943 = vsel %vm2942, 0, %v2941
    %v2944 = vsub.s32 32, %v2943
    %v2945 = vshll.u32 %v2936, %v2943
    %v2946 = vshrl.u32 %v2928, %v2944
    %v2947 = vor.u32 %v2945, %v2946
    %v2948 = vsub.s32 4294967266, %v2943
    %v2949 = vadd.s32 %v2948, 127
    %v2950 = vshll.u32 %v2949, 23
    %v2951 = vor.u32 4788187, %v2950
    %v2952 = vand.u32 2147483647, %v2951
    %v2954 = vcvt.s32.f32 %v2947
    %v2955 = vmul.f32 %v2954, %v2952
    %v2956 = vxor.u32 %v2955, 2147483648
    %v2957 = vsel %vm2874, %v2956, %v2955
    %v2958 = vsub.s32 4, %v2934
    %v2959 = vsel %vm2874, %v2958, %v2934
    %v2960 = vsel %vm2873, %v471, %v2957
    %v2961 = vsel %vm2873, 0, %v2959
    %v2962 = vcosq.f32.pop %v2960
    %v2963 = vsinq.f32.pop %v2960
    %vm2964 = vweird.f32 %v471
    %v2965 = vadd.s32 %v2961, 3
    %v2966 = vand.u32 %v2965, 3
    %vm2967 = vcmp.lt.s32.totalorder %v2966, 2
    %vm2968 = vcmp.eq.s32.totalorder %v2966, 0
    %v2969 = vxor.u32 %v2963, 2147483648
    %v2970 = vsel %vm2968, %v2962, %v2969
    %vm2971 = vcmp.eq.s32.totalorder %v2966, 2
    %v2972 = vxor.u32 %v2962, 2147483648
    %v2973 = vsel %vm2971, %v2972, %v2963
    %v2974 = vsel %vm2967, %v2970, %v2973
    %v2975 = vsel %vm2964, nan, %v2974
    %v2976 = vand.u32 2147483647, %v472
    %vm2977 = vcmp.le.f32.partialorder %v2976, 0.7853982
    %vm2978 = vcmp.lt.s32.totalorder %v472, 0
    %v2979 = vand.u32 %v472, 2139095040
    %v2980 = vshrl.u32 %v2979, 23
    %v2981 = vsub.s32 %v2980, 127
    %v2982 = vand.u32 2147483647, %v472
    %v2983 = vand.u32 %v2982, 8388607
    %v2984 = vor.u32 %v2983, 8388608
    %v2985 = vsub.s32 0, %v2984
    %v2986 = vadd.s32 %v2981, 1
    %vm2987 = vcmp.gt.s32.totalorder %v2986, 0
    %v2988 = vsel %vm2987, %v2986, 0
    %v2989 = vshrl.u32 %v2988, 5
    %v2990 = vand.u32 %v2988, 31
    %v2991 = vsub.s32 32, %v2990
    %v2992 = vshrl.u32 683565275, %v2991
    %v2993 = vshll.u32 683565275, %v2990
    %v2994 = vshrl.u32 2475754826, %v2991
    %v2995 = vor.u32 %v2993, %v2994
    %v2996 = vshll.u32 2475754826, %v2990
    %v2997 = vshrl.u32 2131351028, %v2991
    %v2998 = vor.u32 %v2996, %v2997
    %v2999 = vshll.u32 2131351028, %v2990
    %v3000 = vshrl.u32 2102212464, %v2991
    %v3001 = vor.u32 %v2999, %v3000
    %v3002 = vshll.u32 2102212464, %v2990
    %v3003 = vshrl.u32 920167782, %v2991
    %v3004 = vor.u32 %v3002, %v3003
    %v3005 = vshll.u32 920167782, %v2990
    %v3006 = vshrl.u32 1326507024, %v2991
    %v3007 = vor.u32 %v3005, %v3006
    %vm3008 = vcmp.lt.s32.totalorder %v2989, 1
    %vm3009 = vcmp.lt.s32.totalorder %v2989, 2
    %vm3010 = vcmp.lt.s32.totalorder %v2989, 3
    %vm3011 = vcmp.lt.s32.totalorder %v2989, 4
    %v3012 = vsel %vm3008, %v2992, %v2995
    %v3013 = vsel %vm3011, %v3001, 2102212464
    %v3014 = vsel %vm3010, %v2998, %v3013
    %v3015 = vsel %vm3009, %v3012, %v3014
    %v3016 = vsel %vm3008, %v2995, %v2998
    %v3017 = vsel %vm3011, %v3004, 920167782
    %v3018 = vsel %vm3010, %v3001, %v3017
    %v3019 = vsel %vm3009, %v3016, %v3018
    %v3020 = vsel %vm3008, %v2998, %v3001
    %v3021 = vsel %vm3011, %v3007, 1326507024
    %v3022 = vsel %vm3010, %v3004, %v3021
    %v3023 = vsel %vm3009, %v3020, %v3022
    %v3024 = vshll.u32 %v2984, 8
    %v3025 = vmul.u32.u64.compose %v3024, %v3023
    %v3026 = vextract.low.u32 %v3025
    %v3027 = vextract.high.u32 %v3025
    %v3028 = vmul.u32.u64.compose %v3024, %v3019
    %v3029 = vextract.low.u32 %v3028
    %v3030 = vextract.high.u32 %v3028
    %v3031 = vmul.u32 %v3024, %v3015
    %v3032 = vadd.s32 %v3027, %v3029
    %vm3033 = vc.u32 %v3027, %v3029
    %v3034 = vadd.s32 %v3030, 1
    %v3035 = vsel %vm3033, %v3034, %v3030
    %v3036 = vadd.s32 %v3031, %v3035
    %v3037 = vadd.s32 %v3036, 536870912
    %v3038 = vshrl.u32 %v3037, 30
    %v3039 = vshll.u32 %v3038, 30
    %v3040 = vsub.s32 %v3036, %v3039
    %vm3041 = vcmp.lt.s32.totalorder %v3040, 0
    %v3042 = vsub.s32 0, %v3040
    %v3043 = vsel %vm3041, %v3042, %v3040
    %v3044 = vclz %v3043
    %v3045 = vsub.s32 %v3044, 2
    %vm3046 = vcmp.gt.s32.totalorder 0, %v3045
    %v3047 = vsel %vm3046, 0, %v3045
    %v3048 = vsub.s32 32, %v3047
    %v3049 = vshll.u32 %v3040, %v3047
    %v3050 = vshrl.u32 %v3032, %v3048
    %v3051 = vor.u32 %v3049, %v3050
    %v3052 = vsub.s32 4294967266, %v3047
    %v3053 = vadd.s32 %v3052, 127
    %v3054 = vshll.u32 %v3053, 23
    %v3055 = vor.u32 4788187, %v3054
    %v3056 = vand.u32 2147483647, %v3055
    %v3058 = vcvt.s32.f32 %v3051
    %v3059 = vmul.f32 %v3058, %v3056
    %v3060 = vxor.u32 %v3059, 2147483648
    %v3061 = vsel %vm2978, %v3060, %v3059
    %v3062 = vsub.s32 4, %v3038
    %v3063 = vsel %vm2978, %v3062, %v3038
    %v3064 = vsel %vm2977, %v472, %v3061
    %v3065 = vsel %vm2977, 0, %v3063
    %v3066 = vcosq.f32.pop %v3064
    %v3067 = vsinq.f32.pop %v3064
    %vm3068 = vweird.f32 %v472
    %v3069 = vadd.s32 %v3065, 3
    %v3070 = vand.u32 %v3069, 3
    %vm3071 = vcmp.lt.s32.totalorder %v3070, 2
    %vm3072 = vcmp.eq.s32.totalorder %v3070, 0
    %v3073 = vxor.u32 %v3067, 2147483648
    %v3074 = vsel %vm3072, %v3066, %v3073
    %vm3075 = vcmp.eq.s32.totalorder %v3070, 2
    %v3076 = vxor.u32 %v3066, 2147483648
    %v3077 = vsel %vm3075, %v3076, %v3067
    %v3078 = vsel %vm3071, %v3074, %v3077
    %v3079 = vsel %vm3068, nan, %v3078
    %v3080 = vand.u32 2147483647, %v473
    %vm3081 = vcmp.le.f32.partialorder %v3080, 0.7853982
    %vm3082 = vcmp.lt.s32.totalorder %v473, 0
    %v3083 = vand.u32 %v473, 2139095040
    %v3084 = vshrl.u32 %v3083, 23
    %v3085 = vsub.s32 %v3084, 127
    %v3086 = vand.u32 2147483647, %v473
    %v3087 = vand.u32 %v3086, 8388607
    %v3088 = vor.u32 %v3087, 8388608
    %v3089 = vsub.s32 0, %v3088
    %v3090 = vadd.s32 %v3085, 1
    %vm3091 = vcmp.gt.s32.totalorder %v3090, 0
    %v3092 = vsel %vm3091, %v3090, 0
    %v3093 = vshrl.u32 %v3092, 5
    %v3094 = vand.u32 %v3092, 31
    %v3095 = vsub.s32 32, %v3094
    %v3096 = vshrl.u32 683565275, %v3095
    %v3097 = vshll.u32 683565275, %v3094
    %v3098 = vshrl.u32 2475754826, %v3095
    %v3099 = vor.u32 %v3097, %v3098
    %v3100 = vshll.u32 2475754826, %v3094
    %v3101 = vshrl.u32 2131351028, %v3095
    %v3102 = vor.u32 %v3100, %v3101
    %v3103 = vshll.u32 2131351028, %v3094
    %v3104 = vshrl.u32 2102212464, %v3095
    %v3105 = vor.u32 %v3103, %v3104
    %v3106 = vshll.u32 2102212464, %v3094
    %v3107 = vshrl.u32 920167782, %v3095
    %v3108 = vor.u32 %v3106, %v3107
    %v3109 = vshll.u32 920167782, %v3094
    %v3110 = vshrl.u32 1326507024, %v3095
    %v3111 = vor.u32 %v3109, %v3110
    %vm3112 = vcmp.lt.s32.totalorder %v3093, 1
    %vm3113 = vcmp.lt.s32.totalorder %v3093, 2
    %vm3114 = vcmp.lt.s32.totalorder %v3093, 3
    %vm3115 = vcmp.lt.s32.totalorder %v3093, 4
    %v3116 = vsel %vm3112, %v3096, %v3099
    %v3117 = vsel %vm3115, %v3105, 2102212464
    %v3118 = vsel %vm3114, %v3102, %v3117
    %v3119 = vsel %vm3113, %v3116, %v3118
    %v3120 = vsel %vm3112, %v3099, %v3102
    %v3121 = vsel %vm3115, %v3108, 920167782
    %v3122 = vsel %vm3114, %v3105, %v3121
    %v3123 = vsel %vm3113, %v3120, %v3122
    %v3124 = vsel %vm3112, %v3102, %v3105
    %v3125 = vsel %vm3115, %v3111, 1326507024
    %v3126 = vsel %vm3114, %v3108, %v3125
    %v3127 = vsel %vm3113, %v3124, %v3126
    %v3128 = vshll.u32 %v3088, 8
    %v3129 = vmul.u32.u64.compose %v3128, %v3127
    %v3130 = vextract.low.u32 %v3129
    %v3131 = vextract.high.u32 %v3129
    %v3132 = vmul.u32.u64.compose %v3128, %v3123
    %v3133 = vextract.low.u32 %v3132
    %v3134 = vextract.high.u32 %v3132
    %v3135 = vmul.u32 %v3128, %v3119
    %v3136 = vadd.s32 %v3131, %v3133
    %vm3137 = vc.u32 %v3131, %v3133
    %v3138 = vadd.s32 %v3134, 1
    %v3139 = vsel %vm3137, %v3138, %v3134
    %v3140 = vadd.s32 %v3135, %v3139
    %v3141 = vadd.s32 %v3140, 536870912
    %v3142 = vshrl.u32 %v3141, 30
    %v3143 = vshll.u32 %v3142, 30
    %v3144 = vsub.s32 %v3140, %v3143
    %vm3145 = vcmp.lt.s32.totalorder %v3144, 0
    %v3146 = vsub.s32 0, %v3144
    %v3147 = vsel %vm3145, %v3146, %v3144
    %v3148 = vclz %v3147
    %v3149 = vsub.s32 %v3148, 2
    %vm3150 = vcmp.gt.s32.totalorder 0, %v3149
    %v3151 = vsel %vm3150, 0, %v3149
    %v3152 = vsub.s32 32, %v3151
    %v3153 = vshll.u32 %v3144, %v3151
    %v3154 = vshrl.u32 %v3136, %v3152
    %v3155 = vor.u32 %v3153, %v3154
    %v3156 = vsub.s32 4294967266, %v3151
    %v3157 = vadd.s32 %v3156, 127
    %v3158 = vshll.u32 %v3157, 23
    %v3159 = vor.u32 4788187, %v3158
    %v3160 = vand.u32 2147483647, %v3159
    %v3162 = vcvt.s32.f32 %v3155
    %v3163 = vmul.f32 %v3162, %v3160
    %v3164 = vxor.u32 %v3163, 2147483648
    %v3165 = vsel %vm3082, %v3164, %v3163
    %v3166 = vsub.s32 4, %v3142
    %v3167 = vsel %vm3082, %v3166, %v3142
    %v3168 = vsel %vm3081, %v473, %v3165
    %v3169 = vsel %vm3081, 0, %v3167
    %v3170 = vcosq.f32.pop %v3168
    %v3171 = vsinq.f32.pop %v3168
    %vm3172 = vweird.f32 %v473
    %v3173 = vadd.s32 %v3169, 3
    %v3174 = vand.u32 %v3173, 3
    %vm3175 = vcmp.lt.s32.totalorder %v3174, 2
    %vm3176 = vcmp.eq.s32.totalorder %v3174, 0
    %v3177 = vxor.u32 %v3171, 2147483648
    %v3178 = vsel %vm3176, %v3170, %v3177
    %vm3179 = vcmp.eq.s32.totalorder %v3174, 2
    %v3180 = vxor.u32 %v3170, 2147483648
    %v3181 = vsel %vm3179, %v3180, %v3171
    %v3182 = vsel %vm3175, %v3178, %v3181
    %v3183 = vsel %vm3172, nan, %v3182
    %v3184 = vand.u32 2147483647, %v474
    %vm3185 = vcmp.le.f32.partialorder %v3184, 0.7853982
    %vm3186 = vcmp.lt.s32.totalorder %v474, 0
    %v3187 = vand.u32 %v474, 2139095040
    %v3188 = vshrl.u32 %v3187, 23
    %v3189 = vsub.s32 %v3188, 127
    %v3190 = vand.u32 2147483647, %v474
    %v3191 = vand.u32 %v3190, 8388607
    %v3192 = vor.u32 %v3191, 8388608
    %v3193 = vsub.s32 0, %v3192
    %v3194 = vadd.s32 %v3189, 1
    %vm3195 = vcmp.gt.s32.totalorder %v3194, 0
    %v3196 = vsel %vm3195, %v3194, 0
    %v3197 = vshrl.u32 %v3196, 5
    %v3198 = vand.u32 %v3196, 31
    %v3199 = vsub.s32 32, %v3198
    %v3200 = vshrl.u32 683565275, %v3199
    %v3201 = vshll.u32 683565275, %v3198
    %v3202 = vshrl.u32 2475754826, %v3199
    %v3203 = vor.u32 %v3201, %v3202
    %v3204 = vshll.u32 2475754826, %v3198
    %v3205 = vshrl.u32 2131351028, %v3199
    %v3206 = vor.u32 %v3204, %v3205
    %v3207 = vshll.u32 2131351028, %v3198
    %v3208 = vshrl.u32 2102212464, %v3199
    %v3209 = vor.u32 %v3207, %v3208
    %v3210 = vshll.u32 2102212464, %v3198
    %v3211 = vshrl.u32 920167782, %v3199
    %v3212 = vor.u32 %v3210, %v3211
    %v3213 = vshll.u32 920167782, %v3198
    %v3214 = vshrl.u32 1326507024, %v3199
    %v3215 = vor.u32 %v3213, %v3214
    %vm3216 = vcmp.lt.s32.totalorder %v3197, 1
    %vm3217 = vcmp.lt.s32.totalorder %v3197, 2
    %vm3218 = vcmp.lt.s32.totalorder %v3197, 3
    %vm3219 = vcmp.lt.s32.totalorder %v3197, 4
    %v3220 = vsel %vm3216, %v3200, %v3203
    %v3221 = vsel %vm3219, %v3209, 2102212464
    %v3222 = vsel %vm3218, %v3206, %v3221
    %v3223 = vsel %vm3217, %v3220, %v3222
    %v3224 = vsel %vm3216, %v3203, %v3206
    %v3225 = vsel %vm3219, %v3212, 920167782
    %v3226 = vsel %vm3218, %v3209, %v3225
    %v3227 = vsel %vm3217, %v3224, %v3226
    %v3228 = vsel %vm3216, %v3206, %v3209
    %v3229 = vsel %vm3219, %v3215, 1326507024
    %v3230 = vsel %vm3218, %v3212, %v3229
    %v3231 = vsel %vm3217, %v3228, %v3230
    %v3232 = vshll.u32 %v3192, 8
    %v3233 = vmul.u32.u64.compose %v3232, %v3231
    %v3234 = vextract.low.u32 %v3233
    %v3235 = vextract.high.u32 %v3233
    %v3236 = vmul.u32.u64.compose %v3232, %v3227
    %v3237 = vextract.low.u32 %v3236
    %v3238 = vextract.high.u32 %v3236
    %v3239 = vmul.u32 %v3232, %v3223
    %v3240 = vadd.s32 %v3235, %v3237
    %vm3241 = vc.u32 %v3235, %v3237
    %v3242 = vadd.s32 %v3238, 1
    %v3243 = vsel %vm3241, %v3242, %v3238
    %v3244 = vadd.s32 %v3239, %v3243
    %v3245 = vadd.s32 %v3244, 536870912
    %v3246 = vshrl.u32 %v3245, 30
    %v3247 = vshll.u32 %v3246, 30
    %v3248 = vsub.s32 %v3244, %v3247
    %vm3249 = vcmp.lt.s32.totalorder %v3248, 0
    %v3250 = vsub.s32 0, %v3248
    %v3251 = vsel %vm3249, %v3250, %v3248
    %v3252 = vclz %v3251
    %v3253 = vsub.s32 %v3252, 2
    %vm3254 = vcmp.gt.s32.totalorder 0, %v3253
    %v3255 = vsel %vm3254, 0, %v3253
    %v3256 = vsub.s32 32, %v3255
    %v3257 = vshll.u32 %v3248, %v3255
    %v3258 = vshrl.u32 %v3240, %v3256
    %v3259 = vor.u32 %v3257, %v3258
    %v3260 = vsub.s32 4294967266, %v3255
    %v3261 = vadd.s32 %v3260, 127
    %v3262 = vshll.u32 %v3261, 23
    %v3263 = vor.u32 4788187, %v3262
    %v3264 = vand.u32 2147483647, %v3263
    %v3266 = vcvt.s32.f32 %v3259
    %v3267 = vmul.f32 %v3266, %v3264
    %v3268 = vxor.u32 %v3267, 2147483648
    %v3269 = vsel %vm3186, %v3268, %v3267
    %v3270 = vsub.s32 4, %v3246
    %v3271 = vsel %vm3186, %v3270, %v3246
    %v3272 = vsel %vm3185, %v474, %v3269
    %v3273 = vsel %vm3185, 0, %v3271
    %v3274 = vcosq.f32.pop %v3272
    %v3275 = vsinq.f32.pop %v3272
    %vm3276 = vweird.f32 %v474
    %v3277 = vadd.s32 %v3273, 3
    %v3278 = vand.u32 %v3277, 3
    %vm3279 = vcmp.lt.s32.totalorder %v3278, 2
    %vm3280 = vcmp.eq.s32.totalorder %v3278, 0
    %v3281 = vxor.u32 %v3275, 2147483648
    %v3282 = vsel %vm3280, %v3274, %v3281
    %vm3283 = vcmp.eq.s32.totalorder %v3278, 2
    %v3284 = vxor.u32 %v3274, 2147483648
    %v3285 = vsel %vm3283, %v3284, %v3275
    %v3286 = vsel %vm3279, %v3282, %v3285
    %v3287 = vsel %vm3276, nan, %v3286
    %v3288 = vand.u32 2147483647, %v475
    %vm3289 = vcmp.le.f32.partialorder %v3288, 0.7853982
    %vm3290 = vcmp.lt.s32.totalorder %v475, 0
    %v3291 = vand.u32 %v475, 2139095040
    %v3292 = vshrl.u32 %v3291, 23
    %v3293 = vsub.s32 %v3292, 127
    %v3294 = vand.u32 2147483647, %v475
    %v3295 = vand.u32 %v3294, 8388607
    %v3296 = vor.u32 %v3295, 8388608
    %v3297 = vsub.s32 0, %v3296
    %v3298 = vadd.s32 %v3293, 1
    %vm3299 = vcmp.gt.s32.totalorder %v3298, 0
    %v3300 = vsel %vm3299, %v3298, 0
    %v3301 = vshrl.u32 %v3300, 5
    %v3302 = vand.u32 %v3300, 31
    %v3303 = vsub.s32 32, %v3302
    %v3304 = vshrl.u32 683565275, %v3303
    %v3305 = vshll.u32 683565275, %v3302
    %v3306 = vshrl.u32 2475754826, %v3303
    %v3307 = vor.u32 %v3305, %v3306
    %v3308 = vshll.u32 2475754826, %v3302
    %v3309 = vshrl.u32 2131351028, %v3303
    %v3310 = vor.u32 %v3308, %v3309
    %v3311 = vshll.u32 2131351028, %v3302
    %v3312 = vshrl.u32 2102212464, %v3303
    %v3313 = vor.u32 %v3311, %v3312
    %v3314 = vshll.u32 2102212464, %v3302
    %v3315 = vshrl.u32 920167782, %v3303
    %v3316 = vor.u32 %v3314, %v3315
    %v3317 = vshll.u32 920167782, %v3302
    %v3318 = vshrl.u32 1326507024, %v3303
    %v3319 = vor.u32 %v3317, %v3318
    %vm3320 = vcmp.lt.s32.totalorder %v3301, 1
    %vm3321 = vcmp.lt.s32.totalorder %v3301, 2
    %vm3322 = vcmp.lt.s32.totalorder %v3301, 3
    %vm3323 = vcmp.lt.s32.totalorder %v3301, 4
    %v3324 = vsel %vm3320, %v3304, %v3307
    %v3325 = vsel %vm3323, %v3313, 2102212464
    %v3326 = vsel %vm3322, %v3310, %v3325
    %v3327 = vsel %vm3321, %v3324, %v3326
    %v3328 = vsel %vm3320, %v3307, %v3310
    %v3329 = vsel %vm3323, %v3316, 920167782
    %v3330 = vsel %vm3322, %v3313, %v3329
    %v3331 = vsel %vm3321, %v3328, %v3330
    %v3332 = vsel %vm3320, %v3310, %v3313
    %v3333 = vsel %vm3323, %v3319, 1326507024
    %v3334 = vsel %vm3322, %v3316, %v3333
    %v3335 = vsel %vm3321, %v3332, %v3334
    %v3336 = vshll.u32 %v3296, 8
    %v3337 = vmul.u32.u64.compose %v3336, %v3335
    %v3338 = vextract.low.u32 %v3337
    %v3339 = vextract.high.u32 %v3337
    %v3340 = vmul.u32.u64.compose %v3336, %v3331
    %v3341 = vextract.low.u32 %v3340
    %v3342 = vextract.high.u32 %v3340
    %v3343 = vmul.u32 %v3336, %v3327
    %v3344 = vadd.s32 %v3339, %v3341
    %vm3345 = vc.u32 %v3339, %v3341
    %v3346 = vadd.s32 %v3342, 1
    %v3347 = vsel %vm3345, %v3346, %v3342
    %v3348 = vadd.s32 %v3343, %v3347
    %v3349 = vadd.s32 %v3348, 536870912
    %v3350 = vshrl.u32 %v3349, 30
    %v3351 = vshll.u32 %v3350, 30
    %v3352 = vsub.s32 %v3348, %v3351
    %vm3353 = vcmp.lt.s32.totalorder %v3352, 0
    %v3354 = vsub.s32 0, %v3352
    %v3355 = vsel %vm3353, %v3354, %v3352
    %v3356 = vclz %v3355
    %v3357 = vsub.s32 %v3356, 2
    %vm3358 = vcmp.gt.s32.totalorder 0, %v3357
    %v3359 = vsel %vm3358, 0, %v3357
    %v3360 = vsub.s32 32, %v3359
    %v3361 = vshll.u32 %v3352, %v3359
    %v3362 = vshrl.u32 %v3344, %v3360
    %v3363 = vor.u32 %v3361, %v3362
    %v3364 = vsub.s32 4294967266, %v3359
    %v3365 = vadd.s32 %v3364, 127
    %v3366 = vshll.u32 %v3365, 23
    %v3367 = vor.u32 4788187, %v3366
    %v3368 = vand.u32 2147483647, %v3367
    %v3370 = vcvt.s32.f32 %v3363
    %v3371 = vmul.f32 %v3370, %v3368
    %v3372 = vxor.u32 %v3371, 2147483648
    %v3373 = vsel %vm3290, %v3372, %v3371
    %v3374 = vsub.s32 4, %v3350
    %v3375 = vsel %vm3290, %v3374, %v3350
    %v3376 = vsel %vm3289, %v475, %v3373
    %v3377 = vsel %vm3289, 0, %v3375
    %v3378 = vcosq.f32.pop %v3376
    %v3379 = vsinq.f32.pop %v3376
    %vm3380 = vweird.f32 %v475
    %v3381 = vadd.s32 %v3377, 3
    %v3382 = vand.u32 %v3381, 3
    %vm3383 = vcmp.lt.s32.totalorder %v3382, 2
    %vm3384 = vcmp.eq.s32.totalorder %v3382, 0
    %v3385 = vxor.u32 %v3379, 2147483648
    %v3386 = vsel %vm3384, %v3378, %v3385
    %vm3387 = vcmp.eq.s32.totalorder %v3382, 2
    %v3388 = vxor.u32 %v3378, 2147483648
    %v3389 = vsel %vm3387, %v3388, %v3379
    %v3390 = vsel %vm3383, %v3386, %v3389
    %v3391 = vsel %vm3380, nan, %v3390
    %v3392 = vand.u32 2147483647, %v476
    %vm3393 = vcmp.le.f32.partialorder %v3392, 0.7853982
    %vm3394 = vcmp.lt.s32.totalorder %v476, 0
    %v3395 = vand.u32 %v476, 2139095040
    %v3396 = vshrl.u32 %v3395, 23
    %v3397 = vsub.s32 %v3396, 127
    %v3398 = vand.u32 2147483647, %v476
    %v3399 = vand.u32 %v3398, 8388607
    %v3400 = vor.u32 %v3399, 8388608
    %v3401 = vsub.s32 0, %v3400
    %v3402 = vadd.s32 %v3397, 1
    %vm3403 = vcmp.gt.s32.totalorder %v3402, 0
    %v3404 = vsel %vm3403, %v3402, 0
    %v3405 = vshrl.u32 %v3404, 5
    %v3406 = vand.u32 %v3404, 31
    %v3407 = vsub.s32 32, %v3406
    %v3408 = vshrl.u32 683565275, %v3407
    %v3409 = vshll.u32 683565275, %v3406
    %v3410 = vshrl.u32 2475754826, %v3407
    %v3411 = vor.u32 %v3409, %v3410
    %v3412 = vshll.u32 2475754826, %v3406
    %v3413 = vshrl.u32 2131351028, %v3407
    %v3414 = vor.u32 %v3412, %v3413
    %v3415 = vshll.u32 2131351028, %v3406
    %v3416 = vshrl.u32 2102212464, %v3407
    %v3417 = vor.u32 %v3415, %v3416
    %v3418 = vshll.u32 2102212464, %v3406
    %v3419 = vshrl.u32 920167782, %v3407
    %v3420 = vor.u32 %v3418, %v3419
    %v3421 = vshll.u32 920167782, %v3406
    %v3422 = vshrl.u32 1326507024, %v3407
    %v3423 = vor.u32 %v3421, %v3422
    %vm3424 = vcmp.lt.s32.totalorder %v3405, 1
    %vm3425 = vcmp.lt.s32.totalorder %v3405, 2
    %vm3426 = vcmp.lt.s32.totalorder %v3405, 3
    %vm3427 = vcmp.lt.s32.totalorder %v3405, 4
    %v3428 = vsel %vm3424, %v3408, %v3411
    %v3429 = vsel %vm3427, %v3417, 2102212464
    %v3430 = vsel %vm3426, %v3414, %v3429
    %v3431 = vsel %vm3425, %v3428, %v3430
    %v3432 = vsel %vm3424, %v3411, %v3414
    %v3433 = vsel %vm3427, %v3420, 920167782
    %v3434 = vsel %vm3426, %v3417, %v3433
    %v3435 = vsel %vm3425, %v3432, %v3434
    %v3436 = vsel %vm3424, %v3414, %v3417
    %v3437 = vsel %vm3427, %v3423, 1326507024
    %v3438 = vsel %vm3426, %v3420, %v3437
    %v3439 = vsel %vm3425, %v3436, %v3438
    %v3440 = vshll.u32 %v3400, 8
    %v3441 = vmul.u32.u64.compose %v3440, %v3439
    %v3442 = vextract.low.u32 %v3441
    %v3443 = vextract.high.u32 %v3441
    %v3444 = vmul.u32.u64.compose %v3440, %v3435
    %v3445 = vextract.low.u32 %v3444
    %v3446 = vextract.high.u32 %v3444
    %v3447 = vmul.u32 %v3440, %v3431
    %v3448 = vadd.s32 %v3443, %v3445
    %vm3449 = vc.u32 %v3443, %v3445
    %v3450 = vadd.s32 %v3446, 1
    %v3451 = vsel %vm3449, %v3450, %v3446
    %v3452 = vadd.s32 %v3447, %v3451
    %v3453 = vadd.s32 %v3452, 536870912
    %v3454 = vshrl.u32 %v3453, 30
    %v3455 = vshll.u32 %v3454, 30
    %v3456 = vsub.s32 %v3452, %v3455
    %vm3457 = vcmp.lt.s32.totalorder %v3456, 0
    %v3458 = vsub.s32 0, %v3456
    %v3459 = vsel %vm3457, %v3458, %v3456
    %v3460 = vclz %v3459
    %v3461 = vsub.s32 %v3460, 2
    %vm3462 = vcmp.gt.s32.totalorder 0, %v3461
    %v3463 = vsel %vm3462, 0, %v3461
    %v3464 = vsub.s32 32, %v3463
    %v3465 = vshll.u32 %v3456, %v3463
    %v3466 = vshrl.u32 %v3448, %v3464
    %v3467 = vor.u32 %v3465, %v3466
    %v3468 = vsub.s32 4294967266, %v3463
    %v3469 = vadd.s32 %v3468, 127
    %v3470 = vshll.u32 %v3469, 23
    %v3471 = vor.u32 4788187, %v3470
    %v3472 = vand.u32 2147483647, %v3471
    %v3474 = vcvt.s32.f32 %v3467
    %v3475 = vmul.f32 %v3474, %v3472
    %v3476 = vxor.u32 %v3475, 2147483648
    %v3477 = vsel %vm3394, %v3476, %v3475
    %v3478 = vsub.s32 4, %v3454
    %v3479 = vsel %vm3394, %v3478, %v3454
    %v3480 = vsel %vm3393, %v476, %v3477
    %v3481 = vsel %vm3393, 0, %v3479
    %v3482 = vcosq.f32.pop %v3480
    %v3483 = vsinq.f32.pop %v3480
    %vm3484 = vweird.f32 %v476
    %v3485 = vadd.s32 %v3481, 3
    %v3486 = vand.u32 %v3485, 3
    %vm3487 = vcmp.lt.s32.totalorder %v3486, 2
    %vm3488 = vcmp.eq.s32.totalorder %v3486, 0
    %v3489 = vxor.u32 %v3483, 2147483648
    %v3490 = vsel %vm3488, %v3482, %v3489
    %vm3491 = vcmp.eq.s32.totalorder %v3486, 2
    %v3492 = vxor.u32 %v3482, 2147483648
    %v3493 = vsel %vm3491, %v3492, %v3483
    %v3494 = vsel %vm3487, %v3490, %v3493
    %v3495 = vsel %vm3484, nan, %v3494
    %v3496 = vand.u32 2147483647, %v477
    %vm3497 = vcmp.le.f32.partialorder %v3496, 0.7853982
    %vm3498 = vcmp.lt.s32.totalorder %v477, 0
    %v3499 = vand.u32 %v477, 2139095040
    %v3500 = vshrl.u32 %v3499, 23
    %v3501 = vsub.s32 %v3500, 127
    %v3502 = vand.u32 2147483647, %v477
    %v3503 = vand.u32 %v3502, 8388607
    %v3504 = vor.u32 %v3503, 8388608
    %v3505 = vsub.s32 0, %v3504
    %v3506 = vadd.s32 %v3501, 1
    %vm3507 = vcmp.gt.s32.totalorder %v3506, 0
    %v3508 = vsel %vm3507, %v3506, 0
    %v3509 = vshrl.u32 %v3508, 5
    %v3510 = vand.u32 %v3508, 31
    %v3511 = vsub.s32 32, %v3510
    %v3512 = vshrl.u32 683565275, %v3511
    %v3513 = vshll.u32 683565275, %v3510
    %v3514 = vshrl.u32 2475754826, %v3511
    %v3515 = vor.u32 %v3513, %v3514
    %v3516 = vshll.u32 2475754826, %v3510
    %v3517 = vshrl.u32 2131351028, %v3511
    %v3518 = vor.u32 %v3516, %v3517
    %v3519 = vshll.u32 2131351028, %v3510
    %v3520 = vshrl.u32 2102212464, %v3511
    %v3521 = vor.u32 %v3519, %v3520
    %v3522 = vshll.u32 2102212464, %v3510
    %v3523 = vshrl.u32 920167782, %v3511
    %v3524 = vor.u32 %v3522, %v3523
    %v3525 = vshll.u32 920167782, %v3510
    %v3526 = vshrl.u32 1326507024, %v3511
    %v3527 = vor.u32 %v3525, %v3526
    %vm3528 = vcmp.lt.s32.totalorder %v3509, 1
    %vm3529 = vcmp.lt.s32.totalorder %v3509, 2
    %vm3530 = vcmp.lt.s32.totalorder %v3509, 3
    %vm3531 = vcmp.lt.s32.totalorder %v3509, 4
    %v3532 = vsel %vm3528, %v3512, %v3515
    %v3533 = vsel %vm3531, %v3521, 2102212464
    %v3534 = vsel %vm3530, %v3518, %v3533
    %v3535 = vsel %vm3529, %v3532, %v3534
    %v3536 = vsel %vm3528, %v3515, %v3518
    %v3537 = vsel %vm3531, %v3524, 920167782
    %v3538 = vsel %vm3530, %v3521, %v3537
    %v3539 = vsel %vm3529, %v3536, %v3538
    %v3540 = vsel %vm3528, %v3518, %v3521
    %v3541 = vsel %vm3531, %v3527, 1326507024
    %v3542 = vsel %vm3530, %v3524, %v3541
    %v3543 = vsel %vm3529, %v3540, %v3542
    %v3544 = vshll.u32 %v3504, 8
    %v3545 = vmul.u32.u64.compose %v3544, %v3543
    %v3546 = vextract.low.u32 %v3545
    %v3547 = vextract.high.u32 %v3545
    %v3548 = vmul.u32.u64.compose %v3544, %v3539
    %v3549 = vextract.low.u32 %v3548
    %v3550 = vextract.high.u32 %v3548
    %v3551 = vmul.u32 %v3544, %v3535
    %v3552 = vadd.s32 %v3547, %v3549
    %vm3553 = vc.u32 %v3547, %v3549
    %v3554 = vadd.s32 %v3550, 1
    %v3555 = vsel %vm3553, %v3554, %v3550
    %v3556 = vadd.s32 %v3551, %v3555
    %v3557 = vadd.s32 %v3556, 536870912
    %v3558 = vshrl.u32 %v3557, 30
    %v3559 = vshll.u32 %v3558, 30
    %v3560 = vsub.s32 %v3556, %v3559
    %vm3561 = vcmp.lt.s32.totalorder %v3560, 0
    %v3562 = vsub.s32 0, %v3560
    %v3563 = vsel %vm3561, %v3562, %v3560
    %v3564 = vclz %v3563
    %v3565 = vsub.s32 %v3564, 2
    %vm3566 = vcmp.gt.s32.totalorder 0, %v3565
    %v3567 = vsel %vm3566, 0, %v3565
    %v3568 = vsub.s32 32, %v3567
    %v3569 = vshll.u32 %v3560, %v3567
    %v3570 = vshrl.u32 %v3552, %v3568
    %v3571 = vor.u32 %v3569, %v3570
    %v3572 = vsub.s32 4294967266, %v3567
    %v3573 = vadd.s32 %v3572, 127
    %v3574 = vshll.u32 %v3573, 23
    %v3575 = vor.u32 4788187, %v3574
    %v3576 = vand.u32 2147483647, %v3575
    %v3578 = vcvt.s32.f32 %v3571
    %v3579 = vmul.f32 %v3578, %v3576
    %v3580 = vxor.u32 %v3579, 2147483648
    %v3581 = vsel %vm3498, %v3580, %v3579
    %v3582 = vsub.s32 4, %v3558
    %v3583 = vsel %vm3498, %v3582, %v3558
    %v3584 = vsel %vm3497, %v477, %v3581
    %v3585 = vsel %vm3497, 0, %v3583
    %v3586 = vcosq.f32.pop %v3584
    %v3587 = vsinq.f32.pop %v3584
    %vm3588 = vweird.f32 %v477
    %v3589 = vadd.s32 %v3585, 3
    %v3590 = vand.u32 %v3589, 3
    %vm3591 = vcmp.lt.s32.totalorder %v3590, 2
    %vm3592 = vcmp.eq.s32.totalorder %v3590, 0
    %v3593 = vxor.u32 %v3587, 2147483648
    %v3594 = vsel %vm3592, %v3586, %v3593
    %vm3595 = vcmp.eq.s32.totalorder %v3590, 2
    %v3596 = vxor.u32 %v3586, 2147483648
    %v3597 = vsel %vm3595, %v3596, %v3587
    %v3598 = vsel %vm3591, %v3594, %v3597
    %v3599 = vsel %vm3588, nan, %v3598
    %v3600 = vand.u32 2147483647, %v478
    %vm3601 = vcmp.le.f32.partialorder %v3600, 0.7853982
    %vm3602 = vcmp.lt.s32.totalorder %v478, 0
    %v3603 = vand.u32 %v478, 2139095040
    %v3604 = vshrl.u32 %v3603, 23
    %v3605 = vsub.s32 %v3604, 127
    %v3606 = vand.u32 2147483647, %v478
    %v3607 = vand.u32 %v3606, 8388607
    %v3608 = vor.u32 %v3607, 8388608
    %v3609 = vsub.s32 0, %v3608
    %v3610 = vadd.s32 %v3605, 1
    %vm3611 = vcmp.gt.s32.totalorder %v3610, 0
    %v3612 = vsel %vm3611, %v3610, 0
    %v3613 = vshrl.u32 %v3612, 5
    %v3614 = vand.u32 %v3612, 31
    %v3615 = vsub.s32 32, %v3614
    %v3616 = vshrl.u32 683565275, %v3615
    %v3617 = vshll.u32 683565275, %v3614
    %v3618 = vshrl.u32 2475754826, %v3615
    %v3619 = vor.u32 %v3617, %v3618
    %v3620 = vshll.u32 2475754826, %v3614
    %v3621 = vshrl.u32 2131351028, %v3615
    %v3622 = vor.u32 %v3620, %v3621
    %v3623 = vshll.u32 2131351028, %v3614
    %v3624 = vshrl.u32 2102212464, %v3615
    %v3625 = vor.u32 %v3623, %v3624
    %v3626 = vshll.u32 2102212464, %v3614
    %v3627 = vshrl.u32 920167782, %v3615
    %v3628 = vor.u32 %v3626, %v3627
    %v3629 = vshll.u32 920167782, %v3614
    %v3630 = vshrl.u32 1326507024, %v3615
    %v3631 = vor.u32 %v3629, %v3630
    %vm3632 = vcmp.lt.s32.totalorder %v3613, 1
    %vm3633 = vcmp.lt.s32.totalorder %v3613, 2
    %vm3634 = vcmp.lt.s32.totalorder %v3613, 3
    %vm3635 = vcmp.lt.s32.totalorder %v3613, 4
    %v3636 = vsel %vm3632, %v3616, %v3619
    %v3637 = vsel %vm3635, %v3625, 2102212464
    %v3638 = vsel %vm3634, %v3622, %v3637
    %v3639 = vsel %vm3633, %v3636, %v3638
    %v3640 = vsel %vm3632, %v3619, %v3622
    %v3641 = vsel %vm3635, %v3628, 920167782
    %v3642 = vsel %vm3634, %v3625, %v3641
    %v3643 = vsel %vm3633, %v3640, %v3642
    %v3644 = vsel %vm3632, %v3622, %v3625
    %v3645 = vsel %vm3635, %v3631, 1326507024
    %v3646 = vsel %vm3634, %v3628, %v3645
    %v3647 = vsel %vm3633, %v3644, %v3646
    %v3648 = vshll.u32 %v3608, 8
    %v3649 = vmul.u32.u64.compose %v3648, %v3647
    %v3650 = vextract.low.u32 %v3649
    %v3651 = vextract.high.u32 %v3649
    %v3652 = vmul.u32.u64.compose %v3648, %v3643
    %v3653 = vextract.low.u32 %v3652
    %v3654 = vextract.high.u32 %v3652
    %v3655 = vmul.u32 %v3648, %v3639
    %v3656 = vadd.s32 %v3651, %v3653
    %vm3657 = vc.u32 %v3651, %v3653
    %v3658 = vadd.s32 %v3654, 1
    %v3659 = vsel %vm3657, %v3658, %v3654
    %v3660 = vadd.s32 %v3655, %v3659
    %v3661 = vadd.s32 %v3660, 536870912
    %v3662 = vshrl.u32 %v3661, 30
    %v3663 = vshll.u32 %v3662, 30
    %v3664 = vsub.s32 %v3660, %v3663
    %vm3665 = vcmp.lt.s32.totalorder %v3664, 0
    %v3666 = vsub.s32 0, %v3664
    %v3667 = vsel %vm3665, %v3666, %v3664
    %v3668 = vclz %v3667
    %v3669 = vsub.s32 %v3668, 2
    %vm3670 = vcmp.gt.s32.totalorder 0, %v3669
    %v3671 = vsel %vm3670, 0, %v3669
    %v3672 = vsub.s32 32, %v3671
    %v3673 = vshll.u32 %v3664, %v3671
    %v3674 = vshrl.u32 %v3656, %v3672
    %v3675 = vor.u32 %v3673, %v3674
    %v3676 = vsub.s32 4294967266, %v3671
    %v3677 = vadd.s32 %v3676, 127
    %v3678 = vshll.u32 %v3677, 23
    %v3679 = vor.u32 4788187, %v3678
    %v3680 = vand.u32 2147483647, %v3679
    %v3682 = vcvt.s32.f32 %v3675
    %v3683 = vmul.f32 %v3682, %v3680
    %v3684 = vxor.u32 %v3683, 2147483648
    %v3685 = vsel %vm3602, %v3684, %v3683
    %v3686 = vsub.s32 4, %v3662
    %v3687 = vsel %vm3602, %v3686, %v3662
    %v3688 = vsel %vm3601, %v478, %v3685
    %v3689 = vsel %vm3601, 0, %v3687
    %v3690 = vcosq.f32.pop %v3688
    %v3691 = vsinq.f32.pop %v3688
    %vm3692 = vweird.f32 %v478
    %v3693 = vadd.s32 %v3689, 3
    %v3694 = vand.u32 %v3693, 3
    %vm3695 = vcmp.lt.s32.totalorder %v3694, 2
    %vm3696 = vcmp.eq.s32.totalorder %v3694, 0
    %v3697 = vxor.u32 %v3691, 2147483648
    %v3698 = vsel %vm3696, %v3690, %v3697
    %vm3699 = vcmp.eq.s32.totalorder %v3694, 2
    %v3700 = vxor.u32 %v3690, 2147483648
    %v3701 = vsel %vm3699, %v3700, %v3691
    %v3702 = vsel %vm3695, %v3698, %v3701
    %v3703 = vsel %vm3692, nan, %v3702
    %v3704 = vand.u32 2147483647, %v479
    %vm3705 = vcmp.le.f32.partialorder %v3704, 0.7853982
    %vm3706 = vcmp.lt.s32.totalorder %v479, 0
    %v3707 = vand.u32 %v479, 2139095040
    %v3708 = vshrl.u32 %v3707, 23
    %v3709 = vsub.s32 %v3708, 127
    %v3710 = vand.u32 2147483647, %v479
    %v3711 = vand.u32 %v3710, 8388607
    %v3712 = vor.u32 %v3711, 8388608
    %v3713 = vsub.s32 0, %v3712
    %v3714 = vadd.s32 %v3709, 1
    %vm3715 = vcmp.gt.s32.totalorder %v3714, 0
    %v3716 = vsel %vm3715, %v3714, 0
    %v3717 = vshrl.u32 %v3716, 5
    %v3718 = vand.u32 %v3716, 31
    %v3719 = vsub.s32 32, %v3718
    %v3720 = vshrl.u32 683565275, %v3719
    %v3721 = vshll.u32 683565275, %v3718
    %v3722 = vshrl.u32 2475754826, %v3719
    %v3723 = vor.u32 %v3721, %v3722
    %v3724 = vshll.u32 2475754826, %v3718
    %v3725 = vshrl.u32 2131351028, %v3719
    %v3726 = vor.u32 %v3724, %v3725
    %v3727 = vshll.u32 2131351028, %v3718
    %v3728 = vshrl.u32 2102212464, %v3719
    %v3729 = vor.u32 %v3727, %v3728
    %v3730 = vshll.u32 2102212464, %v3718
    %v3731 = vshrl.u32 920167782, %v3719
    %v3732 = vor.u32 %v3730, %v3731
    %v3733 = vshll.u32 920167782, %v3718
    %v3734 = vshrl.u32 1326507024, %v3719
    %v3735 = vor.u32 %v3733, %v3734
    %vm3736 = vcmp.lt.s32.totalorder %v3717, 1
    %vm3737 = vcmp.lt.s32.totalorder %v3717, 2
    %vm3738 = vcmp.lt.s32.totalorder %v3717, 3
    %vm3739 = vcmp.lt.s32.totalorder %v3717, 4
    %v3740 = vsel %vm3736, %v3720, %v3723
    %v3741 = vsel %vm3739, %v3729, 2102212464
    %v3742 = vsel %vm3738, %v3726, %v3741
    %v3743 = vsel %vm3737, %v3740, %v3742
    %v3744 = vsel %vm3736, %v3723, %v3726
    %v3745 = vsel %vm3739, %v3732, 920167782
    %v3746 = vsel %vm3738, %v3729, %v3745
    %v3747 = vsel %vm3737, %v3744, %v3746
    %v3748 = vsel %vm3736, %v3726, %v3729
    %v3749 = vsel %vm3739, %v3735, 1326507024
    %v3750 = vsel %vm3738, %v3732, %v3749
    %v3751 = vsel %vm3737, %v3748, %v3750
    %v3752 = vshll.u32 %v3712, 8
    %v3753 = vmul.u32.u64.compose %v3752, %v3751
    %v3754 = vextract.low.u32 %v3753
    %v3755 = vextract.high.u32 %v3753
    %v3756 = vmul.u32.u64.compose %v3752, %v3747
    %v3757 = vextract.low.u32 %v3756
    %v3758 = vextract.high.u32 %v3756
    %v3759 = vmul.u32 %v3752, %v3743
    %v3760 = vadd.s32 %v3755, %v3757
    %vm3761 = vc.u32 %v3755, %v3757
    %v3762 = vadd.s32 %v3758, 1
    %v3763 = vsel %vm3761, %v3762, %v3758
    %v3764 = vadd.s32 %v3759, %v3763
    %v3765 = vadd.s32 %v3764, 536870912
    %v3766 = vshrl.u32 %v3765, 30
    %v3767 = vshll.u32 %v3766, 30
    %v3768 = vsub.s32 %v3764, %v3767
    %vm3769 = vcmp.lt.s32.totalorder %v3768, 0
    %v3770 = vsub.s32 0, %v3768
    %v3771 = vsel %vm3769, %v3770, %v3768
    %v3772 = vclz %v3771
    %v3773 = vsub.s32 %v3772, 2
    %vm3774 = vcmp.gt.s32.totalorder 0, %v3773
    %v3775 = vsel %vm3774, 0, %v3773
    %v3776 = vsub.s32 32, %v3775
    %v3777 = vshll.u32 %v3768, %v3775
    %v3778 = vshrl.u32 %v3760, %v3776
    %v3779 = vor.u32 %v3777, %v3778
    %v3780 = vsub.s32 4294967266, %v3775
    %v3781 = vadd.s32 %v3780, 127
    %v3782 = vshll.u32 %v3781, 23
    %v3783 = vor.u32 4788187, %v3782
    %v3784 = vand.u32 2147483647, %v3783
    %v3786 = vcvt.s32.f32 %v3779
    %v3787 = vmul.f32 %v3786, %v3784
    %v3788 = vxor.u32 %v3787, 2147483648
    %v3789 = vsel %vm3706, %v3788, %v3787
    %v3790 = vsub.s32 4, %v3766
    %v3791 = vsel %vm3706, %v3790, %v3766
    %v3792 = vsel %vm3705, %v479, %v3789
    %v3793 = vsel %vm3705, 0, %v3791
    %v3794 = vcosq.f32.pop %v3792
    %v3795 = vsinq.f32.pop %v3792
    %vm3796 = vweird.f32 %v479
    %v3797 = vadd.s32 %v3793, 3
    %v3798 = vand.u32 %v3797, 3
    %vm3799 = vcmp.lt.s32.totalorder %v3798, 2
    %vm3800 = vcmp.eq.s32.totalorder %v3798, 0
    %v3801 = vxor.u32 %v3795, 2147483648
    %v3802 = vsel %vm3800, %v3794, %v3801
    %vm3803 = vcmp.eq.s32.totalorder %v3798, 2
    %v3804 = vxor.u32 %v3794, 2147483648
    %v3805 = vsel %vm3803, %v3804, %v3795
    %v3806 = vsel %vm3799, %v3802, %v3805
    %v3807 = vsel %vm3796, nan, %v3806
    %s3808 = scalar_lea.vmem %s1, 32
    %v3809 = vld [vmem:[%s3808] ss:$8 sm:$0x3]
    %v3811 = vlaneseq
    %v3812 = vshrl.u32 %v3811, 7
    %v3813 = vsub.s32 0, %v3812
    %v3814 = vrot.slane %v3809, %v3813
    %v3816 = vmul.f32 %v183, %v3814
    %v3817 = vmul.f32 %v190, %v3814
    %v3818 = vmul.f32 %v197, %v3814
    %v3819 = vmul.f32 %v204, %v3814
    %v3820 = vmul.f32 %v211, %v3814
    %v3821 = vmul.f32 %v218, %v3814
    %v3822 = vmul.f32 %v225, %v3814
    %v3823 = vmul.f32 %v232, %v3814
    %v3824 = vmul.f32 %v239, %v3814
    %v3825 = vmul.f32 %v246, %v3814
    %v3826 = vmul.f32 %v253, %v3814
    %v3827 = vmul.f32 %v260, %v3814
    %v3828 = vmul.f32 %v267, %v3814
    %v3829 = vmul.f32 %v274, %v3814
    %v3830 = vmul.f32 %v281, %v3814
    %v3831 = vmul.f32 %v288, %v3814
    %v3832 = vmul.f32 %v295, %v3814
    %v3833 = vmul.f32 %v302, %v3814
    %v3834 = vmul.f32 %v309, %v3814
    %v3835 = vmul.f32 %v316, %v3814
    %v3836 = vmul.f32 %v323, %v3814
    %v3837 = vmul.f32 %v330, %v3814
    %v3838 = vmul.f32 %v337, %v3814
    %v3839 = vmul.f32 %v344, %v3814
    %v3840 = vmul.f32 %v351, %v3814
    %v3841 = vmul.f32 %v358, %v3814
    %v3842 = vmul.f32 %v365, %v3814
    %v3843 = vmul.f32 %v372, %v3814
    %v3844 = vmul.f32 %v379, %v3814
    %v3845 = vmul.f32 %v386, %v3814
    %v3846 = vmul.f32 %v393, %v3814
    %v3847 = vmul.f32 %v400, %v3814
    %v3848 = vld [vmem:[%s2] sm:$0xff]
    %v3849 = vpack.c.bf16 %v687, %v583
    %v3850 = vpack.c.bf16 %v895, %v791
    %v3851 = vpack.c.bf16 %v1103, %v999
    %v3852 = vpack.c.bf16 %v1311, %v1207
    %v3853 = vpack.c.bf16 %v1519, %v1415
    %v3854 = vpack.c.bf16 %v1727, %v1623
    %v3855 = vpack.c.bf16 %v1935, %v1831
    %v3856 = vpack.c.bf16 %v2143, %v2039
    %v3857 = vpack.c.bf16 %v2351, %v2247
    %v3858 = vpack.c.bf16 %v2559, %v2455
    %v3859 = vpack.c.bf16 %v2767, %v2663
    %v3860 = vpack.c.bf16 %v2975, %v2871
    %v3861 = vpack.c.bf16 %v3183, %v3079
    %v3862 = vpack.c.bf16 %v3391, %v3287
    %v3863 = vpack.c.bf16 %v3599, %v3495
    %v3864 = vpack.c.bf16 %v3807, %v3703
    %vm3865 = vcmask 64512
    %v3867 = vsel %vm3865, %v3849, 0
    %v3870 = vsel %vm3865, %v3850, 0
    %v3873 = vsel %vm3865, %v3851, 0
    %v3876 = vsel %vm3865, %v3852, 0
    %v3879 = vsel %vm3865, %v3853, 0
    %v3882 = vsel %vm3865, %v3854, 0
    %v3885 = vsel %vm3865, %v3855, 0
    %v3888 = vsel %vm3865, %v3856, 0
    %v3891 = vsel %vm3865, %v3857, 0
    %v3894 = vsel %vm3865, %v3858, 0
    %v3897 = vsel %vm3865, %v3859, 0
    %v3900 = vsel %vm3865, %v3860, 0
    %v3903 = vsel %vm3865, %v3861, 0
    %v3906 = vsel %vm3865, %v3862, 0
    %v3909 = vsel %vm3865, %v3863, 0
    %v3912 = vsel %vm3865, %v3864, 0
    %vm3914 = vcmask 1043456
    %v3916 = vsel %vm3914, %v3848, 0
    %3918 = vmatprep.subr.bf16.mxu0 0
    %3919 = vmatpush1.bf16.msra.mxu0 %v3916
    %3920 = vmatprep.subr.bf16.mxu0 0
    %3921 = vmatpush1.bf16.msra.mxu0 0
    %3922 = vmatprep.subr.bf16.mxu0 0
    %3923 = vmatpush1.bf16.msra.mxu0 0
    %3924 = vmatprep.subr.bf16.mxu0 0
    %3925 = vmatpush1.bf16.msra.mxu0 0
    %3926 = vmatprep.subr.bf16.mxu0 0
    %3927 = vmatpush1.bf16.msra.mxu0 0
    %3928 = vmatprep.subr.bf16.mxu0 0
    %3929 = vmatpush1.bf16.msra.mxu0 0
    %3930 = vmatprep.subr.bf16.mxu0 0
    %3931 = vmatpush1.bf16.msra.mxu0 0
    %3932 = vmatprep.subr.bf16.mxu0 0
    %3933 = vmatpush1.bf16.msra.mxu0 0
    %3934 = vmatprep.subr.bf16.mxu0 0
    %3935 = vmatpush1.bf16.msra.mxu0 0
    %3936 = vmatprep.subr.bf16.mxu0 0
    %3937 = vmatpush1.bf16.msra.mxu0 0
    %3938 = vmatprep.subr.bf16.mxu0 0
    %3939 = vmatpush1.bf16.msra.mxu0 0
    %3940 = vmatprep.subr.bf16.mxu0 0
    %3941 = vmatpush1.bf16.msra.mxu0 0
    %3942 = vmatprep.subr.bf16.mxu0 0
    %3943 = vmatpush1.bf16.msra.mxu0 0
    %3944 = vmatprep.subr.bf16.mxu0 0
    %3945 = vmatpush1.bf16.msra.mxu0 0
    %3946 = vmatprep.subr.bf16.mxu0 0
    %3947 = vmatpush1.bf16.msra.mxu0 0
    %3948 = vmatprep.subr.bf16.mxu0 0
    %3949 = vmatpush1.bf16.msra.mxu0 0
    %3950 = vmatprep.mubr.bf16.mxu0 0
    %3951 = vmatmul.mubr.bf16.gmra.mrb[0].mxu0 %v3867
    %v3952 = vpop.f32.mrb[0].mxu0
    %v3953 = vadd.f32 0.0, %v3952
    %v3954 = vpop.f32.mrb[0].mxu0
    %v3955 = vpop.f32.mrb[0].mxu0
    %v3956 = vadd.f32 0.0, %v3955
    %v3957 = vpop.f32.mrb[0].mxu0
    %3958 = vmatprep.mubr.bf16.mxu0 0
    %3959 = vmatmul.mubr.bf16.gmra.mrb[0].mxu0 %v3870
    %v3960 = vpop.f32.mrb[0].mxu0
    %v3961 = vadd.f32 0.0, %v3960
    %v3962 = vpop.f32.mrb[0].mxu0
    %v3963 = vpop.f32.mrb[0].mxu0
    %v3964 = vadd.f32 0.0, %v3963
    %v3965 = vpop.f32.mrb[0].mxu0
    %3966 = vmatprep.mubr.bf16.mxu0 0
    %3967 = vmatmul.mubr.bf16.gmra.mrb[0].mxu0 %v3873
    %v3968 = vpop.f32.mrb[0].mxu0
    %v3969 = vadd.f32 0.0, %v3968
    %v3970 = vpop.f32.mrb[0].mxu0
    %v3971 = vpop.f32.mrb[0].mxu0
    %v3972 = vadd.f32 0.0, %v3971
    %v3973 = vpop.f32.mrb[0].mxu0
    %3974 = vmatprep.mubr.bf16.mxu0 0
    %3975 = vmatmul.mubr.bf16.gmra.mrb[0].mxu0 %v3876
    %v3976 = vpop.f32.mrb[0].mxu0
    %v3977 = vadd.f32 0.0, %v3976
    %v3978 = vpop.f32.mrb[0].mxu0
    %v3979 = vpop.f32.mrb[0].mxu0
    %v3980 = vadd.f32 0.0, %v3979
    %v3981 = vpop.f32.mrb[0].mxu0
    %3982 = vmatprep.mubr.bf16.mxu0 0
    %3983 = vmatmul.mubr.bf16.gmra.mrb[0].mxu0 %v3879
    %v3984 = vpop.f32.mrb[0].mxu0
    %v3985 = vadd.f32 0.0, %v3984
    %v3986 = vpop.f32.mrb[0].mxu0
    %v3987 = vpop.f32.mrb[0].mxu0
    %v3988 = vadd.f32 0.0, %v3987
    %v3989 = vpop.f32.mrb[0].mxu0
    %3990 = vmatprep.mubr.bf16.mxu0 0
    %3991 = vmatmul.mubr.bf16.gmra.mrb[0].mxu0 %v3882
    %v3992 = vpop.f32.mrb[0].mxu0
    %v3993 = vadd.f32 0.0, %v3992
    %v3994 = vpop.f32.mrb[0].mxu0
    %v3995 = vpop.f32.mrb[0].mxu0
    %v3996 = vadd.f32 0.0, %v3995
    %v3997 = vpop.f32.mrb[0].mxu0
    %3998 = vmatprep.mubr.bf16.mxu0 0
    %3999 = vmatmul.mubr.bf16.gmra.mrb[0].mxu0 %v3885
    %v4000 = vpop.f32.mrb[0].mxu0
    %v4001 = vadd.f32 0.0, %v4000
    %v4002 = vpop.f32.mrb[0].mxu0
    %v4003 = vpop.f32.mrb[0].mxu0
    %v4004 = vadd.f32 0.0, %v4003
    %v4005 = vpop.f32.mrb[0].mxu0
    %4006 = vmatprep.mubr.bf16.mxu0 0
    %4007 = vmatmul.mubr.bf16.gmra.mrb[0].mxu0 %v3888
    %v4008 = vpop.f32.mrb[0].mxu0
    %v4009 = vadd.f32 0.0, %v4008
    %v4010 = vpop.f32.mrb[0].mxu0
    %v4011 = vpop.f32.mrb[0].mxu0
    %v4012 = vadd.f32 0.0, %v4011
    %v4013 = vpop.f32.mrb[0].mxu0
    %4014 = vmatprep.mubr.bf16.mxu0 0
    %4015 = vmatmul.mubr.bf16.gmra.mrb[0].mxu0 %v3891
    %v4016 = vpop.f32.mrb[0].mxu0
    %v4017 = vadd.f32 0.0, %v4016
    %v4018 = vpop.f32.mrb[0].mxu0
    %v4019 = vpop.f32.mrb[0].mxu0
    %v4020 = vadd.f32 0.0, %v4019
    %v4021 = vpop.f32.mrb[0].mxu0
    %4022 = vmatprep.mubr.bf16.mxu0 0
    %4023 = vmatmul.mubr.bf16.gmra.mrb[0].mxu0 %v3894
    %v4024 = vpop.f32.mrb[0].mxu0
    %v4025 = vadd.f32 0.0, %v4024
    %v4026 = vpop.f32.mrb[0].mxu0
    %v4027 = vpop.f32.mrb[0].mxu0
    %v4028 = vadd.f32 0.0, %v4027
    %v4029 = vpop.f32.mrb[0].mxu0
    %4030 = vmatprep.mubr.bf16.mxu0 0
    %4031 = vmatmul.mubr.bf16.gmra.mrb[0].mxu0 %v3897
    %v4032 = vpop.f32.mrb[0].mxu0
    %v4033 = vadd.f32 0.0, %v4032
    %v4034 = vpop.f32.mrb[0].mxu0
    %v4035 = vpop.f32.mrb[0].mxu0
    %v4036 = vadd.f32 0.0, %v4035
    %v4037 = vpop.f32.mrb[0].mxu0
    %4038 = vmatprep.mubr.bf16.mxu0 0
    %4039 = vmatmul.mubr.bf16.gmra.mrb[0].mxu0 %v3900
    %v4040 = vpop.f32.mrb[0].mxu0
    %v4041 = vadd.f32 0.0, %v4040
    %v4042 = vpop.f32.mrb[0].mxu0
    %v4043 = vpop.f32.mrb[0].mxu0
    %v4044 = vadd.f32 0.0, %v4043
    %v4045 = vpop.f32.mrb[0].mxu0
    %4046 = vmatprep.mubr.bf16.mxu0 0
    %4047 = vmatmul.mubr.bf16.gmra.mrb[0].mxu0 %v3903
    %v4048 = vpop.f32.mrb[0].mxu0
    %v4049 = vadd.f32 0.0, %v4048
    %v4050 = vpop.f32.mrb[0].mxu0
    %v4051 = vpop.f32.mrb[0].mxu0
    %v4052 = vadd.f32 0.0, %v4051
    %v4053 = vpop.f32.mrb[0].mxu0
    %4054 = vmatprep.mubr.bf16.mxu0 0
    %4055 = vmatmul.mubr.bf16.gmra.mrb[0].mxu0 %v3906
    %v4056 = vpop.f32.mrb[0].mxu0
    %v4057 = vadd.f32 0.0, %v4056
    %v4058 = vpop.f32.mrb[0].mxu0
    %v4059 = vpop.f32.mrb[0].mxu0
    %v4060 = vadd.f32 0.0, %v4059
    %v4061 = vpop.f32.mrb[0].mxu0
    %4062 = vmatprep.mubr.bf16.mxu0 0
    %4063 = vmatmul.mubr.bf16.gmra.mrb[0].mxu0 %v3909
    %v4064 = vpop.f32.mrb[0].mxu0
    %v4065 = vadd.f32 0.0, %v4064
    %v4066 = vpop.f32.mrb[0].mxu0
    %v4067 = vpop.f32.mrb[0].mxu0
    %v4068 = vadd.f32 0.0, %v4067
    %v4069 = vpop.f32.mrb[0].mxu0
    %4070 = vmatprep.mubr.bf16.mxu0 0
    %4071 = vmatmul.mubr.bf16.gmra.mrb[0].mxu0 %v3912
    %v4072 = vpop.f32.mrb[0].mxu0
    %v4073 = vadd.f32 0.0, %v4072
    %v4074 = vpop.f32.mrb[0].mxu0
    %v4075 = vpop.f32.mrb[0].mxu0
    %v4076 = vadd.f32 0.0, %v4075
    %v4077 = vpop.f32.mrb[0].mxu0
    %4078 = vdwg.mxu0
    %v4079 = vadd.f32 %v3816, %v3953
    %v4080 = vadd.f32 %v3817, %v3956
    %v4081 = vadd.f32 %v3818, %v3961
    %v4082 = vadd.f32 %v3819, %v3964
    %v4083 = vadd.f32 %v3820, %v3969
    %v4084 = vadd.f32 %v3821, %v3972
    %v4085 = vadd.f32 %v3822, %v3977
    %v4086 = vadd.f32 %v3823, %v3980
    %v4087 = vadd.f32 %v3824, %v3985
    %v4088 = vadd.f32 %v3825, %v3988
    %v4089 = vadd.f32 %v3826, %v3993
    %v4090 = vadd.f32 %v3827, %v3996
    %v4091 = vadd.f32 %v3828, %v4001
    %v4092 = vadd.f32 %v3829, %v4004
    %v4093 = vadd.f32 %v3830, %v4009
    %v4094 = vadd.f32 %v3831, %v4012
    %v4095 = vadd.f32 %v3832, %v4017
    %v4096 = vadd.f32 %v3833, %v4020
    %v4097 = vadd.f32 %v3834, %v4025
    %v4098 = vadd.f32 %v3835, %v4028
    %v4099 = vadd.f32 %v3836, %v4033
    %v4100 = vadd.f32 %v3837, %v4036
    %v4101 = vadd.f32 %v3838, %v4041
    %v4102 = vadd.f32 %v3839, %v4044
    %v4103 = vadd.f32 %v3840, %v4049
    %v4104 = vadd.f32 %v3841, %v4052
    %v4105 = vadd.f32 %v3842, %v4057
    %v4106 = vadd.f32 %v3843, %v4060
    %v4107 = vadd.f32 %v3844, %v4065
    %v4108 = vadd.f32 %v3845, %v4068
    %v4109 = vadd.f32 %v3846, %v4073
    %v4110 = vadd.f32 %v3847, %v4076
    %s4111 = scalar_lea.vmem %s1, 48
    %v4112 = vld [vmem:[%s4111] ss:$8 sm:$0x3]
    %v4114 = vlaneseq
    %v4115 = vshrl.u32 %v4114, 7
    %v4116 = vsub.s32 0, %v4115
    %v4117 = vrot.slane %v4112, %v4116
    %v4119 = vadd.f32 %v4079, %v4117
    %v4120 = vadd.f32 %v4080, %v4117
    %v4121 = vadd.f32 %v4081, %v4117
    %v4122 = vadd.f32 %v4082, %v4117
    %v4123 = vadd.f32 %v4083, %v4117
    %v4124 = vadd.f32 %v4084, %v4117
    %v4125 = vadd.f32 %v4085, %v4117
    %v4126 = vadd.f32 %v4086, %v4117
    %v4127 = vadd.f32 %v4087, %v4117
    %v4128 = vadd.f32 %v4088, %v4117
    %v4129 = vadd.f32 %v4089, %v4117
    %v4130 = vadd.f32 %v4090, %v4117
    %v4131 = vadd.f32 %v4091, %v4117
    %v4132 = vadd.f32 %v4092, %v4117
    %v4133 = vadd.f32 %v4093, %v4117
    %v4134 = vadd.f32 %v4094, %v4117
    %v4135 = vadd.f32 %v4095, %v4117
    %v4136 = vadd.f32 %v4096, %v4117
    %v4137 = vadd.f32 %v4097, %v4117
    %v4138 = vadd.f32 %v4098, %v4117
    %v4139 = vadd.f32 %v4099, %v4117
    %v4140 = vadd.f32 %v4100, %v4117
    %v4141 = vadd.f32 %v4101, %v4117
    %v4142 = vadd.f32 %v4102, %v4117
    %v4143 = vadd.f32 %v4103, %v4117
    %v4144 = vadd.f32 %v4104, %v4117
    %v4145 = vadd.f32 %v4105, %v4117
    %v4146 = vadd.f32 %v4106, %v4117
    %v4147 = vadd.f32 %v4107, %v4117
    %v4148 = vadd.f32 %v4108, %v4117
    %v4149 = vadd.f32 %v4109, %v4117
    %v4150 = vadd.f32 %v4110, %v4117
    %v4151 = vmax.f32 %v4119, 0.0
    %v4152 = vmax.f32 %v4120, 0.0
    %v4153 = vmax.f32 %v4121, 0.0
    %v4154 = vmax.f32 %v4122, 0.0
    %v4155 = vmax.f32 %v4123, 0.0
    %v4156 = vmax.f32 %v4124, 0.0
    %v4157 = vmax.f32 %v4125, 0.0
    %v4158 = vmax.f32 %v4126, 0.0
    %v4159 = vmax.f32 %v4127, 0.0
    %v4160 = vmax.f32 %v4128, 0.0
    %v4161 = vmax.f32 %v4129, 0.0
    %v4162 = vmax.f32 %v4130, 0.0
    %v4163 = vmax.f32 %v4131, 0.0
    %v4164 = vmax.f32 %v4132, 0.0
    %v4165 = vmax.f32 %v4133, 0.0
    %v4166 = vmax.f32 %v4134, 0.0
    %v4167 = vmax.f32 %v4135, 0.0
    %v4168 = vmax.f32 %v4136, 0.0
    %v4169 = vmax.f32 %v4137, 0.0
    %v4170 = vmax.f32 %v4138, 0.0
    %v4171 = vmax.f32 %v4139, 0.0
    %v4172 = vmax.f32 %v4140, 0.0
    %v4173 = vmax.f32 %v4141, 0.0
    %v4174 = vmax.f32 %v4142, 0.0
    %v4175 = vmax.f32 %v4143, 0.0
    %v4176 = vmax.f32 %v4144, 0.0
    %v4177 = vmax.f32 %v4145, 0.0
    %v4178 = vmax.f32 %v4146, 0.0
    %v4179 = vmax.f32 %v4147, 0.0
    %v4180 = vmax.f32 %v4148, 0.0
    %v4181 = vmax.f32 %v4149, 0.0
    %v4182 = vmax.f32 %v4150, 0.0
    %v4183 = vld [vmem:[%s2 + $0x10] sm:$0xff]
    %v4184 = vld [vmem:[%s2 + $0x18] sm:$0xff]
    %v4185 = vld [vmem:[%s2 + $0x20] sm:$0xff]
    %v4186 = vld [vmem:[%s2 + $0x28] sm:$0xff]
    %v4187 = vpack.c.bf16 %v4152, %v4151
    %v4188 = vpack.c.bf16 %v4154, %v4153
    %v4189 = vpack.c.bf16 %v4156, %v4155
    %v4190 = vpack.c.bf16 %v4158, %v4157
    %v4191 = vpack.c.bf16 %v4160, %v4159
    %v4192 = vpack.c.bf16 %v4162, %v4161
    %v4193 = vpack.c.bf16 %v4164, %v4163
    %v4194 = vpack.c.bf16 %v4166, %v4165
    %v4195 = vpack.c.bf16 %v4168, %v4167
    %v4196 = vpack.c.bf16 %v4170, %v4169
    %v4197 = vpack.c.bf16 %v4172, %v4171
    %v4198 = vpack.c.bf16 %v4174, %v4173
    %v4199 = vpack.c.bf16 %v4176, %v4175
    %v4200 = vpack.c.bf16 %v4178, %v4177
    %v4201 = vpack.c.bf16 %v4180, %v4179
    %v4202 = vpack.c.bf16 %v4182, %v4181
    %s4203 = scalar_lea.vmem %s1, 64
    %v4204 = vld [vmem:[%s4203] ss:$8 sm:$0x3]
    %v4206 = vlaneseq
    %v4207 = vshrl.u32 %v4206, 7
    %v4208 = vsub.s32 0, %v4207
    %v4209 = vrot.slane %v4204, %v4208
    %v4215 = vunpack.c.l.b16 %v4183
    %v4216 = vunpack.c.l.b16 %v4184
    %v4217 = vunpack.c.l.b16 %v4185
    %v4218 = vunpack.c.l.b16 %v4186
    %v4219 = vpack.c.b16 %v4216, %v4215
    %v4220 = vpack.c.b16 %v4218, %v4217
    %vm4223 = vcmask 261120
    %v4225 = vsel %vm4223, %v4187, 0
    %v4228 = vsel %vm4223, %v4188, 0
    %v4231 = vsel %vm4223, %v4189, 0
    %v4234 = vsel %vm4223, %v4190, 0
    %v4237 = vsel %vm4223, %v4191, 0
    %v4240 = vsel %vm4223, %v4192, 0
    %v4243 = vsel %vm4223, %v4193, 0
    %v4246 = vsel %vm4223, %v4194, 0
    %v4249 = vsel %vm4223, %v4195, 0
    %v4252 = vsel %vm4223, %v4196, 0
    %v4255 = vsel %vm4223, %v4197, 0
    %v4258 = vsel %vm4223, %v4198, 0
    %v4261 = vsel %vm4223, %v4199, 0
    %v4264 = vsel %vm4223, %v4200, 0
    %v4267 = vsel %vm4223, %v4201, 0
    %v4270 = vsel %vm4223, %v4202, 0
    %4272 = vmatprep.subr.bf16.mxu0 0
    %4273 = vmatpush1.bf16.msra.mxu0 %v4219
    %4274 = vmatprep.subr.bf16.mxu0 0
    %4275 = vmatpush1.bf16.msra.mxu0 %v4220
    %4276 = vmatprep.subr.bf16.mxu0 0
    %4277 = vmatpush1.bf16.msra.mxu0 0
    %4278 = vmatprep.subr.bf16.mxu0 0
    %4279 = vmatpush1.bf16.msra.mxu0 0
    %4280 = vmatprep.subr.bf16.mxu0 0
    %4281 = vmatpush1.bf16.msra.mxu0 0
    %4282 = vmatprep.subr.bf16.mxu0 0
    %4283 = vmatpush1.bf16.msra.mxu0 0
    %4284 = vmatprep.subr.bf16.mxu0 0
    %4285 = vmatpush1.bf16.msra.mxu0 0
    %4286 = vmatprep.subr.bf16.mxu0 0
    %4287 = vmatpush1.bf16.msra.mxu0 0
    %4288 = vmatprep.subr.bf16.mxu0 0
    %4289 = vmatpush1.bf16.msra.mxu0 0
    %4290 = vmatprep.subr.bf16.mxu0 0
    %4291 = vmatpush1.bf16.msra.mxu0 0
    %4292 = vmatprep.subr.bf16.mxu0 0
    %4293 = vmatpush1.bf16.msra.mxu0 0
    %4294 = vmatprep.subr.bf16.mxu0 0
    %4295 = vmatpush1.bf16.msra.mxu0 0
    %4296 = vmatprep.subr.bf16.mxu0 0
    %4297 = vmatpush1.bf16.msra.mxu0 0
    %4298 = vmatprep.subr.bf16.mxu0 0
    %4299 = vmatpush1.bf16.msra.mxu0 0
    %4300 = vmatprep.subr.bf16.mxu0 0
    %4301 = vmatpush1.bf16.msra.mxu0 0
    %4302 = vmatprep.subr.bf16.mxu0 0
    %4303 = vmatpush1.bf16.msra.mxu0 0
    %4304 = vmatprep.mubr.bf16.mxu0 0
    %4305 = vmatmul.mubr.bf16.gmra.mrb[0].mxu0 %v4225
    %v4306 = vpop.f32.mrb[0].mxu0
    %v4307 = vadd.f32 %v4209, %v4306
    %v4308 = vpop.f32.mrb[0].mxu0
    %v4309 = vpop.f32.mrb[0].mxu0
    %v4310 = vadd.f32 %v4209, %v4309
    %v4311 = vpop.f32.mrb[0].mxu0
    %4312 = vmatprep.mubr.bf16.mxu0 0
    %4313 = vmatmul.mubr.bf16.gmra.mrb[0].mxu0 %v4228
    %v4314 = vpop.f32.mrb[0].mxu0
    %v4315 = vadd.f32 %v4209, %v4314
    %v4316 = vpop.f32.mrb[0].mxu0
    %v4317 = vpop.f32.mrb[0].mxu0
    %v4318 = vadd.f32 %v4209, %v4317
    %v4319 = vpop.f32.mrb[0].mxu0
    %4320 = vmatprep.mubr.bf16.mxu0 0
    %4321 = vmatmul.mubr.bf16.gmra.mrb[0].mxu0 %v4231
    %v4322 = vpop.f32.mrb[0].mxu0
    %v4323 = vadd.f32 %v4209, %v4322
    %v4324 = vpop.f32.mrb[0].mxu0
    %v4325 = vpop.f32.mrb[0].mxu0
    %v4326 = vadd.f32 %v4209, %v4325
    %v4327 = vpop.f32.mrb[0].mxu0
    %4328 = vmatprep.mubr.bf16.mxu0 0
    %4329 = vmatmul.mubr.bf16.gmra.mrb[0].mxu0 %v4234
    %v4330 = vpop.f32.mrb[0].mxu0
    %v4331 = vadd.f32 %v4209, %v4330
    %v4332 = vpop.f32.mrb[0].mxu0
    %v4333 = vpop.f32.mrb[0].mxu0
    %v4334 = vadd.f32 %v4209, %v4333
    %v4335 = vpop.f32.mrb[0].mxu0
    %4336 = vmatprep.mubr.bf16.mxu0 0
    %4337 = vmatmul.mubr.bf16.gmra.mrb[0].mxu0 %v4237
    %v4338 = vpop.f32.mrb[0].mxu0
    %v4339 = vadd.f32 %v4209, %v4338
    %v4340 = vpop.f32.mrb[0].mxu0
    %v4341 = vpop.f32.mrb[0].mxu0
    %v4342 = vadd.f32 %v4209, %v4341
    %v4343 = vpop.f32.mrb[0].mxu0
    %4344 = vmatprep.mubr.bf16.mxu0 0
    %4345 = vmatmul.mubr.bf16.gmra.mrb[0].mxu0 %v4240
    %v4346 = vpop.f32.mrb[0].mxu0
    %v4347 = vadd.f32 %v4209, %v4346
    %v4348 = vpop.f32.mrb[0].mxu0
    %v4349 = vpop.f32.mrb[0].mxu0
    %v4350 = vadd.f32 %v4209, %v4349
    %v4351 = vpop.f32.mrb[0].mxu0
    %4352 = vmatprep.mubr.bf16.mxu0 0
    %4353 = vmatmul.mubr.bf16.gmra.mrb[0].mxu0 %v4243
    %v4354 = vpop.f32.mrb[0].mxu0
    %v4355 = vadd.f32 %v4209, %v4354
    %v4356 = vpop.f32.mrb[0].mxu0
    %v4357 = vpop.f32.mrb[0].mxu0
    %v4358 = vadd.f32 %v4209, %v4357
    %v4359 = vpop.f32.mrb[0].mxu0
    %4360 = vmatprep.mubr.bf16.mxu0 0
    %4361 = vmatmul.mubr.bf16.gmra.mrb[0].mxu0 %v4246
    %v4362 = vpop.f32.mrb[0].mxu0
    %v4363 = vadd.f32 %v4209, %v4362
    %v4364 = vpop.f32.mrb[0].mxu0
    %v4365 = vpop.f32.mrb[0].mxu0
    %v4366 = vadd.f32 %v4209, %v4365
    %v4367 = vpop.f32.mrb[0].mxu0
    %4368 = vmatprep.mubr.bf16.mxu0 0
    %4369 = vmatmul.mubr.bf16.gmra.mrb[0].mxu0 %v4249
    %v4370 = vpop.f32.mrb[0].mxu0
    %v4371 = vadd.f32 %v4209, %v4370
    %v4372 = vpop.f32.mrb[0].mxu0
    %v4373 = vpop.f32.mrb[0].mxu0
    %v4374 = vadd.f32 %v4209, %v4373
    %v4375 = vpop.f32.mrb[0].mxu0
    %4376 = vmatprep.mubr.bf16.mxu0 0
    %4377 = vmatmul.mubr.bf16.gmra.mrb[0].mxu0 %v4252
    %v4378 = vpop.f32.mrb[0].mxu0
    %v4379 = vadd.f32 %v4209, %v4378
    %v4380 = vpop.f32.mrb[0].mxu0
    %v4381 = vpop.f32.mrb[0].mxu0
    %v4382 = vadd.f32 %v4209, %v4381
    %v4383 = vpop.f32.mrb[0].mxu0
    %4384 = vmatprep.mubr.bf16.mxu0 0
    %4385 = vmatmul.mubr.bf16.gmra.mrb[0].mxu0 %v4255
    %v4386 = vpop.f32.mrb[0].mxu0
    %v4387 = vadd.f32 %v4209, %v4386
    %v4388 = vpop.f32.mrb[0].mxu0
    %v4389 = vpop.f32.mrb[0].mxu0
    %v4390 = vadd.f32 %v4209, %v4389
    %v4391 = vpop.f32.mrb[0].mxu0
    %4392 = vmatprep.mubr.bf16.mxu0 0
    %4393 = vmatmul.mubr.bf16.gmra.mrb[0].mxu0 %v4258
    %v4394 = vpop.f32.mrb[0].mxu0
    %v4395 = vadd.f32 %v4209, %v4394
    %v4396 = vpop.f32.mrb[0].mxu0
    %v4397 = vpop.f32.mrb[0].mxu0
    %v4398 = vadd.f32 %v4209, %v4397
    %v4399 = vpop.f32.mrb[0].mxu0
    %4400 = vmatprep.mubr.bf16.mxu0 0
    %4401 = vmatmul.mubr.bf16.gmra.mrb[0].mxu0 %v4261
    %v4402 = vpop.f32.mrb[0].mxu0
    %v4403 = vadd.f32 %v4209, %v4402
    %v4404 = vpop.f32.mrb[0].mxu0
    %v4405 = vpop.f32.mrb[0].mxu0
    %v4406 = vadd.f32 %v4209, %v4405
    %v4407 = vpop.f32.mrb[0].mxu0
    %4408 = vmatprep.mubr.bf16.mxu0 0
    %4409 = vmatmul.mubr.bf16.gmra.mrb[0].mxu0 %v4264
    %v4410 = vpop.f32.mrb[0].mxu0
    %v4411 = vadd.f32 %v4209, %v4410
    %v4412 = vpop.f32.mrb[0].mxu0
    %v4413 = vpop.f32.mrb[0].mxu0
    %v4414 = vadd.f32 %v4209, %v4413
    %v4415 = vpop.f32.mrb[0].mxu0
    %4416 = vmatprep.mubr.bf16.mxu0 0
    %4417 = vmatmul.mubr.bf16.gmra.mrb[0].mxu0 %v4267
    %v4418 = vpop.f32.mrb[0].mxu0
    %v4419 = vadd.f32 %v4209, %v4418
    %v4420 = vpop.f32.mrb[0].mxu0
    %v4421 = vpop.f32.mrb[0].mxu0
    %v4422 = vadd.f32 %v4209, %v4421
    %v4423 = vpop.f32.mrb[0].mxu0
    %4424 = vmatprep.mubr.bf16.mxu0 0
    %4425 = vmatmul.mubr.bf16.gmra.mrb[0].mxu0 %v4270
    %v4426 = vpop.f32.mrb[0].mxu0
    %v4427 = vadd.f32 %v4209, %v4426
    %v4428 = vpop.f32.mrb[0].mxu0
    %v4429 = vpop.f32.mrb[0].mxu0
    %v4430 = vadd.f32 %v4209, %v4429
    %v4431 = vpop.f32.mrb[0].mxu0
    %4432 = vdwg.mxu0
    %v4433 = vmax.f32 %v4307, 0.0
    %v4434 = vmax.f32 %v4310, 0.0
    %v4435 = vmax.f32 %v4315, 0.0
    %v4436 = vmax.f32 %v4318, 0.0
    %v4437 = vmax.f32 %v4323, 0.0
    %v4438 = vmax.f32 %v4326, 0.0
    %v4439 = vmax.f32 %v4331, 0.0
    %v4440 = vmax.f32 %v4334, 0.0
    %v4441 = vmax.f32 %v4339, 0.0
    %v4442 = vmax.f32 %v4342, 0.0
    %v4443 = vmax.f32 %v4347, 0.0
    %v4444 = vmax.f32 %v4350, 0.0
    %v4445 = vmax.f32 %v4355, 0.0
    %v4446 = vmax.f32 %v4358, 0.0
    %v4447 = vmax.f32 %v4363, 0.0
    %v4448 = vmax.f32 %v4366, 0.0
    %v4449 = vmax.f32 %v4371, 0.0
    %v4450 = vmax.f32 %v4374, 0.0
    %v4451 = vmax.f32 %v4379, 0.0
    %v4452 = vmax.f32 %v4382, 0.0
    %v4453 = vmax.f32 %v4387, 0.0
    %v4454 = vmax.f32 %v4390, 0.0
    %v4455 = vmax.f32 %v4395, 0.0
    %v4456 = vmax.f32 %v4398, 0.0
    %v4457 = vmax.f32 %v4403, 0.0
    %v4458 = vmax.f32 %v4406, 0.0
    %v4459 = vmax.f32 %v4411, 0.0
    %v4460 = vmax.f32 %v4414, 0.0
    %v4461 = vmax.f32 %v4419, 0.0
    %v4462 = vmax.f32 %v4422, 0.0
    %v4463 = vmax.f32 %v4427, 0.0
    %v4464 = vmax.f32 %v4430, 0.0
    %v4465 = vld [vmem:[%s2 + $0x30] sm:$0xff]
    %v4466 = vld [vmem:[%s2 + $0x38] sm:$0xff]
    %v4467 = vld [vmem:[%s2 + $0x40] sm:$0xff]
    %v4468 = vld [vmem:[%s2 + $0x48] sm:$0xff]
    %v4469 = vpack.c.bf16 %v4434, %v4433
    %v4470 = vpack.c.bf16 %v4436, %v4435
    %v4471 = vpack.c.bf16 %v4438, %v4437
    %v4472 = vpack.c.bf16 %v4440, %v4439
    %v4473 = vpack.c.bf16 %v4442, %v4441
    %v4474 = vpack.c.bf16 %v4444, %v4443
    %v4475 = vpack.c.bf16 %v4446, %v4445
    %v4476 = vpack.c.bf16 %v4448, %v4447
    %v4477 = vpack.c.bf16 %v4450, %v4449
    %v4478 = vpack.c.bf16 %v4452, %v4451
    %v4479 = vpack.c.bf16 %v4454, %v4453
    %v4480 = vpack.c.bf16 %v4456, %v4455
    %v4481 = vpack.c.bf16 %v4458, %v4457
    %v4482 = vpack.c.bf16 %v4460, %v4459
    %v4483 = vpack.c.bf16 %v4462, %v4461
    %v4484 = vpack.c.bf16 %v4464, %v4463
    %s4485 = scalar_lea.vmem %s1, 80
    %v4486 = vld [vmem:[%s4485] ss:$8 sm:$0x3]
    %v4488 = vlaneseq
    %v4489 = vshrl.u32 %v4488, 7
    %v4490 = vsub.s32 0, %v4489
    %v4491 = vrot.slane %v4486, %v4490
    %v4497 = vunpack.c.l.b16 %v4465
    %v4498 = vunpack.c.l.b16 %v4466
    %v4499 = vunpack.c.l.b16 %v4467
    %v4500 = vunpack.c.l.b16 %v4468
    %v4501 = vpack.c.b16 %v4498, %v4497
    %v4502 = vpack.c.b16 %v4500, %v4499
    %v4506 = vsel %vm4223, %v4469, 0
    %v4509 = vsel %vm4223, %v4470, 0
    %v4512 = vsel %vm4223, %v4471, 0
    %v4515 = vsel %vm4223, %v4472, 0
    %v4518 = vsel %vm4223, %v4473, 0
    %v4521 = vsel %vm4223, %v4474, 0
    %v4524 = vsel %vm4223, %v4475, 0
    %v4527 = vsel %vm4223, %v4476, 0
    %v4530 = vsel %vm4223, %v4477, 0
    %v4533 = vsel %vm4223, %v4478, 0
    %v4536 = vsel %vm4223, %v4479, 0
    %v4539 = vsel %vm4223, %v4480, 0
    %v4542 = vsel %vm4223, %v4481, 0
    %v4545 = vsel %vm4223, %v4482, 0
    %v4548 = vsel %vm4223, %v4483, 0
    %v4551 = vsel %vm4223, %v4484, 0
    %4553 = vmatprep.subr.bf16.mxu0 0
    %4554 = vmatpush1.bf16.msra.mxu0 %v4501
    %4555 = vmatprep.subr.bf16.mxu0 0
    %4556 = vmatpush1.bf16.msra.mxu0 %v4502
    %4557 = vmatprep.subr.bf16.mxu0 0
    %4558 = vmatpush1.bf16.msra.mxu0 0
    %4559 = vmatprep.subr.bf16.mxu0 0
    %4560 = vmatpush1.bf16.msra.mxu0 0
    %4561 = vmatprep.subr.bf16.mxu0 0
    %4562 = vmatpush1.bf16.msra.mxu0 0
    %4563 = vmatprep.subr.bf16.mxu0 0
    %4564 = vmatpush1.bf16.msra.mxu0 0
    %4565 = vmatprep.subr.bf16.mxu0 0
    %4566 = vmatpush1.bf16.msra.mxu0 0
    %4567 = vmatprep.subr.bf16.mxu0 0
    %4568 = vmatpush1.bf16.msra.mxu0 0
    %4569 = vmatprep.subr.bf16.mxu0 0
    %4570 = vmatpush1.bf16.msra.mxu0 0
    %4571 = vmatprep.subr.bf16.mxu0 0
    %4572 = vmatpush1.bf16.msra.mxu0 0
    %4573 = vmatprep.subr.bf16.mxu0 0
    %4574 = vmatpush1.bf16.msra.mxu0 0
    %4575 = vmatprep.subr.bf16.mxu0 0
    %4576 = vmatpush1.bf16.msra.mxu0 0
    %4577 = vmatprep.subr.bf16.mxu0 0
    %4578 = vmatpush1.bf16.msra.mxu0 0
    %4579 = vmatprep.subr.bf16.mxu0 0
    %4580 = vmatpush1.bf16.msra.mxu0 0
    %4581 = vmatprep.subr.bf16.mxu0 0
    %4582 = vmatpush1.bf16.msra.mxu0 0
    %4583 = vmatprep.subr.bf16.mxu0 0
    %4584 = vmatpush1.bf16.msra.mxu0 0
    %4585 = vmatprep.mubr.bf16.mxu0 0
    %4586 = vmatmul.mubr.bf16.gmra.mrb[0].mxu0 %v4506
    %v4587 = vpop.f32.mrb[0].mxu0
    %v4588 = vadd.f32 %v4491, %v4587
    %v4589 = vpop.f32.mrb[0].mxu0
    %v4590 = vpop.f32.mrb[0].mxu0
    %v4591 = vadd.f32 %v4491, %v4590
    %v4592 = vpop.f32.mrb[0].mxu0
    %4593 = vmatprep.mubr.bf16.mxu0 0
    %4594 = vmatmul.mubr.bf16.gmra.mrb[0].mxu0 %v4509
    %v4595 = vpop.f32.mrb[0].mxu0
    %v4596 = vadd.f32 %v4491, %v4595
    %v4597 = vpop.f32.mrb[0].mxu0
    %v4598 = vpop.f32.mrb[0].mxu0
    %v4599 = vadd.f32 %v4491, %v4598
    %v4600 = vpop.f32.mrb[0].mxu0
    %4601 = vmatprep.mubr.bf16.mxu0 0
    %4602 = vmatmul.mubr.bf16.gmra.mrb[0].mxu0 %v4512
    %v4603 = vpop.f32.mrb[0].mxu0
    %v4604 = vadd.f32 %v4491, %v4603
    %v4605 = vpop.f32.mrb[0].mxu0
    %v4606 = vpop.f32.mrb[0].mxu0
    %v4607 = vadd.f32 %v4491, %v4606
    %v4608 = vpop.f32.mrb[0].mxu0
    %4609 = vmatprep.mubr.bf16.mxu0 0
    %4610 = vmatmul.mubr.bf16.gmra.mrb[0].mxu0 %v4515
    %v4611 = vpop.f32.mrb[0].mxu0
    %v4612 = vadd.f32 %v4491, %v4611
    %v4613 = vpop.f32.mrb[0].mxu0
    %v4614 = vpop.f32.mrb[0].mxu0
    %v4615 = vadd.f32 %v4491, %v4614
    %v4616 = vpop.f32.mrb[0].mxu0
    %4617 = vmatprep.mubr.bf16.mxu0 0
    %4618 = vmatmul.mubr.bf16.gmra.mrb[0].mxu0 %v4518
    %v4619 = vpop.f32.mrb[0].mxu0
    %v4620 = vpop.f32.mrb[0].mxu0
    %v4621 = vpop.f32.mrb[0].mxu0
    %v4622 = vpop.f32.mrb[0].mxu0
    %4623 = vmatprep.mubr.bf16.mxu0 0
    %4624 = vmatmul.mubr.bf16.gmra.mrb[0].mxu0 %v4521
    %v4625 = vpop.f32.mrb[0].mxu0
    %v4626 = vpop.f32.mrb[0].mxu0
    %v4627 = vpop.f32.mrb[0].mxu0
    %v4628 = vpop.f32.mrb[0].mxu0
    %4629 = vmatprep.mubr.bf16.mxu0 0
    %4630 = vmatmul.mubr.bf16.gmra.mrb[0].mxu0 %v4524
    %v4631 = vpop.f32.mrb[0].mxu0
    %v4632 = vpop.f32.mrb[0].mxu0
    %v4633 = vpop.f32.mrb[0].mxu0
    %v4634 = vpop.f32.mrb[0].mxu0
    %4635 = vmatprep.mubr.bf16.mxu0 0
    %4636 = vmatmul.mubr.bf16.gmra.mrb[0].mxu0 %v4527
    %v4637 = vpop.f32.mrb[0].mxu0
    %v4638 = vpop.f32.mrb[0].mxu0
    %v4639 = vpop.f32.mrb[0].mxu0
    %v4640 = vpop.f32.mrb[0].mxu0
    %4641 = vmatprep.mubr.bf16.mxu0 0
    %4642 = vmatmul.mubr.bf16.gmra.mrb[0].mxu0 %v4530
    %v4643 = vpop.f32.mrb[0].mxu0
    %v4644 = vadd.f32 %v4491, %v4643
    %v4645 = vpop.f32.mrb[0].mxu0
    %v4646 = vpop.f32.mrb[0].mxu0
    %v4647 = vadd.f32 %v4491, %v4646
    %v4648 = vpop.f32.mrb[0].mxu0
    %4649 = vmatprep.mubr.bf16.mxu0 0
    %4650 = vmatmul.mubr.bf16.gmra.mrb[0].mxu0 %v4533
    %v4651 = vpop.f32.mrb[0].mxu0
    %v4652 = vadd.f32 %v4491, %v4651
    %v4653 = vpop.f32.mrb[0].mxu0
    %v4654 = vpop.f32.mrb[0].mxu0
    %v4655 = vadd.f32 %v4491, %v4654
    %v4656 = vpop.f32.mrb[0].mxu0
    %4657 = vmatprep.mubr.bf16.mxu0 0
    %4658 = vmatmul.mubr.bf16.gmra.mrb[0].mxu0 %v4536
    %v4659 = vpop.f32.mrb[0].mxu0
    %v4660 = vadd.f32 %v4491, %v4659
    %v4661 = vpop.f32.mrb[0].mxu0
    %v4662 = vpop.f32.mrb[0].mxu0
    %v4663 = vadd.f32 %v4491, %v4662
    %v4664 = vpop.f32.mrb[0].mxu0
    %4665 = vmatprep.mubr.bf16.mxu0 0
    %4666 = vmatmul.mubr.bf16.gmra.mrb[0].mxu0 %v4539
    %v4667 = vpop.f32.mrb[0].mxu0
    %v4668 = vadd.f32 %v4491, %v4667
    %v4669 = vpop.f32.mrb[0].mxu0
    %v4670 = vpop.f32.mrb[0].mxu0
    %v4671 = vadd.f32 %v4491, %v4670
    %v4672 = vpop.f32.mrb[0].mxu0
    %4673 = vmatprep.mubr.bf16.mxu0 0
    %4674 = vmatmul.mubr.bf16.gmra.mrb[0].mxu0 %v4542
    %v4675 = vpop.f32.mrb[0].mxu0
    %v4676 = vpop.f32.mrb[0].mxu0
    %v4677 = vpop.f32.mrb[0].mxu0
    %v4678 = vpop.f32.mrb[0].mxu0
    %4679 = vmatprep.mubr.bf16.mxu0 0
    %4680 = vmatmul.mubr.bf16.gmra.mrb[0].mxu0 %v4545
    %v4681 = vpop.f32.mrb[0].mxu0
    %v4682 = vpop.f32.mrb[0].mxu0
    %v4683 = vpop.f32.mrb[0].mxu0
    %v4684 = vpop.f32.mrb[0].mxu0
    %4685 = vmatprep.mubr.bf16.mxu0 0
    %4686 = vmatmul.mubr.bf16.gmra.mrb[0].mxu0 %v4548
    %v4687 = vpop.f32.mrb[0].mxu0
    %v4688 = vpop.f32.mrb[0].mxu0
    %v4689 = vpop.f32.mrb[0].mxu0
    %v4690 = vpop.f32.mrb[0].mxu0
    %4691 = vmatprep.mubr.bf16.mxu0 0
    %4692 = vmatmul.mubr.bf16.gmra.mrb[0].mxu0 %v4551
    %v4693 = vpop.f32.mrb[0].mxu0
    %v4694 = vpop.f32.mrb[0].mxu0
    %v4695 = vpop.f32.mrb[0].mxu0
    %v4696 = vpop.f32.mrb[0].mxu0
    %4697 = vdwg.mxu0
    %v4698 = vmax.f32 %v4588, 0.0
    %v4699 = vmax.f32 %v4591, 0.0
    %v4700 = vmax.f32 %v4596, 0.0
    %v4701 = vmax.f32 %v4599, 0.0
    %v4702 = vmax.f32 %v4604, 0.0
    %v4703 = vmax.f32 %v4607, 0.0
    %v4704 = vmax.f32 %v4612, 0.0
    %v4705 = vmax.f32 %v4615, 0.0
    %v4706 = vmax.f32 %v4644, 0.0
    %v4707 = vmax.f32 %v4647, 0.0
    %v4708 = vmax.f32 %v4652, 0.0
    %v4709 = vmax.f32 %v4655, 0.0
    %v4710 = vmax.f32 %v4660, 0.0
    %v4711 = vmax.f32 %v4663, 0.0
    %v4712 = vmax.f32 %v4668, 0.0
    %v4713 = vmax.f32 %v4671, 0.0
    %vm4714 = vcmask 130048
    %v4715 = vsel %vm4714, %v4698, 0.0
    %v4716 = vsel %vm4714, %v4699, 0.0
    %v4717 = vadd.f32 %v4715, %v4716
    %v4718 = vsel %vm4714, %v4700, 0.0
    %v4719 = vadd.f32 %v4717, %v4718
    %v4720 = vsel %vm4714, %v4701, 0.0
    %v4721 = vadd.f32 %v4719, %v4720
    %v4722 = vsel %vm4714, %v4702, 0.0
    %v4723 = vadd.f32 %v4721, %v4722
    %v4724 = vsel %vm4714, %v4703, 0.0
    %v4725 = vadd.f32 %v4723, %v4724
    %v4726 = vsel %vm4714, %v4704, 0.0
    %v4727 = vadd.f32 %v4725, %v4726
    %v4728 = vsel %vm4714, %v4705, 0.0
    %v4729 = vadd.f32 %v4727, %v4728
    %v4730 = vsel %vm4714, %v4706, 0.0
    %v4731 = vadd.f32 %v4729, %v4730
    %v4732 = vsel %vm4714, %v4707, 0.0
    %v4733 = vadd.f32 %v4731, %v4732
    %v4734 = vsel %vm4714, %v4708, 0.0
    %v4735 = vadd.f32 %v4733, %v4734
    %v4736 = vsel %vm4714, %v4709, 0.0
    %v4737 = vadd.f32 %v4735, %v4736
    %v4738 = vsel %vm4714, %v4710, 0.0
    %v4739 = vadd.f32 %v4737, %v4738
    %v4740 = vsel %vm4714, %v4711, 0.0
    %v4741 = vadd.f32 %v4739, %v4740
    %v4742 = vsel %vm4714, %v4712, 0.0
    %v4743 = vadd.f32 %v4741, %v4742
    %v4744 = vsel %vm4714, %v4713, 0.0
    %v4745 = vadd.f32 %v4743, %v4744
    %v4746 = vrot.slane %v4745, 4
    %v4747 = vadd.f32 %v4745, %v4746
    %v4748 = vrot.slane %v4747, 2
    %v4749 = vadd.f32 %v4747, %v4748
    %v4750 = vrot.slane %v4749, 1
    %v4751 = vadd.f32 %v4749, %v4750
    %v4752 = vmul.f32 %v4751, 0.0078125
    %v4753 = vmul.f32 %v4698, %v4698
    %v4754 = vmul.f32 %v4699, %v4699
    %v4755 = vmul.f32 %v4700, %v4700
    %v4756 = vmul.f32 %v4701, %v4701
    %v4757 = vmul.f32 %v4702, %v4702
    %v4758 = vmul.f32 %v4703, %v4703
    %v4759 = vmul.f32 %v4704, %v4704
    %v4760 = vmul.f32 %v4705, %v4705
    %v4761 = vmul.f32 %v4706, %v4706
    %v4762 = vmul.f32 %v4707, %v4707
    %v4763 = vmul.f32 %v4708, %v4708
    %v4764 = vmul.f32 %v4709, %v4709
    %v4765 = vmul.f32 %v4710, %v4710
    %v4766 = vmul.f32 %v4711, %v4711
    %v4767 = vmul.f32 %v4712, %v4712
    %v4768 = vmul.f32 %v4713, %v4713
    %v4769 = vsel %vm4714, %v4753, 0.0
    %v4770 = vsel %vm4714, %v4754, 0.0
    %v4771 = vadd.f32 %v4769, %v4770
    %v4772 = vsel %vm4714, %v4755, 0.0
    %v4773 = vadd.f32 %v4771, %v4772
    %v4774 = vsel %vm4714, %v4756, 0.0
    %v4775 = vadd.f32 %v4773, %v4774
    %v4776 = vsel %vm4714, %v4757, 0.0
    %v4777 = vadd.f32 %v4775, %v4776
    %v4778 = vsel %vm4714, %v4758, 0.0
    %v4779 = vadd.f32 %v4777, %v4778
    %v4780 = vsel %vm4714, %v4759, 0.0
    %v4781 = vadd.f32 %v4779, %v4780
    %v4782 = vsel %vm4714, %v4760, 0.0
    %v4783 = vadd.f32 %v4781, %v4782
    %v4784 = vsel %vm4714, %v4761, 0.0
    %v4785 = vadd.f32 %v4783, %v4784
    %v4786 = vsel %vm4714, %v4762, 0.0
    %v4787 = vadd.f32 %v4785, %v4786
    %v4788 = vsel %vm4714, %v4763, 0.0
    %v4789 = vadd.f32 %v4787, %v4788
    %v4790 = vsel %vm4714, %v4764, 0.0
    %v4791 = vadd.f32 %v4789, %v4790
    %v4792 = vsel %vm4714, %v4765, 0.0
    %v4793 = vadd.f32 %v4791, %v4792
    %v4794 = vsel %vm4714, %v4766, 0.0
    %v4795 = vadd.f32 %v4793, %v4794
    %v4796 = vsel %vm4714, %v4767, 0.0
    %v4797 = vadd.f32 %v4795, %v4796
    %v4798 = vsel %vm4714, %v4768, 0.0
    %v4799 = vadd.f32 %v4797, %v4798
    %v4800 = vrot.slane %v4799, 4
    %v4801 = vadd.f32 %v4799, %v4800
    %v4802 = vrot.slane %v4801, 2
    %v4803 = vadd.f32 %v4801, %v4802
    %v4804 = vrot.slane %v4803, 1
    %v4805 = vadd.f32 %v4803, %v4804
    %v4806 = vmul.f32 %v4805, 0.0078125
    %v4807 = vmul.f32 %v4752, %v4752
    %v4808 = vsub.f32 %v4806, %v4807
    %v4809 = vmax.f32 %v4808, 0.0
    %v4810 = vadd.f32 %v4809, 1e-05
    %v4811 = vrsqrt.pop %v4810
    %v4812 = vsub.f32 %v4698, %v4752
    %v4813 = vsub.f32 %v4699, %v4752
    %v4814 = vsub.f32 %v4700, %v4752
    %v4815 = vsub.f32 %v4701, %v4752
    %v4816 = vsub.f32 %v4702, %v4752
    %v4817 = vsub.f32 %v4703, %v4752
    %v4818 = vsub.f32 %v4704, %v4752
    %v4819 = vsub.f32 %v4705, %v4752
    %v4820 = vsub.f32 %v4706, %v4752
    %v4821 = vsub.f32 %v4707, %v4752
    %v4822 = vsub.f32 %v4708, %v4752
    %v4823 = vsub.f32 %v4709, %v4752
    %v4824 = vsub.f32 %v4710, %v4752
    %v4825 = vsub.f32 %v4711, %v4752
    %v4826 = vsub.f32 %v4712, %v4752
    %v4827 = vsub.f32 %v4713, %v4752
    %v4828 = vmul.f32 %v4812, %v4811
    %v4829 = vmul.f32 %v4813, %v4811
    %v4830 = vmul.f32 %v4814, %v4811
    %v4831 = vmul.f32 %v4815, %v4811
    %v4832 = vmul.f32 %v4816, %v4811
    %v4833 = vmul.f32 %v4817, %v4811
    %v4834 = vmul.f32 %v4818, %v4811
    %v4835 = vmul.f32 %v4819, %v4811
    %v4836 = vmul.f32 %v4820, %v4811
    %v4837 = vmul.f32 %v4821, %v4811
    %v4838 = vmul.f32 %v4822, %v4811
    %v4839 = vmul.f32 %v4823, %v4811
    %v4840 = vmul.f32 %v4824, %v4811
    %v4841 = vmul.f32 %v4825, %v4811
    %v4842 = vmul.f32 %v4826, %v4811
    %v4843 = vmul.f32 %v4827, %v4811
    %s4844 = scalar_lea.vmem %s1, 96
    %v4845 = vld [vmem:[%s4844] ss:$8 sm:$0x3]
    %v4847 = vlaneseq
    %v4848 = vshrl.u32 %v4847, 7
    %v4849 = vsub.s32 0, %v4848
    %v4850 = vrot.slane %v4845, %v4849
    %v4852 = vmul.f32 %v4828, %v4850
    %v4853 = vmul.f32 %v4829, %v4850
    %v4854 = vmul.f32 %v4830, %v4850
    %v4855 = vmul.f32 %v4831, %v4850
    %v4856 = vmul.f32 %v4832, %v4850
    %v4857 = vmul.f32 %v4833, %v4850
    %v4858 = vmul.f32 %v4834, %v4850
    %v4859 = vmul.f32 %v4835, %v4850
    %v4860 = vmul.f32 %v4836, %v4850
    %v4861 = vmul.f32 %v4837, %v4850
    %v4862 = vmul.f32 %v4838, %v4850
    %v4863 = vmul.f32 %v4839, %v4850
    %v4864 = vmul.f32 %v4840, %v4850
    %v4865 = vmul.f32 %v4841, %v4850
    %v4866 = vmul.f32 %v4842, %v4850
    %v4867 = vmul.f32 %v4843, %v4850
    %s4868 = scalar_lea.vmem %s1, 112
    %v4869 = vld [vmem:[%s4868] ss:$8 sm:$0x3]
    %v4871 = vlaneseq
    %v4872 = vshrl.u32 %v4871, 7
    %v4873 = vsub.s32 0, %v4872
    %v4874 = vrot.slane %v4869, %v4873
    %v4876 = vadd.f32 %v4852, %v4874
    %v4877 = vadd.f32 %v4853, %v4874
    %v4878 = vadd.f32 %v4854, %v4874
    %v4879 = vadd.f32 %v4855, %v4874
    %v4880 = vadd.f32 %v4856, %v4874
    %v4881 = vadd.f32 %v4857, %v4874
    %v4882 = vadd.f32 %v4858, %v4874
    %v4883 = vadd.f32 %v4859, %v4874
    %v4884 = vadd.f32 %v4860, %v4874
    %v4885 = vadd.f32 %v4861, %v4874
    %v4886 = vadd.f32 %v4862, %v4874
    %v4887 = vadd.f32 %v4863, %v4874
    %v4888 = vadd.f32 %v4864, %v4874
    %v4889 = vadd.f32 %v4865, %v4874
    %v4890 = vadd.f32 %v4866, %v4874
    %v4891 = vadd.f32 %v4867, %v4874
    %v4892 = vld [vmem:[%s2 + $0x50] sm:$0xff]
    %v4893 = vld [vmem:[%s2 + $0x58] sm:$0xff]
    %v4894 = vpack.c.bf16 %v4877, %v4876
    %v4895 = vpack.c.bf16 %v4879, %v4878
    %v4896 = vpack.c.bf16 %v4881, %v4880
    %v4897 = vpack.c.bf16 %v4883, %v4882
    %v4898 = vpack.c.bf16 %v4885, %v4884
    %v4899 = vpack.c.bf16 %v4887, %v4886
    %v4900 = vpack.c.bf16 %v4889, %v4888
    %v4901 = vpack.c.bf16 %v4891, %v4890
    %v4902 = vld [vmem:[%s2 + $0x60] sm:$0xff]
    %v4904 = vsel %vm3914, %v4902, 0
    %4906 = vmatprep.subr.bf16.mxu0 0
    %4907 = vmatpush1.bf16.msra.mxu0 %v4904
    %4908 = vmatprep.subr.bf16.mxu0 0
    %4909 = vmatpush1.bf16.msra.mxu0 0
    %4910 = vmatprep.subr.bf16.mxu0 0
    %4911 = vmatpush1.bf16.msra.mxu0 0
    %4912 = vmatprep.subr.bf16.mxu0 0
    %4913 = vmatpush1.bf16.msra.mxu0 0
    %4914 = vmatprep.subr.bf16.mxu0 0
    %4915 = vmatpush1.bf16.msra.mxu0 0
    %4916 = vmatprep.subr.bf16.mxu0 0
    %4917 = vmatpush1.bf16.msra.mxu0 0
    %4918 = vmatprep.subr.bf16.mxu0 0
    %4919 = vmatpush1.bf16.msra.mxu0 0
    %4920 = vmatprep.subr.bf16.mxu0 0
    %4921 = vmatpush1.bf16.msra.mxu0 0
    %4922 = vmatprep.subr.bf16.mxu0 0
    %4923 = vmatpush1.bf16.msra.mxu0 0
    %4924 = vmatprep.subr.bf16.mxu0 0
    %4925 = vmatpush1.bf16.msra.mxu0 0
    %4926 = vmatprep.subr.bf16.mxu0 0
    %4927 = vmatpush1.bf16.msra.mxu0 0
    %4928 = vmatprep.subr.bf16.mxu0 0
    %4929 = vmatpush1.bf16.msra.mxu0 0
    %4930 = vmatprep.subr.bf16.mxu0 0
    %4931 = vmatpush1.bf16.msra.mxu0 0
    %4932 = vmatprep.subr.bf16.mxu0 0
    %4933 = vmatpush1.bf16.msra.mxu0 0
    %4934 = vmatprep.subr.bf16.mxu0 0
    %4935 = vmatpush1.bf16.msra.mxu0 0
    %4936 = vmatprep.subr.bf16.mxu0 0
    %4937 = vmatpush1.bf16.msra.mxu0 0
    %4938 = vmatprep.mubr.bf16.mxu0 0
    %4939 = vmatmul.mubr.bf16.gmra.mrb[0].mxu0 %v3867
    %v4940 = vpop.f32.mrb[0].mxu0
    %v4941 = vadd.f32 0.0, %v4940
    %v4942 = vpop.f32.mrb[0].mxu0
    %v4943 = vpop.f32.mrb[0].mxu0
    %v4944 = vadd.f32 0.0, %v4943
    %v4945 = vpop.f32.mrb[0].mxu0
    %4946 = vmatprep.mubr.bf16.mxu0 0
    %4947 = vmatmul.mubr.bf16.gmra.mrb[0].mxu0 %v3870
    %v4948 = vpop.f32.mrb[0].mxu0
    %v4949 = vadd.f32 0.0, %v4948
    %v4950 = vpop.f32.mrb[0].mxu0
    %v4951 = vpop.f32.mrb[0].mxu0
    %v4952 = vadd.f32 0.0, %v4951
    %v4953 = vpop.f32.mrb[0].mxu0
    %4954 = vmatprep.mubr.bf16.mxu0 0
    %4955 = vmatmul.mubr.bf16.gmra.mrb[0].mxu0 %v3873
    %v4956 = vpop.f32.mrb[0].mxu0
    %v4957 = vadd.f32 0.0, %v4956
    %v4958 = vpop.f32.mrb[0].mxu0
    %v4959 = vpop.f32.mrb[0].mxu0
    %v4960 = vadd.f32 0.0, %v4959
    %v4961 = vpop.f32.mrb[0].mxu0
    %4962 = vmatprep.mubr.bf16.mxu0 0
    %4963 = vmatmul.mubr.bf16.gmra.mrb[0].mxu0 %v3876
    %v4964 = vpop.f32.mrb[0].mxu0
    %v4965 = vadd.f32 0.0, %v4964
    %v4966 = vpop.f32.mrb[0].mxu0
    %v4967 = vpop.f32.mrb[0].mxu0
    %v4968 = vadd.f32 0.0, %v4967
    %v4969 = vpop.f32.mrb[0].mxu0
    %4970 = vmatprep.mubr.bf16.mxu0 0
    %4971 = vmatmul.mubr.bf16.gmra.mrb[0].mxu0 %v3891
    %v4972 = vpop.f32.mrb[0].mxu0
    %v4973 = vadd.f32 0.0, %v4972
    %v4974 = vpop.f32.mrb[0].mxu0
    %v4975 = vpop.f32.mrb[0].mxu0
    %v4976 = vadd.f32 0.0, %v4975
    %v4977 = vpop.f32.mrb[0].mxu0
    %4978 = vmatprep.mubr.bf16.mxu0 0
    %4979 = vmatmul.mubr.bf16.gmra.mrb[0].mxu0 %v3894
    %v4980 = vpop.f32.mrb[0].mxu0
    %v4981 = vadd.f32 0.0, %v4980
    %v4982 = vpop.f32.mrb[0].mxu0
    %v4983 = vpop.f32.mrb[0].mxu0
    %v4984 = vadd.f32 0.0, %v4983
    %v4985 = vpop.f32.mrb[0].mxu0
    %4986 = vmatprep.mubr.bf16.mxu0 0
    %4987 = vmatmul.mubr.bf16.gmra.mrb[0].mxu0 %v3897
    %v4988 = vpop.f32.mrb[0].mxu0
    %v4989 = vadd.f32 0.0, %v4988
    %v4990 = vpop.f32.mrb[0].mxu0
    %v4991 = vpop.f32.mrb[0].mxu0
    %v4992 = vadd.f32 0.0, %v4991
    %v4993 = vpop.f32.mrb[0].mxu0
    %4994 = vmatprep.mubr.bf16.mxu0 0
    %4995 = vmatmul.mubr.bf16.gmra.mrb[0].mxu0 %v3900
    %v4996 = vpop.f32.mrb[0].mxu0
    %v4997 = vadd.f32 0.0, %v4996
    %v4998 = vpop.f32.mrb[0].mxu0
    %v4999 = vpop.f32.mrb[0].mxu0
    %v5000 = vadd.f32 0.0, %v4999
    %v5001 = vpop.f32.mrb[0].mxu0
    %5002 = vdwg.mxu0
    %v5005 = vunpack.c.l.b16 %v4892
    %v5006 = vunpack.c.l.b16 %v4893
    %v5007 = vpack.c.b16 %v5006, %v5005
    %v5010 = vsel %vm4714, %v4894, 0
    %v5013 = vsel %vm4714, %v4895, 0
    %v5016 = vsel %vm4714, %v4896, 0
    %v5019 = vsel %vm4714, %v4897, 0
    %v5022 = vsel %vm4714, %v4898, 0
    %v5025 = vsel %vm4714, %v4899, 0
    %v5028 = vsel %vm4714, %v4900, 0
    %v5031 = vsel %vm4714, %v4901, 0
    %5033 = vmatprep.subr.bf16.mxu0 0
    %5034 = vmatpush1.bf16.msra.mxu0 %v5007
    %5035 = vmatprep.subr.bf16.mxu0 0
    %5036 = vmatpush1.bf16.msra.mxu0 0
    %5037 = vmatprep.subr.bf16.mxu0 0
    %5038 = vmatpush1.bf16.msra.mxu0 0
    %5039 = vmatprep.subr.bf16.mxu0 0
    %5040 = vmatpush1.bf16.msra.mxu0 0
    %5041 = vmatprep.subr.bf16.mxu0 0
    %5042 = vmatpush1.bf16.msra.mxu0 0
    %5043 = vmatprep.subr.bf16.mxu0 0
    %5044 = vmatpush1.bf16.msra.mxu0 0
    %5045 = vmatprep.subr.bf16.mxu0 0
    %5046 = vmatpush1.bf16.msra.mxu0 0
    %5047 = vmatprep.subr.bf16.mxu0 0
    %5048 = vmatpush1.bf16.msra.mxu0 0
    %5049 = vmatprep.subr.bf16.mxu0 0
    %5050 = vmatpush1.bf16.msra.mxu0 0
    %5051 = vmatprep.subr.bf16.mxu0 0
    %5052 = vmatpush1.bf16.msra.mxu0 0
    %5053 = vmatprep.subr.bf16.mxu0 0
    %5054 = vmatpush1.bf16.msra.mxu0 0
    %5055 = vmatprep.subr.bf16.mxu0 0
    %5056 = vmatpush1.bf16.msra.mxu0 0
    %5057 = vmatprep.subr.bf16.mxu0 0
    %5058 = vmatpush1.bf16.msra.mxu0 0
    %5059 = vmatprep.subr.bf16.mxu0 0
    %5060 = vmatpush1.bf16.msra.mxu0 0
    %5061 = vmatprep.subr.bf16.mxu0 0
    %5062 = vmatpush1.bf16.msra.mxu0 0
    %5063 = vmatprep.subr.bf16.mxu0 0
    %5064 = vmatpush1.bf16.msra.mxu0 0
    %5065 = vmatprep.mubr.bf16.mxu0 0
    %5066 = vmatmul.mubr.bf16.gmra.mrb[0].mxu0 %v5010
    %v5067 = vpop.f32.mrb[0].mxu0
    %v5068 = vadd.f32 %v4941, %v5067
    %v5069 = vpop.f32.mrb[0].mxu0
    %v5070 = vpop.f32.mrb[0].mxu0
    %v5071 = vadd.f32 %v4944, %v5070
    %v5072 = vpop.f32.mrb[0].mxu0
    %5073 = vmatprep.mubr.bf16.mxu0 0
    %5074 = vmatmul.mubr.bf16.gmra.mrb[0].mxu0 %v5013
    %v5075 = vpop.f32.mrb[0].mxu0
    %v5076 = vadd.f32 %v4949, %v5075
    %v5077 = vpop.f32.mrb[0].mxu0
    %v5078 = vpop.f32.mrb[0].mxu0
    %v5079 = vadd.f32 %v4952, %v5078
    %v5080 = vpop.f32.mrb[0].mxu0
    %5081 = vmatprep.mubr.bf16.mxu0 0
    %5082 = vmatmul.mubr.bf16.gmra.mrb[0].mxu0 %v5016
    %v5083 = vpop.f32.mrb[0].mxu0
    %v5084 = vadd.f32 %v4957, %v5083
    %v5085 = vpop.f32.mrb[0].mxu0
    %v5086 = vpop.f32.mrb[0].mxu0
    %v5087 = vadd.f32 %v4960, %v5086
    %v5088 = vpop.f32.mrb[0].mxu0
    %5089 = vmatprep.mubr.bf16.mxu0 0
    %5090 = vmatmul.mubr.bf16.gmra.mrb[0].mxu0 %v5019
    %v5091 = vpop.f32.mrb[0].mxu0
    %v5092 = vadd.f32 %v4965, %v5091
    %v5093 = vpop.f32.mrb[0].mxu0
    %v5094 = vpop.f32.mrb[0].mxu0
    %v5095 = vadd.f32 %v4968, %v5094
    %v5096 = vpop.f32.mrb[0].mxu0
    %5097 = vmatprep.mubr.bf16.mxu0 0
    %5098 = vmatmul.mubr.bf16.gmra.mrb[0].mxu0 %v5022
    %v5099 = vpop.f32.mrb[0].mxu0
    %v5100 = vadd.f32 %v4973, %v5099
    %v5101 = vpop.f32.mrb[0].mxu0
    %v5102 = vpop.f32.mrb[0].mxu0
    %v5103 = vadd.f32 %v4976, %v5102
    %v5104 = vpop.f32.mrb[0].mxu0
    %5105 = vmatprep.mubr.bf16.mxu0 0
    %5106 = vmatmul.mubr.bf16.gmra.mrb[0].mxu0 %v5025
    %v5107 = vpop.f32.mrb[0].mxu0
    %v5108 = vadd.f32 %v4981, %v5107
    %v5109 = vpop.f32.mrb[0].mxu0
    %v5110 = vpop.f32.mrb[0].mxu0
    %v5111 = vadd.f32 %v4984, %v5110
    %v5112 = vpop.f32.mrb[0].mxu0
    %5113 = vmatprep.mubr.bf16.mxu0 0
    %5114 = vmatmul.mubr.bf16.gmra.mrb[0].mxu0 %v5028
    %v5115 = vpop.f32.mrb[0].mxu0
    %v5116 = vadd.f32 %v4989, %v5115
    %v5117 = vpop.f32.mrb[0].mxu0
    %v5118 = vpop.f32.mrb[0].mxu0
    %v5119 = vadd.f32 %v4992, %v5118
    %v5120 = vpop.f32.mrb[0].mxu0
    %5121 = vmatprep.mubr.bf16.mxu0 0
    %5122 = vmatmul.mubr.bf16.gmra.mrb[0].mxu0 %v5031
    %v5123 = vpop.f32.mrb[0].mxu0
    %v5124 = vadd.f32 %v4997, %v5123
    %v5125 = vpop.f32.mrb[0].mxu0
    %v5126 = vpop.f32.mrb[0].mxu0
    %v5127 = vadd.f32 %v5000, %v5126
    %v5128 = vpop.f32.mrb[0].mxu0
    %5129 = vdwg.mxu0
    %s5130 = scalar_lea.vmem %s1, 128
    %v5131 = vld [vmem:[%s5130] ss:$8 sm:$0x3]
    %v5133 = vlaneseq
    %v5134 = vshrl.u32 %v5133, 7
    %v5135 = vsub.s32 0, %v5134
    %v5136 = vrot.slane %v5131, %v5135
    %v5138 = vadd.f32 %v5068, %v5136
    %v5139 = vadd.f32 %v5071, %v5136
    %v5140 = vadd.f32 %v5076, %v5136
    %v5141 = vadd.f32 %v5079, %v5136
    %v5142 = vadd.f32 %v5084, %v5136
    %v5143 = vadd.f32 %v5087, %v5136
    %v5144 = vadd.f32 %v5092, %v5136
    %v5145 = vadd.f32 %v5095, %v5136
    %v5146 = vadd.f32 %v5100, %v5136
    %v5147 = vadd.f32 %v5103, %v5136
    %v5148 = vadd.f32 %v5108, %v5136
    %v5149 = vadd.f32 %v5111, %v5136
    %v5150 = vadd.f32 %v5116, %v5136
    %v5151 = vadd.f32 %v5119, %v5136
    %v5152 = vadd.f32 %v5124, %v5136
    %v5153 = vadd.f32 %v5127, %v5136
    %v5154 = vmax.f32 %v5138, 0.0
    %v5155 = vmax.f32 %v5139, 0.0
    %v5156 = vmax.f32 %v5140, 0.0
    %v5157 = vmax.f32 %v5141, 0.0
    %v5158 = vmax.f32 %v5142, 0.0
    %v5159 = vmax.f32 %v5143, 0.0
    %v5160 = vmax.f32 %v5144, 0.0
    %v5161 = vmax.f32 %v5145, 0.0
    %v5162 = vmax.f32 %v5146, 0.0
    %v5163 = vmax.f32 %v5147, 0.0
    %v5164 = vmax.f32 %v5148, 0.0
    %v5165 = vmax.f32 %v5149, 0.0
    %v5166 = vmax.f32 %v5150, 0.0
    %v5167 = vmax.f32 %v5151, 0.0
    %v5168 = vmax.f32 %v5152, 0.0
    %v5169 = vmax.f32 %v5153, 0.0
    %v5170 = vld [vmem:[%s2 + $0x70] sm:$0xff]
    %v5171 = vld [vmem:[%s2 + $0x78] sm:$0xff]
    %v5172 = vld [vmem:[%s2 + $0x80] sm:$0xff]
    %v5173 = vld [vmem:[%s2 + $0x88] sm:$0xff]
    %v5174 = vpack.c.bf16 %v5155, %v5154
    %v5175 = vpack.c.bf16 %v5157, %v5156
    %v5176 = vpack.c.bf16 %v5159, %v5158
    %v5177 = vpack.c.bf16 %v5161, %v5160
    %v5178 = vpack.c.bf16 %v5163, %v5162
    %v5179 = vpack.c.bf16 %v5165, %v5164
    %v5180 = vpack.c.bf16 %v5167, %v5166
    %v5181 = vpack.c.bf16 %v5169, %v5168
    %s5182 = scalar_lea.vmem %s1, 144
    %v5183 = vld [vmem:[%s5182] ss:$8 sm:$0x3]
    %v5185 = vlaneseq
    %v5186 = vshrl.u32 %v5185, 7
    %v5187 = vsub.s32 0, %v5186
    %v5188 = vrot.slane %v5183, %v5187
    %v5194 = vunpack.c.l.b16 %v5170
    %v5195 = vunpack.c.l.b16 %v5171
    %v5196 = vunpack.c.l.b16 %v5172
    %v5197 = vunpack.c.l.b16 %v5173
    %v5198 = vpack.c.b16 %v5195, %v5194
    %v5199 = vpack.c.b16 %v5197, %v5196
    %v5203 = vsel %vm4223, %v5174, 0
    %v5206 = vsel %vm4223, %v5175, 0
    %v5209 = vsel %vm4223, %v5176, 0
    %v5212 = vsel %vm4223, %v5177, 0
    %v5215 = vsel %vm4223, %v5178, 0
    %v5218 = vsel %vm4223, %v5179, 0
    %v5221 = vsel %vm4223, %v5180, 0
    %v5224 = vsel %vm4223, %v5181, 0
    %5226 = vmatprep.subr.bf16.mxu0 0
    %5227 = vmatpush1.bf16.msra.mxu0 %v5198
    %5228 = vmatprep.subr.bf16.mxu0 0
    %5229 = vmatpush1.bf16.msra.mxu0 %v5199
    %5230 = vmatprep.subr.bf16.mxu0 0
    %5231 = vmatpush1.bf16.msra.mxu0 0
    %5232 = vmatprep.subr.bf16.mxu0 0
    %5233 = vmatpush1.bf16.msra.mxu0 0
    %5234 = vmatprep.subr.bf16.mxu0 0
    %5235 = vmatpush1.bf16.msra.mxu0 0
    %5236 = vmatprep.subr.bf16.mxu0 0
    %5237 = vmatpush1.bf16.msra.mxu0 0
    %5238 = vmatprep.subr.bf16.mxu0 0
    %5239 = vmatpush1.bf16.msra.mxu0 0
    %5240 = vmatprep.subr.bf16.mxu0 0
    %5241 = vmatpush1.bf16.msra.mxu0 0
    %5242 = vmatprep.subr.bf16.mxu0 0
    %5243 = vmatpush1.bf16.msra.mxu0 0
    %5244 = vmatprep.subr.bf16.mxu0 0
    %5245 = vmatpush1.bf16.msra.mxu0 0
    %5246 = vmatprep.subr.bf16.mxu0 0
    %5247 = vmatpush1.bf16.msra.mxu0 0
    %5248 = vmatprep.subr.bf16.mxu0 0
    %5249 = vmatpush1.bf16.msra.mxu0 0
    %5250 = vmatprep.subr.bf16.mxu0 0
    %5251 = vmatpush1.bf16.msra.mxu0 0
    %5252 = vmatprep.subr.bf16.mxu0 0
    %5253 = vmatpush1.bf16.msra.mxu0 0
    %5254 = vmatprep.subr.bf16.mxu0 0
    %5255 = vmatpush1.bf16.msra.mxu0 0
    %5256 = vmatprep.subr.bf16.mxu0 0
    %5257 = vmatpush1.bf16.msra.mxu0 0
    %5258 = vmatprep.mubr.bf16.mxu0 0
    %5259 = vmatmul.mubr.bf16.gmra.mrb[0].mxu0 %v5203
    %v5260 = vpop.f32.mrb[0].mxu0
    %v5261 = vadd.f32 %v5188, %v5260
    %v5262 = vpop.f32.mrb[0].mxu0
    %v5263 = vpop.f32.mrb[0].mxu0
    %v5264 = vadd.f32 %v5188, %v5263
    %v5265 = vpop.f32.mrb[0].mxu0
    %5266 = vmatprep.mubr.bf16.mxu0 0
    %5267 = vmatmul.mubr.bf16.gmra.mrb[0].mxu0 %v5206
    %v5268 = vpop.f32.mrb[0].mxu0
    %v5269 = vadd.f32 %v5188, %v5268
    %v5270 = vpop.f32.mrb[0].mxu0
    %v5271 = vpop.f32.mrb[0].mxu0
    %v5272 = vadd.f32 %v5188, %v5271
    %v5273 = vpop.f32.mrb[0].mxu0
    %5274 = vmatprep.mubr.bf16.mxu0 0
    %5275 = vmatmul.mubr.bf16.gmra.mrb[0].mxu0 %v5209
    %v5276 = vpop.f32.mrb[0].mxu0
    %v5277 = vadd.f32 %v5188, %v5276
    %v5278 = vpop.f32.mrb[0].mxu0
    %v5279 = vpop.f32.mrb[0].mxu0
    %v5280 = vadd.f32 %v5188, %v5279
    %v5281 = vpop.f32.mrb[0].mxu0
    %5282 = vmatprep.mubr.bf16.mxu0 0
    %5283 = vmatmul.mubr.bf16.gmra.mrb[0].mxu0 %v5212
    %v5284 = vpop.f32.mrb[0].mxu0
    %v5285 = vadd.f32 %v5188, %v5284
    %v5286 = vpop.f32.mrb[0].mxu0
    %v5287 = vpop.f32.mrb[0].mxu0
    %v5288 = vadd.f32 %v5188, %v5287
    %v5289 = vpop.f32.mrb[0].mxu0
    %5290 = vmatprep.mubr.bf16.mxu0 0
    %5291 = vmatmul.mubr.bf16.gmra.mrb[0].mxu0 %v5215
    %v5292 = vpop.f32.mrb[0].mxu0
    %v5293 = vadd.f32 %v5188, %v5292
    %v5294 = vpop.f32.mrb[0].mxu0
    %v5295 = vpop.f32.mrb[0].mxu0
    %v5296 = vadd.f32 %v5188, %v5295
    %v5297 = vpop.f32.mrb[0].mxu0
    %5298 = vmatprep.mubr.bf16.mxu0 0
    %5299 = vmatmul.mubr.bf16.gmra.mrb[0].mxu0 %v5218
    %v5300 = vpop.f32.mrb[0].mxu0
    %v5301 = vadd.f32 %v5188, %v5300
    %v5302 = vpop.f32.mrb[0].mxu0
    %v5303 = vpop.f32.mrb[0].mxu0
    %v5304 = vadd.f32 %v5188, %v5303
    %v5305 = vpop.f32.mrb[0].mxu0
    %5306 = vmatprep.mubr.bf16.mxu0 0
    %5307 = vmatmul.mubr.bf16.gmra.mrb[0].mxu0 %v5221
    %v5308 = vpop.f32.mrb[0].mxu0
    %v5309 = vadd.f32 %v5188, %v5308
    %v5310 = vpop.f32.mrb[0].mxu0
    %v5311 = vpop.f32.mrb[0].mxu0
    %v5312 = vadd.f32 %v5188, %v5311
    %v5313 = vpop.f32.mrb[0].mxu0
    %5314 = vmatprep.mubr.bf16.mxu0 0
    %5315 = vmatmul.mubr.bf16.gmra.mrb[0].mxu0 %v5224
    %v5316 = vpop.f32.mrb[0].mxu0
    %v5317 = vadd.f32 %v5188, %v5316
    %v5318 = vpop.f32.mrb[0].mxu0
    %v5319 = vpop.f32.mrb[0].mxu0
    %v5320 = vadd.f32 %v5188, %v5319
    %v5321 = vpop.f32.mrb[0].mxu0
    %5322 = vdwg.mxu0
    %v5323 = vmax.f32 %v5261, 0.0
    %v5324 = vmax.f32 %v5264, 0.0
    %v5325 = vmax.f32 %v5269, 0.0
    %v5326 = vmax.f32 %v5272, 0.0
    %v5327 = vmax.f32 %v5277, 0.0
    %v5328 = vmax.f32 %v5280, 0.0
    %v5329 = vmax.f32 %v5285, 0.0
    %v5330 = vmax.f32 %v5288, 0.0
    %v5331 = vmax.f32 %v5293, 0.0
    %v5332 = vmax.f32 %v5296, 0.0
    %v5333 = vmax.f32 %v5301, 0.0
    %v5334 = vmax.f32 %v5304, 0.0
    %v5335 = vmax.f32 %v5309, 0.0
    %v5336 = vmax.f32 %v5312, 0.0
    %v5337 = vmax.f32 %v5317, 0.0
    %v5338 = vmax.f32 %v5320, 0.0
    %v5339 = vld [vmem:[%s2 + $0x90] sm:$0xff]
    %v5340 = vld [vmem:[%s2 + $0x98] sm:$0xff]
    %v5341 = vld [vmem:[%s2 + $0xa0] sm:$0xff]
    %v5342 = vld [vmem:[%s2 + $0xa8] sm:$0xff]
    %v5343 = vpack.c.bf16 %v5324, %v5323
    %v5344 = vpack.c.bf16 %v5326, %v5325
    %v5345 = vpack.c.bf16 %v5328, %v5327
    %v5346 = vpack.c.bf16 %v5330, %v5329
    %v5347 = vpack.c.bf16 %v5332, %v5331
    %v5348 = vpack.c.bf16 %v5334, %v5333
    %v5349 = vpack.c.bf16 %v5336, %v5335
    %v5350 = vpack.c.bf16 %v5338, %v5337
    %s5351 = scalar_lea.vmem %s1, 160
    %v5352 = vld [vmem:[%s5351] ss:$8 sm:$0x3]
    %v5354 = vlaneseq
    %v5355 = vshrl.u32 %v5354, 7
    %v5356 = vsub.s32 0, %v5355
    %v5357 = vrot.slane %v5352, %v5356
    %v5363 = vunpack.c.l.b16 %v5339
    %v5364 = vunpack.c.l.b16 %v5340
    %v5365 = vunpack.c.l.b16 %v5341
    %v5366 = vunpack.c.l.b16 %v5342
    %v5367 = vpack.c.b16 %v5364, %v5363
    %v5368 = vpack.c.b16 %v5366, %v5365
    %v5372 = vsel %vm4223, %v5343, 0
    %v5375 = vsel %vm4223, %v5344, 0
    %v5378 = vsel %vm4223, %v5345, 0
    %v5381 = vsel %vm4223, %v5346, 0
    %v5384 = vsel %vm4223, %v5347, 0
    %v5387 = vsel %vm4223, %v5348, 0
    %v5390 = vsel %vm4223, %v5349, 0
    %v5393 = vsel %vm4223, %v5350, 0
    %5395 = vmatprep.subr.bf16.mxu0 0
    %5396 = vmatpush1.bf16.msra.mxu0 %v5367
    %5397 = vmatprep.subr.bf16.mxu0 0
    %5398 = vmatpush1.bf16.msra.mxu0 %v5368
    %5399 = vmatprep.subr.bf16.mxu0 0
    %5400 = vmatpush1.bf16.msra.mxu0 0
    %5401 = vmatprep.subr.bf16.mxu0 0
    %5402 = vmatpush1.bf16.msra.mxu0 0
    %5403 = vmatprep.subr.bf16.mxu0 0
    %5404 = vmatpush1.bf16.msra.mxu0 0
    %5405 = vmatprep.subr.bf16.mxu0 0
    %5406 = vmatpush1.bf16.msra.mxu0 0
    %5407 = vmatprep.subr.bf16.mxu0 0
    %5408 = vmatpush1.bf16.msra.mxu0 0
    %5409 = vmatprep.subr.bf16.mxu0 0
    %5410 = vmatpush1.bf16.msra.mxu0 0
    %5411 = vmatprep.subr.bf16.mxu0 0
    %5412 = vmatpush1.bf16.msra.mxu0 0
    %5413 = vmatprep.subr.bf16.mxu0 0
    %5414 = vmatpush1.bf16.msra.mxu0 0
    %5415 = vmatprep.subr.bf16.mxu0 0
    %5416 = vmatpush1.bf16.msra.mxu0 0
    %5417 = vmatprep.subr.bf16.mxu0 0
    %5418 = vmatpush1.bf16.msra.mxu0 0
    %5419 = vmatprep.subr.bf16.mxu0 0
    %5420 = vmatpush1.bf16.msra.mxu0 0
    %5421 = vmatprep.subr.bf16.mxu0 0
    %5422 = vmatpush1.bf16.msra.mxu0 0
    %5423 = vmatprep.subr.bf16.mxu0 0
    %5424 = vmatpush1.bf16.msra.mxu0 0
    %5425 = vmatprep.subr.bf16.mxu0 0
    %5426 = vmatpush1.bf16.msra.mxu0 0
    %5427 = vmatprep.mubr.bf16.mxu0 0
    %5428 = vmatmul.mubr.bf16.gmra.mrb[0].mxu0 %v5372
    %v5429 = vpop.f32.mrb[0].mxu0
    %v5430 = vadd.f32 %v5357, %v5429
    %v5431 = vpop.f32.mrb[0].mxu0
    %v5432 = vpop.f32.mrb[0].mxu0
    %v5433 = vadd.f32 %v5357, %v5432
    %v5434 = vpop.f32.mrb[0].mxu0
    %5435 = vmatprep.mubr.bf16.mxu0 0
    %5436 = vmatmul.mubr.bf16.gmra.mrb[0].mxu0 %v5375
    %v5437 = vpop.f32.mrb[0].mxu0
    %v5438 = vadd.f32 %v5357, %v5437
    %v5439 = vpop.f32.mrb[0].mxu0
    %v5440 = vpop.f32.mrb[0].mxu0
    %v5441 = vadd.f32 %v5357, %v5440
    %v5442 = vpop.f32.mrb[0].mxu0
    %5443 = vmatprep.mubr.bf16.mxu0 0
    %5444 = vmatmul.mubr.bf16.gmra.mrb[0].mxu0 %v5378
    %v5445 = vpop.f32.mrb[0].mxu0
    %v5446 = vpop.f32.mrb[0].mxu0
    %v5447 = vpop.f32.mrb[0].mxu0
    %v5448 = vpop.f32.mrb[0].mxu0
    %5449 = vmatprep.mubr.bf16.mxu0 0
    %5450 = vmatmul.mubr.bf16.gmra.mrb[0].mxu0 %v5381
    %v5451 = vpop.f32.mrb[0].mxu0
    %v5452 = vpop.f32.mrb[0].mxu0
    %v5453 = vpop.f32.mrb[0].mxu0
    %v5454 = vpop.f32.mrb[0].mxu0
    %5455 = vmatprep.mubr.bf16.mxu0 0
    %5456 = vmatmul.mubr.bf16.gmra.mrb[0].mxu0 %v5384
    %v5457 = vpop.f32.mrb[0].mxu0
    %v5458 = vadd.f32 %v5357, %v5457
    %v5459 = vpop.f32.mrb[0].mxu0
    %v5460 = vpop.f32.mrb[0].mxu0
    %v5461 = vadd.f32 %v5357, %v5460
    %v5462 = vpop.f32.mrb[0].mxu0
    %5463 = vmatprep.mubr.bf16.mxu0 0
    %5464 = vmatmul.mubr.bf16.gmra.mrb[0].mxu0 %v5387
    %v5465 = vpop.f32.mrb[0].mxu0
    %v5466 = vadd.f32 %v5357, %v5465
    %v5467 = vpop.f32.mrb[0].mxu0
    %v5468 = vpop.f32.mrb[0].mxu0
    %v5469 = vadd.f32 %v5357, %v5468
    %v5470 = vpop.f32.mrb[0].mxu0
    %5471 = vmatprep.mubr.bf16.mxu0 0
    %5472 = vmatmul.mubr.bf16.gmra.mrb[0].mxu0 %v5390
    %v5473 = vpop.f32.mrb[0].mxu0
    %v5474 = vpop.f32.mrb[0].mxu0
    %v5475 = vpop.f32.mrb[0].mxu0
    %v5476 = vpop.f32.mrb[0].mxu0
    %5477 = vmatprep.mubr.bf16.mxu0 0
    %5478 = vmatmul.mubr.bf16.gmra.mrb[0].mxu0 %v5393
    %v5479 = vpop.f32.mrb[0].mxu0
    %v5480 = vpop.f32.mrb[0].mxu0
    %v5481 = vpop.f32.mrb[0].mxu0
    %v5482 = vpop.f32.mrb[0].mxu0
    %5483 = vdwg.mxu0
    %v5484 = vmax.f32 %v5430, 0.0
    %v5485 = vmax.f32 %v5433, 0.0
    %v5486 = vmax.f32 %v5438, 0.0
    %v5487 = vmax.f32 %v5441, 0.0
    %v5488 = vmax.f32 %v5458, 0.0
    %v5489 = vmax.f32 %v5461, 0.0
    %v5490 = vmax.f32 %v5466, 0.0
    %v5491 = vmax.f32 %v5469, 0.0
    %v5492 = vsel %vm4223, %v5484, 0.0
    %v5493 = vsel %vm4223, %v5485, 0.0
    %v5494 = vadd.f32 %v5492, %v5493
    %v5495 = vsel %vm4223, %v5486, 0.0
    %v5496 = vadd.f32 %v5494, %v5495
    %v5497 = vsel %vm4223, %v5487, 0.0
    %v5498 = vadd.f32 %v5496, %v5497
    %v5499 = vsel %vm4223, %v5488, 0.0
    %v5500 = vadd.f32 %v5498, %v5499
    %v5501 = vsel %vm4223, %v5489, 0.0
    %v5502 = vadd.f32 %v5500, %v5501
    %v5503 = vsel %vm4223, %v5490, 0.0
    %v5504 = vadd.f32 %v5502, %v5503
    %v5505 = vsel %vm4223, %v5491, 0.0
    %v5506 = vadd.f32 %v5504, %v5505
    %v5507 = vrot.slane %v5506, 4
    %v5508 = vadd.f32 %v5506, %v5507
    %v5509 = vrot.slane %v5508, 2
    %v5510 = vadd.f32 %v5508, %v5509
    %v5511 = vrot.slane %v5510, 1
    %v5512 = vadd.f32 %v5510, %v5511
    %v5513 = vmul.f32 %v5512, 0.015625
    %v5514 = vmul.f32 %v5484, %v5484
    %v5515 = vmul.f32 %v5485, %v5485
    %v5516 = vmul.f32 %v5486, %v5486
    %v5517 = vmul.f32 %v5487, %v5487
    %v5518 = vmul.f32 %v5488, %v5488
    %v5519 = vmul.f32 %v5489, %v5489
    %v5520 = vmul.f32 %v5490, %v5490
    %v5521 = vmul.f32 %v5491, %v5491
    %v5522 = vsel %vm4223, %v5514, 0.0
    %v5523 = vsel %vm4223, %v5515, 0.0
    %v5524 = vadd.f32 %v5522, %v5523
    %v5525 = vsel %vm4223, %v5516, 0.0
    %v5526 = vadd.f32 %v5524, %v5525
    %v5527 = vsel %vm4223, %v5517, 0.0
    %v5528 = vadd.f32 %v5526, %v5527
    %v5529 = vsel %vm4223, %v5518, 0.0
    %v5530 = vadd.f32 %v5528, %v5529
    %v5531 = vsel %vm4223, %v5519, 0.0
    %v5532 = vadd.f32 %v5530, %v5531
    %v5533 = vsel %vm4223, %v5520, 0.0
    %v5534 = vadd.f32 %v5532, %v5533
    %v5535 = vsel %vm4223, %v5521, 0.0
    %v5536 = vadd.f32 %v5534, %v5535
    %v5537 = vrot.slane %v5536, 4
    %v5538 = vadd.f32 %v5536, %v5537
    %v5539 = vrot.slane %v5538, 2
    %v5540 = vadd.f32 %v5538, %v5539
    %v5541 = vrot.slane %v5540, 1
    %v5542 = vadd.f32 %v5540, %v5541
    %v5543 = vmul.f32 %v5542, 0.015625
    %v5544 = vmul.f32 %v5513, %v5513
    %v5545 = vsub.f32 %v5543, %v5544
    %v5546 = vmax.f32 %v5545, 0.0
    %v5547 = vadd.f32 %v5546, 1e-05
    %v5548 = vrsqrt.pop %v5547
    %v5549 = vsub.f32 %v5484, %v5513
    %v5550 = vsub.f32 %v5485, %v5513
    %v5551 = vsub.f32 %v5486, %v5513
    %v5552 = vsub.f32 %v5487, %v5513
    %v5553 = vsub.f32 %v5488, %v5513
    %v5554 = vsub.f32 %v5489, %v5513
    %v5555 = vsub.f32 %v5490, %v5513
    %v5556 = vsub.f32 %v5491, %v5513
    %v5557 = vmul.f32 %v5549, %v5548
    %v5558 = vmul.f32 %v5550, %v5548
    %v5559 = vmul.f32 %v5551, %v5548
    %v5560 = vmul.f32 %v5552, %v5548
    %v5561 = vmul.f32 %v5553, %v5548
    %v5562 = vmul.f32 %v5554, %v5548
    %v5563 = vmul.f32 %v5555, %v5548
    %v5564 = vmul.f32 %v5556, %v5548
    %s5565 = scalar_lea.vmem %s1, 176
    %v5566 = vld [vmem:[%s5565] ss:$8 sm:$0x3]
    %v5568 = vlaneseq
    %v5569 = vshrl.u32 %v5568, 7
    %v5570 = vsub.s32 0, %v5569
    %v5571 = vrot.slane %v5566, %v5570
    %v5573 = vmul.f32 %v5557, %v5571
    %v5574 = vmul.f32 %v5558, %v5571
    %v5575 = vmul.f32 %v5559, %v5571
    %v5576 = vmul.f32 %v5560, %v5571
    %v5577 = vmul.f32 %v5561, %v5571
    %v5578 = vmul.f32 %v5562, %v5571
    %v5579 = vmul.f32 %v5563, %v5571
    %v5580 = vmul.f32 %v5564, %v5571
    %s5581 = scalar_lea.vmem %s1, 192
    %v5582 = vld [vmem:[%s5581] ss:$8 sm:$0x3]
    %v5584 = vlaneseq
    %v5585 = vshrl.u32 %v5584, 7
    %v5586 = vsub.s32 0, %v5585
    %v5587 = vrot.slane %v5582, %v5586
    %v5589 = vadd.f32 %v5573, %v5587
    %v5590 = vadd.f32 %v5574, %v5587
    %v5591 = vadd.f32 %v5575, %v5587
    %v5592 = vadd.f32 %v5576, %v5587
    %v5593 = vadd.f32 %v5577, %v5587
    %v5594 = vadd.f32 %v5578, %v5587
    %v5595 = vadd.f32 %v5579, %v5587
    %v5596 = vadd.f32 %v5580, %v5587
    %v5597 = vld [vmem:[%s2 + $0xb0] sm:$0xff]
    %v5598 = vld [vmem:[%s2 + $0xb8] sm:$0xff]
    %v5599 = vld [vmem:[%s2 + $0xc0] sm:$0xff]
    %v5600 = vld [vmem:[%s2 + $0xc8] sm:$0xff]
    %v5601 = vpack.c.bf16 %v5590, %v5589
    %v5602 = vpack.c.bf16 %v5592, %v5591
    %v5603 = vpack.c.bf16 %v5594, %v5593
    %v5604 = vpack.c.bf16 %v5596, %v5595
    %s5605 = scalar_lea.vmem %s1, 208
    %v5606 = vld [vmem:[%s5605] ss:$8 sm:$0x3]
    %v5608 = vlaneseq
    %v5609 = vshrl.u32 %v5608, 7
    %v5610 = vsub.s32 0, %v5609
    %v5611 = vrot.slane %v5606, %v5610
    %v5617 = vunpack.c.l.b16 %v5597
    %v5618 = vunpack.c.l.b16 %v5598
    %v5619 = vunpack.c.l.b16 %v5599
    %v5620 = vunpack.c.l.b16 %v5600
    %v5621 = vpack.c.b16 %v5618, %v5617
    %v5622 = vpack.c.b16 %v5620, %v5619
    %v5626 = vsel %vm4223, %v5601, 0
    %v5629 = vsel %vm4223, %v5602, 0
    %v5632 = vsel %vm4223, %v5603, 0
    %v5635 = vsel %vm4223, %v5604, 0
    %5637 = vmatprep.subr.bf16.mxu0 0
    %5638 = vmatpush1.bf16.msra.mxu0 %v5621
    %5639 = vmatprep.subr.bf16.mxu0 0
    %5640 = vmatpush1.bf16.msra.mxu0 %v5622
    %5641 = vmatprep.subr.bf16.mxu0 0
    %5642 = vmatpush1.bf16.msra.mxu0 0
    %5643 = vmatprep.subr.bf16.mxu0 0
    %5644 = vmatpush1.bf16.msra.mxu0 0
    %5645 = vmatprep.subr.bf16.mxu0 0
    %5646 = vmatpush1.bf16.msra.mxu0 0
    %5647 = vmatprep.subr.bf16.mxu0 0
    %5648 = vmatpush1.bf16.msra.mxu0 0
    %5649 = vmatprep.subr.bf16.mxu0 0
    %5650 = vmatpush1.bf16.msra.mxu0 0
    %5651 = vmatprep.subr.bf16.mxu0 0
    %5652 = vmatpush1.bf16.msra.mxu0 0
    %5653 = vmatprep.subr.bf16.mxu0 0
    %5654 = vmatpush1.bf16.msra.mxu0 0
    %5655 = vmatprep.subr.bf16.mxu0 0
    %5656 = vmatpush1.bf16.msra.mxu0 0
    %5657 = vmatprep.subr.bf16.mxu0 0
    %5658 = vmatpush1.bf16.msra.mxu0 0
    %5659 = vmatprep.subr.bf16.mxu0 0
    %5660 = vmatpush1.bf16.msra.mxu0 0
    %5661 = vmatprep.subr.bf16.mxu0 0
    %5662 = vmatpush1.bf16.msra.mxu0 0
    %5663 = vmatprep.subr.bf16.mxu0 0
    %5664 = vmatpush1.bf16.msra.mxu0 0
    %5665 = vmatprep.subr.bf16.mxu0 0
    %5666 = vmatpush1.bf16.msra.mxu0 0
    %5667 = vmatprep.subr.bf16.mxu0 0
    %5668 = vmatpush1.bf16.msra.mxu0 0
    %5669 = vmatprep.mubr.bf16.mxu0 0
    %5670 = vmatmul.mubr.bf16.gmra.mrb[0].mxu0 %v5626
    %v5671 = vpop.f32.mrb[0].mxu0
    %v5672 = vadd.f32 %v5611, %v5671
    %v5673 = vpop.f32.mrb[0].mxu0
    %v5674 = vpop.f32.mrb[0].mxu0
    %v5675 = vadd.f32 %v5611, %v5674
    %v5676 = vpop.f32.mrb[0].mxu0
    %5677 = vmatprep.mubr.bf16.mxu0 0
    %5678 = vmatmul.mubr.bf16.gmra.mrb[0].mxu0 %v5629
    %v5679 = vpop.f32.mrb[0].mxu0
    %v5680 = vadd.f32 %v5611, %v5679
    %v5681 = vpop.f32.mrb[0].mxu0
    %v5682 = vpop.f32.mrb[0].mxu0
    %v5683 = vadd.f32 %v5611, %v5682
    %v5684 = vpop.f32.mrb[0].mxu0
    %5685 = vmatprep.mubr.bf16.mxu0 0
    %5686 = vmatmul.mubr.bf16.gmra.mrb[0].mxu0 %v5632
    %v5687 = vpop.f32.mrb[0].mxu0
    %v5688 = vadd.f32 %v5611, %v5687
    %v5689 = vpop.f32.mrb[0].mxu0
    %v5690 = vpop.f32.mrb[0].mxu0
    %v5691 = vadd.f32 %v5611, %v5690
    %v5692 = vpop.f32.mrb[0].mxu0
    %5693 = vmatprep.mubr.bf16.mxu0 0
    %5694 = vmatmul.mubr.bf16.gmra.mrb[0].mxu0 %v5635
    %v5695 = vpop.f32.mrb[0].mxu0
    %v5696 = vadd.f32 %v5611, %v5695
    %v5697 = vpop.f32.mrb[0].mxu0
    %v5698 = vpop.f32.mrb[0].mxu0
    %v5699 = vadd.f32 %v5611, %v5698
    %v5700 = vpop.f32.mrb[0].mxu0
    %5701 = vdwg.mxu0
    %v5702 = vmax.f32 %v5672, 0.0
    %v5703 = vmax.f32 %v5675, 0.0
    %v5704 = vmax.f32 %v5680, 0.0
    %v5705 = vmax.f32 %v5683, 0.0
    %v5706 = vmax.f32 %v5688, 0.0
    %v5707 = vmax.f32 %v5691, 0.0
    %v5708 = vmax.f32 %v5696, 0.0
    %v5709 = vmax.f32 %v5699, 0.0
    %v5710 = vpack.c.bf16 %v5703, %v5702
    %v5711 = vpack.c.bf16 %v5705, %v5704
    %v5712 = vpack.c.bf16 %v5707, %v5706
    %v5713 = vpack.c.bf16 %v5709, %v5708
    %v5714 = vld [vmem:[%s1 + $0xe0] sm:$0xf]
    %v5715 = vld [vmem:[%s1 + $0xe8] sm:$0xf]
    %v5716 = vld [vmem:[%s2 + $0xd0] sm:$0xff]
    %v5717 = vld [vmem:[%s2 + $0xd8] sm:$0xff]
    %v5718 = vld [vmem:[%s2 + $0xe0] sm:$0xff]
    %v5719 = vld [vmem:[%s2 + $0xe8] sm:$0xff]
    %v5720 = vld [vmem:[%s2 + $0xf0] sm:$0xff]
    %v5721 = vld [vmem:[%s2 + $0xf8] sm:$0xff]
    %v5722 = vld [vmem:[%s2 + $0x100] sm:$0xff]
    %v5723 = vld [vmem:[%s2 + $0x108] sm:$0xff]
    %v5724 = vld [vmem:[%s2 + $0x110] sm:$0xff]
    %v5725 = vld [vmem:[%s2 + $0x118] sm:$0xff]
    %v5726 = vld [vmem:[%s2 + $0x120] sm:$0xff]
    %v5727 = vld [vmem:[%s2 + $0x128] sm:$0xff]
    %v5728 = vld [vmem:[%s2 + $0x130] sm:$0xff]
    %v5729 = vld [vmem:[%s2 + $0x138] sm:$0xff]
    %v5730 = vld [vmem:[%s2 + $0x140] sm:$0xff]
    %v5731 = vld [vmem:[%s2 + $0x148] sm:$0xff]
    %v5732 = vlaneseq
    %v5733 = vshrl.u32 %v5732, 7
    %v5734 = vsub.s32 0, %v5733
    %v5735 = vrot.slane %v5714, %v5734
    %v5736 = vlaneseq
    %v5737 = vshrl.u32 %v5736, 7
    %v5738 = vsub.s32 0, %v5737
    %v5739 = vrot.slane %v5715, %v5738
    %v5756 = vunpack.c.l.b16 %v5716
    %v5757 = vunpack.c.h.b16 %v5716
    %v5758 = vunpack.c.l.b16 %v5717
    %v5759 = vunpack.c.h.b16 %v5717
    %v5760 = vunpack.c.l.b16 %v5718
    %v5761 = vunpack.c.h.b16 %v5718
    %v5762 = vunpack.c.l.b16 %v5719
    %v5763 = vunpack.c.h.b16 %v5719
    %v5764 = vunpack.c.l.b16 %v5720
    %v5765 = vunpack.c.h.b16 %v5720
    %v5766 = vunpack.c.l.b16 %v5721
    %v5767 = vunpack.c.h.b16 %v5721
    %v5768 = vunpack.c.l.b16 %v5722
    %v5769 = vunpack.c.h.b16 %v5722
    %v5770 = vunpack.c.l.b16 %v5723
    %v5771 = vunpack.c.h.b16 %v5723
    %v5772 = vunpack.c.l.b16 %v5724
    %v5773 = vunpack.c.h.b16 %v5724
    %v5774 = vunpack.c.l.b16 %v5725
    %v5775 = vunpack.c.h.b16 %v5725
    %v5776 = vunpack.c.l.b16 %v5726
    %v5777 = vunpack.c.h.b16 %v5726
    %v5778 = vunpack.c.l.b16 %v5727
    %v5779 = vunpack.c.h.b16 %v5727
    %v5780 = vunpack.c.l.b16 %v5728
    %v5781 = vunpack.c.h.b16 %v5728
    %v5782 = vunpack.c.l.b16 %v5729
    %v5783 = vunpack.c.h.b16 %v5729
    %v5784 = vunpack.c.l.b16 %v5730
    %v5785 = vunpack.c.h.b16 %v5730
    %v5786 = vunpack.c.l.b16 %v5731
    %v5787 = vunpack.c.h.b16 %v5731
    %v5788 = vpack.c.b16 %v5758, %v5756
    %v5789 = vpack.c.b16 %v5759, %v5757
    %v5790 = vpack.c.b16 %v5762, %v5760
    %v5791 = vpack.c.b16 %v5763, %v5761
    %v5792 = vpack.c.b16 %v5766, %v5764
    %v5793 = vpack.c.b16 %v5767, %v5765
    %v5794 = vpack.c.b16 %v5770, %v5768
    %v5795 = vpack.c.b16 %v5771, %v5769
    %v5796 = vpack.c.b16 %v5774, %v5772
    %v5797 = vpack.c.b16 %v5775, %v5773
    %v5798 = vpack.c.b16 %v5778, %v5776
    %v5799 = vpack.c.b16 %v5779, %v5777
    %v5800 = vpack.c.b16 %v5782, %v5780
    %v5801 = vpack.c.b16 %v5783, %v5781
    %v5802 = vpack.c.b16 %v5786, %v5784
    %v5803 = vpack.c.b16 %v5787, %v5785
    %5820 = vmatprep.subr.bf16.mxu0 %v5789
    %5821 = vmatpush1.bf16.msra.mxu0 %v5788
    %5822 = vmatprep.subr.bf16.mxu0 %v5791
    %5823 = vmatpush1.bf16.msra.mxu0 %v5790
    %5824 = vmatprep.subr.bf16.mxu0 %v5793
    %5825 = vmatpush1.bf16.msra.mxu0 %v5792
    %5826 = vmatprep.subr.bf16.mxu0 %v5795
    %5827 = vmatpush1.bf16.msra.mxu0 %v5794
    %5828 = vmatprep.subr.bf16.mxu0 %v5797
    %5829 = vmatpush1.bf16.msra.mxu0 %v5796
    %5830 = vmatprep.subr.bf16.mxu0 %v5799
    %5831 = vmatpush1.bf16.msra.mxu0 %v5798
    %5832 = vmatprep.subr.bf16.mxu0 %v5801
    %5833 = vmatpush1.bf16.msra.mxu0 %v5800
    %5834 = vmatprep.subr.bf16.mxu0 %v5803
    %5835 = vmatpush1.bf16.msra.mxu0 %v5802
    %5836 = vmatprep.subr.bf16.mxu0 0
    %5837 = vmatpush1.bf16.msra.mxu0 0
    %5838 = vmatprep.subr.bf16.mxu0 0
    %5839 = vmatpush1.bf16.msra.mxu0 0
    %5840 = vmatprep.subr.bf16.mxu0 0
    %5841 = vmatpush1.bf16.msra.mxu0 0
    %5842 = vmatprep.subr.bf16.mxu0 0
    %5843 = vmatpush1.bf16.msra.mxu0 0
    %5844 = vmatprep.subr.bf16.mxu0 0
    %5845 = vmatpush1.bf16.msra.mxu0 0
    %5846 = vmatprep.subr.bf16.mxu0 0
    %5847 = vmatpush1.bf16.msra.mxu0 0
    %5848 = vmatprep.subr.bf16.mxu0 0
    %5849 = vmatpush1.bf16.msra.mxu0 0
    %5850 = vmatprep.subr.bf16.mxu0 0
    %5851 = vmatpush1.bf16.msra.mxu0 0
    %5852 = vmatprep.mubr.bf16.mxu0 0
    %5853 = vmatmul.mubr.bf16.gmra.mrb[0].mxu0 %v5710
    %v5854 = vpop.f32.mrb[0].mxu0
    %v5855 = vadd.f32 %v5735, %v5854
    %v5856 = vpop.f32.mrb[0].mxu0
    %v5857 = vadd.f32 %v5739, %v5856
    %v5858 = vpop.f32.mrb[0].mxu0
    %v5859 = vadd.f32 %v5735, %v5858
    %v5860 = vpop.f32.mrb[0].mxu0
    %v5861 = vadd.f32 %v5739, %v5860
    %5862 = vmatprep.mubr.bf16.mxu0 0
    %5863 = vmatmul.mubr.bf16.gmra.mrb[0].mxu0 %v5711
    %v5864 = vpop.f32.mrb[0].mxu0
    %v5865 = vadd.f32 %v5735, %v5864
    %v5866 = vpop.f32.mrb[0].mxu0
    %v5867 = vadd.f32 %v5739, %v5866
    %v5868 = vpop.f32.mrb[0].mxu0
    %v5869 = vadd.f32 %v5735, %v5868
    %v5870 = vpop.f32.mrb[0].mxu0
    %v5871 = vadd.f32 %v5739, %v5870
    %5872 = vmatprep.mubr.bf16.mxu0 0
    %5873 = vmatmul.mubr.bf16.gmra.mrb[0].mxu0 %v5712
    %v5874 = vpop.f32.mrb[0].mxu0
    %v5875 = vadd.f32 %v5735, %v5874
    %v5876 = vpop.f32.mrb[0].mxu0
    %v5877 = vadd.f32 %v5739, %v5876
    %v5878 = vpop.f32.mrb[0].mxu0
    %v5879 = vadd.f32 %v5735, %v5878
    %v5880 = vpop.f32.mrb[0].mxu0
    %v5881 = vadd.f32 %v5739, %v5880
    %5882 = vmatprep.mubr.bf16.mxu0 0
    %5883 = vmatmul.mubr.bf16.gmra.mrb[0].mxu0 %v5713
    %v5884 = vpop.f32.mrb[0].mxu0
    %v5885 = vadd.f32 %v5735, %v5884
    %v5886 = vpop.f32.mrb[0].mxu0
    %v5887 = vadd.f32 %v5739, %v5886
    %v5888 = vpop.f32.mrb[0].mxu0
    %v5889 = vadd.f32 %v5735, %v5888
    %v5890 = vpop.f32.mrb[0].mxu0
    %v5891 = vadd.f32 %v5739, %v5890
    %5892 = vdwg.mxu0
    %v5893 = vmax.f32 %v5855, 0.0
    %v5894 = vmax.f32 %v5857, 0.0
    %v5895 = vmax.f32 %v5859, 0.0
    %v5896 = vmax.f32 %v5861, 0.0
    %v5897 = vmax.f32 %v5865, 0.0
    %v5898 = vmax.f32 %v5867, 0.0
    %v5899 = vmax.f32 %v5869, 0.0
    %v5900 = vmax.f32 %v5871, 0.0
    %v5901 = vmax.f32 %v5875, 0.0
    %v5902 = vmax.f32 %v5877, 0.0
    %v5903 = vmax.f32 %v5879, 0.0
    %v5904 = vmax.f32 %v5881, 0.0
    %v5905 = vmax.f32 %v5885, 0.0
    %v5906 = vmax.f32 %v5887, 0.0
    %v5907 = vmax.f32 %v5889, 0.0
    %v5908 = vmax.f32 %v5891, 0.0
    %v5909 = vmax.f32 %v5893, %v5897
    %v5910 = vmax.f32 %v5895, %v5899
    %v5911 = vmax.f32 %v5909, %v5910
    %v5912 = vrot.slane %v5911, 4
    %v5913 = vmax.f32 %v5911, %v5912
    %v5914 = vrot.slane %v5913, 2
    %v5915 = vmax.f32 %v5913, %v5914
    %v5916 = vrot.slane %v5915, 1
    %v5917 = vmax.f32 %v5915, %v5916
    %v5918 = vmax.f32 %v5894, %v5898
    %v5919 = vmax.f32 %v5896, %v5900
    %v5920 = vmax.f32 %v5918, %v5919
    %v5921 = vrot.slane %v5920, 4
    %v5922 = vmax.f32 %v5920, %v5921
    %v5923 = vrot.slane %v5922, 2
    %v5924 = vmax.f32 %v5922, %v5923
    %v5925 = vrot.slane %v5924, 1
    %v5926 = vmax.f32 %v5924, %v5925
    %v5927 = vmax.f32 %v5901, %v5905
    %v5928 = vmax.f32 %v5903, %v5907
    %v5929 = vmax.f32 %v5927, %v5928
    %v5930 = vrot.slane %v5929, 4
    %v5931 = vmax.f32 %v5929, %v5930
    %v5932 = vrot.slane %v5931, 2
    %v5933 = vmax.f32 %v5931, %v5932
    %v5934 = vrot.slane %v5933, 1
    %v5935 = vmax.f32 %v5933, %v5934
    %v5936 = vmax.f32 %v5902, %v5906
    %v5937 = vmax.f32 %v5904, %v5908
    %v5938 = vmax.f32 %v5936, %v5937
    %v5939 = vrot.slane %v5938, 4
    %v5940 = vmax.f32 %v5938, %v5939
    %v5941 = vrot.slane %v5940, 2
    %v5942 = vmax.f32 %v5940, %v5941
    %v5943 = vrot.slane %v5942, 1
    %v5944 = vmax.f32 %v5942, %v5943
    %vm5945 = vcmask 1040384
    %v5946 = vsel %vm5945, %v5917, %v5935
    %v5947 = vsel %vm5945, %v5926, %v5944
    %v5948 = vld [vmem:[%s2 + $0x2d0] sm:$0xff]
    %v5949 = vld [vmem:[%s2 + $0x2d8] sm:$0xff]
    %v5950 = vld [vmem:[%s2 + $0x2e0] sm:$0xff]
    %v5951 = vld [vmem:[%s2 + $0x2e8] sm:$0xff]
    %v5952 = vld [vmem:[%s2 + $0x2f0] sm:$0xff]
    %v5953 = vld [vmem:[%s2 + $0x2f8] sm:$0xff]
    %v5954 = vld [vmem:[%s2 + $0x300] sm:$0xff]
    %v5955 = vld [vmem:[%s2 + $0x308] sm:$0xff]
    %v5956 = vld [vmem:[%s2 + $0x310] sm:$0xff]
    %v5957 = vld [vmem:[%s2 + $0x318] sm:$0xff]
    %v5958 = vld [vmem:[%s2 + $0x320] sm:$0xff]
    %v5959 = vld [vmem:[%s2 + $0x328] sm:$0xff]
    %v5960 = vld [vmem:[%s2 + $0x330] sm:$0xff]
    %v5961 = vld [vmem:[%s2 + $0x338] sm:$0xff]
    %v5962 = vld [vmem:[%s2 + $0x340] sm:$0xff]
    %v5963 = vld [vmem:[%s2 + $0x348] sm:$0xff]
    %v5964 = vld [vmem:[%s2 + $0x350] sm:$0xff]
    %v5965 = vld [vmem:[%s2 + $0x358] sm:$0xff]
    %v5966 = vld [vmem:[%s2 + $0x360] sm:$0xff]
    %v5967 = vld [vmem:[%s2 + $0x368] sm:$0xff]
    %v5968 = vld [vmem:[%s2 + $0x370] sm:$0xff]
    %v5969 = vld [vmem:[%s2 + $0x378] sm:$0xff]
    %v5970 = vld [vmem:[%s2 + $0x380] sm:$0xff]
    %v5971 = vld [vmem:[%s2 + $0x388] sm:$0xff]
    %v5972 = vld [vmem:[%s2 + $0x390] sm:$0xff]
    %v5973 = vld [vmem:[%s2 + $0x398] sm:$0xff]
    %v5974 = vld [vmem:[%s2 + $0x3a0] sm:$0xff]
    %v5975 = vld [vmem:[%s2 + $0x3a8] sm:$0xff]
    %v5976 = vld [vmem:[%s2 + $0x3b0] sm:$0xff]
    %v5977 = vld [vmem:[%s2 + $0x3b8] sm:$0xff]
    %v5978 = vld [vmem:[%s2 + $0x3c0] sm:$0xff]
    %v5979 = vld [vmem:[%s2 + $0x3c8] sm:$0xff]
    %v5980 = vpack.c.bf16 %v5946, %v5946
    %v5981 = vpack.c.bf16 %v5947, %v5947
    %v5982 = vld [vmem:[%s2 + $0x150] sm:$0xff]
    %v5983 = vld [vmem:[%s2 + $0x158] sm:$0xff]
    %v5984 = vld [vmem:[%s2 + $0x160] sm:$0xff]
    %v5985 = vld [vmem:[%s2 + $0x168] sm:$0xff]
    %v5986 = vld [vmem:[%s2 + $0x170] sm:$0xff]
    %v5987 = vld [vmem:[%s2 + $0x178] sm:$0xff]
    %v5988 = vld [vmem:[%s2 + $0x180] sm:$0xff]
    %v5989 = vld [vmem:[%s2 + $0x188] sm:$0xff]
    %v5990 = vld [vmem:[%s2 + $0x190] sm:$0xff]
    %v5991 = vld [vmem:[%s2 + $0x198] sm:$0xff]
    %v5992 = vld [vmem:[%s2 + $0x1a0] sm:$0xff]
    %v5993 = vld [vmem:[%s2 + $0x1a8] sm:$0xff]
    %v5994 = vld [vmem:[%s2 + $0x1b0] sm:$0xff]
    %v5995 = vld [vmem:[%s2 + $0x1b8] sm:$0xff]
    %v5996 = vld [vmem:[%s2 + $0x1c0] sm:$0xff]
    %v5997 = vld [vmem:[%s2 + $0x1c8] sm:$0xff]
    %v5998 = vlaneseq
    %v5999 = vshrl.u32 %v5998, 7
    %v6000 = vsub.s32 1, %v5999
    %v6001 = vrot.slane %v5714, %v6000
    %v6002 = vlaneseq
    %v6003 = vshrl.u32 %v6002, 7
    %v6004 = vsub.s32 1, %v6003
    %v6005 = vrot.slane %v5715, %v6004
    %v6022 = vunpack.c.l.b16 %v5982
    %v6023 = vunpack.c.h.b16 %v5982
    %v6024 = vunpack.c.l.b16 %v5983
    %v6025 = vunpack.c.h.b16 %v5983
    %v6026 = vunpack.c.l.b16 %v5984
    %v6027 = vunpack.c.h.b16 %v5984
    %v6028 = vunpack.c.l.b16 %v5985
    %v6029 = vunpack.c.h.b16 %v5985
    %v6030 = vunpack.c.l.b16 %v5986
    %v6031 = vunpack.c.h.b16 %v5986
    %v6032 = vunpack.c.l.b16 %v5987
    %v6033 = vunpack.c.h.b16 %v5987
    %v6034 = vunpack.c.l.b16 %v5988
    %v6035 = vunpack.c.h.b16 %v5988
    %v6036 = vunpack.c.l.b16 %v5989
    %v6037 = vunpack.c.h.b16 %v5989
    %v6038 = vunpack.c.l.b16 %v5990
    %v6039 = vunpack.c.h.b16 %v5990
    %v6040 = vunpack.c.l.b16 %v5991
    %v6041 = vunpack.c.h.b16 %v5991
    %v6042 = vunpack.c.l.b16 %v5992
    %v6043 = vunpack.c.h.b16 %v5992
    %v6044 = vunpack.c.l.b16 %v5993
    %v6045 = vunpack.c.h.b16 %v5993
    %v6046 = vunpack.c.l.b16 %v5994
    %v6047 = vunpack.c.h.b16 %v5994
    %v6048 = vunpack.c.l.b16 %v5995
    %v6049 = vunpack.c.h.b16 %v5995
    %v6050 = vunpack.c.l.b16 %v5996
    %v6051 = vunpack.c.h.b16 %v5996
    %v6052 = vunpack.c.l.b16 %v5997
    %v6053 = vunpack.c.h.b16 %v5997
    %v6054 = vpack.c.b16 %v6024, %v6022
    %v6055 = vpack.c.b16 %v6025, %v6023
    %v6056 = vpack.c.b16 %v6028, %v6026
    %v6057 = vpack.c.b16 %v6029, %v6027
    %v6058 = vpack.c.b16 %v6032, %v6030
    %v6059 = vpack.c.b16 %v6033, %v6031
    %v6060 = vpack.c.b16 %v6036, %v6034
    %v6061 = vpack.c.b16 %v6037, %v6035
    %v6062 = vpack.c.b16 %v6040, %v6038
    %v6063 = vpack.c.b16 %v6041, %v6039
    %v6064 = vpack.c.b16 %v6044, %v6042
    %v6065 = vpack.c.b16 %v6045, %v6043
    %v6066 = vpack.c.b16 %v6048, %v6046
    %v6067 = vpack.c.b16 %v6049, %v6047
    %v6068 = vpack.c.b16 %v6052, %v6050
    %v6069 = vpack.c.b16 %v6053, %v6051
    %6086 = vmatprep.subr.bf16.mxu0 %v6055
    %6087 = vmatpush1.bf16.msra.mxu0 %v6054
    %6088 = vmatprep.subr.bf16.mxu0 %v6057
    %6089 = vmatpush1.bf16.msra.mxu0 %v6056
    %6090 = vmatprep.subr.bf16.mxu0 %v6059
    %6091 = vmatpush1.bf16.msra.mxu0 %v6058
    %6092 = vmatprep.subr.bf16.mxu0 %v6061
    %6093 = vmatpush1.bf16.msra.mxu0 %v6060
    %6094 = vmatprep.subr.bf16.mxu0 %v6063
    %6095 = vmatpush1.bf16.msra.mxu0 %v6062
    %6096 = vmatprep.subr.bf16.mxu0 %v6065
    %6097 = vmatpush1.bf16.msra.mxu0 %v6064
    %6098 = vmatprep.subr.bf16.mxu0 %v6067
    %6099 = vmatpush1.bf16.msra.mxu0 %v6066
    %6100 = vmatprep.subr.bf16.mxu0 %v6069
    %6101 = vmatpush1.bf16.msra.mxu0 %v6068
    %6102 = vmatprep.subr.bf16.mxu0 0
    %6103 = vmatpush1.bf16.msra.mxu0 0
    %6104 = vmatprep.subr.bf16.mxu0 0
    %6105 = vmatpush1.bf16.msra.mxu0 0
    %6106 = vmatprep.subr.bf16.mxu0 0
    %6107 = vmatpush1.bf16.msra.mxu0 0
    %6108 = vmatprep.subr.bf16.mxu0 0
    %6109 = vmatpush1.bf16.msra.mxu0 0
    %6110 = vmatprep.subr.bf16.mxu0 0
    %6111 = vmatpush1.bf16.msra.mxu0 0
    %6112 = vmatprep.subr.bf16.mxu0 0
    %6113 = vmatpush1.bf16.msra.mxu0 0
    %6114 = vmatprep.subr.bf16.mxu0 0
    %6115 = vmatpush1.bf16.msra.mxu0 0
    %6116 = vmatprep.subr.bf16.mxu0 0
    %6117 = vmatpush1.bf16.msra.mxu0 0
    %6118 = vmatprep.mubr.bf16.mxu0 0
    %6119 = vmatmul.mubr.bf16.gmra.mrb[0].mxu0 %v5710
    %v6120 = vpop.f32.mrb[0].mxu0
    %v6121 = vadd.f32 %v6001, %v6120
    %v6122 = vpop.f32.mrb[0].mxu0
    %v6123 = vadd.f32 %v6005, %v6122
    %v6124 = vpop.f32.mrb[0].mxu0
    %v6125 = vadd.f32 %v6001, %v6124
    %v6126 = vpop.f32.mrb[0].mxu0
    %v6127 = vadd.f32 %v6005, %v6126
    %6128 = vmatprep.mubr.bf16.mxu0 0
    %6129 = vmatmul.mubr.bf16.gmra.mrb[0].mxu0 %v5711
    %v6130 = vpop.f32.mrb[0].mxu0
    %v6131 = vadd.f32 %v6001, %v6130
    %v6132 = vpop.f32.mrb[0].mxu0
    %v6133 = vadd.f32 %v6005, %v6132
    %v6134 = vpop.f32.mrb[0].mxu0
    %v6135 = vadd.f32 %v6001, %v6134
    %v6136 = vpop.f32.mrb[0].mxu0
    %v6137 = vadd.f32 %v6005, %v6136
    %6138 = vmatprep.mubr.bf16.mxu0 0
    %6139 = vmatmul.mubr.bf16.gmra.mrb[0].mxu0 %v5712
    %v6140 = vpop.f32.mrb[0].mxu0
    %v6141 = vadd.f32 %v6001, %v6140
    %v6142 = vpop.f32.mrb[0].mxu0
    %v6143 = vadd.f32 %v6005, %v6142
    %v6144 = vpop.f32.mrb[0].mxu0
    %v6145 = vadd.f32 %v6001, %v6144
    %v6146 = vpop.f32.mrb[0].mxu0
    %v6147 = vadd.f32 %v6005, %v6146
    %6148 = vmatprep.mubr.bf16.mxu0 0
    %6149 = vmatmul.mubr.bf16.gmra.mrb[0].mxu0 %v5713
    %v6150 = vpop.f32.mrb[0].mxu0
    %v6151 = vadd.f32 %v6001, %v6150
    %v6152 = vpop.f32.mrb[0].mxu0
    %v6153 = vadd.f32 %v6005, %v6152
    %v6154 = vpop.f32.mrb[0].mxu0
    %v6155 = vadd.f32 %v6001, %v6154
    %v6156 = vpop.f32.mrb[0].mxu0
    %v6157 = vadd.f32 %v6005, %v6156
    %6158 = vdwg.mxu0
    %v6159 = vmax.f32 %v6121, 0.0
    %v6160 = vmax.f32 %v6123, 0.0
    %v6161 = vmax.f32 %v6125, 0.0
    %v6162 = vmax.f32 %v6127, 0.0
    %v6163 = vmax.f32 %v6131, 0.0
    %v6164 = vmax.f32 %v6133, 0.0
    %v6165 = vmax.f32 %v6135, 0.0
    %v6166 = vmax.f32 %v6137, 0.0
    %v6167 = vmax.f32 %v6141, 0.0
    %v6168 = vmax.f32 %v6143, 0.0
    %v6169 = vmax.f32 %v6145, 0.0
    %v6170 = vmax.f32 %v6147, 0.0
    %v6171 = vmax.f32 %v6151, 0.0
    %v6172 = vmax.f32 %v6153, 0.0
    %v6173 = vmax.f32 %v6155, 0.0
    %v6174 = vmax.f32 %v6157, 0.0
    %v6175 = vmax.f32 %v6159, %v6163
    %v6176 = vmax.f32 %v6161, %v6165
    %v6177 = vmax.f32 %v6175, %v6176
    %v6178 = vrot.slane %v6177, 4
    %v6179 = vmax.f32 %v6177, %v6178
    %v6180 = vrot.slane %v6179, 2
    %v6181 = vmax.f32 %v6179, %v6180
    %v6182 = vrot.slane %v6181, 1
    %v6183 = vmax.f32 %v6181, %v6182
    %v6184 = vmax.f32 %v6160, %v6164
    %v6185 = vmax.f32 %v6162, %v6166
    %v6186 = vmax.f32 %v6184, %v6185
    %v6187 = vrot.slane %v6186, 4
    %v6188 = vmax.f32 %v6186, %v6187
    %v6189 = vrot.slane %v6188, 2
    %v6190 = vmax.f32 %v6188, %v6189
    %v6191 = vrot.slane %v6190, 1
    %v6192 = vmax.f32 %v6190, %v6191
    %v6193 = vmax.f32 %v6167, %v6171
    %v6194 = vmax.f32 %v6169, %v6173
    %v6195 = vmax.f32 %v6193, %v6194
    %v6196 = vrot.slane %v6195, 4
    %v6197 = vmax.f32 %v6195, %v6196
    %v6198 = vrot.slane %v6197, 2
    %v6199 = vmax.f32 %v6197, %v6198
    %v6200 = vrot.slane %v6199, 1
    %v6201 = vmax.f32 %v6199, %v6200
    %v6202 = vmax.f32 %v6168, %v6172
    %v6203 = vmax.f32 %v6170, %v6174
    %v6204 = vmax.f32 %v6202, %v6203
    %v6205 = vrot.slane %v6204, 4
    %v6206 = vmax.f32 %v6204, %v6205
    %v6207 = vrot.slane %v6206, 2
    %v6208 = vmax.f32 %v6206, %v6207
    %v6209 = vrot.slane %v6208, 1
    %v6210 = vmax.f32 %v6208, %v6209
    %v6211 = vsel %vm5945, %v6183, %v6201
    %v6212 = vsel %vm5945, %v6192, %v6210
    %v6213 = vld [vmem:[%s2 + $0x3d0] sm:$0xff]
    %v6214 = vld [vmem:[%s2 + $0x3d8] sm:$0xff]
    %v6215 = vld [vmem:[%s2 + $0x3e0] sm:$0xff]
    %v6216 = vld [vmem:[%s2 + $0x3e8] sm:$0xff]
    %v6217 = vld [vmem:[%s2 + $0x3f0] sm:$0xff]
    %v6218 = vld [vmem:[%s2 + $0x3f8] sm:$0xff]
    %v6219 = vld [vmem:[%s2 + $0x400] sm:$0xff]
    %v6220 = vld [vmem:[%s2 + $0x408] sm:$0xff]
    %v6221 = vld [vmem:[%s2 + $0x410] sm:$0xff]
    %v6222 = vld [vmem:[%s2 + $0x418] sm:$0xff]
    %v6223 = vld [vmem:[%s2 + $0x420] sm:$0xff]
    %v6224 = vld [vmem:[%s2 + $0x428] sm:$0xff]
    %v6225 = vld [vmem:[%s2 + $0x430] sm:$0xff]
    %v6226 = vld [vmem:[%s2 + $0x438] sm:$0xff]
    %v6227 = vld [vmem:[%s2 + $0x440] sm:$0xff]
    %v6228 = vld [vmem:[%s2 + $0x448] sm:$0xff]
    %v6229 = vld [vmem:[%s2 + $0x450] sm:$0xff]
    %v6230 = vld [vmem:[%s2 + $0x458] sm:$0xff]
    %v6231 = vld [vmem:[%s2 + $0x460] sm:$0xff]
    %v6232 = vld [vmem:[%s2 + $0x468] sm:$0xff]
    %v6233 = vld [vmem:[%s2 + $0x470] sm:$0xff]
    %v6234 = vld [vmem:[%s2 + $0x478] sm:$0xff]
    %v6235 = vld [vmem:[%s2 + $0x480] sm:$0xff]
    %v6236 = vld [vmem:[%s2 + $0x488] sm:$0xff]
    %v6237 = vld [vmem:[%s2 + $0x490] sm:$0xff]
    %v6238 = vld [vmem:[%s2 + $0x498] sm:$0xff]
    %v6239 = vld [vmem:[%s2 + $0x4a0] sm:$0xff]
    %v6240 = vld [vmem:[%s2 + $0x4a8] sm:$0xff]
    %v6241 = vld [vmem:[%s2 + $0x4b0] sm:$0xff]
    %v6242 = vld [vmem:[%s2 + $0x4b8] sm:$0xff]
    %v6243 = vld [vmem:[%s2 + $0x4c0] sm:$0xff]
    %v6244 = vld [vmem:[%s2 + $0x4c8] sm:$0xff]
    %v6245 = vpack.c.bf16 %v6211, %v6211
    %v6246 = vpack.c.bf16 %v6212, %v6212
    %v6279 = vunpack.c.l.b16 %v6213
    %v6280 = vunpack.c.h.b16 %v6213
    %v6281 = vunpack.c.l.b16 %v6214
    %v6282 = vunpack.c.h.b16 %v6214
    %v6283 = vunpack.c.l.b16 %v6215
    %v6284 = vunpack.c.h.b16 %v6215
    %v6285 = vunpack.c.l.b16 %v6216
    %v6286 = vunpack.c.h.b16 %v6216
    %v6287 = vunpack.c.l.b16 %v6217
    %v6288 = vunpack.c.h.b16 %v6217
    %v6289 = vunpack.c.l.b16 %v6218
    %v6290 = vunpack.c.h.b16 %v6218
    %v6291 = vunpack.c.l.b16 %v6219
    %v6292 = vunpack.c.h.b16 %v6219
    %v6293 = vunpack.c.l.b16 %v6220
    %v6294 = vunpack.c.h.b16 %v6220
    %v6295 = vunpack.c.l.b16 %v6221
    %v6296 = vunpack.c.h.b16 %v6221
    %v6297 = vunpack.c.l.b16 %v6222
    %v6298 = vunpack.c.h.b16 %v6222
    %v6299 = vunpack.c.l.b16 %v6223
    %v6300 = vunpack.c.h.b16 %v6223
    %v6301 = vunpack.c.l.b16 %v6224
    %v6302 = vunpack.c.h.b16 %v6224
    %v6303 = vunpack.c.l.b16 %v6225
    %v6304 = vunpack.c.h.b16 %v6225
    %v6305 = vunpack.c.l.b16 %v6226
    %v6306 = vunpack.c.h.b16 %v6226
    %v6307 = vunpack.c.l.b16 %v6227
    %v6308 = vunpack.c.h.b16 %v6227
    %v6309 = vunpack.c.l.b16 %v6228
    %v6310 = vunpack.c.h.b16 %v6228
    %v6311 = vunpack.c.l.b16 %v6229
    %v6312 = vunpack.c.h.b16 %v6229
    %v6313 = vunpack.c.l.b16 %v6230
    %v6314 = vunpack.c.h.b16 %v6230
    %v6315 = vunpack.c.l.b16 %v6231
    %v6316 = vunpack.c.h.b16 %v6231
    %v6317 = vunpack.c.l.b16 %v6232
    %v6318 = vunpack.c.h.b16 %v6232
    %v6319 = vunpack.c.l.b16 %v6233
    %v6320 = vunpack.c.h.b16 %v6233
    %v6321 = vunpack.c.l.b16 %v6234
    %v6322 = vunpack.c.h.b16 %v6234
    %v6323 = vunpack.c.l.b16 %v6235
    %v6324 = vunpack.c.h.b16 %v6235
    %v6325 = vunpack.c.l.b16 %v6236
    %v6326 = vunpack.c.h.b16 %v6236
    %v6327 = vunpack.c.l.b16 %v6237
    %v6328 = vunpack.c.h.b16 %v6237
    %v6329 = vunpack.c.l.b16 %v6238
    %v6330 = vunpack.c.h.b16 %v6238
    %v6331 = vunpack.c.l.b16 %v6239
    %v6332 = vunpack.c.h.b16 %v6239
    %v6333 = vunpack.c.l.b16 %v6240
    %v6334 = vunpack.c.h.b16 %v6240
    %v6335 = vunpack.c.l.b16 %v6241
    %v6336 = vunpack.c.h.b16 %v6241
    %v6337 = vunpack.c.l.b16 %v6242
    %v6338 = vunpack.c.h.b16 %v6242
    %v6339 = vunpack.c.l.b16 %v6243
    %v6340 = vunpack.c.h.b16 %v6243
    %v6341 = vunpack.c.l.b16 %v6244
    %v6342 = vunpack.c.h.b16 %v6244
    %v6343 = vpack.c.b16 %v6281, %v6279
    %v6344 = vpack.c.b16 %v6282, %v6280
    %v6345 = vpack.c.b16 %v6285, %v6283
    %v6346 = vpack.c.b16 %v6286, %v6284
    %v6347 = vpack.c.b16 %v6289, %v6287
    %v6348 = vpack.c.b16 %v6290, %v6288
    %v6349 = vpack.c.b16 %v6293, %v6291
    %v6350 = vpack.c.b16 %v6294, %v6292
    %v6351 = vpack.c.b16 %v6297, %v6295
    %v6352 = vpack.c.b16 %v6298, %v6296
    %v6353 = vpack.c.b16 %v6301, %v6299
    %v6354 = vpack.c.b16 %v6302, %v6300
    %v6355 = vpack.c.b16 %v6305, %v6303
    %v6356 = vpack.c.b16 %v6306, %v6304
    %v6357 = vpack.c.b16 %v6309, %v6307
    %v6358 = vpack.c.b16 %v6310, %v6308
    %v6359 = vpack.c.b16 %v6313, %v6311
    %v6360 = vpack.c.b16 %v6314, %v6312
    %v6361 = vpack.c.b16 %v6317, %v6315
    %v6362 = vpack.c.b16 %v6318, %v6316
    %v6363 = vpack.c.b16 %v6321, %v6319
    %v6364 = vpack.c.b16 %v6322, %v6320
    %v6365 = vpack.c.b16 %v6325, %v6323
    %v6366 = vpack.c.b16 %v6326, %v6324
    %v6367 = vpack.c.b16 %v6329, %v6327
    %v6368 = vpack.c.b16 %v6330, %v6328
    %v6369 = vpack.c.b16 %v6333, %v6331
    %v6370 = vpack.c.b16 %v6334, %v6332
    %v6371 = vpack.c.b16 %v6337, %v6335
    %v6372 = vpack.c.b16 %v6338, %v6336
    %v6373 = vpack.c.b16 %v6341, %v6339
    %v6374 = vpack.c.b16 %v6342, %v6340
    %6407 = vmatprep.subr.bf16.mxu0 %v6344
    %6408 = vmatpush1.bf16.msra.mxu0 %v6343
    %6409 = vmatprep.subr.bf16.mxu0 %v6346
    %6410 = vmatpush1.bf16.msra.mxu0 %v6345
    %6411 = vmatprep.subr.bf16.mxu0 %v6348
    %6412 = vmatpush1.bf16.msra.mxu0 %v6347
    %6413 = vmatprep.subr.bf16.mxu0 %v6350
    %6414 = vmatpush1.bf16.msra.mxu0 %v6349
    %6415 = vmatprep.subr.bf16.mxu0 %v6352
    %6416 = vmatpush1.bf16.msra.mxu0 %v6351
    %6417 = vmatprep.subr.bf16.mxu0 %v6354
    %6418 = vmatpush1.bf16.msra.mxu0 %v6353
    %6419 = vmatprep.subr.bf16.mxu0 %v6356
    %6420 = vmatpush1.bf16.msra.mxu0 %v6355
    %6421 = vmatprep.subr.bf16.mxu0 %v6358
    %6422 = vmatpush1.bf16.msra.mxu0 %v6357
    %6423 = vmatprep.subr.bf16.mxu0 %v6360
    %6424 = vmatpush1.bf16.msra.mxu0 %v6359
    %6425 = vmatprep.subr.bf16.mxu0 %v6362
    %6426 = vmatpush1.bf16.msra.mxu0 %v6361
    %6427 = vmatprep.subr.bf16.mxu0 %v6364
    %6428 = vmatpush1.bf16.msra.mxu0 %v6363
    %6429 = vmatprep.subr.bf16.mxu0 %v6366
    %6430 = vmatpush1.bf16.msra.mxu0 %v6365
    %6431 = vmatprep.subr.bf16.mxu0 %v6368
    %6432 = vmatpush1.bf16.msra.mxu0 %v6367
    %6433 = vmatprep.subr.bf16.mxu0 %v6370
    %6434 = vmatpush1.bf16.msra.mxu0 %v6369
    %6435 = vmatprep.subr.bf16.mxu0 %v6372
    %6436 = vmatpush1.bf16.msra.mxu0 %v6371
    %6437 = vmatprep.subr.bf16.mxu0 %v6374
    %6438 = vmatpush1.bf16.msra.mxu0 %v6373
    %6439 = vmatprep.mubr.bf16.mxu0 %v6246
    %6440 = vmatmul.mubr.bf16.gmra.mrb[0].mxu0 %v6245
    %v6441 = vpop.f32.mrb[0].mxu0
    %v6442 = vadd.f32 0.0, %v6441
    %v6443 = vpop.f32.mrb[0].mxu0
    %v6444 = vadd.f32 0.0, %v6443
    %v6445 = vpop.f32.mrb[0].mxu0
    %v6446 = vpop.f32.mrb[0].mxu0
    %6447 = vdwg.mxu0
    %v6480 = vunpack.c.l.b16 %v5948
    %v6481 = vunpack.c.h.b16 %v5948
    %v6482 = vunpack.c.l.b16 %v5949
    %v6483 = vunpack.c.h.b16 %v5949
    %v6484 = vunpack.c.l.b16 %v5950
    %v6485 = vunpack.c.h.b16 %v5950
    %v6486 = vunpack.c.l.b16 %v5951
    %v6487 = vunpack.c.h.b16 %v5951
    %v6488 = vunpack.c.l.b16 %v5952
    %v6489 = vunpack.c.h.b16 %v5952
    %v6490 = vunpack.c.l.b16 %v5953
    %v6491 = vunpack.c.h.b16 %v5953
    %v6492 = vunpack.c.l.b16 %v5954
    %v6493 = vunpack.c.h.b16 %v5954
    %v6494 = vunpack.c.l.b16 %v5955
    %v6495 = vunpack.c.h.b16 %v5955
    %v6496 = vunpack.c.l.b16 %v5956
    %v6497 = vunpack.c.h.b16 %v5956
    %v6498 = vunpack.c.l.b16 %v5957
    %v6499 = vunpack.c.h.b16 %v5957
    %v6500 = vunpack.c.l.b16 %v5958
    %v6501 = vunpack.c.h.b16 %v5958
    %v6502 = vunpack.c.l.b16 %v5959
    %v6503 = vunpack.c.h.b16 %v5959
    %v6504 = vunpack.c.l.b16 %v5960
    %v6505 = vunpack.c.h.b16 %v5960
    %v6506 = vunpack.c.l.b16 %v5961
    %v6507 = vunpack.c.h.b16 %v5961
    %v6508 = vunpack.c.l.b16 %v5962
    %v6509 = vunpack.c.h.b16 %v5962
    %v6510 = vunpack.c.l.b16 %v5963
    %v6511 = vunpack.c.h.b16 %v5963
    %v6512 = vunpack.c.l.b16 %v5964
    %v6513 = vunpack.c.h.b16 %v5964
    %v6514 = vunpack.c.l.b16 %v5965
    %v6515 = vunpack.c.h.b16 %v5965
    %v6516 = vunpack.c.l.b16 %v5966
    %v6517 = vunpack.c.h.b16 %v5966
    %v6518 = vunpack.c.l.b16 %v5967
    %v6519 = vunpack.c.h.b16 %v5967
    %v6520 = vunpack.c.l.b16 %v5968
    %v6521 = vunpack.c.h.b16 %v5968
    %v6522 = vunpack.c.l.b16 %v5969
    %v6523 = vunpack.c.h.b16 %v5969
    %v6524 = vunpack.c.l.b16 %v5970
    %v6525 = vunpack.c.h.b16 %v5970
    %v6526 = vunpack.c.l.b16 %v5971
    %v6527 = vunpack.c.h.b16 %v5971
    %v6528 = vunpack.c.l.b16 %v5972
    %v6529 = vunpack.c.h.b16 %v5972
    %v6530 = vunpack.c.l.b16 %v5973
    %v6531 = vunpack.c.h.b16 %v5973
    %v6532 = vunpack.c.l.b16 %v5974
    %v6533 = vunpack.c.h.b16 %v5974
    %v6534 = vunpack.c.l.b16 %v5975
    %v6535 = vunpack.c.h.b16 %v5975
    %v6536 = vunpack.c.l.b16 %v5976
    %v6537 = vunpack.c.h.b16 %v5976
    %v6538 = vunpack.c.l.b16 %v5977
    %v6539 = vunpack.c.h.b16 %v5977
    %v6540 = vunpack.c.l.b16 %v5978
    %v6541 = vunpack.c.h.b16 %v5978
    %v6542 = vunpack.c.l.b16 %v5979
    %v6543 = vunpack.c.h.b16 %v5979
    %v6544 = vpack.c.b16 %v6482, %v6480
    %v6545 = vpack.c.b16 %v6483, %v6481
    %v6546 = vpack.c.b16 %v6486, %v6484
    %v6547 = vpack.c.b16 %v6487, %v6485
    %v6548 = vpack.c.b16 %v6490, %v6488
    %v6549 = vpack.c.b16 %v6491, %v6489
    %v6550 = vpack.c.b16 %v6494, %v6492
    %v6551 = vpack.c.b16 %v6495, %v6493
    %v6552 = vpack.c.b16 %v6498, %v6496
    %v6553 = vpack.c.b16 %v6499, %v6497
    %v6554 = vpack.c.b16 %v6502, %v6500
    %v6555 = vpack.c.b16 %v6503, %v6501
    %v6556 = vpack.c.b16 %v6506, %v6504
    %v6557 = vpack.c.b16 %v6507, %v6505
    %v6558 = vpack.c.b16 %v6510, %v6508
    %v6559 = vpack.c.b16 %v6511, %v6509
    %v6560 = vpack.c.b16 %v6514, %v6512
    %v6561 = vpack.c.b16 %v6515, %v6513
    %v6562 = vpack.c.b16 %v6518, %v6516
    %v6563 = vpack.c.b16 %v6519, %v6517
    %v6564 = vpack.c.b16 %v6522, %v6520
    %v6565 = vpack.c.b16 %v6523, %v6521
    %v6566 = vpack.c.b16 %v6526, %v6524
    %v6567 = vpack.c.b16 %v6527, %v6525
    %v6568 = vpack.c.b16 %v6530, %v6528
    %v6569 = vpack.c.b16 %v6531, %v6529
    %v6570 = vpack.c.b16 %v6534, %v6532
    %v6571 = vpack.c.b16 %v6535, %v6533
    %v6572 = vpack.c.b16 %v6538, %v6536
    %v6573 = vpack.c.b16 %v6539, %v6537
    %v6574 = vpack.c.b16 %v6542, %v6540
    %v6575 = vpack.c.b16 %v6543, %v6541
    %6608 = vmatprep.subr.bf16.mxu0 %v6545
    %6609 = vmatpush1.bf16.msra.mxu0 %v6544
    %6610 = vmatprep.subr.bf16.mxu0 %v6547
    %6611 = vmatpush1.bf16.msra.mxu0 %v6546
    %6612 = vmatprep.subr.bf16.mxu0 %v6549
    %6613 = vmatpush1.bf16.msra.mxu0 %v6548
    %6614 = vmatprep.subr.bf16.mxu0 %v6551
    %6615 = vmatpush1.bf16.msra.mxu0 %v6550
    %6616 = vmatprep.subr.bf16.mxu0 %v6553
    %6617 = vmatpush1.bf16.msra.mxu0 %v6552
    %6618 = vmatprep.subr.bf16.mxu0 %v6555
    %6619 = vmatpush1.bf16.msra.mxu0 %v6554
    %6620 = vmatprep.subr.bf16.mxu0 %v6557
    %6621 = vmatpush1.bf16.msra.mxu0 %v6556
    %6622 = vmatprep.subr.bf16.mxu0 %v6559
    %6623 = vmatpush1.bf16.msra.mxu0 %v6558
    %6624 = vmatprep.subr.bf16.mxu0 %v6561
    %6625 = vmatpush1.bf16.msra.mxu0 %v6560
    %6626 = vmatprep.subr.bf16.mxu0 %v6563
    %6627 = vmatpush1.bf16.msra.mxu0 %v6562
    %6628 = vmatprep.subr.bf16.mxu0 %v6565
    %6629 = vmatpush1.bf16.msra.mxu0 %v6564
    %6630 = vmatprep.subr.bf16.mxu0 %v6567
    %6631 = vmatpush1.bf16.msra.mxu0 %v6566
    %6632 = vmatprep.subr.bf16.mxu0 %v6569
    %6633 = vmatpush1.bf16.msra.mxu0 %v6568
    %6634 = vmatprep.subr.bf16.mxu0 %v6571
    %6635 = vmatpush1.bf16.msra.mxu0 %v6570
    %6636 = vmatprep.subr.bf16.mxu0 %v6573
    %6637 = vmatpush1.bf16.msra.mxu0 %v6572
    %6638 = vmatprep.subr.bf16.mxu0 %v6575
    %6639 = vmatpush1.bf16.msra.mxu0 %v6574
    %6640 = vmatprep.mubr.bf16.mxu0 %v5981
    %6641 = vmatmul.mubr.bf16.gmra.mrb[0].mxu0 %v5980
    %v6642 = vpop.f32.mrb[0].mxu0
    %v6643 = vadd.f32 %v6442, %v6642
    %v6644 = vpop.f32.mrb[0].mxu0
    %v6645 = vadd.f32 %v6444, %v6644
    %v6646 = vpop.f32.mrb[0].mxu0
    %v6647 = vpop.f32.mrb[0].mxu0
    %6648 = vdwg.mxu0
    %v6649 = vld [vmem:[%s2 + $0x1d0] sm:$0xff]
    %v6650 = vld [vmem:[%s2 + $0x1d8] sm:$0xff]
    %v6651 = vld [vmem:[%s2 + $0x1e0] sm:$0xff]
    %v6652 = vld [vmem:[%s2 + $0x1e8] sm:$0xff]
    %v6653 = vld [vmem:[%s2 + $0x1f0] sm:$0xff]
    %v6654 = vld [vmem:[%s2 + $0x1f8] sm:$0xff]
    %v6655 = vld [vmem:[%s2 + $0x200] sm:$0xff]
    %v6656 = vld [vmem:[%s2 + $0x208] sm:$0xff]
    %v6657 = vld [vmem:[%s2 + $0x210] sm:$0xff]
    %v6658 = vld [vmem:[%s2 + $0x218] sm:$0xff]
    %v6659 = vld [vmem:[%s2 + $0x220] sm:$0xff]
    %v6660 = vld [vmem:[%s2 + $0x228] sm:$0xff]
    %v6661 = vld [vmem:[%s2 + $0x230] sm:$0xff]
    %v6662 = vld [vmem:[%s2 + $0x238] sm:$0xff]
    %v6663 = vld [vmem:[%s2 + $0x240] sm:$0xff]
    %v6664 = vld [vmem:[%s2 + $0x248] sm:$0xff]
    %v6665 = vlaneseq
    %v6666 = vshrl.u32 %v6665, 7
    %v6667 = vsub.s32 2, %v6666
    %v6668 = vrot.slane %v5714, %v6667
    %v6669 = vlaneseq
    %v6670 = vshrl.u32 %v6669, 7
    %v6671 = vsub.s32 2, %v6670
    %v6672 = vrot.slane %v5715, %v6671
    %v6689 = vunpack.c.l.b16 %v6649
    %v6690 = vunpack.c.h.b16 %v6649
    %v6691 = vunpack.c.l.b16 %v6650
    %v6692 = vunpack.c.h.b16 %v6650
    %v6693 = vunpack.c.l.b16 %v6651
    %v6694 = vunpack.c.h.b16 %v6651
    %v6695 = vunpack.c.l.b16 %v6652
    %v6696 = vunpack.c.h.b16 %v6652
    %v6697 = vunpack.c.l.b16 %v6653
    %v6698 = vunpack.c.h.b16 %v6653
    %v6699 = vunpack.c.l.b16 %v6654
    %v6700 = vunpack.c.h.b16 %v6654
    %v6701 = vunpack.c.l.b16 %v6655
    %v6702 = vunpack.c.h.b16 %v6655
    %v6703 = vunpack.c.l.b16 %v6656
    %v6704 = vunpack.c.h.b16 %v6656
    %v6705 = vunpack.c.l.b16 %v6657
    %v6706 = vunpack.c.h.b16 %v6657
    %v6707 = vunpack.c.l.b16 %v6658
    %v6708 = vunpack.c.h.b16 %v6658
    %v6709 = vunpack.c.l.b16 %v6659
    %v6710 = vunpack.c.h.b16 %v6659
    %v6711 = vunpack.c.l.b16 %v6660
    %v6712 = vunpack.c.h.b16 %v6660
    %v6713 = vunpack.c.l.b16 %v6661
    %v6714 = vunpack.c.h.b16 %v6661
    %v6715 = vunpack.c.l.b16 %v6662
    %v6716 = vunpack.c.h.b16 %v6662
    %v6717 = vunpack.c.l.b16 %v6663
    %v6718 = vunpack.c.h.b16 %v6663
    %v6719 = vunpack.c.l.b16 %v6664
    %v6720 = vunpack.c.h.b16 %v6664
    %v6721 = vpack.c.b16 %v6691, %v6689
    %v6722 = vpack.c.b16 %v6692, %v6690
    %v6723 = vpack.c.b16 %v6695, %v6693
    %v6724 = vpack.c.b16 %v6696, %v6694
    %v6725 = vpack.c.b16 %v6699, %v6697
    %v6726 = vpack.c.b16 %v6700, %v6698
    %v6727 = vpack.c.b16 %v6703, %v6701
    %v6728 = vpack.c.b16 %v6704, %v6702
    %v6729 = vpack.c.b16 %v6707, %v6705
    %v6730 = vpack.c.b16 %v6708, %v6706
    %v6731 = vpack.c.b16 %v6711, %v6709
    %v6732 = vpack.c.b16 %v6712, %v6710
    %v6733 = vpack.c.b16 %v6715, %v6713
    %v6734 = vpack.c.b16 %v6716, %v6714
    %v6735 = vpack.c.b16 %v6719, %v6717
    %v6736 = vpack.c.b16 %v6720, %v6718
    %6753 = vmatprep.subr.bf16.mxu0 %v6722
    %6754 = vmatpush1.bf16.msra.mxu0 %v6721
    %6755 = vmatprep.subr.bf16.mxu0 %v6724
    %6756 = vmatpush1.bf16.msra.mxu0 %v6723
    %6757 = vmatprep.subr.bf16.mxu0 %v6726
    %6758 = vmatpush1.bf16.msra.mxu0 %v6725
    %6759 = vmatprep.subr.bf16.mxu0 %v6728
    %6760 = vmatpush1.bf16.msra.mxu0 %v6727
    %6761 = vmatprep.subr.bf16.mxu0 %v6730
    %6762 = vmatpush1.bf16.msra.mxu0 %v6729
    %6763 = vmatprep.subr.bf16.mxu0 %v6732
    %6764 = vmatpush1.bf16.msra.mxu0 %v6731
    %6765 = vmatprep.subr.bf16.mxu0 %v6734
    %6766 = vmatpush1.bf16.msra.mxu0 %v6733
    %6767 = vmatprep.subr.bf16.mxu0 %v6736
    %6768 = vmatpush1.bf16.msra.mxu0 %v6735
    %6769 = vmatprep.subr.bf16.mxu0 0
    %6770 = vmatpush1.bf16.msra.mxu0 0
    %6771 = vmatprep.subr.bf16.mxu0 0
    %6772 = vmatpush1.bf16.msra.mxu0 0
    %6773 = vmatprep.subr.bf16.mxu0 0
    %6774 = vmatpush1.bf16.msra.mxu0 0
    %6775 = vmatprep.subr.bf16.mxu0 0
    %6776 = vmatpush1.bf16.msra.mxu0 0
    %6777 = vmatprep.subr.bf16.mxu0 0
    %6778 = vmatpush1.bf16.msra.mxu0 0
    %6779 = vmatprep.subr.bf16.mxu0 0
    %6780 = vmatpush1.bf16.msra.mxu0 0
    %6781 = vmatprep.subr.bf16.mxu0 0
    %6782 = vmatpush1.bf16.msra.mxu0 0
    %6783 = vmatprep.subr.bf16.mxu0 0
    %6784 = vmatpush1.bf16.msra.mxu0 0
    %6785 = vmatprep.mubr.bf16.mxu0 0
    %6786 = vmatmul.mubr.bf16.gmra.mrb[0].mxu0 %v5710
    %v6787 = vpop.f32.mrb[0].mxu0
    %v6788 = vadd.f32 %v6668, %v6787
    %v6789 = vpop.f32.mrb[0].mxu0
    %v6790 = vadd.f32 %v6672, %v6789
    %v6791 = vpop.f32.mrb[0].mxu0
    %v6792 = vadd.f32 %v6668, %v6791
    %v6793 = vpop.f32.mrb[0].mxu0
    %v6794 = vadd.f32 %v6672, %v6793
    %6795 = vmatprep.mubr.bf16.mxu0 0
    %6796 = vmatmul.mubr.bf16.gmra.mrb[0].mxu0 %v5711
    %v6797 = vpop.f32.mrb[0].mxu0
    %v6798 = vadd.f32 %v6668, %v6797
    %v6799 = vpop.f32.mrb[0].mxu0
    %v6800 = vadd.f32 %v6672, %v6799
    %v6801 = vpop.f32.mrb[0].mxu0
    %v6802 = vadd.f32 %v6668, %v6801
    %v6803 = vpop.f32.mrb[0].mxu0
    %v6804 = vadd.f32 %v6672, %v6803
    %6805 = vmatprep.mubr.bf16.mxu0 0
    %6806 = vmatmul.mubr.bf16.gmra.mrb[0].mxu0 %v5712
    %v6807 = vpop.f32.mrb[0].mxu0
    %v6808 = vadd.f32 %v6668, %v6807
    %v6809 = vpop.f32.mrb[0].mxu0
    %v6810 = vadd.f32 %v6672, %v6809
    %v6811 = vpop.f32.mrb[0].mxu0
    %v6812 = vadd.f32 %v6668, %v6811
    %v6813 = vpop.f32.mrb[0].mxu0
    %v6814 = vadd.f32 %v6672, %v6813
    %6815 = vmatprep.mubr.bf16.mxu0 0
    %6816 = vmatmul.mubr.bf16.gmra.mrb[0].mxu0 %v5713
    %v6817 = vpop.f32.mrb[0].mxu0
    %v6818 = vadd.f32 %v6668, %v6817
    %v6819 = vpop.f32.mrb[0].mxu0
    %v6820 = vadd.f32 %v6672, %v6819
    %v6821 = vpop.f32.mrb[0].mxu0
    %v6822 = vadd.f32 %v6668, %v6821
    %v6823 = vpop.f32.mrb[0].mxu0
    %v6824 = vadd.f32 %v6672, %v6823
    %6825 = vdwg.mxu0
    %v6826 = vmax.f32 %v6788, 0.0
    %v6827 = vmax.f32 %v6790, 0.0
    %v6828 = vmax.f32 %v6792, 0.0
    %v6829 = vmax.f32 %v6794, 0.0
    %v6830 = vmax.f32 %v6798, 0.0
    %v6831 = vmax.f32 %v6800, 0.0
    %v6832 = vmax.f32 %v6802, 0.0
    %v6833 = vmax.f32 %v6804, 0.0
    %v6834 = vmax.f32 %v6808, 0.0
    %v6835 = vmax.f32 %v6810, 0.0
    %v6836 = vmax.f32 %v6812, 0.0
    %v6837 = vmax.f32 %v6814, 0.0
    %v6838 = vmax.f32 %v6818, 0.0
    %v6839 = vmax.f32 %v6820, 0.0
    %v6840 = vmax.f32 %v6822, 0.0
    %v6841 = vmax.f32 %v6824, 0.0
    %v6842 = vmax.f32 %v6826, %v6830
    %v6843 = vmax.f32 %v6828, %v6832
    %v6844 = vmax.f32 %v6842, %v6843
    %v6845 = vrot.slane %v6844, 4
    %v6846 = vmax.f32 %v6844, %v6845
    %v6847 = vrot.slane %v6846, 2
    %v6848 = vmax.f32 %v6846, %v6847
    %v6849 = vrot.slane %v6848, 1
    %v6850 = vmax.f32 %v6848, %v6849
    %v6851 = vmax.f32 %v6827, %v6831
    %v6852 = vmax.f32 %v6829, %v6833
    %v6853 = vmax.f32 %v6851, %v6852
    %v6854 = vrot.slane %v6853, 4
    %v6855 = vmax.f32 %v6853, %v6854
    %v6856 = vrot.slane %v6855, 2
    %v6857 = vmax.f32 %v6855, %v6856
    %v6858 = vrot.slane %v6857, 1
    %v6859 = vmax.f32 %v6857, %v6858
    %v6860 = vmax.f32 %v6834, %v6838
    %v6861 = vmax.f32 %v6836, %v6840
    %v6862 = vmax.f32 %v6860, %v6861
    %v6863 = vrot.slane %v6862, 4
    %v6864 = vmax.f32 %v6862, %v6863
    %v6865 = vrot.slane %v6864, 2
    %v6866 = vmax.f32 %v6864, %v6865
    %v6867 = vrot.slane %v6866, 1
    %v6868 = vmax.f32 %v6866, %v6867
    %v6869 = vmax.f32 %v6835, %v6839
    %v6870 = vmax.f32 %v6837, %v6841
    %v6871 = vmax.f32 %v6869, %v6870
    %v6872 = vrot.slane %v6871, 4
    %v6873 = vmax.f32 %v6871, %v6872
    %v6874 = vrot.slane %v6873, 2
    %v6875 = vmax.f32 %v6873, %v6874
    %v6876 = vrot.slane %v6875, 1
    %v6877 = vmax.f32 %v6875, %v6876
    %v6878 = vsel %vm5945, %v6850, %v6868
    %v6879 = vsel %vm5945, %v6859, %v6877
    %v6880 = vld [vmem:[%s2 + $0x4d0] sm:$0xff]
    %v6881 = vld [vmem:[%s2 + $0x4d8] sm:$0xff]
    %v6882 = vld [vmem:[%s2 + $0x4e0] sm:$0xff]
    %v6883 = vld [vmem:[%s2 + $0x4e8] sm:$0xff]
    %v6884 = vld [vmem:[%s2 + $0x4f0] sm:$0xff]
    %v6885 = vld [vmem:[%s2 + $0x4f8] sm:$0xff]
    %v6886 = vld [vmem:[%s2 + $0x500] sm:$0xff]
    %v6887 = vld [vmem:[%s2 + $0x508] sm:$0xff]
    %v6888 = vld [vmem:[%s2 + $0x510] sm:$0xff]
    %v6889 = vld [vmem:[%s2 + $0x518] sm:$0xff]
    %v6890 = vld [vmem:[%s2 + $0x520] sm:$0xff]
    %v6891 = vld [vmem:[%s2 + $0x528] sm:$0xff]
    %v6892 = vld [vmem:[%s2 + $0x530] sm:$0xff]
    %v6893 = vld [vmem:[%s2 + $0x538] sm:$0xff]
    %v6894 = vld [vmem:[%s2 + $0x540] sm:$0xff]
    %v6895 = vld [vmem:[%s2 + $0x548] sm:$0xff]
    %v6896 = vld [vmem:[%s2 + $0x550] sm:$0xff]
    %v6897 = vld [vmem:[%s2 + $0x558] sm:$0xff]
    %v6898 = vld [vmem:[%s2 + $0x560] sm:$0xff]
    %v6899 = vld [vmem:[%s2 + $0x568] sm:$0xff]
    %v6900 = vld [vmem:[%s2 + $0x570] sm:$0xff]
    %v6901 = vld [vmem:[%s2 + $0x578] sm:$0xff]
    %v6902 = vld [vmem:[%s2 + $0x580] sm:$0xff]
    %v6903 = vld [vmem:[%s2 + $0x588] sm:$0xff]
    %v6904 = vld [vmem:[%s2 + $0x590] sm:$0xff]
    %v6905 = vld [vmem:[%s2 + $0x598] sm:$0xff]
    %v6906 = vld [vmem:[%s2 + $0x5a0] sm:$0xff]
    %v6907 = vld [vmem:[%s2 + $0x5a8] sm:$0xff]
    %v6908 = vld [vmem:[%s2 + $0x5b0] sm:$0xff]
    %v6909 = vld [vmem:[%s2 + $0x5b8] sm:$0xff]
    %v6910 = vld [vmem:[%s2 + $0x5c0] sm:$0xff]
    %v6911 = vld [vmem:[%s2 + $0x5c8] sm:$0xff]
    %v6912 = vpack.c.bf16 %v6878, %v6878
    %v6913 = vpack.c.bf16 %v6879, %v6879
    %v6946 = vunpack.c.l.b16 %v6880
    %v6947 = vunpack.c.h.b16 %v6880
    %v6948 = vunpack.c.l.b16 %v6881
    %v6949 = vunpack.c.h.b16 %v6881
    %v6950 = vunpack.c.l.b16 %v6882
    %v6951 = vunpack.c.h.b16 %v6882
    %v6952 = vunpack.c.l.b16 %v6883
    %v6953 = vunpack.c.h.b16 %v6883
    %v6954 = vunpack.c.l.b16 %v6884
    %v6955 = vunpack.c.h.b16 %v6884
    %v6956 = vunpack.c.l.b16 %v6885
    %v6957 = vunpack.c.h.b16 %v6885
    %v6958 = vunpack.c.l.b16 %v6886
    %v6959 = vunpack.c.h.b16 %v6886
    %v6960 = vunpack.c.l.b16 %v6887
    %v6961 = vunpack.c.h.b16 %v6887
    %v6962 = vunpack.c.l.b16 %v6888
    %v6963 = vunpack.c.h.b16 %v6888
    %v6964 = vunpack.c.l.b16 %v6889
    %v6965 = vunpack.c.h.b16 %v6889
    %v6966 = vunpack.c.l.b16 %v6890
    %v6967 = vunpack.c.h.b16 %v6890
    %v6968 = vunpack.c.l.b16 %v6891
    %v6969 = vunpack.c.h.b16 %v6891
    %v6970 = vunpack.c.l.b16 %v6892
    %v6971 = vunpack.c.h.b16 %v6892
    %v6972 = vunpack.c.l.b16 %v6893
    %v6973 = vunpack.c.h.b16 %v6893
    %v6974 = vunpack.c.l.b16 %v6894
    %v6975 = vunpack.c.h.b16 %v6894
    %v6976 = vunpack.c.l.b16 %v6895
    %v6977 = vunpack.c.h.b16 %v6895
    %v6978 = vunpack.c.l.b16 %v6896
    %v6979 = vunpack.c.h.b16 %v6896
    %v6980 = vunpack.c.l.b16 %v6897
    %v6981 = vunpack.c.h.b16 %v6897
    %v6982 = vunpack.c.l.b16 %v6898
    %v6983 = vunpack.c.h.b16 %v6898
    %v6984 = vunpack.c.l.b16 %v6899
    %v6985 = vunpack.c.h.b16 %v6899
    %v6986 = vunpack.c.l.b16 %v6900
    %v6987 = vunpack.c.h.b16 %v6900
    %v6988 = vunpack.c.l.b16 %v6901
    %v6989 = vunpack.c.h.b16 %v6901
    %v6990 = vunpack.c.l.b16 %v6902
    %v6991 = vunpack.c.h.b16 %v6902
    %v6992 = vunpack.c.l.b16 %v6903
    %v6993 = vunpack.c.h.b16 %v6903
    %v6994 = vunpack.c.l.b16 %v6904
    %v6995 = vunpack.c.h.b16 %v6904
    %v6996 = vunpack.c.l.b16 %v6905
    %v6997 = vunpack.c.h.b16 %v6905
    %v6998 = vunpack.c.l.b16 %v6906
    %v6999 = vunpack.c.h.b16 %v6906
    %v7000 = vunpack.c.l.b16 %v6907
    %v7001 = vunpack.c.h.b16 %v6907
    %v7002 = vunpack.c.l.b16 %v6908
    %v7003 = vunpack.c.h.b16 %v6908
    %v7004 = vunpack.c.l.b16 %v6909
    %v7005 = vunpack.c.h.b16 %v6909
    %v7006 = vunpack.c.l.b16 %v6910
    %v7007 = vunpack.c.h.b16 %v6910
    %v7008 = vunpack.c.l.b16 %v6911
    %v7009 = vunpack.c.h.b16 %v6911
    %v7010 = vpack.c.b16 %v6948, %v6946
    %v7011 = vpack.c.b16 %v6949, %v6947
    %v7012 = vpack.c.b16 %v6952, %v6950
    %v7013 = vpack.c.b16 %v6953, %v6951
    %v7014 = vpack.c.b16 %v6956, %v6954
    %v7015 = vpack.c.b16 %v6957, %v6955
    %v7016 = vpack.c.b16 %v6960, %v6958
    %v7017 = vpack.c.b16 %v6961, %v6959
    %v7018 = vpack.c.b16 %v6964, %v6962
    %v7019 = vpack.c.b16 %v6965, %v6963
    %v7020 = vpack.c.b16 %v6968, %v6966
    %v7021 = vpack.c.b16 %v6969, %v6967
    %v7022 = vpack.c.b16 %v6972, %v6970
    %v7023 = vpack.c.b16 %v6973, %v6971
    %v7024 = vpack.c.b16 %v6976, %v6974
    %v7025 = vpack.c.b16 %v6977, %v6975
    %v7026 = vpack.c.b16 %v6980, %v6978
    %v7027 = vpack.c.b16 %v6981, %v6979
    %v7028 = vpack.c.b16 %v6984, %v6982
    %v7029 = vpack.c.b16 %v6985, %v6983
    %v7030 = vpack.c.b16 %v6988, %v6986
    %v7031 = vpack.c.b16 %v6989, %v6987
    %v7032 = vpack.c.b16 %v6992, %v6990
    %v7033 = vpack.c.b16 %v6993, %v6991
    %v7034 = vpack.c.b16 %v6996, %v6994
    %v7035 = vpack.c.b16 %v6997, %v6995
    %v7036 = vpack.c.b16 %v7000, %v6998
    %v7037 = vpack.c.b16 %v7001, %v6999
    %v7038 = vpack.c.b16 %v7004, %v7002
    %v7039 = vpack.c.b16 %v7005, %v7003
    %v7040 = vpack.c.b16 %v7008, %v7006
    %v7041 = vpack.c.b16 %v7009, %v7007
    %7074 = vmatprep.subr.bf16.mxu0 %v7011
    %7075 = vmatpush1.bf16.msra.mxu0 %v7010
    %7076 = vmatprep.subr.bf16.mxu0 %v7013
    %7077 = vmatpush1.bf16.msra.mxu0 %v7012
    %7078 = vmatprep.subr.bf16.mxu0 %v7015
    %7079 = vmatpush1.bf16.msra.mxu0 %v7014
    %7080 = vmatprep.subr.bf16.mxu0 %v7017
    %7081 = vmatpush1.bf16.msra.mxu0 %v7016
    %7082 = vmatprep.subr.bf16.mxu0 %v7019
    %7083 = vmatpush1.bf16.msra.mxu0 %v7018
    %7084 = vmatprep.subr.bf16.mxu0 %v7021
    %7085 = vmatpush1.bf16.msra.mxu0 %v7020
    %7086 = vmatprep.subr.bf16.mxu0 %v7023
    %7087 = vmatpush1.bf16.msra.mxu0 %v7022
    %7088 = vmatprep.subr.bf16.mxu0 %v7025
    %7089 = vmatpush1.bf16.msra.mxu0 %v7024
    %7090 = vmatprep.subr.bf16.mxu0 %v7027
    %7091 = vmatpush1.bf16.msra.mxu0 %v7026
    %7092 = vmatprep.subr.bf16.mxu0 %v7029
    %7093 = vmatpush1.bf16.msra.mxu0 %v7028
    %7094 = vmatprep.subr.bf16.mxu0 %v7031
    %7095 = vmatpush1.bf16.msra.mxu0 %v7030
    %7096 = vmatprep.subr.bf16.mxu0 %v7033
    %7097 = vmatpush1.bf16.msra.mxu0 %v7032
    %7098 = vmatprep.subr.bf16.mxu0 %v7035
    %7099 = vmatpush1.bf16.msra.mxu0 %v7034
    %7100 = vmatprep.subr.bf16.mxu0 %v7037
    %7101 = vmatpush1.bf16.msra.mxu0 %v7036
    %7102 = vmatprep.subr.bf16.mxu0 %v7039
    %7103 = vmatpush1.bf16.msra.mxu0 %v7038
    %7104 = vmatprep.subr.bf16.mxu0 %v7041
    %7105 = vmatpush1.bf16.msra.mxu0 %v7040
    %7106 = vmatprep.mubr.bf16.mxu0 %v6913
    %7107 = vmatmul.mubr.bf16.gmra.mrb[0].mxu0 %v6912
    %v7108 = vpop.f32.mrb[0].mxu0
    %v7109 = vadd.f32 0.0, %v7108
    %v7110 = vpop.f32.mrb[0].mxu0
    %v7111 = vadd.f32 0.0, %v7110
    %v7112 = vpop.f32.mrb[0].mxu0
    %v7113 = vpop.f32.mrb[0].mxu0
    %7114 = vdwg.mxu0
    %v7115 = vadd.f32 %v6643, %v7109
    %v7116 = vadd.f32 %v6645, %v7111
    %v7117 = vld [vmem:[%s2 + $0x250] sm:$0xff]
    %v7118 = vld [vmem:[%s2 + $0x258] sm:$0xff]
    %v7119 = vld [vmem:[%s2 + $0x260] sm:$0xff]
    %v7120 = vld [vmem:[%s2 + $0x268] sm:$0xff]
    %v7121 = vld [vmem:[%s2 + $0x270] sm:$0xff]
    %v7122 = vld [vmem:[%s2 + $0x278] sm:$0xff]
    %v7123 = vld [vmem:[%s2 + $0x280] sm:$0xff]
    %v7124 = vld [vmem:[%s2 + $0x288] sm:$0xff]
    %v7125 = vld [vmem:[%s2 + $0x290] sm:$0xff]
    %v7126 = vld [vmem:[%s2 + $0x298] sm:$0xff]
    %v7127 = vld [vmem:[%s2 + $0x2a0] sm:$0xff]
    %v7128 = vld [vmem:[%s2 + $0x2a8] sm:$0xff]
    %v7129 = vld [vmem:[%s2 + $0x2b0] sm:$0xff]
    %v7130 = vld [vmem:[%s2 + $0x2b8] sm:$0xff]
    %v7131 = vld [vmem:[%s2 + $0x2c0] sm:$0xff]
    %v7132 = vld [vmem:[%s2 + $0x2c8] sm:$0xff]
    %v7133 = vlaneseq
    %v7134 = vshrl.u32 %v7133, 7
    %v7135 = vsub.s32 3, %v7134
    %v7136 = vrot.slane %v5714, %v7135
    %v7137 = vlaneseq
    %v7138 = vshrl.u32 %v7137, 7
    %v7139 = vsub.s32 3, %v7138
    %v7140 = vrot.slane %v5715, %v7139
    %v7157 = vunpack.c.l.b16 %v7117
    %v7158 = vunpack.c.h.b16 %v7117
    %v7159 = vunpack.c.l.b16 %v7118
    %v7160 = vunpack.c.h.b16 %v7118
    %v7161 = vunpack.c.l.b16 %v7119
    %v7162 = vunpack.c.h.b16 %v7119
    %v7163 = vunpack.c.l.b16 %v7120
    %v7164 = vunpack.c.h.b16 %v7120
    %v7165 = vunpack.c.l.b16 %v7121
    %v7166 = vunpack.c.h.b16 %v7121
    %v7167 = vunpack.c.l.b16 %v7122
    %v7168 = vunpack.c.h.b16 %v7122
    %v7169 = vunpack.c.l.b16 %v7123
    %v7170 = vunpack.c.h.b16 %v7123
    %v7171 = vunpack.c.l.b16 %v7124
    %v7172 = vunpack.c.h.b16 %v7124
    %v7173 = vunpack.c.l.b16 %v7125
    %v7174 = vunpack.c.h.b16 %v7125
    %v7175 = vunpack.c.l.b16 %v7126
    %v7176 = vunpack.c.h.b16 %v7126
    %v7177 = vunpack.c.l.b16 %v7127
    %v7178 = vunpack.c.h.b16 %v7127
    %v7179 = vunpack.c.l.b16 %v7128
    %v7180 = vunpack.c.h.b16 %v7128
    %v7181 = vunpack.c.l.b16 %v7129
    %v7182 = vunpack.c.h.b16 %v7129
    %v7183 = vunpack.c.l.b16 %v7130
    %v7184 = vunpack.c.h.b16 %v7130
    %v7185 = vunpack.c.l.b16 %v7131
    %v7186 = vunpack.c.h.b16 %v7131
    %v7187 = vunpack.c.l.b16 %v7132
    %v7188 = vunpack.c.h.b16 %v7132
    %v7189 = vpack.c.b16 %v7159, %v7157
    %v7190 = vpack.c.b16 %v7160, %v7158
    %v7191 = vpack.c.b16 %v7163, %v7161
    %v7192 = vpack.c.b16 %v7164, %v7162
    %v7193 = vpack.c.b16 %v7167, %v7165
    %v7194 = vpack.c.b16 %v7168, %v7166
    %v7195 = vpack.c.b16 %v7171, %v7169
    %v7196 = vpack.c.b16 %v7172, %v7170
    %v7197 = vpack.c.b16 %v7175, %v7173
    %v7198 = vpack.c.b16 %v7176, %v7174
    %v7199 = vpack.c.b16 %v7179, %v7177
    %v7200 = vpack.c.b16 %v7180, %v7178
    %v7201 = vpack.c.b16 %v7183, %v7181
    %v7202 = vpack.c.b16 %v7184, %v7182
    %v7203 = vpack.c.b16 %v7187, %v7185
    %v7204 = vpack.c.b16 %v7188, %v7186
    %7221 = vmatprep.subr.bf16.mxu0 %v7190
    %7222 = vmatpush1.bf16.msra.mxu0 %v7189
    %7223 = vmatprep.subr.bf16.mxu0 %v7192
    %7224 = vmatpush1.bf16.msra.mxu0 %v7191
    %7225 = vmatprep.subr.bf16.mxu0 %v7194
    %7226 = vmatpush1.bf16.msra.mxu0 %v7193
    %7227 = vmatprep.subr.bf16.mxu0 %v7196
    %7228 = vmatpush1.bf16.msra.mxu0 %v7195
    %7229 = vmatprep.subr.bf16.mxu0 %v7198
    %7230 = vmatpush1.bf16.msra.mxu0 %v7197
    %7231 = vmatprep.subr.bf16.mxu0 %v7200
    %7232 = vmatpush1.bf16.msra.mxu0 %v7199
    %7233 = vmatprep.subr.bf16.mxu0 %v7202
    %7234 = vmatpush1.bf16.msra.mxu0 %v7201
    %7235 = vmatprep.subr.bf16.mxu0 %v7204
    %7236 = vmatpush1.bf16.msra.mxu0 %v7203
    %7237 = vmatprep.subr.bf16.mxu0 0
    %7238 = vmatpush1.bf16.msra.mxu0 0
    %7239 = vmatprep.subr.bf16.mxu0 0
    %7240 = vmatpush1.bf16.msra.mxu0 0
    %7241 = vmatprep.subr.bf16.mxu0 0
    %7242 = vmatpush1.bf16.msra.mxu0 0
    %7243 = vmatprep.subr.bf16.mxu0 0
    %7244 = vmatpush1.bf16.msra.mxu0 0
    %7245 = vmatprep.subr.bf16.mxu0 0
    %7246 = vmatpush1.bf16.msra.mxu0 0
    %7247 = vmatprep.subr.bf16.mxu0 0
    %7248 = vmatpush1.bf16.msra.mxu0 0
    %7249 = vmatprep.subr.bf16.mxu0 0
    %7250 = vmatpush1.bf16.msra.mxu0 0
    %7251 = vmatprep.subr.bf16.mxu0 0
    %7252 = vmatpush1.bf16.msra.mxu0 0
    %7253 = vmatprep.mubr.bf16.mxu0 0
    %7254 = vmatmul.mubr.bf16.gmra.mrb[0].mxu0 %v5710
    %v7255 = vpop.f32.mrb[0].mxu0
    %v7256 = vadd.f32 %v7136, %v7255
    %v7257 = vpop.f32.mrb[0].mxu0
    %v7258 = vadd.f32 %v7140, %v7257
    %v7259 = vpop.f32.mrb[0].mxu0
    %v7260 = vadd.f32 %v7136, %v7259
    %v7261 = vpop.f32.mrb[0].mxu0
    %v7262 = vadd.f32 %v7140, %v7261
    %7263 = vmatprep.mubr.bf16.mxu0 0
    %7264 = vmatmul.mubr.bf16.gmra.mrb[0].mxu0 %v5711
    %v7265 = vpop.f32.mrb[0].mxu0
    %v7266 = vadd.f32 %v7136, %v7265
    %v7267 = vpop.f32.mrb[0].mxu0
    %v7268 = vadd.f32 %v7140, %v7267
    %v7269 = vpop.f32.mrb[0].mxu0
    %v7270 = vadd.f32 %v7136, %v7269
    %v7271 = vpop.f32.mrb[0].mxu0
    %v7272 = vadd.f32 %v7140, %v7271
    %7273 = vmatprep.mubr.bf16.mxu0 0
    %7274 = vmatmul.mubr.bf16.gmra.mrb[0].mxu0 %v5712
    %v7275 = vpop.f32.mrb[0].mxu0
    %v7276 = vadd.f32 %v7136, %v7275
    %v7277 = vpop.f32.mrb[0].mxu0
    %v7278 = vadd.f32 %v7140, %v7277
    %v7279 = vpop.f32.mrb[0].mxu0
    %v7280 = vadd.f32 %v7136, %v7279
    %v7281 = vpop.f32.mrb[0].mxu0
    %v7282 = vadd.f32 %v7140, %v7281
    %7283 = vmatprep.mubr.bf16.mxu0 0
    %7284 = vmatmul.mubr.bf16.gmra.mrb[0].mxu0 %v5713
    %v7285 = vpop.f32.mrb[0].mxu0
    %v7286 = vadd.f32 %v7136, %v7285
    %v7287 = vpop.f32.mrb[0].mxu0
    %v7288 = vadd.f32 %v7140, %v7287
    %v7289 = vpop.f32.mrb[0].mxu0
    %v7290 = vadd.f32 %v7136, %v7289
    %v7291 = vpop.f32.mrb[0].mxu0
    %v7292 = vadd.f32 %v7140, %v7291
    %7293 = vdwg.mxu0
    %v7294 = vmax.f32 %v7256, 0.0
    %v7295 = vmax.f32 %v7258, 0.0
    %v7296 = vmax.f32 %v7260, 0.0
    %v7297 = vmax.f32 %v7262, 0.0
    %v7298 = vmax.f32 %v7266, 0.0
    %v7299 = vmax.f32 %v7268, 0.0
    %v7300 = vmax.f32 %v7270, 0.0
    %v7301 = vmax.f32 %v7272, 0.0
    %v7302 = vmax.f32 %v7276, 0.0
    %v7303 = vmax.f32 %v7278, 0.0
    %v7304 = vmax.f32 %v7280, 0.0
    %v7305 = vmax.f32 %v7282, 0.0
    %v7306 = vmax.f32 %v7286, 0.0
    %v7307 = vmax.f32 %v7288, 0.0
    %v7308 = vmax.f32 %v7290, 0.0
    %v7309 = vmax.f32 %v7292, 0.0
    %v7310 = vmax.f32 %v7294, %v7298
    %v7311 = vmax.f32 %v7296, %v7300
    %v7312 = vmax.f32 %v7310, %v7311
    %v7313 = vrot.slane %v7312, 4
    %v7314 = vmax.f32 %v7312, %v7313
    %v7315 = vrot.slane %v7314, 2
    %v7316 = vmax.f32 %v7314, %v7315
    %v7317 = vrot.slane %v7316, 1
    %v7318 = vmax.f32 %v7316, %v7317
    %v7319 = vmax.f32 %v7295, %v7299
    %v7320 = vmax.f32 %v7297, %v7301
    %v7321 = vmax.f32 %v7319, %v7320
    %v7322 = vrot.slane %v7321, 4
    %v7323 = vmax.f32 %v7321, %v7322
    %v7324 = vrot.slane %v7323, 2
    %v7325 = vmax.f32 %v7323, %v7324
    %v7326 = vrot.slane %v7325, 1
    %v7327 = vmax.f32 %v7325, %v7326
    %v7328 = vmax.f32 %v7302, %v7306
    %v7329 = vmax.f32 %v7304, %v7308
    %v7330 = vmax.f32 %v7328, %v7329
    %v7331 = vrot.slane %v7330, 4
    %v7332 = vmax.f32 %v7330, %v7331
    %v7333 = vrot.slane %v7332, 2
    %v7334 = vmax.f32 %v7332, %v7333
    %v7335 = vrot.slane %v7334, 1
    %v7336 = vmax.f32 %v7334, %v7335
    %v7337 = vmax.f32 %v7303, %v7307
    %v7338 = vmax.f32 %v7305, %v7309
    %v7339 = vmax.f32 %v7337, %v7338
    %v7340 = vrot.slane %v7339, 4
    %v7341 = vmax.f32 %v7339, %v7340
    %v7342 = vrot.slane %v7341, 2
    %v7343 = vmax.f32 %v7341, %v7342
    %v7344 = vrot.slane %v7343, 1
    %v7345 = vmax.f32 %v7343, %v7344
    %v7346 = vsel %vm5945, %v7318, %v7336
    %v7347 = vsel %vm5945, %v7327, %v7345
    %v7348 = vld [vmem:[%s2 + $0x5d0] sm:$0xff]
    %v7349 = vld [vmem:[%s2 + $0x5d8] sm:$0xff]
    %v7350 = vld [vmem:[%s2 + $0x5e0] sm:$0xff]
    %v7351 = vld [vmem:[%s2 + $0x5e8] sm:$0xff]
    %v7352 = vld [vmem:[%s2 + $0x5f0] sm:$0xff]
    %v7353 = vld [vmem:[%s2 + $0x5f8] sm:$0xff]
    %v7354 = vld [vmem:[%s2 + $0x600] sm:$0xff]
    %v7355 = vld [vmem:[%s2 + $0x608] sm:$0xff]
    %v7356 = vld [vmem:[%s2 + $0x610] sm:$0xff]
    %v7357 = vld [vmem:[%s2 + $0x618] sm:$0xff]
    %v7358 = vld [vmem:[%s2 + $0x620] sm:$0xff]
    %v7359 = vld [vmem:[%s2 + $0x628] sm:$0xff]
    %v7360 = vld [vmem:[%s2 + $0x630] sm:$0xff]
    %v7361 = vld [vmem:[%s2 + $0x638] sm:$0xff]
    %v7362 = vld [vmem:[%s2 + $0x640] sm:$0xff]
    %v7363 = vld [vmem:[%s2 + $0x648] sm:$0xff]
    %v7364 = vld [vmem:[%s2 + $0x650] sm:$0xff]
    %v7365 = vld [vmem:[%s2 + $0x658] sm:$0xff]
    %v7366 = vld [vmem:[%s2 + $0x660] sm:$0xff]
    %v7367 = vld [vmem:[%s2 + $0x668] sm:$0xff]
    %v7368 = vld [vmem:[%s2 + $0x670] sm:$0xff]
    %v7369 = vld [vmem:[%s2 + $0x678] sm:$0xff]
    %v7370 = vld [vmem:[%s2 + $0x680] sm:$0xff]
    %v7371 = vld [vmem:[%s2 + $0x688] sm:$0xff]
    %v7372 = vld [vmem:[%s2 + $0x690] sm:$0xff]
    %v7373 = vld [vmem:[%s2 + $0x698] sm:$0xff]
    %v7374 = vld [vmem:[%s2 + $0x6a0] sm:$0xff]
    %v7375 = vld [vmem:[%s2 + $0x6a8] sm:$0xff]
    %v7376 = vld [vmem:[%s2 + $0x6b0] sm:$0xff]
    %v7377 = vld [vmem:[%s2 + $0x6b8] sm:$0xff]
    %v7378 = vld [vmem:[%s2 + $0x6c0] sm:$0xff]
    %v7379 = vld [vmem:[%s2 + $0x6c8] sm:$0xff]
    %v7380 = vpack.c.bf16 %v7346, %v7346
    %v7381 = vpack.c.bf16 %v7347, %v7347
    %v7414 = vunpack.c.l.b16 %v7348
    %v7415 = vunpack.c.h.b16 %v7348
    %v7416 = vunpack.c.l.b16 %v7349
    %v7417 = vunpack.c.h.b16 %v7349
    %v7418 = vunpack.c.l.b16 %v7350
    %v7419 = vunpack.c.h.b16 %v7350
    %v7420 = vunpack.c.l.b16 %v7351
    %v7421 = vunpack.c.h.b16 %v7351
    %v7422 = vunpack.c.l.b16 %v7352
    %v7423 = vunpack.c.h.b16 %v7352
    %v7424 = vunpack.c.l.b16 %v7353
    %v7425 = vunpack.c.h.b16 %v7353
    %v7426 = vunpack.c.l.b16 %v7354
    %v7427 = vunpack.c.h.b16 %v7354
    %v7428 = vunpack.c.l.b16 %v7355
    %v7429 = vunpack.c.h.b16 %v7355
    %v7430 = vunpack.c.l.b16 %v7356
    %v7431 = vunpack.c.h.b16 %v7356
    %v7432 = vunpack.c.l.b16 %v7357
    %v7433 = vunpack.c.h.b16 %v7357
    %v7434 = vunpack.c.l.b16 %v7358
    %v7435 = vunpack.c.h.b16 %v7358
    %v7436 = vunpack.c.l.b16 %v7359
    %v7437 = vunpack.c.h.b16 %v7359
    %v7438 = vunpack.c.l.b16 %v7360
    %v7439 = vunpack.c.h.b16 %v7360
    %v7440 = vunpack.c.l.b16 %v7361
    %v7441 = vunpack.c.h.b16 %v7361
    %v7442 = vunpack.c.l.b16 %v7362
    %v7443 = vunpack.c.h.b16 %v7362
    %v7444 = vunpack.c.l.b16 %v7363
    %v7445 = vunpack.c.h.b16 %v7363
    %v7446 = vunpack.c.l.b16 %v7364
    %v7447 = vunpack.c.h.b16 %v7364
    %v7448 = vunpack.c.l.b16 %v7365
    %v7449 = vunpack.c.h.b16 %v7365
    %v7450 = vunpack.c.l.b16 %v7366
    %v7451 = vunpack.c.h.b16 %v7366
    %v7452 = vunpack.c.l.b16 %v7367
    %v7453 = vunpack.c.h.b16 %v7367
    %v7454 = vunpack.c.l.b16 %v7368
    %v7455 = vunpack.c.h.b16 %v7368
    %v7456 = vunpack.c.l.b16 %v7369
    %v7457 = vunpack.c.h.b16 %v7369
    %v7458 = vunpack.c.l.b16 %v7370
    %v7459 = vunpack.c.h.b16 %v7370
    %v7460 = vunpack.c.l.b16 %v7371
    %v7461 = vunpack.c.h.b16 %v7371
    %v7462 = vunpack.c.l.b16 %v7372
    %v7463 = vunpack.c.h.b16 %v7372
    %v7464 = vunpack.c.l.b16 %v7373
    %v7465 = vunpack.c.h.b16 %v7373
    %v7466 = vunpack.c.l.b16 %v7374
    %v7467 = vunpack.c.h.b16 %v7374
    %v7468 = vunpack.c.l.b16 %v7375
    %v7469 = vunpack.c.h.b16 %v7375
    %v7470 = vunpack.c.l.b16 %v7376
    %v7471 = vunpack.c.h.b16 %v7376
    %v7472 = vunpack.c.l.b16 %v7377
    %v7473 = vunpack.c.h.b16 %v7377
    %v7474 = vunpack.c.l.b16 %v7378
    %v7475 = vunpack.c.h.b16 %v7378
    %v7476 = vunpack.c.l.b16 %v7379
    %v7477 = vunpack.c.h.b16 %v7379
    %v7478 = vpack.c.b16 %v7416, %v7414
    %v7479 = vpack.c.b16 %v7417, %v7415
    %v7480 = vpack.c.b16 %v7420, %v7418
    %v7481 = vpack.c.b16 %v7421, %v7419
    %v7482 = vpack.c.b16 %v7424, %v7422
    %v7483 = vpack.c.b16 %v7425, %v7423
    %v7484 = vpack.c.b16 %v7428, %v7426
    %v7485 = vpack.c.b16 %v7429, %v7427
    %v7486 = vpack.c.b16 %v7432, %v7430
    %v7487 = vpack.c.b16 %v7433, %v7431
    %v7488 = vpack.c.b16 %v7436, %v7434
    %v7489 = vpack.c.b16 %v7437, %v7435
    %v7490 = vpack.c.b16 %v7440, %v7438
    %v7491 = vpack.c.b16 %v7441, %v7439
    %v7492 = vpack.c.b16 %v7444, %v7442
    %v7493 = vpack.c.b16 %v7445, %v7443
    %v7494 = vpack.c.b16 %v7448, %v7446
    %v7495 = vpack.c.b16 %v7449, %v7447
    %v7496 = vpack.c.b16 %v7452, %v7450
    %v7497 = vpack.c.b16 %v7453, %v7451
    %v7498 = vpack.c.b16 %v7456, %v7454
    %v7499 = vpack.c.b16 %v7457, %v7455
    %v7500 = vpack.c.b16 %v7460, %v7458
    %v7501 = vpack.c.b16 %v7461, %v7459
    %v7502 = vpack.c.b16 %v7464, %v7462
    %v7503 = vpack.c.b16 %v7465, %v7463
    %v7504 = vpack.c.b16 %v7468, %v7466
    %v7505 = vpack.c.b16 %v7469, %v7467
    %v7506 = vpack.c.b16 %v7472, %v7470
    %v7507 = vpack.c.b16 %v7473, %v7471
    %v7508 = vpack.c.b16 %v7476, %v7474
    %v7509 = vpack.c.b16 %v7477, %v7475
    %7542 = vmatprep.subr.bf16.mxu0 %v7479
    %7543 = vmatpush1.bf16.msra.mxu0 %v7478
    %7544 = vmatprep.subr.bf16.mxu0 %v7481
    %7545 = vmatpush1.bf16.msra.mxu0 %v7480
    %7546 = vmatprep.subr.bf16.mxu0 %v7483
    %7547 = vmatpush1.bf16.msra.mxu0 %v7482
    %7548 = vmatprep.subr.bf16.mxu0 %v7485
    %7549 = vmatpush1.bf16.msra.mxu0 %v7484
    %7550 = vmatprep.subr.bf16.mxu0 %v7487
    %7551 = vmatpush1.bf16.msra.mxu0 %v7486
    %7552 = vmatprep.subr.bf16.mxu0 %v7489
    %7553 = vmatpush1.bf16.msra.mxu0 %v7488
    %7554 = vmatprep.subr.bf16.mxu0 %v7491
    %7555 = vmatpush1.bf16.msra.mxu0 %v7490
    %7556 = vmatprep.subr.bf16.mxu0 %v7493
    %7557 = vmatpush1.bf16.msra.mxu0 %v7492
    %7558 = vmatprep.subr.bf16.mxu0 %v7495
    %7559 = vmatpush1.bf16.msra.mxu0 %v7494
    %7560 = vmatprep.subr.bf16.mxu0 %v7497
    %7561 = vmatpush1.bf16.msra.mxu0 %v7496
    %7562 = vmatprep.subr.bf16.mxu0 %v7499
    %7563 = vmatpush1.bf16.msra.mxu0 %v7498
    %7564 = vmatprep.subr.bf16.mxu0 %v7501
    %7565 = vmatpush1.bf16.msra.mxu0 %v7500
    %7566 = vmatprep.subr.bf16.mxu0 %v7503
    %7567 = vmatpush1.bf16.msra.mxu0 %v7502
    %7568 = vmatprep.subr.bf16.mxu0 %v7505
    %7569 = vmatpush1.bf16.msra.mxu0 %v7504
    %7570 = vmatprep.subr.bf16.mxu0 %v7507
    %7571 = vmatpush1.bf16.msra.mxu0 %v7506
    %7572 = vmatprep.subr.bf16.mxu0 %v7509
    %7573 = vmatpush1.bf16.msra.mxu0 %v7508
    %7574 = vmatprep.mubr.bf16.mxu0 %v7381
    %7575 = vmatmul.mubr.bf16.gmra.mrb[0].mxu0 %v7380
    %v7576 = vpop.f32.mrb[0].mxu0
    %v7577 = vadd.f32 0.0, %v7576
    %v7578 = vpop.f32.mrb[0].mxu0
    %v7579 = vadd.f32 0.0, %v7578
    %v7580 = vpop.f32.mrb[0].mxu0
    %v7581 = vpop.f32.mrb[0].mxu0
    %7582 = vdwg.mxu0
    %v7583 = vadd.f32 %v7115, %v7577
    %v7584 = vadd.f32 %v7116, %v7579
    %s7585 = scalar_lea.vmem %s1, 240
    %v7586 = vld [vmem:[%s7585] ss:$8 sm:$0x3]
    %v7588 = vlaneseq
    %v7589 = vshrl.u32 %v7588, 7
    %v7590 = vsub.s32 0, %v7589
    %v7591 = vrot.slane %v7586, %v7590
    %v7592 = vlaneseq
    %v7593 = vshrl.u32 %v7592, 7
    %v7594 = vsub.s32 1, %v7593
    %v7595 = vrot.slane %v7586, %v7594
    %v7598 = vadd.f32 %v7583, %v7591
    %v7599 = vadd.f32 %v7584, %v7595
    %v7600 = vmax.f32 %v7598, 0.0
    %v7601 = vmax.f32 %v7599, 0.0
    %v7602 = vld [vmem:[%s2 + $0x6d0] sm:$0xff]
    %v7603 = vld [vmem:[%s2 + $0x6d8] sm:$0xff]
    %v7604 = vld [vmem:[%s2 + $0x6e0] sm:$0xff]
    %v7605 = vld [vmem:[%s2 + $0x6e8] sm:$0xff]
    %v7606 = vld [vmem:[%s2 + $0x6f0] sm:$0xff]
    %v7607 = vld [vmem:[%s2 + $0x6f8] sm:$0xff]
    %v7608 = vld [vmem:[%s2 + $0x700] sm:$0xff]
    %v7609 = vld [vmem:[%s2 + $0x708] sm:$0xff]
    %v7610 = vld [vmem:[%s2 + $0x710] sm:$0xff]
    %v7611 = vld [vmem:[%s2 + $0x718] sm:$0xff]
    %v7612 = vld [vmem:[%s2 + $0x720] sm:$0xff]
    %v7613 = vld [vmem:[%s2 + $0x728] sm:$0xff]
    %v7614 = vld [vmem:[%s2 + $0x730] sm:$0xff]
    %v7615 = vld [vmem:[%s2 + $0x738] sm:$0xff]
    %v7616 = vld [vmem:[%s2 + $0x740] sm:$0xff]
    %v7617 = vld [vmem:[%s2 + $0x748] sm:$0xff]
    %v7618 = vld [vmem:[%s2 + $0x750] sm:$0xff]
    %v7619 = vld [vmem:[%s2 + $0x758] sm:$0xff]
    %v7620 = vld [vmem:[%s2 + $0x760] sm:$0xff]
    %v7621 = vld [vmem:[%s2 + $0x768] sm:$0xff]
    %v7622 = vld [vmem:[%s2 + $0x770] sm:$0xff]
    %v7623 = vld [vmem:[%s2 + $0x778] sm:$0xff]
    %v7624 = vld [vmem:[%s2 + $0x780] sm:$0xff]
    %v7625 = vld [vmem:[%s2 + $0x788] sm:$0xff]
    %v7626 = vld [vmem:[%s2 + $0x790] sm:$0xff]
    %v7627 = vld [vmem:[%s2 + $0x798] sm:$0xff]
    %v7628 = vld [vmem:[%s2 + $0x7a0] sm:$0xff]
    %v7629 = vld [vmem:[%s2 + $0x7a8] sm:$0xff]
    %v7630 = vld [vmem:[%s2 + $0x7b0] sm:$0xff]
    %v7631 = vld [vmem:[%s2 + $0x7b8] sm:$0xff]
    %v7632 = vld [vmem:[%s2 + $0x7c0] sm:$0xff]
    %v7633 = vld [vmem:[%s2 + $0x7c8] sm:$0xff]
    %v7634 = vpack.c.bf16 %v7600, %v7600
    %v7635 = vpack.c.bf16 %v7601, %v7601
    %s7636 = scalar_lea.vmem %s1, 256
    %v7637 = vld [vmem:[%s7636] ss:$8 sm:$0x3]
    %v7639 = vlaneseq
    %v7640 = vshrl.u32 %v7639, 7
    %v7641 = vsub.s32 0, %v7640
    %v7642 = vrot.slane %v7637, %v7641
    %v7676 = vunpack.c.l.b16 %v7602
    %v7677 = vunpack.c.l.b16 %v7603
    %v7678 = vunpack.c.l.b16 %v7604
    %v7679 = vunpack.c.l.b16 %v7605
    %v7680 = vunpack.c.l.b16 %v7606
    %v7681 = vunpack.c.l.b16 %v7607
    %v7682 = vunpack.c.l.b16 %v7608
    %v7683 = vunpack.c.l.b16 %v7609
    %v7684 = vunpack.c.l.b16 %v7610
    %v7685 = vunpack.c.l.b16 %v7611
    %v7686 = vunpack.c.l.b16 %v7612
    %v7687 = vunpack.c.l.b16 %v7613
    %v7688 = vunpack.c.l.b16 %v7614
    %v7689 = vunpack.c.l.b16 %v7615
    %v7690 = vunpack.c.l.b16 %v7616
    %v7691 = vunpack.c.l.b16 %v7617
    %v7692 = vunpack.c.l.b16 %v7618
    %v7693 = vunpack.c.l.b16 %v7619
    %v7694 = vunpack.c.l.b16 %v7620
    %v7695 = vunpack.c.l.b16 %v7621
    %v7696 = vunpack.c.l.b16 %v7622
    %v7697 = vunpack.c.l.b16 %v7623
    %v7698 = vunpack.c.l.b16 %v7624
    %v7699 = vunpack.c.l.b16 %v7625
    %v7700 = vunpack.c.l.b16 %v7626
    %v7701 = vunpack.c.l.b16 %v7627
    %v7702 = vunpack.c.l.b16 %v7628
    %v7703 = vunpack.c.l.b16 %v7629
    %v7704 = vunpack.c.l.b16 %v7630
    %v7705 = vunpack.c.l.b16 %v7631
    %v7706 = vunpack.c.l.b16 %v7632
    %v7707 = vunpack.c.l.b16 %v7633
    %v7708 = vpack.c.b16 %v7677, %v7676
    %v7709 = vpack.c.b16 %v7679, %v7678
    %v7710 = vpack.c.b16 %v7681, %v7680
    %v7711 = vpack.c.b16 %v7683, %v7682
    %v7712 = vpack.c.b16 %v7685, %v7684
    %v7713 = vpack.c.b16 %v7687, %v7686
    %v7714 = vpack.c.b16 %v7689, %v7688
    %v7715 = vpack.c.b16 %v7691, %v7690
    %v7716 = vpack.c.b16 %v7693, %v7692
    %v7717 = vpack.c.b16 %v7695, %v7694
    %v7718 = vpack.c.b16 %v7697, %v7696
    %v7719 = vpack.c.b16 %v7699, %v7698
    %v7720 = vpack.c.b16 %v7701, %v7700
    %v7721 = vpack.c.b16 %v7703, %v7702
    %v7722 = vpack.c.b16 %v7705, %v7704
    %v7723 = vpack.c.b16 %v7707, %v7706
    %7740 = vmatprep.subr.bf16.mxu0 0
    %7741 = vmatpush1.bf16.msra.mxu0 %v7708
    %7742 = vmatprep.subr.bf16.mxu0 0
    %7743 = vmatpush1.bf16.msra.mxu0 %v7709
    %7744 = vmatprep.subr.bf16.mxu0 0
    %7745 = vmatpush1.bf16.msra.mxu0 %v7710
    %7746 = vmatprep.subr.bf16.mxu0 0
    %7747 = vmatpush1.bf16.msra.mxu0 %v7711
    %7748 = vmatprep.subr.bf16.mxu0 0
    %7749 = vmatpush1.bf16.msra.mxu0 %v7712
    %7750 = vmatprep.subr.bf16.mxu0 0
    %7751 = vmatpush1.bf16.msra.mxu0 %v7713
    %7752 = vmatprep.subr.bf16.mxu0 0
    %7753 = vmatpush1.bf16.msra.mxu0 %v7714
    %7754 = vmatprep.subr.bf16.mxu0 0
    %7755 = vmatpush1.bf16.msra.mxu0 %v7715
    %7756 = vmatprep.subr.bf16.mxu0 0
    %7757 = vmatpush1.bf16.msra.mxu0 %v7716
    %7758 = vmatprep.subr.bf16.mxu0 0
    %7759 = vmatpush1.bf16.msra.mxu0 %v7717
    %7760 = vmatprep.subr.bf16.mxu0 0
    %7761 = vmatpush1.bf16.msra.mxu0 %v7718
    %7762 = vmatprep.subr.bf16.mxu0 0
    %7763 = vmatpush1.bf16.msra.mxu0 %v7719
    %7764 = vmatprep.subr.bf16.mxu0 0
    %7765 = vmatpush1.bf16.msra.mxu0 %v7720
    %7766 = vmatprep.subr.bf16.mxu0 0
    %7767 = vmatpush1.bf16.msra.mxu0 %v7721
    %7768 = vmatprep.subr.bf16.mxu0 0
    %7769 = vmatpush1.bf16.msra.mxu0 %v7722
    %7770 = vmatprep.subr.bf16.mxu0 0
    %7771 = vmatpush1.bf16.msra.mxu0 %v7723
    %7772 = vmatprep.mubr.bf16.mxu0 %v7635
    %7773 = vmatmul.mubr.bf16.gmra.mrb[0].mxu0 %v7634
    %v7774 = vpop.f32.mrb[0].mxu0
    %v7775 = vadd.f32 %v7642, %v7774
    %v7776 = vpop.f32.mrb[0].mxu0
    %v7777 = vpop.f32.mrb[0].mxu0
    %v7778 = vpop.f32.mrb[0].mxu0
    %7779 = vdwg.mxu0
    %7780 = vst [vmem:[#allocation2] sm:$0x3] %v7775
    // Predicated region
    $region14: #{_lambda_.1} parent=1 // pred_check
      _
    $region15: #{_lambda_.1} parent=1 // pred_check_branch
      %7782 = sbr.rel (0) target = $region17
    $region16: #{_lambda_.1} parent=1 // pred_region
      %s7784 = ssub.s32 32, 32
      %7785 = vsyncadd [#allocation3], %s7784
      %s7787 = sshll.u32 [#allocation2], 4
      %s7788 = int_to_ptr.vmem [resolvable:$true] %s7787
      %7790 = dma.vmem_to_hbm [thread:$0]  %s7788, 32, %s3, [#allocation3]
    $region17: #{_lambda_.1} parent=1 // pred_fallthru
      _
    // Predicated region
    $region18: #{_lambda_.1} parent=1 // pred_check
      _
    $region19: #{_lambda_.1} parent=1 // pred_check_branch
      %7792 = sbr.rel (0) target = $region21
    $region20: #{_lambda_.1} parent=1 // pred_region
      %7793 = dma.done [#allocation3], 32
    $region21: #{_lambda_.1} parent=1 // pred_fallthru
      _
    %7794 = vsyncpa [#allocation3], 1

</llo_original>
